<compile_context>
chip_gen: v6e
topology: v6e:2x2x1
jax: 0.10.0
libtpu: 0.0.40
codegen_flags: <defaults>
</compile_context>

<pallas_src>
import functools

import jax
import jax.numpy as jnp
from jax.experimental import pallas as pl
from jax.experimental.pallas import tpu as pltpu


LANE = 128           # lane width; Cout (and carried channels) padded to this
_EPS = 1e-5          # nn.InstanceNorm2d default
_SLOPE = 0.2         # LeakyReLU slope


def _round_up(x, m):
    return ((x + m - 1) // m) * m


def _vmem_limit(block_bytes, extra_bytes=0):
    """Explicit scoped-VMEM limit: 2x (double-buffer) + headroom, floored at the
    per-generation defaults so we never shrink the compiler's budget."""
    want = 2 * block_bytes + extra_bytes + (4 << 20)
    return int(min(48 << 20, max(32 << 20, want)))


# ----------------------------------------------------------------------------
# Pallas kernel 1: fused im2col conv = sum of per-tap MXU matmuls
#                  (+ optional bias, + optional LeakyReLU), f32 accumulation.
# ----------------------------------------------------------------------------
def _conv_taps_kernel(*refs, tap_offsets, m_out, has_bias, apply_lrelu, slope):
    """refs = (x_ref, w_ref[, b_ref], o_ref)

    x_ref : (1, L, K)        bf16  flattened space-to-depth'd input (+ overrun pad)
    w_ref : (T, K, Coutp)    bf16  per-tap weight matrices (T = kb*kb)
    b_ref : (1, Coutp)       f32   (only when has_bias)
    o_ref : (1, M, Coutp)          M = Ho * Wq (junk columns cropped outside)
    """
    if has_bias:
        x_ref, w_ref, b_ref, o_ref = refs
    else:
        x_ref, w_ref, o_ref = refs
        b_ref = None

    acc = None
    for t, off in enumerate(tap_offsets):               # static; unrolled
        lhs = x_ref[0, pl.ds(off, m_out), :]             # (M, K) bf16
        part = jnp.dot(lhs, w_ref[t], preferred_element_type=jnp.float32)
        acc = part if acc is None else acc + part
    if b_ref is not None:
        acc = acc + b_ref[...]                           # (1, Coutp) broadcasts
    if apply_lrelu:
        acc = jnp.where(acc >= 0, acc, slope * acc)
    o_ref[0] = acc.astype(o_ref.dtype)


def conv4x4_pallas(h_nhwc, w_taps, bias, *, stride, apply_lrelu,
                   out_dtype=jnp.bfloat16):
    """4x4 conv, padding=1, stride in {1,2}, with pre-laid-out per-tap weights.

    h_nhwc : (N, H, W, Cc) activations (Cc = carried channel count)
    w_taps : (kb*kb, stride^2 * Cc, Coutp) bf16
    bias   : (1, Coutp) f32 or None
    returns: (N, Ho, Wo, Coutp) in out_dtype
    """
    N, H, W, Cc = h_nhwc.shape
    s = stride
    p = 1
    kb = 4 // s
    Ho = (H + 2 * p - 4) // s + 1
    Wo = (W + 2 * p - 4) // s + 1

    # ---- XLA prep: zero-pad + space-to-depth + flatten (one ~1x-size pass) ----
    # extra bottom/right rows make the padded dims divisible by s and give the
    # flattened array >= kb-1 rows of slack for the tap-offset overrun.
    pad_h = (-(H + 2 * p)) % s + s
    pad_w = (-(W + 2 * p)) % s
    x = jnp.pad(h_nhwc.astype(jnp.bfloat16),
                ((0, 0), (p, p + pad_h), (p, p + pad_w), (0, 0)))
    Hq = (H + 2 * p + pad_h) // s
    Wq = (W + 2 * p + pad_w) // s
    x = x.reshape(N, Hq, s, Wq, s, Cc).transpose(0, 1, 3, 2, 4, 5)
    x = x.reshape(N, Hq * Wq, s * s * Cc)                # (N, L, K)

    T, K, Coutp = w_taps.shape
    assert T == kb * kb and K == s * s * Cc
    L = Hq * Wq
    Mo = Ho * Wq                                         # incl. junk cols (cropped below)
    tap_offsets = tuple(ib * Wq + jb for ib in range(kb) for jb in range(kb))
    assert tap_offsets[-1] + Mo <= L

    has_bias = bias is not None
    inputs = (x, w_taps) + ((bias,) if has_bias else ())
    in_specs = [
        pl.BlockSpec((1, L, K), lambda n: (n, 0, 0)),          # activation slab
        pl.BlockSpec((T, K, Coutp), lambda n: (0, 0, 0)),      # full weight (resident)
    ]
    if has_bias:
        in_specs.append(pl.BlockSpec((1, Coutp), lambda n: (0, 0)))

    out_isz = jnp.dtype(out_dtype).itemsize
    block_bytes = (L * K * 2) + (T * K * Coutp * 2) + (Mo * Coutp * out_isz) \
        + (Coutp * 4 if has_bias else 0)
    vmem_limit = _vmem_limit(block_bytes, extra_bytes=Mo * Coutp * 4)  # f32 acc

    kernel = functools.partial(
        _conv_taps_kernel, tap_offsets=tap_offsets, m_out=Mo,
        has_bias=has_bias, apply_lrelu=apply_lrelu, slope=_SLOPE)

    out = pl.pallas_call(
        kernel,
        out_shape=jax.ShapeDtypeStruct((N, Mo, Coutp), out_dtype),
        grid_spec=pltpu.PrefetchScalarGridSpec(
            num_scalar_prefetch=0,
            grid=(N,),
            in_specs=in_specs,
            out_specs=pl.BlockSpec((1, Mo, Coutp), lambda n: (n, 0, 0)),
        ),
        compiler_params=pltpu.CompilerParams(
            dimension_semantics=("parallel",),
            vmem_limit_bytes=vmem_limit),
    )(*inputs)

    # crop the junk columns (ox in [Wo, Wq)) introduced by the flatten trick
    return out.reshape(N, Ho, Wq, Coutp)[:, :, :Wo, :]


# ----------------------------------------------------------------------------
# Pallas kernel 2: InstanceNorm2d(affine=False, eps=1e-5) + LeakyReLU(0.2).
#   NHWC view (N, H*W, C); C (padded to 128) on lanes, reduce over sublanes.
#   bf16 in / bf16 out, f32 math.  Grid (N, C/128): both axes parallel so both
#   v7x TensorCores get work even at tiny batch.
# ----------------------------------------------------------------------------
def _instnorm_lrelu_kernel(x_ref, o_ref, *, eps, slope):
    x = x_ref[0].astype(jnp.float32)                     # (HW, 128)
    mean = jnp.mean(x, axis=0, keepdims=True)
    var = jnp.mean(jnp.square(x - mean), axis=0, keepdims=True)   # biased var
    # eps inside the rsqrt: zero-padded channels give 0 * rsqrt(eps) = 0 (no NaN)
    y = (x - mean) * jax.lax.rsqrt(var + eps)
    o_ref[0] = jnp.where(y >= 0, y, slope * y).astype(o_ref.dtype)


def instnorm_lrelu_pallas(h_nhwc):
    N, H, W, C = h_nhwc.shape
    assert C % LANE == 0
    HW = H * W
    x = h_nhwc.reshape(N, HW, C)
    vmem_limit = _vmem_limit(2 * HW * LANE * 2, extra_bytes=HW * LANE * 4)
    out = pl.pallas_call(
        functools.partial(_instnorm_lrelu_kernel, eps=_EPS, slope=_SLOPE),
        out_shape=jax.ShapeDtypeStruct((N, HW, C), jnp.bfloat16),
        grid_spec=pltpu.PrefetchScalarGridSpec(
            num_scalar_prefetch=0,
            grid=(N, C // LANE),
            in_specs=[pl.BlockSpec((1, HW, LANE), lambda n, c: (n, 0, c))],
            out_specs=pl.BlockSpec((1, HW, LANE), lambda n, c: (n, 0, c)),
        ),
        compiler_params=pltpu.CompilerParams(
            dimension_semantics=("parallel", "parallel"),
            vmem_limit_bytes=vmem_limit),
    )(x)
    return out.reshape(N, H, W, C)


# ----------------------------------------------------------------------------
# Parameters: torch-layout init + one-time relayout (hoisted out of forward)
# ----------------------------------------------------------------------------
def init_params(dim=16, seed=0):
    """Torch-layout parameters (OIHW weights), matching D(dim)."""
    key = jax.random.PRNGKey(seed)
    ks = jax.random.split(key, 8)
    return {
        "w1": 0.05 * jax.random.normal(ks[0], (dim, 3, 4, 4), jnp.float32),
        "b1": 0.05 * jax.random.normal(ks[1], (dim,), jnp.float32),
        "w2": 0.05 * jax.random.normal(ks[2], (dim * 2, dim, 4, 4), jnp.float32),
        "w3": 0.05 * jax.random.normal(ks[3], (dim * 4, dim * 2, 4, 4), jnp.float32),
        "w4": 0.05 * jax.random.normal(ks[4], (dim * 8, dim * 4, 4, 4), jnp.float32),
        "w5": 0.05 * jax.random.normal(ks[5], (1, dim * 8, 4, 4), jnp.float32),
        "b5": 0.05 * jax.random.normal(ks[6], (1,), jnp.float32),
    }


def _prep_weight(w_oihw, stride, cin_carried, coutp):
    """OIHW torch weight -> per-tap (kb*kb, stride^2*cin_carried, coutp) bf16.

    Tap t = ib*kb + jb, K index k = (ir*stride + jr)*cin_carried + c correspond
    to the original tap (i, j) = (stride*ib + ir, stride*jb + jr), channel c.
    Padded in/out channels are zero-weighted (inert)."""
    Cout, Cin, kh, kw = w_oihw.shape
    s = stride
    kb = kh // s
    w = jnp.transpose(w_oihw, (2, 3, 1, 0))                       # (kh, kw, Cin, Cout)
    w = jnp.pad(w, ((0, 0), (0, 0), (0, cin_carried - Cin), (0, coutp - Cout)))
    w = w.reshape(kb, s, kb, s, cin_carried, coutp)               # (ib, ir, jb, jr, c, co)
    w = jnp.transpose(w, (0, 2, 1, 3, 4, 5))                      # (ib, jb, ir, jr, c, co)
    return w.reshape(kb * kb, s * s * cin_carried, coutp).astype(jnp.bfloat16)


def prepare_params(p):
    """One-time weight/bias relayout + channel padding (done outside jit)."""
    dim = p["w1"].shape[0]
    c1 = _round_up(dim, LANE)
    c2 = _round_up(dim * 2, LANE)
    c3 = _round_up(dim * 4, LANE)
    c4 = _round_up(dim * 8, LANE)
    c5 = _round_up(1, LANE)
    return {
        "w1": _prep_weight(p["w1"], 2, 3, c1),
        "b1": jnp.pad(p["b1"], (0, c1 - dim)).astype(jnp.float32).reshape(1, c1),
        "w2": _prep_weight(p["w2"], 2, c1, c2),
        "w3": _prep_weight(p["w3"], 2, c2, c3),
        "w4": _prep_weight(p["w4"], 1, c3, c4),
        "w5": _prep_weight(p["w5"], 1, c4, c5),
        "b5": jnp.pad(p["b5"], (0, c5 - 1)).astype(jnp.float32).reshape(1, c5),
    }


# ----------------------------------------------------------------------------
# The discriminator D (forward pass)
# ----------------------------------------------------------------------------
def discriminator_forward(q, x_nchw):
    """x: (N, 3, H, W) f32 NCHW in -> (N, 1, Ho, Wo) f32 NCHW out."""
    h = jnp.transpose(x_nchw, (0, 2, 3, 1)).astype(jnp.bfloat16)   # NHWC, bf16

    # block 1: conv(3 -> dim, s2) + bias + LeakyReLU (fused in epilogue)
    h = conv4x4_pallas(h, q["w1"], q["b1"], stride=2, apply_lrelu=True)
    # block 2: conv(dim -> 2dim, s2, no bias) + InstanceNorm + LeakyReLU
    h = conv4x4_pallas(h, q["w2"], None, stride=2, apply_lrelu=False)
    h = instnorm_lrelu_pallas(h)
    # block 3
    h = conv4x4_pallas(h, q["w3"], None, stride=2, apply_lrelu=False)
    h = instnorm_lrelu_pallas(h)
    # block 4 (stride 1)
    h = conv4x4_pallas(h, q["w4"], None, stride=1, apply_lrelu=False)
    h = instnorm_lrelu_pallas(h)
    # block 5: conv(8dim -> 1, s1) + bias, no activation; f32 out (final consumer)
    h = conv4x4_pallas(h, q["w5"], q["b5"], stride=1, apply_lrelu=False,
                       out_dtype=jnp.float32)

    # keep only the real output channel, NHWC -> NCHW (matches PyTorch D)
    return jnp.transpose(h[..., :1], (0, 3, 1, 2))


# ----------------------------------------------------------------------------
# Pure-JAX reference (same bf16 quantization points) for correctness checking
# ----------------------------------------------------------------------------
def _reference_forward(p, x_nchw):
    def conv(h, w, b, s):
        out = jax.lax.conv_general_dilated(
            h, jnp.transpose(w, (2, 3, 1, 0)).astype(jnp.bfloat16),
            window_strides=(s, s), padding=((1, 1), (1, 1)),
            dimension_numbers=("NHWC", "HWIO", "NHWC"),
            preferred_element_type=jnp.float32)
        return out if b is None else out + b

    def lrelu(x):
        return jnp.where(x >= 0, x, _SLOPE * x)

    def inorm(h):
        h = h.astype(jnp.float32)
        mean = jnp.mean(h, axis=(1, 2), keepdims=True)
        var = jnp.mean(jnp.square(h - mean), axis=(1, 2), keepdims=True)
        return (h - mean) * jax.lax.rsqrt(var + _EPS)

    h = jnp.transpose(x_nchw, (0, 2, 3, 1)).astype(jnp.bfloat16)
    h = lrelu(conv(h, p["w1"], p["b1"], 2)).astype(jnp.bfloat16)
    h = lrelu(inorm(conv(h, p["w2"], None, 2).astype(jnp.bfloat16))).astype(jnp.bfloat16)
    h = lrelu(inorm(conv(h, p["w3"], None, 2).astype(jnp.bfloat16))).astype(jnp.bfloat16)
    h = lrelu(inorm(conv(h, p["w4"], None, 1).astype(jnp.bfloat16))).astype(jnp.bfloat16)
    h = conv(h, p["w5"], p["b5"], 1)
    return jnp.transpose(h, (0, 3, 1, 2)).astype(jnp.float32)


if __name__ == "__main__":
    dim = 16                      # small hidden dim (module default is 64)
    torch_params = init_params(dim=dim, seed=0)
    params = prepare_params(torch_params)          # one-time weight relayout

    key = jax.random.PRNGKey(0)
    # 32x32 keeps all 5 conv outputs non-empty: 32 -> 16 -> 8 -> 4 -> 3 -> 2
    x = jax.random.normal(key, (2, 3, 32, 32), jnp.float32)

    fwd = jax.jit(discriminator_forward)
    out = jax.block_until_ready(fwd(params, x))

    assert out.shape == (2, 1, 2, 2), out.shape
    assert bool(jnp.all(jnp.isfinite(out)))

    # correctness vs. a pure-JAX reference with the same bf16 quantization points
    ref = jax.block_until_ready(jax.jit(_reference_forward)(torch_params, x))
    max_err = float(jnp.max(jnp.abs(out - ref)))
    assert max_err < 1e-1, f"max |pallas - reference| = {max_err}"

    print("KERNEL_OK")
</pallas_src>

<mosaic_0001>
module attributes {stable_mosaic.version = 11 : i64} {
  func.func @_conv_taps_kernel(%arg0: i32, %arg1: memref<1x306x12xbf16, #tpu.memory_space<vmem>>, %arg2: memref<4x12x128xbf16, #tpu.memory_space<vmem>>, %arg3: memref<1x128xf32, #tpu.memory_space<vmem>>, %arg4: memref<1x272x128xbf16, #tpu.memory_space<vmem>>) attributes {dimension_semantics = [#tpu.dimension_semantics<parallel>], iteration_bounds = array<i64: 2>, scalar_prefetch = 0 : i64, scratch_operands = 0 : i64, tpu.core_type = #tpu.core_type<tc>, window_params = [{transform_indices = @transform_0, window_bounds = array<i64: 1, 306, 12>}, {pipeline_mode = #tpu.pipeline_mode<synchronous>, transform_indices = @transform_1, window_bounds = array<i64: 4, 12, 128>}, {pipeline_mode = #tpu.pipeline_mode<synchronous>, transform_indices = @transform_2, window_bounds = array<i64: 1, 128>}, {transform_indices = @transform_3, window_bounds = array<i64: 1, 272, 128>}]} {
    %c0 = arith.constant 0 : index
    %c0_0 = arith.constant 0 : index
    %c0_1 = arith.constant 0 : index
    %0 = vector.load %arg1[%c0, %c0_0, %c0_1] : memref<1x306x12xbf16, #tpu.memory_space<vmem>>, vector<1x272x12xbf16>
    %1 = vector.shape_cast %0 : vector<1x272x12xbf16> to vector<272x12xbf16>
    %c0_2 = arith.constant 0 : index
    %c0_3 = arith.constant 0 : index
    %c0_4 = arith.constant 0 : index
    %2 = vector.load %arg2[%c0_2, %c0_3, %c0_4] : memref<4x12x128xbf16, #tpu.memory_space<vmem>>, vector<1x12x128xbf16>
    %3 = vector.shape_cast %2 : vector<1x12x128xbf16> to vector<12x128xbf16>
    %cst = arith.constant dense<0.000000e+00> : vector<272x128xf32>
    %4 = tpu.matmul %1, %3, %cst {dimension_numbers = #tpu.dot_dimension_numbers<[1], [0], [0], [1], [0, 0, 1, 1], [], []>} : vector<272x12xbf16>, vector<12x128xbf16>, vector<272x128xf32> -> vector<272x128xf32>
    %c0_5 = arith.constant 0 : index
    %c1 = arith.constant 1 : index
    %c0_6 = arith.constant 0 : index
    %5 = vector.load %arg1[%c0_5, %c1, %c0_6] : memref<1x306x12xbf16, #tpu.memory_space<vmem>>, vector<1x272x12xbf16>
    %6 = vector.shape_cast %5 : vector<1x272x12xbf16> to vector<272x12xbf16>
    %c1_7 = arith.constant 1 : index
    %c0_8 = arith.constant 0 : index
    %c0_9 = arith.constant 0 : index
    %7 = vector.load %arg2[%c1_7, %c0_8, %c0_9] : memref<4x12x128xbf16, #tpu.memory_space<vmem>>, vector<1x12x128xbf16>
    %8 = vector.shape_cast %7 : vector<1x12x128xbf16> to vector<12x128xbf16>
    %cst_10 = arith.constant dense<0.000000e+00> : vector<272x128xf32>
    %9 = tpu.matmul %6, %8, %cst_10 {dimension_numbers = #tpu.dot_dimension_numbers<[1], [0], [0], [1], [0, 0, 1, 1], [], []>} : vector<272x12xbf16>, vector<12x128xbf16>, vector<272x128xf32> -> vector<272x128xf32>
    %10 = arith.addf %4, %9 : vector<272x128xf32>
    %c0_11 = arith.constant 0 : index
    %c17 = arith.constant 17 : index
    %c0_12 = arith.constant 0 : index
    %11 = vector.load %arg1[%c0_11, %c17, %c0_12] : memref<1x306x12xbf16, #tpu.memory_space<vmem>>, vector<1x272x12xbf16>
    %12 = vector.shape_cast %11 : vector<1x272x12xbf16> to vector<272x12xbf16>
    %c2 = arith.constant 2 : index
    %c0_13 = arith.constant 0 : index
    %c0_14 = arith.constant 0 : index
    %13 = vector.load %arg2[%c2, %c0_13, %c0_14] : memref<4x12x128xbf16, #tpu.memory_space<vmem>>, vector<1x12x128xbf16>
    %14 = vector.shape_cast %13 : vector<1x12x128xbf16> to vector<12x128xbf16>
    %cst_15 = arith.constant dense<0.000000e+00> : vector<272x128xf32>
    %15 = tpu.matmul %12, %14, %cst_15 {dimension_numbers = #tpu.dot_dimension_numbers<[1], [0], [0], [1], [0, 0, 1, 1], [], []>} : vector<272x12xbf16>, vector<12x128xbf16>, vector<272x128xf32> -> vector<272x128xf32>
    %16 = arith.addf %10, %15 : vector<272x128xf32>
    %c0_16 = arith.constant 0 : index
    %c18 = arith.constant 18 : index
    %c0_17 = arith.constant 0 : index
    %17 = vector.load %arg1[%c0_16, %c18, %c0_17] : memref<1x306x12xbf16, #tpu.memory_space<vmem>>, vector<1x272x12xbf16>
    %18 = vector.shape_cast %17 : vector<1x272x12xbf16> to vector<272x12xbf16>
    %c3 = arith.constant 3 : index
    %c0_18 = arith.constant 0 : index
    %c0_19 = arith.constant 0 : index
    %19 = vector.load %arg2[%c3, %c0_18, %c0_19] : memref<4x12x128xbf16, #tpu.memory_space<vmem>>, vector<1x12x128xbf16>
    %20 = vector.shape_cast %19 : vector<1x12x128xbf16> to vector<12x128xbf16>
    %cst_20 = arith.constant dense<0.000000e+00> : vector<272x128xf32>
    %21 = tpu.matmul %18, %20, %cst_20 {dimension_numbers = #tpu.dot_dimension_numbers<[1], [0], [0], [1], [0, 0, 1, 1], [], []>} : vector<272x12xbf16>, vector<12x128xbf16>, vector<272x128xf32> -> vector<272x128xf32>
    %22 = arith.addf %16, %21 : vector<272x128xf32>
    %c0_21 = arith.constant 0 : index
    %c0_22 = arith.constant 0 : index
    %23 = vector.load %arg3[%c0_21, %c0_22] : memref<1x128xf32, #tpu.memory_space<vmem>>, vector<1x128xf32>
    %24 = vector.broadcast %23 : vector<1x128xf32> to vector<272x128xf32>
    %25 = arith.addf %22, %24 : vector<272x128xf32>
    %cst_23 = arith.constant 0.000000e+00 : f32
    %26 = vector.broadcast %cst_23 : f32 to vector<272x128xf32>
    %27 = arith.cmpf oge, %25, %26 : vector<272x128xf32>
    %cst_24 = arith.constant 2.000000e-01 : f32
    %28 = vector.broadcast %cst_24 : f32 to vector<272x128xf32>
    %29 = arith.mulf %28, %25 : vector<272x128xf32>
    %30 = arith.select %27, %25, %29 : vector<272x128xi1>, vector<272x128xf32>
    %31 = arith.truncf %30 : vector<272x128xf32> to vector<272x128xbf16>
    %c0_25 = arith.constant 0 : index
    %c0_26 = arith.constant 0 : index
    %c0_27 = arith.constant 0 : index
    %32 = vector.load %arg4[%c0_25, %c0_26, %c0_27] : memref<1x272x128xbf16, #tpu.memory_space<vmem>>, vector<1x272x128xbf16>
    %33 = vector.shape_cast %32 : vector<1x272x128xbf16> to vector<272x128xbf16>
    %34 = vector.shape_cast %31 : vector<272x128xbf16> to vector<1x272x128xbf16>
    tpu.vector_store %arg4[%c0_25, %c0_26, %c0_27], %34 {strides = array<i32>} : memref<1x272x128xbf16, #tpu.memory_space<vmem>>, vector<1x272x128xbf16>,
    return
  }
  func.func @transform_0(%arg0: i32) -> (i32, i32, i32) {
    %c0_i32 = arith.constant 0 : i32
    %c0_i32_0 = arith.constant 0 : i32
    %c0_i32_1 = arith.constant 0 : i32
    return %arg0, %c0_i32, %c0_i32_0 : i32, i32, i32
  }
  func.func @transform_1(%arg0: i32) -> (i32, i32, i32) {
    %c0_i32 = arith.constant 0 : i32
    %c0_i32_0 = arith.constant 0 : i32
    %c0_i32_1 = arith.constant 0 : i32
    %c0_i32_2 = arith.constant 0 : i32
    return %c0_i32, %c0_i32_0, %c0_i32_1 : i32, i32, i32
  }
  func.func @transform_2(%arg0: i32) -> (i32, i32) {
    %c0_i32 = arith.constant 0 : i32
    %c0_i32_0 = arith.constant 0 : i32
    %c0_i32_1 = arith.constant 0 : i32
    return %c0_i32, %c0_i32_0 : i32, i32
  }
  func.func @transform_3(%arg0: i32) -> (i32, i32, i32) {
    %c0_i32 = arith.constant 0 : i32
    %c0_i32_0 = arith.constant 0 : i32
    %c0_i32_1 = arith.constant 0 : i32
    return %arg0, %c0_i32, %c0_i32_0 : i32, i32, i32
  }
}

module attributes {stable_mosaic.version = 11 : i64} {
  func.func @_conv_taps_kernel(%arg0: i32, %arg1: memref<1x90x512xbf16, #tpu.memory_space<vmem>>, %arg2: memref<4x512x128xbf16, #tpu.memory_space<vmem>>, %arg3: memref<1x72x128xbf16, #tpu.memory_space<vmem>>) attributes {dimension_semantics = [#tpu.dimension_semantics<parallel>], iteration_bounds = array<i64: 2>, scalar_prefetch = 0 : i64, scratch_operands = 0 : i64, tpu.core_type = #tpu.core_type<tc>, window_params = [{transform_indices = @transform_0, window_bounds = array<i64: 1, 90, 512>}, {pipeline_mode = #tpu.pipeline_mode<synchronous>, transform_indices = @transform_1, window_bounds = array<i64: 4, 512, 128>}, {transform_indices = @transform_2, window_bounds = array<i64: 1, 72, 128>}]} {
    %c0 = arith.constant 0 : index
    %c0_0 = arith.constant 0 : index
    %c0_1 = arith.constant 0 : index
    %0 = vector.load %arg1[%c0, %c0_0, %c0_1] : memref<1x90x512xbf16, #tpu.memory_space<vmem>>, vector<1x72x512xbf16>
    %1 = vector.shape_cast %0 : vector<1x72x512xbf16> to vector<72x512xbf16>
    %c0_2 = arith.constant 0 : index
    %c0_3 = arith.constant 0 : index
    %c0_4 = arith.constant 0 : index
    %2 = vector.load %arg2[%c0_2, %c0_3, %c0_4] : memref<4x512x128xbf16, #tpu.memory_space<vmem>>, vector<1x512x128xbf16>
    %3 = vector.shape_cast %2 : vector<1x512x128xbf16> to vector<512x128xbf16>
    %cst = arith.constant dense<0.000000e+00> : vector<72x128xf32>
    %4 = tpu.matmul %1, %3, %cst {dimension_numbers = #tpu.dot_dimension_numbers<[1], [0], [0], [1], [0, 0, 1, 1], [], []>} : vector<72x512xbf16>, vector<512x128xbf16>, vector<72x128xf32> -> vector<72x128xf32>
    %c0_5 = arith.constant 0 : index
    %c1 = arith.constant 1 : index
    %c0_6 = arith.constant 0 : index
    %5 = vector.load %arg1[%c0_5, %c1, %c0_6] : memref<1x90x512xbf16, #tpu.memory_space<vmem>>, vector<1x72x512xbf16>
    %6 = vector.shape_cast %5 : vector<1x72x512xbf16> to vector<72x512xbf16>
    %c1_7 = arith.constant 1 : index
    %c0_8 = arith.constant 0 : index
    %c0_9 = arith.constant 0 : index
    %7 = vector.load %arg2[%c1_7, %c0_8, %c0_9] : memref<4x512x128xbf16, #tpu.memory_space<vmem>>, vector<1x512x128xbf16>
    %8 = vector.shape_cast %7 : vector<1x512x128xbf16> to vector<512x128xbf16>
    %cst_10 = arith.constant dense<0.000000e+00> : vector<72x128xf32>
    %9 = tpu.matmul %6, %8, %cst_10 {dimension_numbers = #tpu.dot_dimension_numbers<[1], [0], [0], [1], [0, 0, 1, 1], [], []>} : vector<72x512xbf16>, vector<512x128xbf16>, vector<72x128xf32> -> vector<72x128xf32>
    %10 = arith.addf %4, %9 : vector<72x128xf32>
    %c0_11 = arith.constant 0 : index
    %c9 = arith.constant 9 : index
    %c0_12 = arith.constant 0 : index
    %11 = vector.load %arg1[%c0_11, %c9, %c0_12] : memref<1x90x512xbf16, #tpu.memory_space<vmem>>, vector<1x72x512xbf16>
    %12 = vector.shape_cast %11 : vector<1x72x512xbf16> to vector<72x512xbf16>
    %c2 = arith.constant 2 : index
    %c0_13 = arith.constant 0 : index
    %c0_14 = arith.constant 0 : index
    %13 = vector.load %arg2[%c2, %c0_13, %c0_14] : memref<4x512x128xbf16, #tpu.memory_space<vmem>>, vector<1x512x128xbf16>
    %14 = vector.shape_cast %13 : vector<1x512x128xbf16> to vector<512x128xbf16>
    %cst_15 = arith.constant dense<0.000000e+00> : vector<72x128xf32>
    %15 = tpu.matmul %12, %14, %cst_15 {dimension_numbers = #tpu.dot_dimension_numbers<[1], [0], [0], [1], [0, 0, 1, 1], [], []>} : vector<72x512xbf16>, vector<512x128xbf16>, vector<72x128xf32> -> vector<72x128xf32>
    %16 = arith.addf %10, %15 : vector<72x128xf32>
    %c0_16 = arith.constant 0 : index
    %c10 = arith.constant 10 : index
    %c0_17 = arith.constant 0 : index
    %17 = vector.load %arg1[%c0_16, %c10, %c0_17] : memref<1x90x512xbf16, #tpu.memory_space<vmem>>, vector<1x72x512xbf16>
    %18 = vector.shape_cast %17 : vector<1x72x512xbf16> to vector<72x512xbf16>
    %c3 = arith.constant 3 : index
    %c0_18 = arith.constant 0 : index
    %c0_19 = arith.constant 0 : index
    %19 = vector.load %arg2[%c3, %c0_18, %c0_19] : memref<4x512x128xbf16, #tpu.memory_space<vmem>>, vector<1x512x128xbf16>
    %20 = vector.shape_cast %19 : vector<1x512x128xbf16> to vector<512x128xbf16>
    %cst_20 = arith.constant dense<0.000000e+00> : vector<72x128xf32>
    %21 = tpu.matmul %18, %20, %cst_20 {dimension_numbers = #tpu.dot_dimension_numbers<[1], [0], [0], [1], [0, 0, 1, 1], [], []>} : vector<72x512xbf16>, vector<512x128xbf16>, vector<72x128xf32> -> vector<72x128xf32>
    %22 = arith.addf %16, %21 : vector<72x128xf32>
    %23 = arith.truncf %22 : vector<72x128xf32> to vector<72x128xbf16>
    %c0_21 = arith.constant 0 : index
    %c0_22 = arith.constant 0 : index
    %c0_23 = arith.constant 0 : index
    %24 = vector.load %arg3[%c0_21, %c0_22, %c0_23] : memref<1x72x128xbf16, #tpu.memory_space<vmem>>, vector<1x72x128xbf16>
    %25 = vector.shape_cast %24 : vector<1x72x128xbf16> to vector<72x128xbf16>
    %26 = vector.shape_cast %23 : vector<72x128xbf16> to vector<1x72x128xbf16>
    tpu.vector_store %arg3[%c0_21, %c0_22, %c0_23], %26 {strides = array<i32>} : memref<1x72x128xbf16, #tpu.memory_space<vmem>>, vector<1x72x128xbf16>,
    return
  }
  func.func @transform_0(%arg0: i32) -> (i32, i32, i32) {
    %c0_i32 = arith.constant 0 : i32
    %c0_i32_0 = arith.constant 0 : i32
    %c0_i32_1 = arith.constant 0 : i32
    return %arg0, %c0_i32, %c0_i32_0 : i32, i32, i32
  }
  func.func @transform_1(%arg0: i32) -> (i32, i32, i32) {
    %c0_i32 = arith.constant 0 : i32
    %c0_i32_0 = arith.constant 0 : i32
    %c0_i32_1 = arith.constant 0 : i32
    %c0_i32_2 = arith.constant 0 : i32
    return %c0_i32, %c0_i32_0, %c0_i32_1 : i32, i32, i32
  }
  func.func @transform_2(%arg0: i32) -> (i32, i32, i32) {
    %c0_i32 = arith.constant 0 : i32
    %c0_i32_0 = arith.constant 0 : i32
    %c0_i32_1 = arith.constant 0 : i32
    return %arg0, %c0_i32, %c0_i32_0 : i32, i32, i32
  }
}

module attributes {stable_mosaic.version = 11 : i64} {
  func.func @_instnorm_lrelu_kernel(%arg0: i32, %arg1: i32, %arg2: memref<1x64x128xbf16, #tpu.memory_space<vmem>>, %arg3: memref<1x64x128xbf16, #tpu.memory_space<vmem>>) attributes {dimension_semantics = [#tpu.dimension_semantics<parallel>, #tpu.dimension_semantics<parallel>], iteration_bounds = array<i64: 2, 1>, scalar_prefetch = 0 : i64, scratch_operands = 0 : i64, tpu.core_type = #tpu.core_type<tc>, window_params = [{transform_indices = @transform_0, window_bounds = array<i64: 1, 64, 128>}, {transform_indices = @transform_1, window_bounds = array<i64: 1, 64, 128>}]} {
    %c0 = arith.constant 0 : index
    %c0_0 = arith.constant 0 : index
    %c0_1 = arith.constant 0 : index
    %0 = vector.load %arg2[%c0, %c0_0, %c0_1] : memref<1x64x128xbf16, #tpu.memory_space<vmem>>, vector<1x64x128xbf16>
    %1 = vector.shape_cast %0 : vector<1x64x128xbf16> to vector<64x128xbf16>
    %2 = arith.extf %1 : vector<64x128xbf16> to vector<64x128xf32>
    %cst = arith.constant dense<0.000000e+00> : vector<128xf32>
    %3 = vector.multi_reduction <add>, %2, %cst [0] : vector<64x128xf32> to vector<128xf32>
    %4 = vector.shape_cast %3 : vector<128xf32> to vector<1x128xf32>
    %cst_2 = arith.constant 6.400000e+01 : f32
    %5 = vector.broadcast %cst_2 : f32 to vector<1x128xf32>
    %6 = arith.divf %4, %5 : vector<1x128xf32>
    %7 = vector.broadcast %6 : vector<1x128xf32> to vector<64x128xf32>
    %8 = arith.subf %2, %7 : vector<64x128xf32>
    %9 = arith.mulf %8, %8 : vector<64x128xf32>
    %cst_3 = arith.constant dense<0.000000e+00> : vector<128xf32>
    %10 = vector.multi_reduction <add>, %9, %cst_3 [0] : vector<64x128xf32> to vector<128xf32>
    %11 = vector.shape_cast %10 : vector<128xf32> to vector<1x128xf32>
    %cst_4 = arith.constant 6.400000e+01 : f32
    %12 = vector.broadcast %cst_4 : f32 to vector<1x128xf32>
    %13 = arith.divf %11, %12 : vector<1x128xf32>
    %14 = vector.broadcast %6 : vector<1x128xf32> to vector<64x128xf32>
    %15 = arith.subf %2, %14 : vector<64x128xf32>
    %cst_5 = arith.constant 9.99999974E-6 : f32
    %16 = vector.broadcast %cst_5 : f32 to vector<1x128xf32>
    %17 = arith.addf %13, %16 : vector<1x128xf32>
    %18 = math.rsqrt %17 : vector<1x128xf32>
    %19 = vector.broadcast %18 : vector<1x128xf32> to vector<64x128xf32>
    %20 = arith.mulf %15, %19 : vector<64x128xf32>
    %cst_6 = arith.constant 0.000000e+00 : f32
    %21 = vector.broadcast %cst_6 : f32 to vector<64x128xf32>
    %22 = arith.cmpf oge, %20, %21 : vector<64x128xf32>
    %cst_7 = arith.constant 2.000000e-01 : f32
    %23 = vector.broadcast %cst_7 : f32 to vector<64x128xf32>
    %24 = arith.mulf %23, %20 : vector<64x128xf32>
    %25 = arith.select %22, %20, %24 : vector<64x128xi1>, vector<64x128xf32>
    %26 = arith.truncf %25 : vector<64x128xf32> to vector<64x128xbf16>
    %c0_8 = arith.constant 0 : index
    %c0_9 = arith.constant 0 : index
    %c0_10 = arith.constant 0 : index
    %27 = vector.load %arg3[%c0_8, %c0_9, %c0_10] : memref<1x64x128xbf16, #tpu.memory_space<vmem>>, vector<1x64x128xbf16>
    %28 = vector.shape_cast %27 : vector<1x64x128xbf16> to vector<64x128xbf16>
    %29 = vector.shape_cast %26 : vector<64x128xbf16> to vector<1x64x128xbf16>
    tpu.vector_store %arg3[%c0_8, %c0_9, %c0_10], %29 {strides = array<i32>} : memref<1x64x128xbf16, #tpu.memory_space<vmem>>, vector<1x64x128xbf16>,
    return
  }
  func.func @transform_0(%arg0: i32, %arg1: i32) -> (i32, i32, i32) {
    %c0_i32 = arith.constant 0 : i32
    %c0_i32_0 = arith.constant 0 : i32
    return %arg0, %c0_i32, %arg1 : i32, i32, i32
  }
  func.func @transform_1(%arg0: i32, %arg1: i32) -> (i32, i32, i32) {
    %c0_i32 = arith.constant 0 : i32
    %c0_i32_0 = arith.constant 0 : i32
    return %arg0, %c0_i32, %arg1 : i32, i32, i32
  }
}

module attributes {stable_mosaic.version = 11 : i64} {
  func.func @_conv_taps_kernel(%arg0: i32, %arg1: memref<1x30x512xbf16, #tpu.memory_space<vmem>>, %arg2: memref<4x512x128xbf16, #tpu.memory_space<vmem>>, %arg3: memref<1x20x128xbf16, #tpu.memory_space<vmem>>) attributes {dimension_semantics = [#tpu.dimension_semantics<parallel>], iteration_bounds = array<i64: 2>, scalar_prefetch = 0 : i64, scratch_operands = 0 : i64, tpu.core_type = #tpu.core_type<tc>, window_params = [{transform_indices = @transform_0, window_bounds = array<i64: 1, 30, 512>}, {pipeline_mode = #tpu.pipeline_mode<synchronous>, transform_indices = @transform_1, window_bounds = array<i64: 4, 512, 128>}, {transform_indices = @transform_2, window_bounds = array<i64: 1, 20, 128>}]} {
    %c0 = arith.constant 0 : index
    %c0_0 = arith.constant 0 : index
    %c0_1 = arith.constant 0 : index
    %0 = vector.load %arg1[%c0, %c0_0, %c0_1] : memref<1x30x512xbf16, #tpu.memory_space<vmem>>, vector<1x20x512xbf16>
    %1 = vector.shape_cast %0 : vector<1x20x512xbf16> to vector<20x512xbf16>
    %c0_2 = arith.constant 0 : index
    %c0_3 = arith.constant 0 : index
    %c0_4 = arith.constant 0 : index
    %2 = vector.load %arg2[%c0_2, %c0_3, %c0_4] : memref<4x512x128xbf16, #tpu.memory_space<vmem>>, vector<1x512x128xbf16>
    %3 = vector.shape_cast %2 : vector<1x512x128xbf16> to vector<512x128xbf16>
    %cst = arith.constant dense<0.000000e+00> : vector<20x128xf32>
    %4 = tpu.matmul %1, %3, %cst {dimension_numbers = #tpu.dot_dimension_numbers<[1], [0], [0], [1], [0, 0, 1, 1], [], []>} : vector<20x512xbf16>, vector<512x128xbf16>, vector<20x128xf32> -> vector<20x128xf32>
    %c0_5 = arith.constant 0 : index
    %c1 = arith.constant 1 : index
    %c0_6 = arith.constant 0 : index
    %5 = vector.load %arg1[%c0_5, %c1, %c0_6] : memref<1x30x512xbf16, #tpu.memory_space<vmem>>, vector<1x20x512xbf16>
    %6 = vector.shape_cast %5 : vector<1x20x512xbf16> to vector<20x512xbf16>
    %c1_7 = arith.constant 1 : index
    %c0_8 = arith.constant 0 : index
    %c0_9 = arith.constant 0 : index
    %7 = vector.load %arg2[%c1_7, %c0_8, %c0_9] : memref<4x512x128xbf16, #tpu.memory_space<vmem>>, vector<1x512x128xbf16>
    %8 = vector.shape_cast %7 : vector<1x512x128xbf16> to vector<512x128xbf16>
    %cst_10 = arith.constant dense<0.000000e+00> : vector<20x128xf32>
    %9 = tpu.matmul %6, %8, %cst_10 {dimension_numbers = #tpu.dot_dimension_numbers<[1], [0], [0], [1], [0, 0, 1, 1], [], []>} : vector<20x512xbf16>, vector<512x128xbf16>, vector<20x128xf32> -> vector<20x128xf32>
    %10 = arith.addf %4, %9 : vector<20x128xf32>
    %c0_11 = arith.constant 0 : index
    %c5 = arith.constant 5 : index
    %c0_12 = arith.constant 0 : index
    %11 = vector.load %arg1[%c0_11, %c5, %c0_12] : memref<1x30x512xbf16, #tpu.memory_space<vmem>>, vector<1x20x512xbf16>
    %12 = vector.shape_cast %11 : vector<1x20x512xbf16> to vector<20x512xbf16>
    %c2 = arith.constant 2 : index
    %c0_13 = arith.constant 0 : index
    %c0_14 = arith.constant 0 : index
    %13 = vector.load %arg2[%c2, %c0_13, %c0_14] : memref<4x512x128xbf16, #tpu.memory_space<vmem>>, vector<1x512x128xbf16>
    %14 = vector.shape_cast %13 : vector<1x512x128xbf16> to vector<512x128xbf16>
    %cst_15 = arith.constant dense<0.000000e+00> : vector<20x128xf32>
    %15 = tpu.matmul %12, %14, %cst_15 {dimension_numbers = #tpu.dot_dimension_numbers<[1], [0], [0], [1], [0, 0, 1, 1], [], []>} : vector<20x512xbf16>, vector<512x128xbf16>, vector<20x128xf32> -> vector<20x128xf32>
    %16 = arith.addf %10, %15 : vector<20x128xf32>
    %c0_16 = arith.constant 0 : index
    %c6 = arith.constant 6 : index
    %c0_17 = arith.constant 0 : index
    %17 = vector.load %arg1[%c0_16, %c6, %c0_17] : memref<1x30x512xbf16, #tpu.memory_space<vmem>>, vector<1x20x512xbf16>
    %18 = vector.shape_cast %17 : vector<1x20x512xbf16> to vector<20x512xbf16>
    %c3 = arith.constant 3 : index
    %c0_18 = arith.constant 0 : index
    %c0_19 = arith.constant 0 : index
    %19 = vector.load %arg2[%c3, %c0_18, %c0_19] : memref<4x512x128xbf16, #tpu.memory_space<vmem>>, vector<1x512x128xbf16>
    %20 = vector.shape_cast %19 : vector<1x512x128xbf16> to vector<512x128xbf16>
    %cst_20 = arith.constant dense<0.000000e+00> : vector<20x128xf32>
    %21 = tpu.matmul %18, %20, %cst_20 {dimension_numbers = #tpu.dot_dimension_numbers<[1], [0], [0], [1], [0, 0, 1, 1], [], []>} : vector<20x512xbf16>, vector<512x128xbf16>, vector<20x128xf32> -> vector<20x128xf32>
    %22 = arith.addf %16, %21 : vector<20x128xf32>
    %23 = arith.truncf %22 : vector<20x128xf32> to vector<20x128xbf16>
    %c0_21 = arith.constant 0 : index
    %c0_22 = arith.constant 0 : index
    %c0_23 = arith.constant 0 : index
    %24 = vector.load %arg3[%c0_21, %c0_22, %c0_23] : memref<1x20x128xbf16, #tpu.memory_space<vmem>>, vector<1x20x128xbf16>
    %25 = vector.shape_cast %24 : vector<1x20x128xbf16> to vector<20x128xbf16>
    %26 = vector.shape_cast %23 : vector<20x128xbf16> to vector<1x20x128xbf16>
    tpu.vector_store %arg3[%c0_21, %c0_22, %c0_23], %26 {strides = array<i32>} : memref<1x20x128xbf16, #tpu.memory_space<vmem>>, vector<1x20x128xbf16>,
    return
  }
  func.func @transform_0(%arg0: i32) -> (i32, i32, i32) {
    %c0_i32 = arith.constant 0 : i32
    %c0_i32_0 = arith.constant 0 : i32
    %c0_i32_1 = arith.constant 0 : i32
    return %arg0, %c0_i32, %c0_i32_0 : i32, i32, i32
  }
  func.func @transform_1(%arg0: i32) -> (i32, i32, i32) {
    %c0_i32 = arith.constant 0 : i32
    %c0_i32_0 = arith.constant 0 : i32
    %c0_i32_1 = arith.constant 0 : i32
    %c0_i32_2 = arith.constant 0 : i32
    return %c0_i32, %c0_i32_0, %c0_i32_1 : i32, i32, i32
  }
  func.func @transform_2(%arg0: i32) -> (i32, i32, i32) {
    %c0_i32 = arith.constant 0 : i32
    %c0_i32_0 = arith.constant 0 : i32
    %c0_i32_1 = arith.constant 0 : i32
    return %arg0, %c0_i32, %c0_i32_0 : i32, i32, i32
  }
}

module attributes {stable_mosaic.version = 11 : i64} {
  func.func @_instnorm_lrelu_kernel(%arg0: i32, %arg1: i32, %arg2: memref<1x16x128xbf16, #tpu.memory_space<vmem>>, %arg3: memref<1x16x128xbf16, #tpu.memory_space<vmem>>) attributes {dimension_semantics = [#tpu.dimension_semantics<parallel>, #tpu.dimension_semantics<parallel>], iteration_bounds = array<i64: 2, 1>, scalar_prefetch = 0 : i64, scratch_operands = 0 : i64, tpu.core_type = #tpu.core_type<tc>, window_params = [{transform_indices = @transform_0, window_bounds = array<i64: 1, 16, 128>}, {transform_indices = @transform_1, window_bounds = array<i64: 1, 16, 128>}]} {
    %c0 = arith.constant 0 : index
    %c0_0 = arith.constant 0 : index
    %c0_1 = arith.constant 0 : index
    %0 = vector.load %arg2[%c0, %c0_0, %c0_1] : memref<1x16x128xbf16, #tpu.memory_space<vmem>>, vector<1x16x128xbf16>
    %1 = vector.shape_cast %0 : vector<1x16x128xbf16> to vector<16x128xbf16>
    %2 = arith.extf %1 : vector<16x128xbf16> to vector<16x128xf32>
    %cst = arith.constant dense<0.000000e+00> : vector<128xf32>
    %3 = vector.multi_reduction <add>, %2, %cst [0] : vector<16x128xf32> to vector<128xf32>
    %4 = vector.shape_cast %3 : vector<128xf32> to vector<1x128xf32>
    %cst_2 = arith.constant 1.600000e+01 : f32
    %5 = vector.broadcast %cst_2 : f32 to vector<1x128xf32>
    %6 = arith.divf %4, %5 : vector<1x128xf32>
    %7 = vector.broadcast %6 : vector<1x128xf32> to vector<16x128xf32>
    %8 = arith.subf %2, %7 : vector<16x128xf32>
    %9 = arith.mulf %8, %8 : vector<16x128xf32>
    %cst_3 = arith.constant dense<0.000000e+00> : vector<128xf32>
    %10 = vector.multi_reduction <add>, %9, %cst_3 [0] : vector<16x128xf32> to vector<128xf32>
    %11 = vector.shape_cast %10 : vector<128xf32> to vector<1x128xf32>
    %cst_4 = arith.constant 1.600000e+01 : f32
    %12 = vector.broadcast %cst_4 : f32 to vector<1x128xf32>
    %13 = arith.divf %11, %12 : vector<1x128xf32>
    %14 = vector.broadcast %6 : vector<1x128xf32> to vector<16x128xf32>
    %15 = arith.subf %2, %14 : vector<16x128xf32>
    %cst_5 = arith.constant 9.99999974E-6 : f32
    %16 = vector.broadcast %cst_5 : f32 to vector<1x128xf32>
    %17 = arith.addf %13, %16 : vector<1x128xf32>
    %18 = math.rsqrt %17 : vector<1x128xf32>
    %19 = vector.broadcast %18 : vector<1x128xf32> to vector<16x128xf32>
    %20 = arith.mulf %15, %19 : vector<16x128xf32>
    %cst_6 = arith.constant 0.000000e+00 : f32
    %21 = vector.broadcast %cst_6 : f32 to vector<16x128xf32>
    %22 = arith.cmpf oge, %20, %21 : vector<16x128xf32>
    %cst_7 = arith.constant 2.000000e-01 : f32
    %23 = vector.broadcast %cst_7 : f32 to vector<16x128xf32>
    %24 = arith.mulf %23, %20 : vector<16x128xf32>
    %25 = arith.select %22, %20, %24 : vector<16x128xi1>, vector<16x128xf32>
    %26 = arith.truncf %25 : vector<16x128xf32> to vector<16x128xbf16>
    %c0_8 = arith.constant 0 : index
    %c0_9 = arith.constant 0 : index
    %c0_10 = arith.constant 0 : index
    %27 = vector.load %arg3[%c0_8, %c0_9, %c0_10] : memref<1x16x128xbf16, #tpu.memory_space<vmem>>, vector<1x16x128xbf16>
    %28 = vector.shape_cast %27 : vector<1x16x128xbf16> to vector<16x128xbf16>
    %29 = vector.shape_cast %26 : vector<16x128xbf16> to vector<1x16x128xbf16>
    tpu.vector_store %arg3[%c0_8, %c0_9, %c0_10], %29 {strides = array<i32>} : memref<1x16x128xbf16, #tpu.memory_space<vmem>>, vector<1x16x128xbf16>,
    return
  }
  func.func @transform_0(%arg0: i32, %arg1: i32) -> (i32, i32, i32) {
    %c0_i32 = arith.constant 0 : i32
    %c0_i32_0 = arith.constant 0 : i32
    return %arg0, %c0_i32, %arg1 : i32, i32, i32
  }
  func.func @transform_1(%arg0: i32, %arg1: i32) -> (i32, i32, i32) {
    %c0_i32 = arith.constant 0 : i32
    %c0_i32_0 = arith.constant 0 : i32
    return %arg0, %c0_i32, %arg1 : i32, i32, i32
  }
}

module attributes {stable_mosaic.version = 11 : i64} {
  func.func @_conv_taps_kernel(%arg0: i32, %arg1: memref<1x42x128xbf16, #tpu.memory_space<vmem>>, %arg2: memref<16x128x128xbf16, #tpu.memory_space<vmem>>, %arg3: memref<1x18x128xbf16, #tpu.memory_space<vmem>>) attributes {dimension_semantics = [#tpu.dimension_semantics<parallel>], iteration_bounds = array<i64: 2>, scalar_prefetch = 0 : i64, scratch_operands = 0 : i64, tpu.core_type = #tpu.core_type<tc>, window_params = [{transform_indices = @transform_0, window_bounds = array<i64: 1, 42, 128>}, {pipeline_mode = #tpu.pipeline_mode<synchronous>, transform_indices = @transform_1, window_bounds = array<i64: 16, 128, 128>}, {transform_indices = @transform_2, window_bounds = array<i64: 1, 18, 128>}]} {
    %c0 = arith.constant 0 : index
    %c0_0 = arith.constant 0 : index
    %c0_1 = arith.constant 0 : index
    %0 = vector.load %arg1[%c0, %c0_0, %c0_1] : memref<1x42x128xbf16, #tpu.memory_space<vmem>>, vector<1x18x128xbf16>
    %1 = vector.shape_cast %0 : vector<1x18x128xbf16> to vector<18x128xbf16>
    %c0_2 = arith.constant 0 : index
    %c0_3 = arith.constant 0 : index
    %c0_4 = arith.constant 0 : index
    %2 = vector.load %arg2[%c0_2, %c0_3, %c0_4] : memref<16x128x128xbf16, #tpu.memory_space<vmem>>, vector<1x128x128xbf16>
    %3 = vector.shape_cast %2 : vector<1x128x128xbf16> to vector<128x128xbf16>
    %cst = arith.constant dense<0.000000e+00> : vector<18x128xf32>
    %4 = tpu.matmul %1, %3, %cst {dimension_numbers = #tpu.dot_dimension_numbers<[1], [0], [0], [1], [0, 0, 1, 1], [], []>} : vector<18x128xbf16>, vector<128x128xbf16>, vector<18x128xf32> -> vector<18x128xf32>
    %c0_5 = arith.constant 0 : index
    %c1 = arith.constant 1 : index
    %c0_6 = arith.constant 0 : index
    %5 = vector.load %arg1[%c0_5, %c1, %c0_6] : memref<1x42x128xbf16, #tpu.memory_space<vmem>>, vector<1x18x128xbf16>
    %6 = vector.shape_cast %5 : vector<1x18x128xbf16> to vector<18x128xbf16>
    %c1_7 = arith.constant 1 : index
    %c0_8 = arith.constant 0 : index
    %c0_9 = arith.constant 0 : index
    %7 = vector.load %arg2[%c1_7, %c0_8, %c0_9] : memref<16x128x128xbf16, #tpu.memory_space<vmem>>, vector<1x128x128xbf16>
    %8 = vector.shape_cast %7 : vector<1x128x128xbf16> to vector<128x128xbf16>
    %cst_10 = arith.constant dense<0.000000e+00> : vector<18x128xf32>
    %9 = tpu.matmul %6, %8, %cst_10 {dimension_numbers = #tpu.dot_dimension_numbers<[1], [0], [0], [1], [0, 0, 1, 1], [], []>} : vector<18x128xbf16>, vector<128x128xbf16>, vector<18x128xf32> -> vector<18x128xf32>
    %10 = arith.addf %4, %9 : vector<18x128xf32>
    %c0_11 = arith.constant 0 : index
    %c2 = arith.constant 2 : index
    %c0_12 = arith.constant 0 : index
    %11 = vector.load %arg1[%c0_11, %c2, %c0_12] : memref<1x42x128xbf16, #tpu.memory_space<vmem>>, vector<1x18x128xbf16>
    %12 = vector.shape_cast %11 : vector<1x18x128xbf16> to vector<18x128xbf16>
    %c2_13 = arith.constant 2 : index
    %c0_14 = arith.constant 0 : index
    %c0_15 = arith.constant 0 : index
    %13 = vector.load %arg2[%c2_13, %c0_14, %c0_15] : memref<16x128x128xbf16, #tpu.memory_space<vmem>>, vector<1x128x128xbf16>
    %14 = vector.shape_cast %13 : vector<1x128x128xbf16> to vector<128x128xbf16>
    %cst_16 = arith.constant dense<0.000000e+00> : vector<18x128xf32>
    %15 = tpu.matmul %12, %14, %cst_16 {dimension_numbers = #tpu.dot_dimension_numbers<[1], [0], [0], [1], [0, 0, 1, 1], [], []>} : vector<18x128xbf16>, vector<128x128xbf16>, vector<18x128xf32> -> vector<18x128xf32>
    %16 = arith.addf %10, %15 : vector<18x128xf32>
    %c0_17 = arith.constant 0 : index
    %c3 = arith.constant 3 : index
    %c0_18 = arith.constant 0 : index
    %17 = vector.load %arg1[%c0_17, %c3, %c0_18] : memref<1x42x128xbf16, #tpu.memory_space<vmem>>, vector<1x18x128xbf16>
    %18 = vector.shape_cast %17 : vector<1x18x128xbf16> to vector<18x128xbf16>
    %c3_19 = arith.constant 3 : index
    %c0_20 = arith.constant 0 : index
    %c0_21 = arith.constant 0 : index
    %19 = vector.load %arg2[%c3_19, %c0_20, %c0_21] : memref<16x128x128xbf16, #tpu.memory_space<vmem>>, vector<1x128x128xbf16>
    %20 = vector.shape_cast %19 : vector<1x128x128xbf16> to vector<128x128xbf16>
    %cst_22 = arith.constant dense<0.000000e+00> : vector<18x128xf32>
    %21 = tpu.matmul %18, %20, %cst_22 {dimension_numbers = #tpu.dot_dimension_numbers<[1], [0], [0], [1], [0, 0, 1, 1], [], []>} : vector<18x128xbf16>, vector<128x128xbf16>, vector<18x128xf32> -> vector<18x128xf32>
    %22 = arith.addf %16, %21 : vector<18x128xf32>
    %c0_23 = arith.constant 0 : index
    %c6 = arith.constant 6 : index
    %c0_24 = arith.constant 0 : index
    %23 = vector.load %arg1[%c0_23, %c6, %c0_24] : memref<1x42x128xbf16, #tpu.memory_space<vmem>>, vector<1x18x128xbf16>
    %24 = vector.shape_cast %23 : vector<1x18x128xbf16> to vector<18x128xbf16>
    %c4 = arith.constant 4 : index
    %c0_25 = arith.constant 0 : index
    %c0_26 = arith.constant 0 : index
    %25 = vector.load %arg2[%c4, %c0_25, %c0_26] : memref<16x128x128xbf16, #tpu.memory_space<vmem>>, vector<1x128x128xbf16>
    %26 = vector.shape_cast %25 : vector<1x128x128xbf16> to vector<128x128xbf16>
    %cst_27 = arith.constant dense<0.000000e+00> : vector<18x128xf32>
    %27 = tpu.matmul %24, %26, %cst_27 {dimension_numbers = #tpu.dot_dimension_numbers<[1], [0], [0], [1], [0, 0, 1, 1], [], []>} : vector<18x128xbf16>, vector<128x128xbf16>, vector<18x128xf32> -> vector<18x128xf32>
    %28 = arith.addf %22, %27 : vector<18x128xf32>
    %c0_28 = arith.constant 0 : index
    %c7 = arith.constant 7 : index
    %c0_29 = arith.constant 0 : index
    %29 = vector.load %arg1[%c0_28, %c7, %c0_29] : memref<1x42x128xbf16, #tpu.memory_space<vmem>>, vector<1x18x128xbf16>
    %30 = vector.shape_cast %29 : vector<1x18x128xbf16> to vector<18x128xbf16>
    %c5 = arith.constant 5 : index
    %c0_30 = arith.constant 0 : index
    %c0_31 = arith.constant 0 : index
    %31 = vector.load %arg2[%c5, %c0_30, %c0_31] : memref<16x128x128xbf16, #tpu.memory_space<vmem>>, vector<1x128x128xbf16>
    %32 = vector.shape_cast %31 : vector<1x128x128xbf16> to vector<128x128xbf16>
    %cst_32 = arith.constant dense<0.000000e+00> : vector<18x128xf32>
    %33 = tpu.matmul %30, %32, %cst_32 {dimension_numbers = #tpu.dot_dimension_numbers<[1], [0], [0], [1], [0, 0, 1, 1], [], []>} : vector<18x128xbf16>, vector<128x128xbf16>, vector<18x128xf32> -> vector<18x128xf32>
    %34 = arith.addf %28, %33 : vector<18x128xf32>
    %c0_33 = arith.constant 0 : index
    %c8 = arith.constant 8 : index
    %c0_34 = arith.constant 0 : index
    %35 = vector.load %arg1[%c0_33, %c8, %c0_34] : memref<1x42x128xbf16, #tpu.memory_space<vmem>>, vector<1x18x128xbf16>
    %36 = vector.shape_cast %35 : vector<1x18x128xbf16> to vector<18x128xbf16>
    %c6_35 = arith.constant 6 : index
    %c0_36 = arith.constant 0 : index
    %c0_37 = arith.constant 0 : index
    %37 = vector.load %arg2[%c6_35, %c0_36, %c0_37] : memref<16x128x128xbf16, #tpu.memory_space<vmem>>, vector<1x128x128xbf16>
    %38 = vector.shape_cast %37 : vector<1x128x128xbf16> to vector<128x128xbf16>
    %cst_38 = arith.constant dense<0.000000e+00> : vector<18x128xf32>
    %39 = tpu.matmul %36, %38, %cst_38 {dimension_numbers = #tpu.dot_dimension_numbers<[1], [0], [0], [1], [0, 0, 1, 1], [], []>} : vector<18x128xbf16>, vector<128x128xbf16>, vector<18x128xf32> -> vector<18x128xf32>
    %40 = arith.addf %34, %39 : vector<18x128xf32>
    %c0_39 = arith.constant 0 : index
    %c9 = arith.constant 9 : index
    %c0_40 = arith.constant 0 : index
    %41 = vector.load %arg1[%c0_39, %c9, %c0_40] : memref<1x42x128xbf16, #tpu.memory_space<vmem>>, vector<1x18x128xbf16>
    %42 = vector.shape_cast %41 : vector<1x18x128xbf16> to vector<18x128xbf16>
    %c7_41 = arith.constant 7 : index
    %c0_42 = arith.constant 0 : index
    %c0_43 = arith.constant 0 : index
    %43 = vector.load %arg2[%c7_41, %c0_42, %c0_43] : memref<16x128x128xbf16, #tpu.memory_space<vmem>>, vector<1x128x128xbf16>
    %44 = vector.shape_cast %43 : vector<1x128x128xbf16> to vector<128x128xbf16>
    %cst_44 = arith.constant dense<0.000000e+00> : vector<18x128xf32>
    %45 = tpu.matmul %42, %44, %cst_44 {dimension_numbers = #tpu.dot_dimension_numbers<[1], [0], [0], [1], [0, 0, 1, 1], [], []>} : vector<18x128xbf16>, vector<128x128xbf16>, vector<18x128xf32> -> vector<18x128xf32>
    %46 = arith.addf %40, %45 : vector<18x128xf32>
    %c0_45 = arith.constant 0 : index
    %c12 = arith.constant 12 : index
    %c0_46 = arith.constant 0 : index
    %47 = vector.load %arg1[%c0_45, %c12, %c0_46] : memref<1x42x128xbf16, #tpu.memory_space<vmem>>, vector<1x18x128xbf16>
    %48 = vector.shape_cast %47 : vector<1x18x128xbf16> to vector<18x128xbf16>
    %c8_47 = arith.constant 8 : index
    %c0_48 = arith.constant 0 : index
    %c0_49 = arith.constant 0 : index
    %49 = vector.load %arg2[%c8_47, %c0_48, %c0_49] : memref<16x128x128xbf16, #tpu.memory_space<vmem>>, vector<1x128x128xbf16>
    %50 = vector.shape_cast %49 : vector<1x128x128xbf16> to vector<128x128xbf16>
    %cst_50 = arith.constant dense<0.000000e+00> : vector<18x128xf32>
    %51 = tpu.matmul %48, %50, %cst_50 {dimension_numbers = #tpu.dot_dimension_numbers<[1], [0], [0], [1], [0, 0, 1, 1], [], []>} : vector<18x128xbf16>, vector<128x128xbf16>, vector<18x128xf32> -> vector<18x128xf32>
    %52 = arith.addf %46, %51 : vector<18x128xf32>
    %c0_51 = arith.constant 0 : index
    %c13 = arith.constant 13 : index
    %c0_52 = arith.constant 0 : index
    %53 = vector.load %arg1[%c0_51, %c13, %c0_52] : memref<1x42x128xbf16, #tpu.memory_space<vmem>>, vector<1x18x128xbf16>
    %54 = vector.shape_cast %53 : vector<1x18x128xbf16> to vector<18x128xbf16>
    %c9_53 = arith.constant 9 : index
    %c0_54 = arith.constant 0 : index
    %c0_55 = arith.constant 0 : index
    %55 = vector.load %arg2[%c9_53, %c0_54, %c0_55] : memref<16x128x128xbf16, #tpu.memory_space<vmem>>, vector<1x128x128xbf16>
    %56 = vector.shape_cast %55 : vector<1x128x128xbf16> to vector<128x128xbf16>
    %cst_56 = arith.constant dense<0.000000e+00> : vector<18x128xf32>
    %57 = tpu.matmul %54, %56, %cst_56 {dimension_numbers = #tpu.dot_dimension_numbers<[1], [0], [0], [1], [0, 0, 1, 1], [], []>} : vector<18x128xbf16>, vector<128x128xbf16>, vector<18x128xf32> -> vector<18x128xf32>
    %58 = arith.addf %52, %57 : vector<18x128xf32>
    %c0_57 = arith.constant 0 : index
    %c14 = arith.constant 14 : index
    %c0_58 = arith.constant 0 : index
    %59 = vector.load %arg1[%c0_57, %c14, %c0_58] : memref<1x42x128xbf16, #tpu.memory_space<vmem>>, vector<1x18x128xbf16>
    %60 = vector.shape_cast %59 : vector<1x18x128xbf16> to vector<18x128xbf16>
    %c10 = arith.constant 10 : index
    %c0_59 = arith.constant 0 : index
    %c0_60 = arith.constant 0 : index
    %61 = vector.load %arg2[%c10, %c0_59, %c0_60] : memref<16x128x128xbf16, #tpu.memory_space<vmem>>, vector<1x128x128xbf16>
    %62 = vector.shape_cast %61 : vector<1x128x128xbf16> to vector<128x128xbf16>
    %cst_61 = arith.constant dense<0.000000e+00> : vector<18x128xf32>
    %63 = tpu.matmul %60, %62, %cst_61 {dimension_numbers = #tpu.dot_dimension_numbers<[1], [0], [0], [1], [0, 0, 1, 1], [], []>} : vector<18x128xbf16>, vector<128x128xbf16>, vector<18x128xf32> -> vector<18x128xf32>
    %64 = arith.addf %58, %63 : vector<18x128xf32>
    %c0_62 = arith.constant 0 : index
    %c15 = arith.constant 15 : index
    %c0_63 = arith.constant 0 : index
    %65 = vector.load %arg1[%c0_62, %c15, %c0_63] : memref<1x42x128xbf16, #tpu.memory_space<vmem>>, vector<1x18x128xbf16>
    %66 = vector.shape_cast %65 : vector<1x18x128xbf16> to vector<18x128xbf16>
    %c11 = arith.constant 11 : index
    %c0_64 = arith.constant 0 : index
    %c0_65 = arith.constant 0 : index
    %67 = vector.load %arg2[%c11, %c0_64, %c0_65] : memref<16x128x128xbf16, #tpu.memory_space<vmem>>, vector<1x128x128xbf16>
    %68 = vector.shape_cast %67 : vector<1x128x128xbf16> to vector<128x128xbf16>
    %cst_66 = arith.constant dense<0.000000e+00> : vector<18x128xf32>
    %69 = tpu.matmul %66, %68, %cst_66 {dimension_numbers = #tpu.dot_dimension_numbers<[1], [0], [0], [1], [0, 0, 1, 1], [], []>} : vector<18x128xbf16>, vector<128x128xbf16>, vector<18x128xf32> -> vector<18x128xf32>
    %70 = arith.addf %64, %69 : vector<18x128xf32>
    %c0_67 = arith.constant 0 : index
    %c18 = arith.constant 18 : index
    %c0_68 = arith.constant 0 : index
    %71 = vector.load %arg1[%c0_67, %c18, %c0_68] : memref<1x42x128xbf16, #tpu.memory_space<vmem>>, vector<1x18x128xbf16>
    %72 = vector.shape_cast %71 : vector<1x18x128xbf16> to vector<18x128xbf16>
    %c12_69 = arith.constant 12 : index
    %c0_70 = arith.constant 0 : index
    %c0_71 = arith.constant 0 : index
    %73 = vector.load %arg2[%c12_69, %c0_70, %c0_71] : memref<16x128x128xbf16, #tpu.memory_space<vmem>>, vector<1x128x128xbf16>
    %74 = vector.shape_cast %73 : vector<1x128x128xbf16> to vector<128x128xbf16>
    %cst_72 = arith.constant dense<0.000000e+00> : vector<18x128xf32>
    %75 = tpu.matmul %72, %74, %cst_72 {dimension_numbers = #tpu.dot_dimension_numbers<[1], [0], [0], [1], [0, 0, 1, 1], [], []>} : vector<18x128xbf16>, vector<128x128xbf16>, vector<18x128xf32> -> vector<18x128xf32>
    %76 = arith.addf %70, %75 : vector<18x128xf32>
    %c0_73 = arith.constant 0 : index
    %c19 = arith.constant 19 : index
    %c0_74 = arith.constant 0 : index
    %77 = vector.load %arg1[%c0_73, %c19, %c0_74] : memref<1x42x128xbf16, #tpu.memory_space<vmem>>, vector<1x18x128xbf16>
    %78 = vector.shape_cast %77 : vector<1x18x128xbf16> to vector<18x128xbf16>
    %c13_75 = arith.constant 13 : index
    %c0_76 = arith.constant 0 : index
    %c0_77 = arith.constant 0 : index
    %79 = vector.load %arg2[%c13_75, %c0_76, %c0_77] : memref<16x128x128xbf16, #tpu.memory_space<vmem>>, vector<1x128x128xbf16>
    %80 = vector.shape_cast %79 : vector<1x128x128xbf16> to vector<128x128xbf16>
    %cst_78 = arith.constant dense<0.000000e+00> : vector<18x128xf32>
    %81 = tpu.matmul %78, %80, %cst_78 {dimension_numbers = #tpu.dot_dimension_numbers<[1], [0], [0], [1], [0, 0, 1, 1], [], []>} : vector<18x128xbf16>, vector<128x128xbf16>, vector<18x128xf32> -> vector<18x128xf32>
    %82 = arith.addf %76, %81 : vector<18x128xf32>
    %c0_79 = arith.constant 0 : index
    %c20 = arith.constant 20 : index
    %c0_80 = arith.constant 0 : index
    %83 = vector.load %arg1[%c0_79, %c20, %c0_80] : memref<1x42x128xbf16, #tpu.memory_space<vmem>>, vector<1x18x128xbf16>
    %84 = vector.shape_cast %83 : vector<1x18x128xbf16> to vector<18x128xbf16>
    %c14_81 = arith.constant 14 : index
    %c0_82 = arith.constant 0 : index
    %c0_83 = arith.constant 0 : index
    %85 = vector.load %arg2[%c14_81, %c0_82, %c0_83] : memref<16x128x128xbf16, #tpu.memory_space<vmem>>, vector<1x128x128xbf16>
    %86 = vector.shape_cast %85 : vector<1x128x128xbf16> to vector<128x128xbf16>
    %cst_84 = arith.constant dense<0.000000e+00> : vector<18x128xf32>
    %87 = tpu.matmul %84, %86, %cst_84 {dimension_numbers = #tpu.dot_dimension_numbers<[1], [0], [0], [1], [0, 0, 1, 1], [], []>} : vector<18x128xbf16>, vector<128x128xbf16>, vector<18x128xf32> -> vector<18x128xf32>
    %88 = arith.addf %82, %87 : vector<18x128xf32>
    %c0_85 = arith.constant 0 : index
    %c21 = arith.constant 21 : index
    %c0_86 = arith.constant 0 : index
    %89 = vector.load %arg1[%c0_85, %c21, %c0_86] : memref<1x42x128xbf16, #tpu.memory_space<vmem>>, vector<1x18x128xbf16>
    %90 = vector.shape_cast %89 : vector<1x18x128xbf16> to vector<18x128xbf16>
    %c15_87 = arith.constant 15 : index
    %c0_88 = arith.constant 0 : index
    %c0_89 = arith.constant 0 : index
    %91 = vector.load %arg2[%c15_87, %c0_88, %c0_89] : memref<16x128x128xbf16, #tpu.memory_space<vmem>>, vector<1x128x128xbf16>
    %92 = vector.shape_cast %91 : vector<1x128x128xbf16> to vector<128x128xbf16>
    %cst_90 = arith.constant dense<0.000000e+00> : vector<18x128xf32>
    %93 = tpu.matmul %90, %92, %cst_90 {dimension_numbers = #tpu.dot_dimension_numbers<[1], [0], [0], [1], [0, 0, 1, 1], [], []>} : vector<18x128xbf16>, vector<128x128xbf16>, vector<18x128xf32> -> vector<18x128xf32>
    %94 = arith.addf %88, %93 : vector<18x128xf32>
    %95 = arith.truncf %94 : vector<18x128xf32> to vector<18x128xbf16>
    %c0_91 = arith.constant 0 : index
    %c0_92 = arith.constant 0 : index
    %c0_93 = arith.constant 0 : index
    %96 = vector.load %arg3[%c0_91, %c0_92, %c0_93] : memref<1x18x128xbf16, #tpu.memory_space<vmem>>, vector<1x18x128xbf16>
    %97 = vector.shape_cast %96 : vector<1x18x128xbf16> to vector<18x128xbf16>
    %98 = vector.shape_cast %95 : vector<18x128xbf16> to vector<1x18x128xbf16>
    tpu.vector_store %arg3[%c0_91, %c0_92, %c0_93], %98 {strides = array<i32>} : memref<1x18x128xbf16, #tpu.memory_space<vmem>>, vector<1x18x128xbf16>,
    return
  }
  func.func @transform_0(%arg0: i32) -> (i32, i32, i32) {
    %c0_i32 = arith.constant 0 : i32
    %c0_i32_0 = arith.constant 0 : i32
    %c0_i32_1 = arith.constant 0 : i32
    return %arg0, %c0_i32, %c0_i32_0 : i32, i32, i32
  }
  func.func @transform_1(%arg0: i32) -> (i32, i32, i32) {
    %c0_i32 = arith.constant 0 : i32
    %c0_i32_0 = arith.constant 0 : i32
    %c0_i32_1 = arith.constant 0 : i32
    %c0_i32_2 = arith.constant 0 : i32
    return %c0_i32, %c0_i32_0, %c0_i32_1 : i32, i32, i32
  }
  func.func @transform_2(%arg0: i32) -> (i32, i32, i32) {
    %c0_i32 = arith.constant 0 : i32
    %c0_i32_0 = arith.constant 0 : i32
    %c0_i32_1 = arith.constant 0 : i32
    return %arg0, %c0_i32, %c0_i32_0 : i32, i32, i32
  }
}

module attributes {stable_mosaic.version = 11 : i64} {
  func.func @_instnorm_lrelu_kernel(%arg0: i32, %arg1: i32, %arg2: memref<1x9x128xbf16, #tpu.memory_space<vmem>>, %arg3: memref<1x9x128xbf16, #tpu.memory_space<vmem>>) attributes {dimension_semantics = [#tpu.dimension_semantics<parallel>, #tpu.dimension_semantics<parallel>], iteration_bounds = array<i64: 2, 1>, scalar_prefetch = 0 : i64, scratch_operands = 0 : i64, tpu.core_type = #tpu.core_type<tc>, window_params = [{transform_indices = @transform_0, window_bounds = array<i64: 1, 9, 128>}, {transform_indices = @transform_1, window_bounds = array<i64: 1, 9, 128>}]} {
    %c0 = arith.constant 0 : index
    %c0_0 = arith.constant 0 : index
    %c0_1 = arith.constant 0 : index
    %0 = vector.load %arg2[%c0, %c0_0, %c0_1] : memref<1x9x128xbf16, #tpu.memory_space<vmem>>, vector<1x9x128xbf16>
    %1 = vector.shape_cast %0 : vector<1x9x128xbf16> to vector<9x128xbf16>
    %2 = arith.extf %1 : vector<9x128xbf16> to vector<9x128xf32>
    %cst = arith.constant dense<0.000000e+00> : vector<128xf32>
    %3 = vector.multi_reduction <add>, %2, %cst [0] : vector<9x128xf32> to vector<128xf32>
    %4 = vector.shape_cast %3 : vector<128xf32> to vector<1x128xf32>
    %cst_2 = arith.constant 9.000000e+00 : f32
    %5 = vector.broadcast %cst_2 : f32 to vector<1x128xf32>
    %6 = arith.divf %4, %5 : vector<1x128xf32>
    %7 = vector.broadcast %6 : vector<1x128xf32> to vector<9x128xf32>
    %8 = arith.subf %2, %7 : vector<9x128xf32>
    %9 = arith.mulf %8, %8 : vector<9x128xf32>
    %cst_3 = arith.constant dense<0.000000e+00> : vector<128xf32>
    %10 = vector.multi_reduction <add>, %9, %cst_3 [0] : vector<9x128xf32> to vector<128xf32>
    %11 = vector.shape_cast %10 : vector<128xf32> to vector<1x128xf32>
    %cst_4 = arith.constant 9.000000e+00 : f32
    %12 = vector.broadcast %cst_4 : f32 to vector<1x128xf32>
    %13 = arith.divf %11, %12 : vector<1x128xf32>
    %14 = vector.broadcast %6 : vector<1x128xf32> to vector<9x128xf32>
    %15 = arith.subf %2, %14 : vector<9x128xf32>
    %cst_5 = arith.constant 9.99999974E-6 : f32
    %16 = vector.broadcast %cst_5 : f32 to vector<1x128xf32>
    %17 = arith.addf %13, %16 : vector<1x128xf32>
    %18 = math.rsqrt %17 : vector<1x128xf32>
    %19 = vector.broadcast %18 : vector<1x128xf32> to vector<9x128xf32>
    %20 = arith.mulf %15, %19 : vector<9x128xf32>
    %cst_6 = arith.constant 0.000000e+00 : f32
    %21 = vector.broadcast %cst_6 : f32 to vector<9x128xf32>
    %22 = arith.cmpf oge, %20, %21 : vector<9x128xf32>
    %cst_7 = arith.constant 2.000000e-01 : f32
    %23 = vector.broadcast %cst_7 : f32 to vector<9x128xf32>
    %24 = arith.mulf %23, %20 : vector<9x128xf32>
    %25 = arith.select %22, %20, %24 : vector<9x128xi1>, vector<9x128xf32>
    %26 = arith.truncf %25 : vector<9x128xf32> to vector<9x128xbf16>
    %c0_8 = arith.constant 0 : index
    %c0_9 = arith.constant 0 : index
    %c0_10 = arith.constant 0 : index
    %27 = vector.load %arg3[%c0_8, %c0_9, %c0_10] : memref<1x9x128xbf16, #tpu.memory_space<vmem>>, vector<1x9x128xbf16>
    %28 = vector.shape_cast %27 : vector<1x9x128xbf16> to vector<9x128xbf16>
    %29 = vector.shape_cast %26 : vector<9x128xbf16> to vector<1x9x128xbf16>
    tpu.vector_store %arg3[%c0_8, %c0_9, %c0_10], %29 {strides = array<i32>} : memref<1x9x128xbf16, #tpu.memory_space<vmem>>, vector<1x9x128xbf16>,
    return
  }
  func.func @transform_0(%arg0: i32, %arg1: i32) -> (i32, i32, i32) {
    %c0_i32 = arith.constant 0 : i32
    %c0_i32_0 = arith.constant 0 : i32
    return %arg0, %c0_i32, %arg1 : i32, i32, i32
  }
  func.func @transform_1(%arg0: i32, %arg1: i32) -> (i32, i32, i32) {
    %c0_i32 = arith.constant 0 : i32
    %c0_i32_0 = arith.constant 0 : i32
    return %arg0, %c0_i32, %arg1 : i32, i32, i32
  }
}

module attributes {stable_mosaic.version = 11 : i64} {
  func.func @_conv_taps_kernel(%arg0: i32, %arg1: memref<1x30x128xbf16, #tpu.memory_space<vmem>>, %arg2: memref<16x128x128xbf16, #tpu.memory_space<vmem>>, %arg3: memref<1x128xf32, #tpu.memory_space<vmem>>, %arg4: memref<1x10x128xf32, #tpu.memory_space<vmem>>) attributes {dimension_semantics = [#tpu.dimension_semantics<parallel>], iteration_bounds = array<i64: 2>, scalar_prefetch = 0 : i64, scratch_operands = 0 : i64, tpu.core_type = #tpu.core_type<tc>, window_params = [{transform_indices = @transform_0, window_bounds = array<i64: 1, 30, 128>}, {pipeline_mode = #tpu.pipeline_mode<synchronous>, transform_indices = @transform_1, window_bounds = array<i64: 16, 128, 128>}, {pipeline_mode = #tpu.pipeline_mode<synchronous>, transform_indices = @transform_2, window_bounds = array<i64: 1, 128>}, {transform_indices = @transform_3, window_bounds = array<i64: 1, 10, 128>}]} {
    %c0 = arith.constant 0 : index
    %c0_0 = arith.constant 0 : index
    %c0_1 = arith.constant 0 : index
    %0 = vector.load %arg1[%c0, %c0_0, %c0_1] : memref<1x30x128xbf16, #tpu.memory_space<vmem>>, vector<1x10x128xbf16>
    %1 = vector.shape_cast %0 : vector<1x10x128xbf16> to vector<10x128xbf16>
    %c0_2 = arith.constant 0 : index
    %c0_3 = arith.constant 0 : index
    %c0_4 = arith.constant 0 : index
    %2 = vector.load %arg2[%c0_2, %c0_3, %c0_4] : memref<16x128x128xbf16, #tpu.memory_space<vmem>>, vector<1x128x128xbf16>
    %3 = vector.shape_cast %2 : vector<1x128x128xbf16> to vector<128x128xbf16>
    %cst = arith.constant dense<0.000000e+00> : vector<10x128xf32>
    %4 = tpu.matmul %1, %3, %cst {dimension_numbers = #tpu.dot_dimension_numbers<[1], [0], [0], [1], [0, 0, 1, 1], [], []>} : vector<10x128xbf16>, vector<128x128xbf16>, vector<10x128xf32> -> vector<10x128xf32>
    %c0_5 = arith.constant 0 : index
    %c1 = arith.constant 1 : index
    %c0_6 = arith.constant 0 : index
    %5 = vector.load %arg1[%c0_5, %c1, %c0_6] : memref<1x30x128xbf16, #tpu.memory_space<vmem>>, vector<1x10x128xbf16>
    %6 = vector.shape_cast %5 : vector<1x10x128xbf16> to vector<10x128xbf16>
    %c1_7 = arith.constant 1 : index
    %c0_8 = arith.constant 0 : index
    %c0_9 = arith.constant 0 : index
    %7 = vector.load %arg2[%c1_7, %c0_8, %c0_9] : memref<16x128x128xbf16, #tpu.memory_space<vmem>>, vector<1x128x128xbf16>
    %8 = vector.shape_cast %7 : vector<1x128x128xbf16> to vector<128x128xbf16>
    %cst_10 = arith.constant dense<0.000000e+00> : vector<10x128xf32>
    %9 = tpu.matmul %6, %8, %cst_10 {dimension_numbers = #tpu.dot_dimension_numbers<[1], [0], [0], [1], [0, 0, 1, 1], [], []>} : vector<10x128xbf16>, vector<128x128xbf16>, vector<10x128xf32> -> vector<10x128xf32>
    %10 = arith.addf %4, %9 : vector<10x128xf32>
    %c0_11 = arith.constant 0 : index
    %c2 = arith.constant 2 : index
    %c0_12 = arith.constant 0 : index
    %11 = vector.load %arg1[%c0_11, %c2, %c0_12] : memref<1x30x128xbf16, #tpu.memory_space<vmem>>, vector<1x10x128xbf16>
    %12 = vector.shape_cast %11 : vector<1x10x128xbf16> to vector<10x128xbf16>
    %c2_13 = arith.constant 2 : index
    %c0_14 = arith.constant 0 : index
    %c0_15 = arith.constant 0 : index
    %13 = vector.load %arg2[%c2_13, %c0_14, %c0_15] : memref<16x128x128xbf16, #tpu.memory_space<vmem>>, vector<1x128x128xbf16>
    %14 = vector.shape_cast %13 : vector<1x128x128xbf16> to vector<128x128xbf16>
    %cst_16 = arith.constant dense<0.000000e+00> : vector<10x128xf32>
    %15 = tpu.matmul %12, %14, %cst_16 {dimension_numbers = #tpu.dot_dimension_numbers<[1], [0], [0], [1], [0, 0, 1, 1], [], []>} : vector<10x128xbf16>, vector<128x128xbf16>, vector<10x128xf32> -> vector<10x128xf32>
    %16 = arith.addf %10, %15 : vector<10x128xf32>
    %c0_17 = arith.constant 0 : index
    %c3 = arith.constant 3 : index
    %c0_18 = arith.constant 0 : index
    %17 = vector.load %arg1[%c0_17, %c3, %c0_18] : memref<1x30x128xbf16, #tpu.memory_space<vmem>>, vector<1x10x128xbf16>
    %18 = vector.shape_cast %17 : vector<1x10x128xbf16> to vector<10x128xbf16>
    %c3_19 = arith.constant 3 : index
    %c0_20 = arith.constant 0 : index
    %c0_21 = arith.constant 0 : index
    %19 = vector.load %arg2[%c3_19, %c0_20, %c0_21] : memref<16x128x128xbf16, #tpu.memory_space<vmem>>, vector<1x128x128xbf16>
    %20 = vector.shape_cast %19 : vector<1x128x128xbf16> to vector<128x128xbf16>
    %cst_22 = arith.constant dense<0.000000e+00> : vector<10x128xf32>
    %21 = tpu.matmul %18, %20, %cst_22 {dimension_numbers = #tpu.dot_dimension_numbers<[1], [0], [0], [1], [0, 0, 1, 1], [], []>} : vector<10x128xbf16>, vector<128x128xbf16>, vector<10x128xf32> -> vector<10x128xf32>
    %22 = arith.addf %16, %21 : vector<10x128xf32>
    %c0_23 = arith.constant 0 : index
    %c5 = arith.constant 5 : index
    %c0_24 = arith.constant 0 : index
    %23 = vector.load %arg1[%c0_23, %c5, %c0_24] : memref<1x30x128xbf16, #tpu.memory_space<vmem>>, vector<1x10x128xbf16>
    %24 = vector.shape_cast %23 : vector<1x10x128xbf16> to vector<10x128xbf16>
    %c4 = arith.constant 4 : index
    %c0_25 = arith.constant 0 : index
    %c0_26 = arith.constant 0 : index
    %25 = vector.load %arg2[%c4, %c0_25, %c0_26] : memref<16x128x128xbf16, #tpu.memory_space<vmem>>, vector<1x128x128xbf16>
    %26 = vector.shape_cast %25 : vector<1x128x128xbf16> to vector<128x128xbf16>
    %cst_27 = arith.constant dense<0.000000e+00> : vector<10x128xf32>
    %27 = tpu.matmul %24, %26, %cst_27 {dimension_numbers = #tpu.dot_dimension_numbers<[1], [0], [0], [1], [0, 0, 1, 1], [], []>} : vector<10x128xbf16>, vector<128x128xbf16>, vector<10x128xf32> -> vector<10x128xf32>
    %28 = arith.addf %22, %27 : vector<10x128xf32>
    %c0_28 = arith.constant 0 : index
    %c6 = arith.constant 6 : index
    %c0_29 = arith.constant 0 : index
    %29 = vector.load %arg1[%c0_28, %c6, %c0_29] : memref<1x30x128xbf16, #tpu.memory_space<vmem>>, vector<1x10x128xbf16>
    %30 = vector.shape_cast %29 : vector<1x10x128xbf16> to vector<10x128xbf16>
    %c5_30 = arith.constant 5 : index
    %c0_31 = arith.constant 0 : index
    %c0_32 = arith.constant 0 : index
    %31 = vector.load %arg2[%c5_30, %c0_31, %c0_32] : memref<16x128x128xbf16, #tpu.memory_space<vmem>>, vector<1x128x128xbf16>
    %32 = vector.shape_cast %31 : vector<1x128x128xbf16> to vector<128x128xbf16>
    %cst_33 = arith.constant dense<0.000000e+00> : vector<10x128xf32>
    %33 = tpu.matmul %30, %32, %cst_33 {dimension_numbers = #tpu.dot_dimension_numbers<[1], [0], [0], [1], [0, 0, 1, 1], [], []>} : vector<10x128xbf16>, vector<128x128xbf16>, vector<10x128xf32> -> vector<10x128xf32>
    %34 = arith.addf %28, %33 : vector<10x128xf32>
    %c0_34 = arith.constant 0 : index
    %c7 = arith.constant 7 : index
    %c0_35 = arith.constant 0 : index
    %35 = vector.load %arg1[%c0_34, %c7, %c0_35] : memref<1x30x128xbf16, #tpu.memory_space<vmem>>, vector<1x10x128xbf16>
    %36 = vector.shape_cast %35 : vector<1x10x128xbf16> to vector<10x128xbf16>
    %c6_36 = arith.constant 6 : index
    %c0_37 = arith.constant 0 : index
    %c0_38 = arith.constant 0 : index
    %37 = vector.load %arg2[%c6_36, %c0_37, %c0_38] : memref<16x128x128xbf16, #tpu.memory_space<vmem>>, vector<1x128x128xbf16>
    %38 = vector.shape_cast %37 : vector<1x128x128xbf16> to vector<128x128xbf16>
    %cst_39 = arith.constant dense<0.000000e+00> : vector<10x128xf32>
    %39 = tpu.matmul %36, %38, %cst_39 {dimension_numbers = #tpu.dot_dimension_numbers<[1], [0], [0], [1], [0, 0, 1, 1], [], []>} : vector<10x128xbf16>, vector<128x128xbf16>, vector<10x128xf32> -> vector<10x128xf32>
    %40 = arith.addf %34, %39 : vector<10x128xf32>
    %c0_40 = arith.constant 0 : index
    %c8 = arith.constant 8 : index
    %c0_41 = arith.constant 0 : index
    %41 = vector.load %arg1[%c0_40, %c8, %c0_41] : memref<1x30x128xbf16, #tpu.memory_space<vmem>>, vector<1x10x128xbf16>
    %42 = vector.shape_cast %41 : vector<1x10x128xbf16> to vector<10x128xbf16>
    %c7_42 = arith.constant 7 : index
    %c0_43 = arith.constant 0 : index
    %c0_44 = arith.constant 0 : index
    %43 = vector.load %arg2[%c7_42, %c0_43, %c0_44] : memref<16x128x128xbf16, #tpu.memory_space<vmem>>, vector<1x128x128xbf16>
    %44 = vector.shape_cast %43 : vector<1x128x128xbf16> to vector<128x128xbf16>
    %cst_45 = arith.constant dense<0.000000e+00> : vector<10x128xf32>
    %45 = tpu.matmul %42, %44, %cst_45 {dimension_numbers = #tpu.dot_dimension_numbers<[1], [0], [0], [1], [0, 0, 1, 1], [], []>} : vector<10x128xbf16>, vector<128x128xbf16>, vector<10x128xf32> -> vector<10x128xf32>
    %46 = arith.addf %40, %45 : vector<10x128xf32>
    %c0_46 = arith.constant 0 : index
    %c10 = arith.constant 10 : index
    %c0_47 = arith.constant 0 : index
    %47 = vector.load %arg1[%c0_46, %c10, %c0_47] : memref<1x30x128xbf16, #tpu.memory_space<vmem>>, vector<1x10x128xbf16>
    %48 = vector.shape_cast %47 : vector<1x10x128xbf16> to vector<10x128xbf16>
    %c8_48 = arith.constant 8 : index
    %c0_49 = arith.constant 0 : index
    %c0_50 = arith.constant 0 : index
    %49 = vector.load %arg2[%c8_48, %c0_49, %c0_50] : memref<16x128x128xbf16, #tpu.memory_space<vmem>>, vector<1x128x128xbf16>
    %50 = vector.shape_cast %49 : vector<1x128x128xbf16> to vector<128x128xbf16>
    %cst_51 = arith.constant dense<0.000000e+00> : vector<10x128xf32>
    %51 = tpu.matmul %48, %50, %cst_51 {dimension_numbers = #tpu.dot_dimension_numbers<[1], [0], [0], [1], [0, 0, 1, 1], [], []>} : vector<10x128xbf16>, vector<128x128xbf16>, vector<10x128xf32> -> vector<10x128xf32>
    %52 = arith.addf %46, %51 : vector<10x128xf32>
    %c0_52 = arith.constant 0 : index
    %c11 = arith.constant 11 : index
    %c0_53 = arith.constant 0 : index
    %53 = vector.load %arg1[%c0_52, %c11, %c0_53] : memref<1x30x128xbf16, #tpu.memory_space<vmem>>, vector<1x10x128xbf16>
    %54 = vector.shape_cast %53 : vector<1x10x128xbf16> to vector<10x128xbf16>
    %c9 = arith.constant 9 : index
    %c0_54 = arith.constant 0 : index
    %c0_55 = arith.constant 0 : index
    %55 = vector.load %arg2[%c9, %c0_54, %c0_55] : memref<16x128x128xbf16, #tpu.memory_space<vmem>>, vector<1x128x128xbf16>
    %56 = vector.shape_cast %55 : vector<1x128x128xbf16> to vector<128x128xbf16>
    %cst_56 = arith.constant dense<0.000000e+00> : vector<10x128xf32>
    %57 = tpu.matmul %54, %56, %cst_56 {dimension_numbers = #tpu.dot_dimension_numbers<[1], [0], [0], [1], [0, 0, 1, 1], [], []>} : vector<10x128xbf16>, vector<128x128xbf16>, vector<10x128xf32> -> vector<10x128xf32>
    %58 = arith.addf %52, %57 : vector<10x128xf32>
    %c0_57 = arith.constant 0 : index
    %c12 = arith.constant 12 : index
    %c0_58 = arith.constant 0 : index
    %59 = vector.load %arg1[%c0_57, %c12, %c0_58] : memref<1x30x128xbf16, #tpu.memory_space<vmem>>, vector<1x10x128xbf16>
    %60 = vector.shape_cast %59 : vector<1x10x128xbf16> to vector<10x128xbf16>
    %c10_59 = arith.constant 10 : index
    %c0_60 = arith.constant 0 : index
    %c0_61 = arith.constant 0 : index
    %61 = vector.load %arg2[%c10_59, %c0_60, %c0_61] : memref<16x128x128xbf16, #tpu.memory_space<vmem>>, vector<1x128x128xbf16>
    %62 = vector.shape_cast %61 : vector<1x128x128xbf16> to vector<128x128xbf16>
    %cst_62 = arith.constant dense<0.000000e+00> : vector<10x128xf32>
    %63 = tpu.matmul %60, %62, %cst_62 {dimension_numbers = #tpu.dot_dimension_numbers<[1], [0], [0], [1], [0, 0, 1, 1], [], []>} : vector<10x128xbf16>, vector<128x128xbf16>, vector<10x128xf32> -> vector<10x128xf32>
    %64 = arith.addf %58, %63 : vector<10x128xf32>
    %c0_63 = arith.constant 0 : index
    %c13 = arith.constant 13 : index
    %c0_64 = arith.constant 0 : index
    %65 = vector.load %arg1[%c0_63, %c13, %c0_64] : memref<1x30x128xbf16, #tpu.memory_space<vmem>>, vector<1x10x128xbf16>
    %66 = vector.shape_cast %65 : vector<1x10x128xbf16> to vector<10x128xbf16>
    %c11_65 = arith.constant 11 : index
    %c0_66 = arith.constant 0 : index
    %c0_67 = arith.constant 0 : index
    %67 = vector.load %arg2[%c11_65, %c0_66, %c0_67] : memref<16x128x128xbf16, #tpu.memory_space<vmem>>, vector<1x128x128xbf16>
    %68 = vector.shape_cast %67 : vector<1x128x128xbf16> to vector<128x128xbf16>
    %cst_68 = arith.constant dense<0.000000e+00> : vector<10x128xf32>
    %69 = tpu.matmul %66, %68, %cst_68 {dimension_numbers = #tpu.dot_dimension_numbers<[1], [0], [0], [1], [0, 0, 1, 1], [], []>} : vector<10x128xbf16>, vector<128x128xbf16>, vector<10x128xf32> -> vector<10x128xf32>
    %70 = arith.addf %64, %69 : vector<10x128xf32>
    %c0_69 = arith.constant 0 : index
    %c15 = arith.constant 15 : index
    %c0_70 = arith.constant 0 : index
    %71 = vector.load %arg1[%c0_69, %c15, %c0_70] : memref<1x30x128xbf16, #tpu.memory_space<vmem>>, vector<1x10x128xbf16>
    %72 = vector.shape_cast %71 : vector<1x10x128xbf16> to vector<10x128xbf16>
    %c12_71 = arith.constant 12 : index
    %c0_72 = arith.constant 0 : index
    %c0_73 = arith.constant 0 : index
    %73 = vector.load %arg2[%c12_71, %c0_72, %c0_73] : memref<16x128x128xbf16, #tpu.memory_space<vmem>>, vector<1x128x128xbf16>
    %74 = vector.shape_cast %73 : vector<1x128x128xbf16> to vector<128x128xbf16>
    %cst_74 = arith.constant dense<0.000000e+00> : vector<10x128xf32>
    %75 = tpu.matmul %72, %74, %cst_74 {dimension_numbers = #tpu.dot_dimension_numbers<[1], [0], [0], [1], [0, 0, 1, 1], [], []>} : vector<10x128xbf16>, vector<128x128xbf16>, vector<10x128xf32> -> vector<10x128xf32>
    %76 = arith.addf %70, %75 : vector<10x128xf32>
    %c0_75 = arith.constant 0 : index
    %c16 = arith.constant 16 : index
    %c0_76 = arith.constant 0 : index
    %77 = vector.load %arg1[%c0_75, %c16, %c0_76] : memref<1x30x128xbf16, #tpu.memory_space<vmem>>, vector<1x10x128xbf16>
    %78 = vector.shape_cast %77 : vector<1x10x128xbf16> to vector<10x128xbf16>
    %c13_77 = arith.constant 13 : index
    %c0_78 = arith.constant 0 : index
    %c0_79 = arith.constant 0 : index
    %79 = vector.load %arg2[%c13_77, %c0_78, %c0_79] : memref<16x128x128xbf16, #tpu.memory_space<vmem>>, vector<1x128x128xbf16>
    %80 = vector.shape_cast %79 : vector<1x128x128xbf16> to vector<128x128xbf16>
    %cst_80 = arith.constant dense<0.000000e+00> : vector<10x128xf32>
    %81 = tpu.matmul %78, %80, %cst_80 {dimension_numbers = #tpu.dot_dimension_numbers<[1], [0], [0], [1], [0, 0, 1, 1], [], []>} : vector<10x128xbf16>, vector<128x128xbf16>, vector<10x128xf32> -> vector<10x128xf32>
    %82 = arith.addf %76, %81 : vector<10x128xf32>
    %c0_81 = arith.constant 0 : index
    %c17 = arith.constant 17 : index
    %c0_82 = arith.constant 0 : index
    %83 = vector.load %arg1[%c0_81, %c17, %c0_82] : memref<1x30x128xbf16, #tpu.memory_space<vmem>>, vector<1x10x128xbf16>
    %84 = vector.shape_cast %83 : vector<1x10x128xbf16> to vector<10x128xbf16>
    %c14 = arith.constant 14 : index
    %c0_83 = arith.constant 0 : index
    %c0_84 = arith.constant 0 : index
    %85 = vector.load %arg2[%c14, %c0_83, %c0_84] : memref<16x128x128xbf16, #tpu.memory_space<vmem>>, vector<1x128x128xbf16>
    %86 = vector.shape_cast %85 : vector<1x128x128xbf16> to vector<128x128xbf16>
    %cst_85 = arith.constant dense<0.000000e+00> : vector<10x128xf32>
    %87 = tpu.matmul %84, %86, %cst_85 {dimension_numbers = #tpu.dot_dimension_numbers<[1], [0], [0], [1], [0, 0, 1, 1], [], []>} : vector<10x128xbf16>, vector<128x128xbf16>, vector<10x128xf32> -> vector<10x128xf32>
    %88 = arith.addf %82, %87 : vector<10x128xf32>
    %c0_86 = arith.constant 0 : index
    %c18 = arith.constant 18 : index
    %c0_87 = arith.constant 0 : index
    %89 = vector.load %arg1[%c0_86, %c18, %c0_87] : memref<1x30x128xbf16, #tpu.memory_space<vmem>>, vector<1x10x128xbf16>
    %90 = vector.shape_cast %89 : vector<1x10x128xbf16> to vector<10x128xbf16>
    %c15_88 = arith.constant 15 : index
    %c0_89 = arith.constant 0 : index
    %c0_90 = arith.constant 0 : index
    %91 = vector.load %arg2[%c15_88, %c0_89, %c0_90] : memref<16x128x128xbf16, #tpu.memory_space<vmem>>, vector<1x128x128xbf16>
    %92 = vector.shape_cast %91 : vector<1x128x128xbf16> to vector<128x128xbf16>
    %cst_91 = arith.constant dense<0.000000e+00> : vector<10x128xf32>
    %93 = tpu.matmul %90, %92, %cst_91 {dimension_numbers = #tpu.dot_dimension_numbers<[1], [0], [0], [1], [0, 0, 1, 1], [], []>} : vector<10x128xbf16>, vector<128x128xbf16>, vector<10x128xf32> -> vector<10x128xf32>
    %94 = arith.addf %88, %93 : vector<10x128xf32>
    %c0_92 = arith.constant 0 : index
    %c0_93 = arith.constant 0 : index
    %95 = vector.load %arg3[%c0_92, %c0_93] : memref<1x128xf32, #tpu.memory_space<vmem>>, vector<1x128xf32>
    %96 = vector.broadcast %95 : vector<1x128xf32> to vector<10x128xf32>
    %97 = arith.addf %94, %96 : vector<10x128xf32>
    %c0_94 = arith.constant 0 : index
    %c0_95 = arith.constant 0 : index
    %c0_96 = arith.constant 0 : index
    %98 = vector.load %arg4[%c0_94, %c0_95, %c0_96] : memref<1x10x128xf32, #tpu.memory_space<vmem>>, vector<1x10x128xf32>
    %99 = vector.shape_cast %98 : vector<1x10x128xf32> to vector<10x128xf32>
    %100 = vector.shape_cast %97 : vector<10x128xf32> to vector<1x10x128xf32>
    tpu.vector_store %arg4[%c0_94, %c0_95, %c0_96], %100 {strides = array<i32>} : memref<1x10x128xf32, #tpu.memory_space<vmem>>, vector<1x10x128xf32>,
    return
  }
  func.func @transform_0(%arg0: i32) -> (i32, i32, i32) {
    %c0_i32 = arith.constant 0 : i32
    %c0_i32_0 = arith.constant 0 : i32
    %c0_i32_1 = arith.constant 0 : i32
    return %arg0, %c0_i32, %c0_i32_0 : i32, i32, i32
  }
  func.func @transform_1(%arg0: i32) -> (i32, i32, i32) {
    %c0_i32 = arith.constant 0 : i32
    %c0_i32_0 = arith.constant 0 : i32
    %c0_i32_1 = arith.constant 0 : i32
    %c0_i32_2 = arith.constant 0 : i32
    return %c0_i32, %c0_i32_0, %c0_i32_1 : i32, i32, i32
  }
  func.func @transform_2(%arg0: i32) -> (i32, i32) {
    %c0_i32 = arith.constant 0 : i32
    %c0_i32_0 = arith.constant 0 : i32
    %c0_i32_1 = arith.constant 0 : i32
    return %c0_i32, %c0_i32_0 : i32, i32
  }
  func.func @transform_3(%arg0: i32) -> (i32, i32, i32) {
    %c0_i32 = arith.constant 0 : i32
    %c0_i32_0 = arith.constant 0 : i32
    %c0_i32_1 = arith.constant 0 : i32
    return %arg0, %c0_i32, %c0_i32_0 : i32, i32, i32
  }
}

</mosaic_0001>

<llo_original>
// kernel: discriminator_forward.8
$region0: #{discriminator_forward.8}
  #allocation0 [shape = 'u32[]', space=smem, size = 0x4, offset = 0x4, fixed_abs, tag = 'smem constant byte address 0x4 - core index']
  #allocation1 [shape = 'u32[144,128]{1,0:T(1,128)}', space=vmem, size = 0x12000, scoped, tag = 'internal scratch']
  %s0 = inlined_call_operand.vmem [shape: bf16[2,306,12], index: 0, kind: input, shape index: {}]
  %s1 = inlined_call_operand.vmem [shape: bf16[4,12,128], index: 1, kind: input, shape index: {}]
  %s2 = inlined_call_operand.vmem [shape: f32[1,128], index: 2, kind: input, shape index: {}]
  %s3 = inlined_call_operand.vmem [shape: bf16[2,272,128], index: 3, kind: output, shape index: {}]
  %s4 = sld [smem:[#allocation0]]
  $region45: #{discriminator_forward.8} parent=0
    _
  %s6 = ssub.s32 1, %s4
  %s7 = scalar_select 0, %s6, %s4
  loop: start=0, step=1, limit=4
  $region2: #{discriminator_forward.8} parent=0 // loop_pre_header
    _
  $region3: #{discriminator_forward.8} parent=0 // loop_header
    %s9 = sphi 0, %s13
    %p10 = scmp.ge.s32.totalorder %s9, 4
    %s19 = sphi 0, %s21
    %s22 = sphi 0, %s19
    %s23 = sphi 0, %s22
    %s39 = sphi 0, %s23
    %s43 = sphi 0, %s43
    %s45 = sphi 0, %s43
    %s46 = sphi 0, %s45
    %s60 = sphi 0, %s46
    %s64 = sphi 0, %s64
    %s66 = sphi 0, %s64
    %s67 = sphi 0, %s66
    %s81 = sphi 0, %s67
    %s87 = sphi 0, %s89
    %s90 = sphi 0, %s87
    %s91 = sphi 0, %s90
    %s107 = sphi 0, %s91
  $region4: #{discriminator_forward.8} parent=0 // loop_header_branch
    %12 = sbr.rel (%p10) target = $region8
  $region5: #{discriminator_forward.8} parent=0 // loop_body
    %s14 = ssub.s32 %s9, 1
    %s15 = ssub.s32 %s9, 2
    %s16 = sadd.s32 %s9, 1
    %s17 = ssub.s32 %s9, %s16
    %p18 = scmp.eq.s32.totalorder %s17, 0
    %s20 = sadd.s32 %s19, 1
    %s21 = scalar_select %p18, %s19, %s20
    %p24 = pneg %p18
    %p25 = scmp.eq.s32.totalorder %s9, 1
    %p26 = por %p24, %p25
    %p27 = scmp.ne.s32.totalorder %s19, %s22
    %p28 = scmp.eq.s32.totalorder %s9, 0
    %p29 = por %p27, %p28
    %p30 = scmp.ne.s32.totalorder %s19, %s22
    %p31 = scmp.eq.s32.totalorder %s14, 1
    %p32 = por %p30, %p31
    %p33 = scmp.ne.s32.totalorder %s22, %s23
    %p34 = scmp.eq.s32.totalorder %s14, 0
    %p35 = por %p33, %p34
    %p36 = scmp.ne.s32.totalorder %s22, %s23
    %p37 = scmp.eq.s32.totalorder %s15, 1
    %p38 = por %p36, %p37
    %p40 = scmp.ne.s32.totalorder %s23, %s39
    %p41 = scmp.eq.s32.totalorder %s15, 0
    %p42 = por %p40, %p41
    %s44 = sadd.s32 %s43, 1
    %p47 = scmp.eq.s32.totalorder %s9, 1
    %p48 = scmp.ne.s32.totalorder %s43, %s45
    %p49 = scmp.eq.s32.totalorder %s9, 0
    %p50 = por %p48, %p49
    %p51 = scmp.ne.s32.totalorder %s43, %s45
    %p52 = scmp.eq.s32.totalorder %s14, 1
    %p53 = por %p51, %p52
    %p54 = scmp.ne.s32.totalorder %s45, %s46
    %p55 = scmp.eq.s32.totalorder %s14, 0
    %p56 = por %p54, %p55
    %p57 = scmp.ne.s32.totalorder %s45, %s46
    %p58 = scmp.eq.s32.totalorder %s15, 1
    %p59 = por %p57, %p58
    %p61 = scmp.ne.s32.totalorder %s46, %s60
    %p62 = scmp.eq.s32.totalorder %s15, 0
    %p63 = por %p61, %p62
    %s65 = sadd.s32 %s64, 1
    %p68 = scmp.eq.s32.totalorder %s9, 1
    %p69 = scmp.ne.s32.totalorder %s64, %s66
    %p70 = scmp.eq.s32.totalorder %s9, 0
    %p71 = por %p69, %p70
    %p72 = scmp.ne.s32.totalorder %s64, %s66
    %p73 = scmp.eq.s32.totalorder %s14, 1
    %p74 = por %p72, %p73
    %p75 = scmp.ne.s32.totalorder %s66, %s67
    %p76 = scmp.eq.s32.totalorder %s14, 0
    %p77 = por %p75, %p76
    %p78 = scmp.ne.s32.totalorder %s66, %s67
    %p79 = scmp.eq.s32.totalorder %s15, 1
    %p80 = por %p78, %p79
    %p82 = scmp.ne.s32.totalorder %s67, %s81
    %p83 = scmp.eq.s32.totalorder %s15, 0
    %p84 = por %p82, %p83
    %s85 = ssub.s32 %s9, %s16
    %p86 = scmp.eq.s32.totalorder %s85, 0
    %s88 = sadd.s32 %s87, 1
    %s89 = scalar_select %p86, %s87, %s88
    %p92 = pneg %p86
    %p93 = scmp.eq.s32.totalorder %s9, 1
    %p94 = por %p92, %p93
    %p95 = scmp.ne.s32.totalorder %s87, %s90
    %p96 = scmp.eq.s32.totalorder %s9, 0
    %p97 = por %p95, %p96
    %p98 = scmp.ne.s32.totalorder %s87, %s90
    %p99 = scmp.eq.s32.totalorder %s14, 1
    %p100 = por %p98, %p99
    %p101 = scmp.ne.s32.totalorder %s90, %s91
    %p102 = scmp.eq.s32.totalorder %s14, 0
    %p103 = por %p101, %p102
    %p104 = scmp.ne.s32.totalorder %s90, %s91
    %p105 = scmp.eq.s32.totalorder %s15, 1
    %p106 = por %p104, %p105
    %p108 = scmp.ne.s32.totalorder %s91, %s107
    %p109 = scmp.eq.s32.totalorder %s15, 0
    %p110 = por %p108, %p109
    %p111 = scmp.le.s32.totalorder 1, %s9
    %p112 = scmp.lt.s32.totalorder %s9, 3
    %p113 = pnand %p111, %p112
    %p114 = pneg %p113
    // Predicated region
    $region9: #{discriminator_forward.8} parent=5 // pred_check
      _
    $region10: #{discriminator_forward.8} parent=5 // pred_check_branch
      %116 = sbr.rel (%p113) target = $region12
    $region11: #{discriminator_forward.8} parent=5 // pred_region
      %s117 = ssub.s32 %s9, 1
      // Predicated region
      $region13: #{discriminator_forward.8} parent=11 // pred_check
        %p118 = pneg %p56
      $region14: #{discriminator_forward.8} parent=11 // pred_check_branch
        %120 = sbr.rel (%p118) target = $region16
      $region15: #{discriminator_forward.8} parent=11 // pred_region
        _
      $region16: #{discriminator_forward.8} parent=11 // pred_fallthru
        _
      // Predicated region
      $region17: #{discriminator_forward.8} parent=11 // pred_check
        %p121 = pneg %p77
      $region18: #{discriminator_forward.8} parent=11 // pred_check_branch
        %123 = sbr.rel (%p121) target = $region20
      $region19: #{discriminator_forward.8} parent=11 // pred_region
        _
      $region20: #{discriminator_forward.8} parent=11 // pred_fallthru
        _
    $region12: #{discriminator_forward.8} parent=5 // pred_fallthru
      _
    %p124 = scmp.lt.s32.totalorder %s9, 2
    // Predicated region
    $region21: #{discriminator_forward.8} parent=5 // pred_check
      %p125 = pneg %p124
    $region22: #{discriminator_forward.8} parent=5 // pred_check_branch
      %127 = sbr.rel (%p125) target = $region24
    $region23: #{discriminator_forward.8} parent=5 // pred_region
      // Predicated region
      $region25: #{discriminator_forward.8} parent=23 // pred_check
        %p128 = pneg %p29
      $region26: #{discriminator_forward.8} parent=23 // pred_check_branch
        %130 = sbr.rel (%p128) target = $region28
      $region27: #{discriminator_forward.8} parent=23 // pred_region
        %p131 = scmp.lt.s32.totalorder %s9, 1
        %s132 = scalar_select %p131, %s9, 1
        %s133 = smul.addr %s132, 39
        %s134 = smul.addr %s133, 4
        %s135 = scalar_lea.vmem %s0, %s134
      $region28: #{discriminator_forward.8} parent=23 // pred_fallthru
        _
    $region24: #{discriminator_forward.8} parent=5 // pred_fallthru
      _
    %p136 = scmp.le.s32.totalorder 1, %s9
    %p137 = scmp.lt.s32.totalorder %s9, 3
    %p138 = pnand %p136, %p137
    %p139 = pneg %p138
    // Predicated region
    $region29: #{discriminator_forward.8} parent=5 // pred_check
      _
    $region30: #{discriminator_forward.8} parent=5 // pred_check_branch
      %141 = sbr.rel (%p138) target = $region32
    $region31: #{discriminator_forward.8} parent=5 // pred_region
      %s142 = ssub.s32 %s9, 1
      %p143 = scmp.lt.s32.totalorder %s14, 1
      %s144 = scalar_select %p143, %s14, 1
      %s145 = smul.addr %s144, 39
      %s146 = smul.addr %s145, 4
      %s147 = scalar_lea.vmem %s0, %s146
      %p148 = pneg %p35
      %p149 = pneg %p32
      %p150 = pneg %p56
      %p151 = pneg %p53
      %p152 = pneg %p77
      %p153 = pneg %p74
      %p154 = pneg %p103
      %p155 = pneg %p100
      %p156 = scmp.lt.s32.totalorder %s14, 1
      %s157 = scalar_select %p156, %s14, 1
      %s158 = smul.addr %s157, 34
      %s159 = smul.addr %s158, 4
      %s160 = scalar_lea.vmem %s3, %s159
      %p161 = scmp.lt.s32.totalorder %s14, 1
      %s162 = scalar_select %p161, %s14, 1
      %s163 = smul.addr %s162, 39
      %s164 = smul.addr %s163, 4
      %s165 = scalar_lea.vmem %s0, %s164
      %p166 = scmp.lt.s32.totalorder %s14, 1
      %s167 = scalar_select %p166, %s14, 1
      %s168 = smul.addr %s167, 34
      %s169 = smul.addr %s168, 4
      %s170 = scalar_lea.vmem %s3, %s169
      %v172 = vld [vmem:[%s165] sm:$0xf]
      %v173 = vld [vmem:[%s165 + $0x4] sm:$0xf]
      %v174 = vld [vmem:[%s165 + $0x8] sm:$0xf]
      %v175 = vld [vmem:[%s165 + $0xc] sm:$0xf]
      %v176 = vld [vmem:[%s165 + $0x10] sm:$0xf]
      %v177 = vld [vmem:[%s165 + $0x14] sm:$0xf]
      %v178 = vld [vmem:[%s165 + $0x18] sm:$0xf]
      %v179 = vld [vmem:[%s165 + $0x1c] sm:$0xf]
      %v180 = vld [vmem:[%s165 + $0x20] sm:$0xf]
      %v181 = vld [vmem:[%s165 + $0x24] sm:$0xf]
      %v182 = vld [vmem:[%s165 + $0x28] sm:$0xf]
      %v183 = vld [vmem:[%s165 + $0x2c] sm:$0xf]
      %v184 = vld [vmem:[%s165 + $0x30] sm:$0xf]
      %v185 = vld [vmem:[%s165 + $0x34] sm:$0xf]
      %v186 = vld [vmem:[%s165 + $0x38] sm:$0xf]
      %v187 = vld [vmem:[%s165 + $0x3c] sm:$0xf]
      %v188 = vld [vmem:[%s165 + $0x40] sm:$0xf]
      %v189 = vld [vmem:[%s165 + $0x44] sm:$0xf]
      %v190 = vld [vmem:[%s165 + $0x48] sm:$0xf]
      %v191 = vld [vmem:[%s165 + $0x4c] sm:$0xf]
      %v192 = vld [vmem:[%s165 + $0x50] sm:$0xf]
      %v193 = vld [vmem:[%s165 + $0x54] sm:$0xf]
      %v194 = vld [vmem:[%s165 + $0x58] sm:$0xf]
      %v195 = vld [vmem:[%s165 + $0x5c] sm:$0xf]
      %v196 = vld [vmem:[%s165 + $0x60] sm:$0xf]
      %v197 = vld [vmem:[%s165 + $0x64] sm:$0xf]
      %v198 = vld [vmem:[%s165 + $0x68] sm:$0xf]
      %v199 = vld [vmem:[%s165 + $0x6c] sm:$0xf]
      %v200 = vld [vmem:[%s165 + $0x70] sm:$0xf]
      %v201 = vld [vmem:[%s165 + $0x74] sm:$0xf]
      %v202 = vld [vmem:[%s165 + $0x78] sm:$0xf]
      %v203 = vld [vmem:[%s165 + $0x7c] sm:$0xf]
      %v204 = vld [vmem:[%s165 + $0x80] sm:$0xf]
      %v205 = vld [vmem:[%s165 + $0x84] sm:$0xf]
      %v206 = vld [vmem:[%s1] sm:$0xf]
      %v207 = vld [vmem:[%s1 + $0x4] sm:$0x3]
      %v208 = vld [vmem:[%s165 + $0x88] sm:$0x1]
      %s209 = scalar_lea.vmem %s1, 8
      %v210 = vld [vmem:[%s209] sm:$0xf]
      %v211 = vld [vmem:[%s209 + $0x4] sm:$0x3]
      %v247 = vunpack.c.l.b16 %v172
      %v248 = vunpack.c.l.b16 %v173
      %v249 = vunpack.c.l.b16 %v174
      %v250 = vunpack.c.l.b16 %v175
      %v251 = vunpack.c.l.b16 %v176
      %v252 = vunpack.c.l.b16 %v177
      %v253 = vunpack.c.l.b16 %v178
      %v254 = vunpack.c.l.b16 %v179
      %v255 = vunpack.c.l.b16 %v180
      %v256 = vunpack.c.l.b16 %v181
      %v257 = vunpack.c.l.b16 %v182
      %v258 = vunpack.c.l.b16 %v183
      %v259 = vunpack.c.l.b16 %v184
      %v260 = vunpack.c.l.b16 %v185
      %v261 = vunpack.c.l.b16 %v186
      %v262 = vunpack.c.l.b16 %v187
      %v263 = vunpack.c.l.b16 %v188
      %v264 = vunpack.c.l.b16 %v189
      %v265 = vunpack.c.l.b16 %v190
      %v266 = vunpack.c.l.b16 %v191
      %v267 = vunpack.c.l.b16 %v192
      %v268 = vunpack.c.l.b16 %v193
      %v269 = vunpack.c.l.b16 %v194
      %v270 = vunpack.c.l.b16 %v195
      %v271 = vunpack.c.l.b16 %v196
      %v272 = vunpack.c.l.b16 %v197
      %v273 = vunpack.c.l.b16 %v198
      %v274 = vunpack.c.l.b16 %v199
      %v275 = vunpack.c.l.b16 %v200
      %v276 = vunpack.c.l.b16 %v201
      %v277 = vunpack.c.l.b16 %v202
      %v278 = vunpack.c.l.b16 %v203
      %v279 = vunpack.c.l.b16 %v204
      %v280 = vunpack.c.l.b16 %v205
      %v281 = vunpack.c.l.b16 %v208
      %v282 = vpack.c.b16 %v248, %v247
      %v283 = vpack.c.b16 %v250, %v249
      %v284 = vpack.c.b16 %v252, %v251
      %v285 = vpack.c.b16 %v254, %v253
      %v286 = vpack.c.b16 %v256, %v255
      %v287 = vpack.c.b16 %v258, %v257
      %v288 = vpack.c.b16 %v260, %v259
      %v289 = vpack.c.b16 %v262, %v261
      %v290 = vpack.c.b16 %v264, %v263
      %v291 = vpack.c.b16 %v266, %v265
      %v292 = vpack.c.b16 %v268, %v267
      %v293 = vpack.c.b16 %v270, %v269
      %v294 = vpack.c.b16 %v272, %v271
      %v295 = vpack.c.b16 %v274, %v273
      %v296 = vpack.c.b16 %v276, %v275
      %v297 = vpack.c.b16 %v278, %v277
      %v298 = vpack.c.b16 %v280, %v279
      %v299 = vpack.c.b16 %v281, %v281
      %vm300 = vsmask.f32 7424
      %v302 = vshrl.u32 %v282, 16
      %v304 = vshll.u32 %v282, 16
      %v306 = vrot.slane %v304, 1
      %v307 = vor.u32 %v302, %v306
      %v309 = vshll.u32 %v283, 16
      %v311 = vrot.slane %v309, 1
      %v312 = vsel %vm300, %v307, %v311
      %v313 = vshrl.u32 %v283, 16
      %v315 = vor.u32 %v313, %v311
      %v317 = vshll.u32 %v284, 16
      %v319 = vrot.slane %v317, 1
      %v320 = vsel %vm300, %v315, %v319
      %v321 = vshrl.u32 %v284, 16
      %v323 = vor.u32 %v321, %v319
      %v325 = vshll.u32 %v285, 16
      %v327 = vrot.slane %v325, 1
      %v328 = vsel %vm300, %v323, %v327
      %v329 = vshrl.u32 %v285, 16
      %v331 = vor.u32 %v329, %v327
      %v333 = vshll.u32 %v286, 16
      %v335 = vrot.slane %v333, 1
      %v336 = vsel %vm300, %v331, %v335
      %v337 = vshrl.u32 %v286, 16
      %v339 = vor.u32 %v337, %v335
      %v341 = vshll.u32 %v287, 16
      %v343 = vrot.slane %v341, 1
      %v344 = vsel %vm300, %v339, %v343
      %v345 = vshrl.u32 %v287, 16
      %v347 = vor.u32 %v345, %v343
      %v349 = vshll.u32 %v288, 16
      %v351 = vrot.slane %v349, 1
      %v352 = vsel %vm300, %v347, %v351
      %v353 = vshrl.u32 %v288, 16
      %v355 = vor.u32 %v353, %v351
      %v357 = vshll.u32 %v289, 16
      %v359 = vrot.slane %v357, 1
      %v360 = vsel %vm300, %v355, %v359
      %v361 = vshrl.u32 %v289, 16
      %v363 = vor.u32 %v361, %v359
      %v365 = vshll.u32 %v290, 16
      %v367 = vrot.slane %v365, 1
      %v368 = vsel %vm300, %v363, %v367
      %v369 = vshrl.u32 %v290, 16
      %v371 = vor.u32 %v369, %v367
      %v373 = vshll.u32 %v291, 16
      %v375 = vrot.slane %v373, 1
      %v376 = vsel %vm300, %v371, %v375
      %v377 = vshrl.u32 %v291, 16
      %v379 = vor.u32 %v377, %v375
      %v381 = vshll.u32 %v292, 16
      %v383 = vrot.slane %v381, 1
      %v384 = vsel %vm300, %v379, %v383
      %v385 = vshrl.u32 %v292, 16
      %v387 = vor.u32 %v385, %v383
      %v389 = vshll.u32 %v293, 16
      %v391 = vrot.slane %v389, 1
      %v392 = vsel %vm300, %v387, %v391
      %v393 = vshrl.u32 %v293, 16
      %v395 = vor.u32 %v393, %v391
      %v397 = vshll.u32 %v294, 16
      %v399 = vrot.slane %v397, 1
      %v400 = vsel %vm300, %v395, %v399
      %v401 = vshrl.u32 %v294, 16
      %v403 = vor.u32 %v401, %v399
      %v405 = vshll.u32 %v295, 16
      %v407 = vrot.slane %v405, 1
      %v408 = vsel %vm300, %v403, %v407
      %v409 = vshrl.u32 %v295, 16
      %v411 = vor.u32 %v409, %v407
      %v413 = vshll.u32 %v296, 16
      %v415 = vrot.slane %v413, 1
      %v416 = vsel %vm300, %v411, %v415
      %v417 = vshrl.u32 %v296, 16
      %v419 = vor.u32 %v417, %v415
      %v421 = vshll.u32 %v297, 16
      %v423 = vrot.slane %v421, 1
      %v424 = vsel %vm300, %v419, %v423
      %v425 = vshrl.u32 %v297, 16
      %v427 = vor.u32 %v425, %v423
      %v429 = vshll.u32 %v298, 16
      %v431 = vrot.slane %v429, 1
      %v432 = vsel %vm300, %v427, %v431
      %v433 = vshrl.u32 %v298, 16
      %v435 = vor.u32 %v433, %v431
      %v437 = vshll.u32 %v299, 16
      %v439 = vrot.slane %v437, 1
      %v440 = vsel %vm300, %v435, %v439
      %v443 = vunpack.c.l.b16 %v210
      %v444 = vunpack.c.l.b16 %v211
      %v445 = vpack.c.b16 %v444, %v443
      %vm446 = vcmask 97280
      %v448 = vsel %vm446, %v312, 0
      %v451 = vsel %vm446, %v320, 0
      %v454 = vsel %vm446, %v328, 0
      %v457 = vsel %vm446, %v336, 0
      %v460 = vsel %vm446, %v344, 0
      %v463 = vsel %vm446, %v352, 0
      %v466 = vsel %vm446, %v360, 0
      %v469 = vsel %vm446, %v368, 0
      %v472 = vsel %vm446, %v376, 0
      %v475 = vsel %vm446, %v384, 0
      %v478 = vsel %vm446, %v392, 0
      %v481 = vsel %vm446, %v400, 0
      %v484 = vsel %vm446, %v408, 0
      %v487 = vsel %vm446, %v416, 0
      %v490 = vsel %vm446, %v424, 0
      %v493 = vsel %vm446, %v432, 0
      %v496 = vsel %vm446, %v440, 0
      %vm498 = vcmask 1045504
      %v500 = vsel %vm498, %v445, 0
      %502 = vmatprep.subr.bf16.mxu0 0
      %503 = vmatpush1.bf16.msra.mxu0 0
      %504 = vmatprep.subr.bf16.mxu0 0
      %505 = vmatpush1.bf16.msra.mxu0 0
      %506 = vmatprep.subr.bf16.mxu0 0
      %507 = vmatpush1.bf16.msra.mxu0 0
      %508 = vmatprep.subr.bf16.mxu0 0
      %509 = vmatpush1.bf16.msra.mxu0 0
      %510 = vmatprep.subr.bf16.mxu0 0
      %511 = vmatpush1.bf16.msra.mxu0 0
      %512 = vmatprep.subr.bf16.mxu0 0
      %513 = vmatpush1.bf16.msra.mxu0 0
      %514 = vmatprep.subr.bf16.mxu0 0
      %515 = vmatpush1.bf16.msra.mxu0 0
      %516 = vmatprep.subr.bf16.mxu0 0
      %517 = vmatpush1.bf16.msra.mxu0 %v500
      %518 = vmatprep.subr.bf16.mxu0 0
      %519 = vmatpush2.bf16.msra.mxu0 0
      %520 = vmatprep.subr.bf16.mxu0 0
      %521 = vmatpush2.bf16.msra.mxu0 0
      %522 = vmatprep.subr.bf16.mxu0 0
      %523 = vmatpush2.bf16.msra.mxu0 0
      %524 = vmatprep.subr.bf16.mxu0 0
      %525 = vmatpush2.bf16.msra.mxu0 0
      %526 = vmatprep.subr.bf16.mxu0 0
      %527 = vmatpush2.bf16.msra.mxu0 0
      %528 = vmatprep.subr.bf16.mxu0 0
      %529 = vmatpush2.bf16.msra.mxu0 0
      %530 = vmatprep.subr.bf16.mxu0 0
      %531 = vmatpush2.bf16.msra.mxu0 0
      %532 = vmatprep.subr.bf16.mxu0 0
      %533 = vmatpush2.bf16.msra.mxu0 0
      %534 = vmatprep.mubr.bf16.mxu0 0
      %535 = vmatmul.mubr.bf16.gmra.mxu0 %v448
      %v536 = vpop.f32.mrf.mxu0
      %v537 = vadd.f32 0.0, %v536
      %v538 = vpop.f32.mrf.mxu0
      %v539 = vpop.f32.mrf.mxu0
      %v540 = vadd.f32 0.0, %v539
      %v541 = vpop.f32.mrf.mxu0
      %542 = vmatprep.mubr.bf16.mxu0 0
      %543 = vmatmul.mubr.bf16.gmra.mxu0 %v451
      %v544 = vpop.f32.mrf.mxu0
      %v545 = vadd.f32 0.0, %v544
      %v546 = vpop.f32.mrf.mxu0
      %v547 = vpop.f32.mrf.mxu0
      %v548 = vadd.f32 0.0, %v547
      %v549 = vpop.f32.mrf.mxu0
      %550 = vmatprep.mubr.bf16.mxu0 0
      %551 = vmatmul.mubr.bf16.gmra.mxu0 %v454
      %v552 = vpop.f32.mrf.mxu0
      %v553 = vadd.f32 0.0, %v552
      %v554 = vpop.f32.mrf.mxu0
      %v555 = vpop.f32.mrf.mxu0
      %v556 = vadd.f32 0.0, %v555
      %v557 = vpop.f32.mrf.mxu0
      %558 = vmatprep.mubr.bf16.mxu0 0
      %559 = vmatmul.mubr.bf16.gmra.mxu0 %v457
      %v560 = vpop.f32.mrf.mxu0
      %v561 = vadd.f32 0.0, %v560
      %v562 = vpop.f32.mrf.mxu0
      %v563 = vpop.f32.mrf.mxu0
      %v564 = vadd.f32 0.0, %v563
      %v565 = vpop.f32.mrf.mxu0
      %566 = vmatprep.mubr.bf16.mxu0 0
      %567 = vmatmul.mubr.bf16.gmra.mxu0 %v460
      %v568 = vpop.f32.mrf.mxu0
      %v569 = vadd.f32 0.0, %v568
      %v570 = vpop.f32.mrf.mxu0
      %v571 = vpop.f32.mrf.mxu0
      %v572 = vadd.f32 0.0, %v571
      %v573 = vpop.f32.mrf.mxu0
      %574 = vmatprep.mubr.bf16.mxu0 0
      %575 = vmatmul.mubr.bf16.gmra.mxu0 %v463
      %v576 = vpop.f32.mrf.mxu0
      %v577 = vadd.f32 0.0, %v576
      %v578 = vpop.f32.mrf.mxu0
      %v579 = vpop.f32.mrf.mxu0
      %v580 = vadd.f32 0.0, %v579
      %v581 = vpop.f32.mrf.mxu0
      %582 = vmatprep.mubr.bf16.mxu0 0
      %583 = vmatmul.mubr.bf16.gmra.mxu0 %v466
      %v584 = vpop.f32.mrf.mxu0
      %v585 = vadd.f32 0.0, %v584
      %v586 = vpop.f32.mrf.mxu0
      %v587 = vpop.f32.mrf.mxu0
      %v588 = vadd.f32 0.0, %v587
      %v589 = vpop.f32.mrf.mxu0
      %590 = vmatprep.mubr.bf16.mxu0 0
      %591 = vmatmul.mubr.bf16.gmra.mxu0 %v469
      %v592 = vpop.f32.mrf.mxu0
      %v593 = vadd.f32 0.0, %v592
      %v594 = vpop.f32.mrf.mxu0
      %v595 = vpop.f32.mrf.mxu0
      %v596 = vadd.f32 0.0, %v595
      %v597 = vpop.f32.mrf.mxu0
      %598 = vmatprep.mubr.bf16.mxu0 0
      %599 = vmatmul.mubr.bf16.gmra.mxu0 %v472
      %v600 = vpop.f32.mrf.mxu0
      %v601 = vadd.f32 0.0, %v600
      %v602 = vpop.f32.mrf.mxu0
      %v603 = vpop.f32.mrf.mxu0
      %v604 = vadd.f32 0.0, %v603
      %v605 = vpop.f32.mrf.mxu0
      %606 = vmatprep.mubr.bf16.mxu0 0
      %607 = vmatmul.mubr.bf16.gmra.mxu0 %v475
      %v608 = vpop.f32.mrf.mxu0
      %v609 = vadd.f32 0.0, %v608
      %v610 = vpop.f32.mrf.mxu0
      %v611 = vpop.f32.mrf.mxu0
      %v612 = vadd.f32 0.0, %v611
      %v613 = vpop.f32.mrf.mxu0
      %614 = vmatprep.mubr.bf16.mxu0 0
      %615 = vmatmul.mubr.bf16.gmra.mxu0 %v478
      %v616 = vpop.f32.mrf.mxu0
      %v617 = vadd.f32 0.0, %v616
      %v618 = vpop.f32.mrf.mxu0
      %v619 = vpop.f32.mrf.mxu0
      %v620 = vadd.f32 0.0, %v619
      %v621 = vpop.f32.mrf.mxu0
      %622 = vmatprep.mubr.bf16.mxu0 0
      %623 = vmatmul.mubr.bf16.gmra.mxu0 %v481
      %v624 = vpop.f32.mrf.mxu0
      %v625 = vadd.f32 0.0, %v624
      %v626 = vpop.f32.mrf.mxu0
      %v627 = vpop.f32.mrf.mxu0
      %v628 = vadd.f32 0.0, %v627
      %v629 = vpop.f32.mrf.mxu0
      %630 = vmatprep.mubr.bf16.mxu0 0
      %631 = vmatmul.mubr.bf16.gmra.mxu0 %v484
      %v632 = vpop.f32.mrf.mxu0
      %v633 = vadd.f32 0.0, %v632
      %v634 = vpop.f32.mrf.mxu0
      %v635 = vpop.f32.mrf.mxu0
      %v636 = vadd.f32 0.0, %v635
      %v637 = vpop.f32.mrf.mxu0
      %638 = vmatprep.mubr.bf16.mxu0 0
      %639 = vmatmul.mubr.bf16.gmra.mxu0 %v487
      %v640 = vpop.f32.mrf.mxu0
      %v641 = vadd.f32 0.0, %v640
      %v642 = vpop.f32.mrf.mxu0
      %v643 = vpop.f32.mrf.mxu0
      %v644 = vadd.f32 0.0, %v643
      %v645 = vpop.f32.mrf.mxu0
      %646 = vmatprep.mubr.bf16.mxu0 0
      %647 = vmatmul.mubr.bf16.gmra.mxu0 %v490
      %v648 = vpop.f32.mrf.mxu0
      %v649 = vadd.f32 0.0, %v648
      %v650 = vpop.f32.mrf.mxu0
      %v651 = vpop.f32.mrf.mxu0
      %v652 = vadd.f32 0.0, %v651
      %v653 = vpop.f32.mrf.mxu0
      %654 = vmatprep.mubr.bf16.mxu0 0
      %655 = vmatmul.mubr.bf16.gmra.mxu0 %v493
      %v656 = vpop.f32.mrf.mxu0
      %v657 = vadd.f32 0.0, %v656
      %v658 = vpop.f32.mrf.mxu0
      %v659 = vpop.f32.mrf.mxu0
      %v660 = vadd.f32 0.0, %v659
      %v661 = vpop.f32.mrf.mxu0
      %662 = vmatprep.mubr.bf16.mxu0 0
      %663 = vmatmul.mubr.bf16.gmra.mxu0 %v496
      %v664 = vpop.f32.mrf.mxu0
      %v665 = vadd.f32 0.0, %v664
      %v666 = vpop.f32.mrf.mxu0
      %v667 = vpop.f32.mrf.mxu0
      %v668 = vadd.f32 0.0, %v667
      %v669 = vpop.f32.mrf.mxu0
      %670 = vdwg.mxu0
      %v673 = vunpack.c.l.b16 %v206
      %v674 = vunpack.c.l.b16 %v207
      %v675 = vpack.c.b16 %v674, %v673
      %v676 = vsel %vm446, %v282, 0
      %v678 = vsel %vm446, %v283, 0
      %v680 = vsel %vm446, %v284, 0
      %v682 = vsel %vm446, %v285, 0
      %v684 = vsel %vm446, %v286, 0
      %v686 = vsel %vm446, %v287, 0
      %v688 = vsel %vm446, %v288, 0
      %v690 = vsel %vm446, %v289, 0
      %v692 = vsel %vm446, %v290, 0
      %v694 = vsel %vm446, %v291, 0
      %v696 = vsel %vm446, %v292, 0
      %v698 = vsel %vm446, %v293, 0
      %v700 = vsel %vm446, %v294, 0
      %v702 = vsel %vm446, %v295, 0
      %v704 = vsel %vm446, %v296, 0
      %v706 = vsel %vm446, %v297, 0
      %v708 = vsel %vm446, %v298, 0
      %v711 = vsel %vm498, %v675, 0
      %713 = vmatprep.subr.bf16.mxu0 0
      %714 = vmatpush1.bf16.msra.mxu0 0
      %715 = vmatprep.subr.bf16.mxu0 0
      %716 = vmatpush1.bf16.msra.mxu0 0
      %717 = vmatprep.subr.bf16.mxu0 0
      %718 = vmatpush1.bf16.msra.mxu0 0
      %719 = vmatprep.subr.bf16.mxu0 0
      %720 = vmatpush1.bf16.msra.mxu0 0
      %721 = vmatprep.subr.bf16.mxu0 0
      %722 = vmatpush1.bf16.msra.mxu0 0
      %723 = vmatprep.subr.bf16.mxu0 0
      %724 = vmatpush1.bf16.msra.mxu0 0
      %725 = vmatprep.subr.bf16.mxu0 0
      %726 = vmatpush1.bf16.msra.mxu0 0
      %727 = vmatprep.subr.bf16.mxu0 0
      %728 = vmatpush1.bf16.msra.mxu0 %v711
      %729 = vmatprep.subr.bf16.mxu0 0
      %730 = vmatpush2.bf16.msra.mxu0 0
      %731 = vmatprep.subr.bf16.mxu0 0
      %732 = vmatpush2.bf16.msra.mxu0 0
      %733 = vmatprep.subr.bf16.mxu0 0
      %734 = vmatpush2.bf16.msra.mxu0 0
      %735 = vmatprep.subr.bf16.mxu0 0
      %736 = vmatpush2.bf16.msra.mxu0 0
      %737 = vmatprep.subr.bf16.mxu0 0
      %738 = vmatpush2.bf16.msra.mxu0 0
      %739 = vmatprep.subr.bf16.mxu0 0
      %740 = vmatpush2.bf16.msra.mxu0 0
      %741 = vmatprep.subr.bf16.mxu0 0
      %742 = vmatpush2.bf16.msra.mxu0 0
      %743 = vmatprep.subr.bf16.mxu0 0
      %744 = vmatpush2.bf16.msra.mxu0 0
      %745 = vmatprep.mubr.bf16.mxu0 0
      %746 = vmatmul.mubr.bf16.gmra.mxu0 %v676
      %v747 = vpop.f32.mrf.mxu0
      %v748 = vadd.f32 %v537, %v747
      %v749 = vpop.f32.mrf.mxu0
      %v750 = vpop.f32.mrf.mxu0
      %v751 = vadd.f32 %v540, %v750
      %v752 = vpop.f32.mrf.mxu0
      %753 = vmatprep.mubr.bf16.mxu0 0
      %754 = vmatmul.mubr.bf16.gmra.mxu0 %v678
      %v755 = vpop.f32.mrf.mxu0
      %v756 = vadd.f32 %v545, %v755
      %v757 = vpop.f32.mrf.mxu0
      %v758 = vpop.f32.mrf.mxu0
      %v759 = vadd.f32 %v548, %v758
      %v760 = vpop.f32.mrf.mxu0
      %761 = vmatprep.mubr.bf16.mxu0 0
      %762 = vmatmul.mubr.bf16.gmra.mxu0 %v680
      %v763 = vpop.f32.mrf.mxu0
      %v764 = vadd.f32 %v553, %v763
      %v765 = vpop.f32.mrf.mxu0
      %v766 = vpop.f32.mrf.mxu0
      %v767 = vadd.f32 %v556, %v766
      %v768 = vpop.f32.mrf.mxu0
      %769 = vmatprep.mubr.bf16.mxu0 0
      %770 = vmatmul.mubr.bf16.gmra.mxu0 %v682
      %v771 = vpop.f32.mrf.mxu0
      %v772 = vadd.f32 %v561, %v771
      %v773 = vpop.f32.mrf.mxu0
      %v774 = vpop.f32.mrf.mxu0
      %v775 = vadd.f32 %v564, %v774
      %v776 = vpop.f32.mrf.mxu0
      %777 = vmatprep.mubr.bf16.mxu0 0
      %778 = vmatmul.mubr.bf16.gmra.mxu0 %v684
      %v779 = vpop.f32.mrf.mxu0
      %v780 = vadd.f32 %v569, %v779
      %v781 = vpop.f32.mrf.mxu0
      %v782 = vpop.f32.mrf.mxu0
      %v783 = vadd.f32 %v572, %v782
      %v784 = vpop.f32.mrf.mxu0
      %785 = vmatprep.mubr.bf16.mxu0 0
      %786 = vmatmul.mubr.bf16.gmra.mxu0 %v686
      %v787 = vpop.f32.mrf.mxu0
      %v788 = vadd.f32 %v577, %v787
      %v789 = vpop.f32.mrf.mxu0
      %v790 = vpop.f32.mrf.mxu0
      %v791 = vadd.f32 %v580, %v790
      %v792 = vpop.f32.mrf.mxu0
      %793 = vmatprep.mubr.bf16.mxu0 0
      %794 = vmatmul.mubr.bf16.gmra.mxu0 %v688
      %v795 = vpop.f32.mrf.mxu0
      %v796 = vadd.f32 %v585, %v795
      %v797 = vpop.f32.mrf.mxu0
      %v798 = vpop.f32.mrf.mxu0
      %v799 = vadd.f32 %v588, %v798
      %v800 = vpop.f32.mrf.mxu0
      %801 = vmatprep.mubr.bf16.mxu0 0
      %802 = vmatmul.mubr.bf16.gmra.mxu0 %v690
      %v803 = vpop.f32.mrf.mxu0
      %v804 = vadd.f32 %v593, %v803
      %v805 = vpop.f32.mrf.mxu0
      %v806 = vpop.f32.mrf.mxu0
      %v807 = vadd.f32 %v596, %v806
      %v808 = vpop.f32.mrf.mxu0
      %809 = vmatprep.mubr.bf16.mxu0 0
      %810 = vmatmul.mubr.bf16.gmra.mxu0 %v692
      %v811 = vpop.f32.mrf.mxu0
      %v812 = vadd.f32 %v601, %v811
      %v813 = vpop.f32.mrf.mxu0
      %v814 = vpop.f32.mrf.mxu0
      %v815 = vadd.f32 %v604, %v814
      %v816 = vpop.f32.mrf.mxu0
      %817 = vmatprep.mubr.bf16.mxu0 0
      %818 = vmatmul.mubr.bf16.gmra.mxu0 %v694
      %v819 = vpop.f32.mrf.mxu0
      %v820 = vadd.f32 %v609, %v819
      %v821 = vpop.f32.mrf.mxu0
      %v822 = vpop.f32.mrf.mxu0
      %v823 = vadd.f32 %v612, %v822
      %v824 = vpop.f32.mrf.mxu0
      %825 = vmatprep.mubr.bf16.mxu0 0
      %826 = vmatmul.mubr.bf16.gmra.mxu0 %v696
      %v827 = vpop.f32.mrf.mxu0
      %v828 = vadd.f32 %v617, %v827
      %v829 = vpop.f32.mrf.mxu0
      %v830 = vpop.f32.mrf.mxu0
      %v831 = vadd.f32 %v620, %v830
      %v832 = vpop.f32.mrf.mxu0
      %833 = vmatprep.mubr.bf16.mxu0 0
      %834 = vmatmul.mubr.bf16.gmra.mxu0 %v698
      %v835 = vpop.f32.mrf.mxu0
      %v836 = vadd.f32 %v625, %v835
      %v837 = vpop.f32.mrf.mxu0
      %v838 = vpop.f32.mrf.mxu0
      %v839 = vadd.f32 %v628, %v838
      %v840 = vpop.f32.mrf.mxu0
      %841 = vmatprep.mubr.bf16.mxu0 0
      %842 = vmatmul.mubr.bf16.gmra.mxu0 %v700
      %v843 = vpop.f32.mrf.mxu0
      %v844 = vadd.f32 %v633, %v843
      %v845 = vpop.f32.mrf.mxu0
      %v846 = vpop.f32.mrf.mxu0
      %v847 = vadd.f32 %v636, %v846
      %v848 = vpop.f32.mrf.mxu0
      %849 = vmatprep.mubr.bf16.mxu0 0
      %850 = vmatmul.mubr.bf16.gmra.mxu0 %v702
      %v851 = vpop.f32.mrf.mxu0
      %v852 = vadd.f32 %v641, %v851
      %v853 = vpop.f32.mrf.mxu0
      %v854 = vpop.f32.mrf.mxu0
      %v855 = vadd.f32 %v644, %v854
      %v856 = vpop.f32.mrf.mxu0
      %857 = vmatprep.mubr.bf16.mxu0 0
      %858 = vmatmul.mubr.bf16.gmra.mxu0 %v704
      %v859 = vpop.f32.mrf.mxu0
      %v860 = vadd.f32 %v649, %v859
      %v861 = vpop.f32.mrf.mxu0
      %v862 = vpop.f32.mrf.mxu0
      %v863 = vadd.f32 %v652, %v862
      %v864 = vpop.f32.mrf.mxu0
      %865 = vmatprep.mubr.bf16.mxu0 0
      %866 = vmatmul.mubr.bf16.gmra.mxu0 %v706
      %v867 = vpop.f32.mrf.mxu0
      %v868 = vadd.f32 %v657, %v867
      %v869 = vpop.f32.mrf.mxu0
      %v870 = vpop.f32.mrf.mxu0
      %v871 = vadd.f32 %v660, %v870
      %v872 = vpop.f32.mrf.mxu0
      %873 = vmatprep.mubr.bf16.mxu0 0
      %874 = vmatmul.mubr.bf16.gmra.mxu0 %v708
      %v875 = vpop.f32.mrf.mxu0
      %v876 = vadd.f32 %v665, %v875
      %v877 = vpop.f32.mrf.mxu0
      %v878 = vpop.f32.mrf.mxu0
      %v879 = vadd.f32 %v668, %v878
      %v880 = vpop.f32.mrf.mxu0
      %881 = vdwg.mxu0
      %v882 = vld [vmem:[%s165 + $0x8] sm:$0xf]
      %v883 = vld [vmem:[%s165 + $0xc] sm:$0xf]
      %v884 = vld [vmem:[%s165 + $0x10] sm:$0xf]
      %v885 = vld [vmem:[%s165 + $0x14] sm:$0xf]
      %v886 = vld [vmem:[%s165 + $0x18] sm:$0xf]
      %v887 = vld [vmem:[%s165 + $0x1c] sm:$0xf]
      %v888 = vld [vmem:[%s165 + $0x20] sm:$0xf]
      %v889 = vld [vmem:[%s165 + $0x24] sm:$0xf]
      %v890 = vld [vmem:[%s165 + $0x28] sm:$0xf]
      %v891 = vld [vmem:[%s165 + $0x2c] sm:$0xf]
      %v892 = vld [vmem:[%s165 + $0x30] sm:$0xf]
      %v893 = vld [vmem:[%s165 + $0x34] sm:$0xf]
      %v894 = vld [vmem:[%s165 + $0x38] sm:$0xf]
      %v895 = vld [vmem:[%s165 + $0x3c] sm:$0xf]
      %v896 = vld [vmem:[%s165 + $0x40] sm:$0xf]
      %v897 = vld [vmem:[%s165 + $0x44] sm:$0xf]
      %v898 = vld [vmem:[%s165 + $0x48] sm:$0xf]
      %v899 = vld [vmem:[%s165 + $0x4c] sm:$0xf]
      %v900 = vld [vmem:[%s165 + $0x50] sm:$0xf]
      %v901 = vld [vmem:[%s165 + $0x54] sm:$0xf]
      %v902 = vld [vmem:[%s165 + $0x58] sm:$0xf]
      %v903 = vld [vmem:[%s165 + $0x5c] sm:$0xf]
      %v904 = vld [vmem:[%s165 + $0x60] sm:$0xf]
      %v905 = vld [vmem:[%s165 + $0x64] sm:$0xf]
      %v906 = vld [vmem:[%s165 + $0x68] sm:$0xf]
      %v907 = vld [vmem:[%s165 + $0x6c] sm:$0xf]
      %v908 = vld [vmem:[%s165 + $0x70] sm:$0xf]
      %v909 = vld [vmem:[%s165 + $0x74] sm:$0xf]
      %v910 = vld [vmem:[%s165 + $0x78] sm:$0xf]
      %v911 = vld [vmem:[%s165 + $0x7c] sm:$0xf]
      %v912 = vld [vmem:[%s165 + $0x80] sm:$0xf]
      %v913 = vld [vmem:[%s165 + $0x84] sm:$0xf]
      %v914 = vld [vmem:[%s165 + $0x88] sm:$0xf]
      %v915 = vld [vmem:[%s165 + $0x8c] sm:$0xf]
      %v916 = vld [vmem:[%s165 + $0x90] sm:$0x1]
      %s917 = scalar_lea.vmem %s1, 16
      %v918 = vld [vmem:[%s917] sm:$0xf]
      %v919 = vld [vmem:[%s917 + $0x4] sm:$0x3]
      %v955 = vunpack.c.l.b16 %v882
      %v956 = vunpack.c.l.b16 %v883
      %v957 = vunpack.c.l.b16 %v884
      %v958 = vunpack.c.l.b16 %v885
      %v959 = vunpack.c.l.b16 %v886
      %v960 = vunpack.c.l.b16 %v887
      %v961 = vunpack.c.l.b16 %v888
      %v962 = vunpack.c.l.b16 %v889
      %v963 = vunpack.c.l.b16 %v890
      %v964 = vunpack.c.l.b16 %v891
      %v965 = vunpack.c.l.b16 %v892
      %v966 = vunpack.c.l.b16 %v893
      %v967 = vunpack.c.l.b16 %v894
      %v968 = vunpack.c.l.b16 %v895
      %v969 = vunpack.c.l.b16 %v896
      %v970 = vunpack.c.l.b16 %v897
      %v971 = vunpack.c.l.b16 %v898
      %v972 = vunpack.c.l.b16 %v899
      %v973 = vunpack.c.l.b16 %v900
      %v974 = vunpack.c.l.b16 %v901
      %v975 = vunpack.c.l.b16 %v902
      %v976 = vunpack.c.l.b16 %v903
      %v977 = vunpack.c.l.b16 %v904
      %v978 = vunpack.c.l.b16 %v905
      %v979 = vunpack.c.l.b16 %v906
      %v980 = vunpack.c.l.b16 %v907
      %v981 = vunpack.c.l.b16 %v908
      %v982 = vunpack.c.l.b16 %v909
      %v983 = vunpack.c.l.b16 %v910
      %v984 = vunpack.c.l.b16 %v911
      %v985 = vunpack.c.l.b16 %v912
      %v986 = vunpack.c.l.b16 %v913
      %v987 = vunpack.c.l.b16 %v914
      %v988 = vunpack.c.l.b16 %v915
      %v989 = vunpack.c.l.b16 %v916
      %v990 = vpack.c.b16 %v956, %v955
      %v991 = vpack.c.b16 %v958, %v957
      %v992 = vpack.c.b16 %v960, %v959
      %v993 = vpack.c.b16 %v962, %v961
      %v994 = vpack.c.b16 %v964, %v963
      %v995 = vpack.c.b16 %v966, %v965
      %v996 = vpack.c.b16 %v968, %v967
      %v997 = vpack.c.b16 %v970, %v969
      %v998 = vpack.c.b16 %v972, %v971
      %v999 = vpack.c.b16 %v974, %v973
      %v1000 = vpack.c.b16 %v976, %v975
      %v1001 = vpack.c.b16 %v978, %v977
      %v1002 = vpack.c.b16 %v980, %v979
      %v1003 = vpack.c.b16 %v982, %v981
      %v1004 = vpack.c.b16 %v984, %v983
      %v1005 = vpack.c.b16 %v986, %v985
      %v1006 = vpack.c.b16 %v988, %v987
      %v1007 = vpack.c.b16 %v989, %v989
      %v1009 = vshrl.u32 %v990, 16
      %v1011 = vshll.u32 %v990, 16
      %v1013 = vrot.slane %v1011, 1
      %v1014 = vor.u32 %v1009, %v1013
      %v1016 = vshll.u32 %v991, 16
      %v1018 = vrot.slane %v1016, 1
      %v1019 = vsel %vm300, %v1014, %v1018
      %v1020 = vshrl.u32 %v991, 16
      %v1022 = vor.u32 %v1020, %v1018
      %v1024 = vshll.u32 %v992, 16
      %v1026 = vrot.slane %v1024, 1
      %v1027 = vsel %vm300, %v1022, %v1026
      %v1028 = vshrl.u32 %v992, 16
      %v1030 = vor.u32 %v1028, %v1026
      %v1032 = vshll.u32 %v993, 16
      %v1034 = vrot.slane %v1032, 1
      %v1035 = vsel %vm300, %v1030, %v1034
      %v1036 = vshrl.u32 %v993, 16
      %v1038 = vor.u32 %v1036, %v1034
      %v1040 = vshll.u32 %v994, 16
      %v1042 = vrot.slane %v1040, 1
      %v1043 = vsel %vm300, %v1038, %v1042
      %v1044 = vshrl.u32 %v994, 16
      %v1046 = vor.u32 %v1044, %v1042
      %v1048 = vshll.u32 %v995, 16
      %v1050 = vrot.slane %v1048, 1
      %v1051 = vsel %vm300, %v1046, %v1050
      %v1052 = vshrl.u32 %v995, 16
      %v1054 = vor.u32 %v1052, %v1050
      %v1056 = vshll.u32 %v996, 16
      %v1058 = vrot.slane %v1056, 1
      %v1059 = vsel %vm300, %v1054, %v1058
      %v1060 = vshrl.u32 %v996, 16
      %v1062 = vor.u32 %v1060, %v1058
      %v1064 = vshll.u32 %v997, 16
      %v1066 = vrot.slane %v1064, 1
      %v1067 = vsel %vm300, %v1062, %v1066
      %v1068 = vshrl.u32 %v997, 16
      %v1070 = vor.u32 %v1068, %v1066
      %v1072 = vshll.u32 %v998, 16
      %v1074 = vrot.slane %v1072, 1
      %v1075 = vsel %vm300, %v1070, %v1074
      %v1076 = vshrl.u32 %v998, 16
      %v1078 = vor.u32 %v1076, %v1074
      %v1080 = vshll.u32 %v999, 16
      %v1082 = vrot.slane %v1080, 1
      %v1083 = vsel %vm300, %v1078, %v1082
      %v1084 = vshrl.u32 %v999, 16
      %v1086 = vor.u32 %v1084, %v1082
      %v1088 = vshll.u32 %v1000, 16
      %v1090 = vrot.slane %v1088, 1
      %v1091 = vsel %vm300, %v1086, %v1090
      %v1092 = vshrl.u32 %v1000, 16
      %v1094 = vor.u32 %v1092, %v1090
      %v1096 = vshll.u32 %v1001, 16
      %v1098 = vrot.slane %v1096, 1
      %v1099 = vsel %vm300, %v1094, %v1098
      %v1100 = vshrl.u32 %v1001, 16
      %v1102 = vor.u32 %v1100, %v1098
      %v1104 = vshll.u32 %v1002, 16
      %v1106 = vrot.slane %v1104, 1
      %v1107 = vsel %vm300, %v1102, %v1106
      %v1108 = vshrl.u32 %v1002, 16
      %v1110 = vor.u32 %v1108, %v1106
      %v1112 = vshll.u32 %v1003, 16
      %v1114 = vrot.slane %v1112, 1
      %v1115 = vsel %vm300, %v1110, %v1114
      %v1116 = vshrl.u32 %v1003, 16
      %v1118 = vor.u32 %v1116, %v1114
      %v1120 = vshll.u32 %v1004, 16
      %v1122 = vrot.slane %v1120, 1
      %v1123 = vsel %vm300, %v1118, %v1122
      %v1124 = vshrl.u32 %v1004, 16
      %v1126 = vor.u32 %v1124, %v1122
      %v1128 = vshll.u32 %v1005, 16
      %v1130 = vrot.slane %v1128, 1
      %v1131 = vsel %vm300, %v1126, %v1130
      %v1132 = vshrl.u32 %v1005, 16
      %v1134 = vor.u32 %v1132, %v1130
      %v1136 = vshll.u32 %v1006, 16
      %v1138 = vrot.slane %v1136, 1
      %v1139 = vsel %vm300, %v1134, %v1138
      %v1140 = vshrl.u32 %v1006, 16
      %v1142 = vor.u32 %v1140, %v1138
      %v1144 = vshll.u32 %v1007, 16
      %v1146 = vrot.slane %v1144, 1
      %v1147 = vsel %vm300, %v1142, %v1146
      %v1150 = vunpack.c.l.b16 %v918
      %v1151 = vunpack.c.l.b16 %v919
      %v1152 = vpack.c.b16 %v1151, %v1150
      %v1154 = vsel %vm446, %v1019, 0
      %v1157 = vsel %vm446, %v1027, 0
      %v1160 = vsel %vm446, %v1035, 0
      %v1163 = vsel %vm446, %v1043, 0
      %v1166 = vsel %vm446, %v1051, 0
      %v1169 = vsel %vm446, %v1059, 0
      %v1172 = vsel %vm446, %v1067, 0
      %v1175 = vsel %vm446, %v1075, 0
      %v1178 = vsel %vm446, %v1083, 0
      %v1181 = vsel %vm446, %v1091, 0
      %v1184 = vsel %vm446, %v1099, 0
      %v1187 = vsel %vm446, %v1107, 0
      %v1190 = vsel %vm446, %v1115, 0
      %v1193 = vsel %vm446, %v1123, 0
      %v1196 = vsel %vm446, %v1131, 0
      %v1199 = vsel %vm446, %v1139, 0
      %v1202 = vsel %vm446, %v1147, 0
      %v1205 = vsel %vm498, %v1152, 0
      %1207 = vmatprep.subr.bf16.mxu0 0
      %1208 = vmatpush1.bf16.msra.mxu0 0
      %1209 = vmatprep.subr.bf16.mxu0 0
      %1210 = vmatpush1.bf16.msra.mxu0 0
      %1211 = vmatprep.subr.bf16.mxu0 0
      %1212 = vmatpush1.bf16.msra.mxu0 0
      %1213 = vmatprep.subr.bf16.mxu0 0
      %1214 = vmatpush1.bf16.msra.mxu0 0
      %1215 = vmatprep.subr.bf16.mxu0 0
      %1216 = vmatpush1.bf16.msra.mxu0 0
      %1217 = vmatprep.subr.bf16.mxu0 0
      %1218 = vmatpush1.bf16.msra.mxu0 0
      %1219 = vmatprep.subr.bf16.mxu0 0
      %1220 = vmatpush1.bf16.msra.mxu0 0
      %1221 = vmatprep.subr.bf16.mxu0 0
      %1222 = vmatpush1.bf16.msra.mxu0 %v1205
      %1223 = vmatprep.subr.bf16.mxu0 0
      %1224 = vmatpush2.bf16.msra.mxu0 0
      %1225 = vmatprep.subr.bf16.mxu0 0
      %1226 = vmatpush2.bf16.msra.mxu0 0
      %1227 = vmatprep.subr.bf16.mxu0 0
      %1228 = vmatpush2.bf16.msra.mxu0 0
      %1229 = vmatprep.subr.bf16.mxu0 0
      %1230 = vmatpush2.bf16.msra.mxu0 0
      %1231 = vmatprep.subr.bf16.mxu0 0
      %1232 = vmatpush2.bf16.msra.mxu0 0
      %1233 = vmatprep.subr.bf16.mxu0 0
      %1234 = vmatpush2.bf16.msra.mxu0 0
      %1235 = vmatprep.subr.bf16.mxu0 0
      %1236 = vmatpush2.bf16.msra.mxu0 0
      %1237 = vmatprep.subr.bf16.mxu0 0
      %1238 = vmatpush2.bf16.msra.mxu0 0
      %1239 = vmatprep.mubr.bf16.mxu0 0
      %1240 = vmatmul.mubr.bf16.gmra.mxu0 %v1154
      %v1241 = vpop.f32.mrf.mxu0
      %v1242 = vadd.f32 0.0, %v1241
      %v1243 = vpop.f32.mrf.mxu0
      %v1244 = vpop.f32.mrf.mxu0
      %v1245 = vadd.f32 0.0, %v1244
      %v1246 = vpop.f32.mrf.mxu0
      %1247 = vmatprep.mubr.bf16.mxu0 0
      %1248 = vmatmul.mubr.bf16.gmra.mxu0 %v1157
      %v1249 = vpop.f32.mrf.mxu0
      %v1250 = vadd.f32 0.0, %v1249
      %v1251 = vpop.f32.mrf.mxu0
      %v1252 = vpop.f32.mrf.mxu0
      %v1253 = vadd.f32 0.0, %v1252
      %v1254 = vpop.f32.mrf.mxu0
      %1255 = vmatprep.mubr.bf16.mxu0 0
      %1256 = vmatmul.mubr.bf16.gmra.mxu0 %v1160
      %v1257 = vpop.f32.mrf.mxu0
      %v1258 = vadd.f32 0.0, %v1257
      %v1259 = vpop.f32.mrf.mxu0
      %v1260 = vpop.f32.mrf.mxu0
      %v1261 = vadd.f32 0.0, %v1260
      %v1262 = vpop.f32.mrf.mxu0
      %1263 = vmatprep.mubr.bf16.mxu0 0
      %1264 = vmatmul.mubr.bf16.gmra.mxu0 %v1163
      %v1265 = vpop.f32.mrf.mxu0
      %v1266 = vadd.f32 0.0, %v1265
      %v1267 = vpop.f32.mrf.mxu0
      %v1268 = vpop.f32.mrf.mxu0
      %v1269 = vadd.f32 0.0, %v1268
      %v1270 = vpop.f32.mrf.mxu0
      %1271 = vmatprep.mubr.bf16.mxu0 0
      %1272 = vmatmul.mubr.bf16.gmra.mxu0 %v1166
      %v1273 = vpop.f32.mrf.mxu0
      %v1274 = vadd.f32 0.0, %v1273
      %v1275 = vpop.f32.mrf.mxu0
      %v1276 = vpop.f32.mrf.mxu0
      %v1277 = vadd.f32 0.0, %v1276
      %v1278 = vpop.f32.mrf.mxu0
      %1279 = vmatprep.mubr.bf16.mxu0 0
      %1280 = vmatmul.mubr.bf16.gmra.mxu0 %v1169
      %v1281 = vpop.f32.mrf.mxu0
      %v1282 = vadd.f32 0.0, %v1281
      %v1283 = vpop.f32.mrf.mxu0
      %v1284 = vpop.f32.mrf.mxu0
      %v1285 = vadd.f32 0.0, %v1284
      %v1286 = vpop.f32.mrf.mxu0
      %1287 = vmatprep.mubr.bf16.mxu0 0
      %1288 = vmatmul.mubr.bf16.gmra.mxu0 %v1172
      %v1289 = vpop.f32.mrf.mxu0
      %v1290 = vadd.f32 0.0, %v1289
      %v1291 = vpop.f32.mrf.mxu0
      %v1292 = vpop.f32.mrf.mxu0
      %v1293 = vadd.f32 0.0, %v1292
      %v1294 = vpop.f32.mrf.mxu0
      %1295 = vmatprep.mubr.bf16.mxu0 0
      %1296 = vmatmul.mubr.bf16.gmra.mxu0 %v1175
      %v1297 = vpop.f32.mrf.mxu0
      %v1298 = vadd.f32 0.0, %v1297
      %v1299 = vpop.f32.mrf.mxu0
      %v1300 = vpop.f32.mrf.mxu0
      %v1301 = vadd.f32 0.0, %v1300
      %v1302 = vpop.f32.mrf.mxu0
      %1303 = vmatprep.mubr.bf16.mxu0 0
      %1304 = vmatmul.mubr.bf16.gmra.mxu0 %v1178
      %v1305 = vpop.f32.mrf.mxu0
      %v1306 = vadd.f32 0.0, %v1305
      %v1307 = vpop.f32.mrf.mxu0
      %v1308 = vpop.f32.mrf.mxu0
      %v1309 = vadd.f32 0.0, %v1308
      %v1310 = vpop.f32.mrf.mxu0
      %1311 = vmatprep.mubr.bf16.mxu0 0
      %1312 = vmatmul.mubr.bf16.gmra.mxu0 %v1181
      %v1313 = vpop.f32.mrf.mxu0
      %v1314 = vadd.f32 0.0, %v1313
      %v1315 = vpop.f32.mrf.mxu0
      %v1316 = vpop.f32.mrf.mxu0
      %v1317 = vadd.f32 0.0, %v1316
      %v1318 = vpop.f32.mrf.mxu0
      %1319 = vmatprep.mubr.bf16.mxu0 0
      %1320 = vmatmul.mubr.bf16.gmra.mxu0 %v1184
      %v1321 = vpop.f32.mrf.mxu0
      %v1322 = vadd.f32 0.0, %v1321
      %v1323 = vpop.f32.mrf.mxu0
      %v1324 = vpop.f32.mrf.mxu0
      %v1325 = vadd.f32 0.0, %v1324
      %v1326 = vpop.f32.mrf.mxu0
      %1327 = vmatprep.mubr.bf16.mxu0 0
      %1328 = vmatmul.mubr.bf16.gmra.mxu0 %v1187
      %v1329 = vpop.f32.mrf.mxu0
      %v1330 = vadd.f32 0.0, %v1329
      %v1331 = vpop.f32.mrf.mxu0
      %v1332 = vpop.f32.mrf.mxu0
      %v1333 = vadd.f32 0.0, %v1332
      %v1334 = vpop.f32.mrf.mxu0
      %1335 = vmatprep.mubr.bf16.mxu0 0
      %1336 = vmatmul.mubr.bf16.gmra.mxu0 %v1190
      %v1337 = vpop.f32.mrf.mxu0
      %v1338 = vadd.f32 0.0, %v1337
      %v1339 = vpop.f32.mrf.mxu0
      %v1340 = vpop.f32.mrf.mxu0
      %v1341 = vadd.f32 0.0, %v1340
      %v1342 = vpop.f32.mrf.mxu0
      %1343 = vmatprep.mubr.bf16.mxu0 0
      %1344 = vmatmul.mubr.bf16.gmra.mxu0 %v1193
      %v1345 = vpop.f32.mrf.mxu0
      %v1346 = vadd.f32 0.0, %v1345
      %v1347 = vpop.f32.mrf.mxu0
      %v1348 = vpop.f32.mrf.mxu0
      %v1349 = vadd.f32 0.0, %v1348
      %v1350 = vpop.f32.mrf.mxu0
      %1351 = vmatprep.mubr.bf16.mxu0 0
      %1352 = vmatmul.mubr.bf16.gmra.mxu0 %v1196
      %v1353 = vpop.f32.mrf.mxu0
      %v1354 = vadd.f32 0.0, %v1353
      %v1355 = vpop.f32.mrf.mxu0
      %v1356 = vpop.f32.mrf.mxu0
      %v1357 = vadd.f32 0.0, %v1356
      %v1358 = vpop.f32.mrf.mxu0
      %1359 = vmatprep.mubr.bf16.mxu0 0
      %1360 = vmatmul.mubr.bf16.gmra.mxu0 %v1199
      %v1361 = vpop.f32.mrf.mxu0
      %v1362 = vadd.f32 0.0, %v1361
      %v1363 = vpop.f32.mrf.mxu0
      %v1364 = vpop.f32.mrf.mxu0
      %v1365 = vadd.f32 0.0, %v1364
      %v1366 = vpop.f32.mrf.mxu0
      %1367 = vmatprep.mubr.bf16.mxu0 0
      %1368 = vmatmul.mubr.bf16.gmra.mxu0 %v1202
      %v1369 = vpop.f32.mrf.mxu0
      %v1370 = vadd.f32 0.0, %v1369
      %v1371 = vpop.f32.mrf.mxu0
      %v1372 = vpop.f32.mrf.mxu0
      %v1373 = vadd.f32 0.0, %v1372
      %v1374 = vpop.f32.mrf.mxu0
      %1375 = vdwg.mxu0
      %v1376 = vadd.f32 %v748, %v1242
      %v1377 = vadd.f32 %v751, %v1245
      %v1378 = vadd.f32 %v756, %v1250
      %v1379 = vadd.f32 %v759, %v1253
      %v1380 = vadd.f32 %v764, %v1258
      %v1381 = vadd.f32 %v767, %v1261
      %v1382 = vadd.f32 %v772, %v1266
      %v1383 = vadd.f32 %v775, %v1269
      %v1384 = vadd.f32 %v780, %v1274
      %v1385 = vadd.f32 %v783, %v1277
      %v1386 = vadd.f32 %v788, %v1282
      %v1387 = vadd.f32 %v791, %v1285
      %v1388 = vadd.f32 %v796, %v1290
      %v1389 = vadd.f32 %v799, %v1293
      %v1390 = vadd.f32 %v804, %v1298
      %v1391 = vadd.f32 %v807, %v1301
      %v1392 = vadd.f32 %v812, %v1306
      %v1393 = vadd.f32 %v815, %v1309
      %v1394 = vadd.f32 %v820, %v1314
      %v1395 = vadd.f32 %v823, %v1317
      %v1396 = vadd.f32 %v828, %v1322
      %v1397 = vadd.f32 %v831, %v1325
      %v1398 = vadd.f32 %v836, %v1330
      %v1399 = vadd.f32 %v839, %v1333
      %v1400 = vadd.f32 %v844, %v1338
      %v1401 = vadd.f32 %v847, %v1341
      %v1402 = vadd.f32 %v852, %v1346
      %v1403 = vadd.f32 %v855, %v1349
      %v1404 = vadd.f32 %v860, %v1354
      %v1405 = vadd.f32 %v863, %v1357
      %v1406 = vadd.f32 %v868, %v1362
      %v1407 = vadd.f32 %v871, %v1365
      %v1408 = vadd.f32 %v876, %v1370
      %v1409 = vadd.f32 %v879, %v1373
      %v1410 = vld [vmem:[%s165 + $0x8] sm:$0xe]
      %s1411 = scalar_lea.vmem %s1, 24
      %v1412 = vld [vmem:[%s1411] sm:$0xf]
      %v1413 = vld [vmem:[%s1411 + $0x4] sm:$0x3]
      %v1415 = vunpack.c.l.b16 %v1410
      %v1416 = vpack.c.b16 %v956, %v1415
      %vm1417 = vcmask 1046528
      %v1418 = vrot.slane %v1416, 1
      %v1419 = vrot.slane %v991, 1
      %v1420 = vsel %vm1417, %v1418, %v1419
      %v1421 = vrot.slane %v992, 1
      %v1422 = vsel %vm1417, %v1419, %v1421
      %v1423 = vrot.slane %v993, 1
      %v1424 = vsel %vm1417, %v1421, %v1423
      %v1425 = vrot.slane %v994, 1
      %v1426 = vsel %vm1417, %v1423, %v1425
      %v1427 = vrot.slane %v995, 1
      %v1428 = vsel %vm1417, %v1425, %v1427
      %v1429 = vrot.slane %v996, 1
      %v1430 = vsel %vm1417, %v1427, %v1429
      %v1431 = vrot.slane %v997, 1
      %v1432 = vsel %vm1417, %v1429, %v1431
      %v1433 = vrot.slane %v998, 1
      %v1434 = vsel %vm1417, %v1431, %v1433
      %v1435 = vrot.slane %v999, 1
      %v1436 = vsel %vm1417, %v1433, %v1435
      %v1437 = vrot.slane %v1000, 1
      %v1438 = vsel %vm1417, %v1435, %v1437
      %v1439 = vrot.slane %v1001, 1
      %v1440 = vsel %vm1417, %v1437, %v1439
      %v1441 = vrot.slane %v1002, 1
      %v1442 = vsel %vm1417, %v1439, %v1441
      %v1443 = vrot.slane %v1003, 1
      %v1444 = vsel %vm1417, %v1441, %v1443
      %v1445 = vrot.slane %v1004, 1
      %v1446 = vsel %vm1417, %v1443, %v1445
      %v1447 = vrot.slane %v1005, 1
      %v1448 = vsel %vm1417, %v1445, %v1447
      %v1449 = vrot.slane %v1006, 1
      %v1450 = vsel %vm1417, %v1447, %v1449
      %v1451 = vrot.slane %v1007, 1
      %v1452 = vsel %vm1417, %v1449, %v1451
      %v1455 = vunpack.c.l.b16 %v1412
      %v1456 = vunpack.c.l.b16 %v1413
      %v1457 = vpack.c.b16 %v1456, %v1455
      %v1459 = vsel %vm446, %v1420, 0
      %v1462 = vsel %vm446, %v1422, 0
      %v1465 = vsel %vm446, %v1424, 0
      %v1468 = vsel %vm446, %v1426, 0
      %v1471 = vsel %vm446, %v1428, 0
      %v1474 = vsel %vm446, %v1430, 0
      %v1477 = vsel %vm446, %v1432, 0
      %v1480 = vsel %vm446, %v1434, 0
      %v1483 = vsel %vm446, %v1436, 0
      %v1486 = vsel %vm446, %v1438, 0
      %v1489 = vsel %vm446, %v1440, 0
      %v1492 = vsel %vm446, %v1442, 0
      %v1495 = vsel %vm446, %v1444, 0
      %v1498 = vsel %vm446, %v1446, 0
      %v1501 = vsel %vm446, %v1448, 0
      %v1504 = vsel %vm446, %v1450, 0
      %v1507 = vsel %vm446, %v1452, 0
      %v1510 = vsel %vm498, %v1457, 0
      %1512 = vmatprep.subr.bf16.mxu0 0
      %1513 = vmatpush1.bf16.msra.mxu0 0
      %1514 = vmatprep.subr.bf16.mxu0 0
      %1515 = vmatpush1.bf16.msra.mxu0 0
      %1516 = vmatprep.subr.bf16.mxu0 0
      %1517 = vmatpush1.bf16.msra.mxu0 0
      %1518 = vmatprep.subr.bf16.mxu0 0
      %1519 = vmatpush1.bf16.msra.mxu0 0
      %1520 = vmatprep.subr.bf16.mxu0 0
      %1521 = vmatpush1.bf16.msra.mxu0 0
      %1522 = vmatprep.subr.bf16.mxu0 0
      %1523 = vmatpush1.bf16.msra.mxu0 0
      %1524 = vmatprep.subr.bf16.mxu0 0
      %1525 = vmatpush1.bf16.msra.mxu0 0
      %1526 = vmatprep.subr.bf16.mxu0 0
      %1527 = vmatpush1.bf16.msra.mxu0 %v1510
      %1528 = vmatprep.subr.bf16.mxu0 0
      %1529 = vmatpush2.bf16.msra.mxu0 0
      %1530 = vmatprep.subr.bf16.mxu0 0
      %1531 = vmatpush2.bf16.msra.mxu0 0
      %1532 = vmatprep.subr.bf16.mxu0 0
      %1533 = vmatpush2.bf16.msra.mxu0 0
      %1534 = vmatprep.subr.bf16.mxu0 0
      %1535 = vmatpush2.bf16.msra.mxu0 0
      %1536 = vmatprep.subr.bf16.mxu0 0
      %1537 = vmatpush2.bf16.msra.mxu0 0
      %1538 = vmatprep.subr.bf16.mxu0 0
      %1539 = vmatpush2.bf16.msra.mxu0 0
      %1540 = vmatprep.subr.bf16.mxu0 0
      %1541 = vmatpush2.bf16.msra.mxu0 0
      %1542 = vmatprep.subr.bf16.mxu0 0
      %1543 = vmatpush2.bf16.msra.mxu0 0
      %1544 = vmatprep.mubr.bf16.mxu0 0
      %1545 = vmatmul.mubr.bf16.gmra.mxu0 %v1459
      %v1546 = vpop.f32.mrf.mxu0
      %v1547 = vadd.f32 0.0, %v1546
      %v1548 = vpop.f32.mrf.mxu0
      %v1549 = vpop.f32.mrf.mxu0
      %v1550 = vadd.f32 0.0, %v1549
      %v1551 = vpop.f32.mrf.mxu0
      %1552 = vmatprep.mubr.bf16.mxu0 0
      %1553 = vmatmul.mubr.bf16.gmra.mxu0 %v1462
      %v1554 = vpop.f32.mrf.mxu0
      %v1555 = vadd.f32 0.0, %v1554
      %v1556 = vpop.f32.mrf.mxu0
      %v1557 = vpop.f32.mrf.mxu0
      %v1558 = vadd.f32 0.0, %v1557
      %v1559 = vpop.f32.mrf.mxu0
      %1560 = vmatprep.mubr.bf16.mxu0 0
      %1561 = vmatmul.mubr.bf16.gmra.mxu0 %v1465
      %v1562 = vpop.f32.mrf.mxu0
      %v1563 = vadd.f32 0.0, %v1562
      %v1564 = vpop.f32.mrf.mxu0
      %v1565 = vpop.f32.mrf.mxu0
      %v1566 = vadd.f32 0.0, %v1565
      %v1567 = vpop.f32.mrf.mxu0
      %1568 = vmatprep.mubr.bf16.mxu0 0
      %1569 = vmatmul.mubr.bf16.gmra.mxu0 %v1468
      %v1570 = vpop.f32.mrf.mxu0
      %v1571 = vadd.f32 0.0, %v1570
      %v1572 = vpop.f32.mrf.mxu0
      %v1573 = vpop.f32.mrf.mxu0
      %v1574 = vadd.f32 0.0, %v1573
      %v1575 = vpop.f32.mrf.mxu0
      %1576 = vmatprep.mubr.bf16.mxu0 0
      %1577 = vmatmul.mubr.bf16.gmra.mxu0 %v1471
      %v1578 = vpop.f32.mrf.mxu0
      %v1579 = vadd.f32 0.0, %v1578
      %v1580 = vpop.f32.mrf.mxu0
      %v1581 = vpop.f32.mrf.mxu0
      %v1582 = vadd.f32 0.0, %v1581
      %v1583 = vpop.f32.mrf.mxu0
      %1584 = vmatprep.mubr.bf16.mxu0 0
      %1585 = vmatmul.mubr.bf16.gmra.mxu0 %v1474
      %v1586 = vpop.f32.mrf.mxu0
      %v1587 = vadd.f32 0.0, %v1586
      %v1588 = vpop.f32.mrf.mxu0
      %v1589 = vpop.f32.mrf.mxu0
      %v1590 = vadd.f32 0.0, %v1589
      %v1591 = vpop.f32.mrf.mxu0
      %1592 = vmatprep.mubr.bf16.mxu0 0
      %1593 = vmatmul.mubr.bf16.gmra.mxu0 %v1477
      %v1594 = vpop.f32.mrf.mxu0
      %v1595 = vadd.f32 0.0, %v1594
      %v1596 = vpop.f32.mrf.mxu0
      %v1597 = vpop.f32.mrf.mxu0
      %v1598 = vadd.f32 0.0, %v1597
      %v1599 = vpop.f32.mrf.mxu0
      %1600 = vmatprep.mubr.bf16.mxu0 0
      %1601 = vmatmul.mubr.bf16.gmra.mxu0 %v1480
      %v1602 = vpop.f32.mrf.mxu0
      %v1603 = vadd.f32 0.0, %v1602
      %v1604 = vpop.f32.mrf.mxu0
      %v1605 = vpop.f32.mrf.mxu0
      %v1606 = vadd.f32 0.0, %v1605
      %v1607 = vpop.f32.mrf.mxu0
      %1608 = vmatprep.mubr.bf16.mxu0 0
      %1609 = vmatmul.mubr.bf16.gmra.mxu0 %v1483
      %v1610 = vpop.f32.mrf.mxu0
      %v1611 = vadd.f32 0.0, %v1610
      %v1612 = vpop.f32.mrf.mxu0
      %v1613 = vpop.f32.mrf.mxu0
      %v1614 = vadd.f32 0.0, %v1613
      %v1615 = vpop.f32.mrf.mxu0
      %1616 = vmatprep.mubr.bf16.mxu0 0
      %1617 = vmatmul.mubr.bf16.gmra.mxu0 %v1486
      %v1618 = vpop.f32.mrf.mxu0
      %v1619 = vadd.f32 0.0, %v1618
      %v1620 = vpop.f32.mrf.mxu0
      %v1621 = vpop.f32.mrf.mxu0
      %v1622 = vadd.f32 0.0, %v1621
      %v1623 = vpop.f32.mrf.mxu0
      %1624 = vmatprep.mubr.bf16.mxu0 0
      %1625 = vmatmul.mubr.bf16.gmra.mxu0 %v1489
      %v1626 = vpop.f32.mrf.mxu0
      %v1627 = vadd.f32 0.0, %v1626
      %v1628 = vpop.f32.mrf.mxu0
      %v1629 = vpop.f32.mrf.mxu0
      %v1630 = vadd.f32 0.0, %v1629
      %v1631 = vpop.f32.mrf.mxu0
      %1632 = vmatprep.mubr.bf16.mxu0 0
      %1633 = vmatmul.mubr.bf16.gmra.mxu0 %v1492
      %v1634 = vpop.f32.mrf.mxu0
      %v1635 = vadd.f32 0.0, %v1634
      %v1636 = vpop.f32.mrf.mxu0
      %v1637 = vpop.f32.mrf.mxu0
      %v1638 = vadd.f32 0.0, %v1637
      %v1639 = vpop.f32.mrf.mxu0
      %1640 = vmatprep.mubr.bf16.mxu0 0
      %1641 = vmatmul.mubr.bf16.gmra.mxu0 %v1495
      %v1642 = vpop.f32.mrf.mxu0
      %v1643 = vadd.f32 0.0, %v1642
      %v1644 = vpop.f32.mrf.mxu0
      %v1645 = vpop.f32.mrf.mxu0
      %v1646 = vadd.f32 0.0, %v1645
      %v1647 = vpop.f32.mrf.mxu0
      %1648 = vmatprep.mubr.bf16.mxu0 0
      %1649 = vmatmul.mubr.bf16.gmra.mxu0 %v1498
      %v1650 = vpop.f32.mrf.mxu0
      %v1651 = vadd.f32 0.0, %v1650
      %v1652 = vpop.f32.mrf.mxu0
      %v1653 = vpop.f32.mrf.mxu0
      %v1654 = vadd.f32 0.0, %v1653
      %v1655 = vpop.f32.mrf.mxu0
      %1656 = vmatprep.mubr.bf16.mxu0 0
      %1657 = vmatmul.mubr.bf16.gmra.mxu0 %v1501
      %v1658 = vpop.f32.mrf.mxu0
      %v1659 = vadd.f32 0.0, %v1658
      %v1660 = vpop.f32.mrf.mxu0
      %v1661 = vpop.f32.mrf.mxu0
      %v1662 = vadd.f32 0.0, %v1661
      %v1663 = vpop.f32.mrf.mxu0
      %1664 = vmatprep.mubr.bf16.mxu0 0
      %1665 = vmatmul.mubr.bf16.gmra.mxu0 %v1504
      %v1666 = vpop.f32.mrf.mxu0
      %v1667 = vadd.f32 0.0, %v1666
      %v1668 = vpop.f32.mrf.mxu0
      %v1669 = vpop.f32.mrf.mxu0
      %v1670 = vadd.f32 0.0, %v1669
      %v1671 = vpop.f32.mrf.mxu0
      %1672 = vmatprep.mubr.bf16.mxu0 0
      %1673 = vmatmul.mubr.bf16.gmra.mxu0 %v1507
      %v1674 = vpop.f32.mrf.mxu0
      %v1675 = vadd.f32 0.0, %v1674
      %v1676 = vpop.f32.mrf.mxu0
      %v1677 = vpop.f32.mrf.mxu0
      %v1678 = vadd.f32 0.0, %v1677
      %v1679 = vpop.f32.mrf.mxu0
      %1680 = vdwg.mxu0
      %v1681 = vadd.f32 %v1376, %v1547
      %v1682 = vadd.f32 %v1377, %v1550
      %v1683 = vadd.f32 %v1378, %v1555
      %v1684 = vadd.f32 %v1379, %v1558
      %v1685 = vadd.f32 %v1380, %v1563
      %v1686 = vadd.f32 %v1381, %v1566
      %v1687 = vadd.f32 %v1382, %v1571
      %v1688 = vadd.f32 %v1383, %v1574
      %v1689 = vadd.f32 %v1384, %v1579
      %v1690 = vadd.f32 %v1385, %v1582
      %v1691 = vadd.f32 %v1386, %v1587
      %v1692 = vadd.f32 %v1387, %v1590
      %v1693 = vadd.f32 %v1388, %v1595
      %v1694 = vadd.f32 %v1389, %v1598
      %v1695 = vadd.f32 %v1390, %v1603
      %v1696 = vadd.f32 %v1391, %v1606
      %v1697 = vadd.f32 %v1392, %v1611
      %v1698 = vadd.f32 %v1393, %v1614
      %v1699 = vadd.f32 %v1394, %v1619
      %v1700 = vadd.f32 %v1395, %v1622
      %v1701 = vadd.f32 %v1396, %v1627
      %v1702 = vadd.f32 %v1397, %v1630
      %v1703 = vadd.f32 %v1398, %v1635
      %v1704 = vadd.f32 %v1399, %v1638
      %v1705 = vadd.f32 %v1400, %v1643
      %v1706 = vadd.f32 %v1401, %v1646
      %v1707 = vadd.f32 %v1402, %v1651
      %v1708 = vadd.f32 %v1403, %v1654
      %v1709 = vadd.f32 %v1404, %v1659
      %v1710 = vadd.f32 %v1405, %v1662
      %v1711 = vadd.f32 %v1406, %v1667
      %v1712 = vadd.f32 %v1407, %v1670
      %v1713 = vadd.f32 %v1408, %v1675
      %v1714 = vadd.f32 %v1409, %v1678
      %v1715 = vld [vmem:[%s2] sm:$0x1]
      %v1717 = vlaneseq
      %v1718 = vshrl.u32 %v1717, 7
      %v1719 = vsub.s32 0, %v1718
      %v1720 = vrot.slane %v1715, %v1719
      %v1722 = vadd.f32 %v1681, %v1720
      %v1723 = vadd.f32 %v1682, %v1720
      %v1724 = vadd.f32 %v1683, %v1720
      %v1725 = vadd.f32 %v1684, %v1720
      %v1726 = vadd.f32 %v1685, %v1720
      %v1727 = vadd.f32 %v1686, %v1720
      %v1728 = vadd.f32 %v1687, %v1720
      %v1729 = vadd.f32 %v1688, %v1720
      %v1730 = vadd.f32 %v1689, %v1720
      %v1731 = vadd.f32 %v1690, %v1720
      %v1732 = vadd.f32 %v1691, %v1720
      %v1733 = vadd.f32 %v1692, %v1720
      %v1734 = vadd.f32 %v1693, %v1720
      %v1735 = vadd.f32 %v1694, %v1720
      %v1736 = vadd.f32 %v1695, %v1720
      %v1737 = vadd.f32 %v1696, %v1720
      %v1738 = vadd.f32 %v1697, %v1720
      %v1739 = vadd.f32 %v1698, %v1720
      %v1740 = vadd.f32 %v1699, %v1720
      %v1741 = vadd.f32 %v1700, %v1720
      %v1742 = vadd.f32 %v1701, %v1720
      %v1743 = vadd.f32 %v1702, %v1720
      %v1744 = vadd.f32 %v1703, %v1720
      %v1745 = vadd.f32 %v1704, %v1720
      %v1746 = vadd.f32 %v1705, %v1720
      %v1747 = vadd.f32 %v1706, %v1720
      %v1748 = vadd.f32 %v1707, %v1720
      %v1749 = vadd.f32 %v1708, %v1720
      %v1750 = vadd.f32 %v1709, %v1720
      %v1751 = vadd.f32 %v1710, %v1720
      %v1752 = vadd.f32 %v1711, %v1720
      %v1753 = vadd.f32 %v1712, %v1720
      %v1754 = vadd.f32 %v1713, %v1720
      %v1755 = vadd.f32 %v1714, %v1720
      %vm1756 = vcmp.ge.f32.partialorder %v1722, 0.0
      %vm1757 = vcmp.ge.f32.partialorder %v1723, 0.0
      %vm1758 = vcmp.ge.f32.partialorder %v1724, 0.0
      %vm1759 = vcmp.ge.f32.partialorder %v1725, 0.0
      %vm1760 = vcmp.ge.f32.partialorder %v1726, 0.0
      %vm1761 = vcmp.ge.f32.partialorder %v1727, 0.0
      %vm1762 = vcmp.ge.f32.partialorder %v1728, 0.0
      %vm1763 = vcmp.ge.f32.partialorder %v1729, 0.0
      %vm1764 = vcmp.ge.f32.partialorder %v1730, 0.0
      %vm1765 = vcmp.ge.f32.partialorder %v1731, 0.0
      %vm1766 = vcmp.ge.f32.partialorder %v1732, 0.0
      %vm1767 = vcmp.ge.f32.partialorder %v1733, 0.0
      %vm1768 = vcmp.ge.f32.partialorder %v1734, 0.0
      %vm1769 = vcmp.ge.f32.partialorder %v1735, 0.0
      %vm1770 = vcmp.ge.f32.partialorder %v1736, 0.0
      %vm1771 = vcmp.ge.f32.partialorder %v1737, 0.0
      %vm1772 = vcmp.ge.f32.partialorder %v1738, 0.0
      %vm1773 = vcmp.ge.f32.partialorder %v1739, 0.0
      %vm1774 = vcmp.ge.f32.partialorder %v1740, 0.0
      %vm1775 = vcmp.ge.f32.partialorder %v1741, 0.0
      %vm1776 = vcmp.ge.f32.partialorder %v1742, 0.0
      %vm1777 = vcmp.ge.f32.partialorder %v1743, 0.0
      %vm1778 = vcmp.ge.f32.partialorder %v1744, 0.0
      %vm1779 = vcmp.ge.f32.partialorder %v1745, 0.0
      %vm1780 = vcmp.ge.f32.partialorder %v1746, 0.0
      %vm1781 = vcmp.ge.f32.partialorder %v1747, 0.0
      %vm1782 = vcmp.ge.f32.partialorder %v1748, 0.0
      %vm1783 = vcmp.ge.f32.partialorder %v1749, 0.0
      %vm1784 = vcmp.ge.f32.partialorder %v1750, 0.0
      %vm1785 = vcmp.ge.f32.partialorder %v1751, 0.0
      %vm1786 = vcmp.ge.f32.partialorder %v1752, 0.0
      %vm1787 = vcmp.ge.f32.partialorder %v1753, 0.0
      %vm1788 = vcmp.ge.f32.partialorder %v1754, 0.0
      %vm1789 = vcmp.ge.f32.partialorder %v1755, 0.0
      %v1790 = vmul.f32 %v1722, 0.2
      %v1791 = vmul.f32 %v1723, 0.2
      %v1792 = vmul.f32 %v1724, 0.2
      %v1793 = vmul.f32 %v1725, 0.2
      %v1794 = vmul.f32 %v1726, 0.2
      %v1795 = vmul.f32 %v1727, 0.2
      %v1796 = vmul.f32 %v1728, 0.2
      %v1797 = vmul.f32 %v1729, 0.2
      %v1798 = vmul.f32 %v1730, 0.2
      %v1799 = vmul.f32 %v1731, 0.2
      %v1800 = vmul.f32 %v1732, 0.2
      %v1801 = vmul.f32 %v1733, 0.2
      %v1802 = vmul.f32 %v1734, 0.2
      %v1803 = vmul.f32 %v1735, 0.2
      %v1804 = vmul.f32 %v1736, 0.2
      %v1805 = vmul.f32 %v1737, 0.2
      %v1806 = vmul.f32 %v1738, 0.2
      %v1807 = vmul.f32 %v1739, 0.2
      %v1808 = vmul.f32 %v1740, 0.2
      %v1809 = vmul.f32 %v1741, 0.2
      %v1810 = vmul.f32 %v1742, 0.2
      %v1811 = vmul.f32 %v1743, 0.2
      %v1812 = vmul.f32 %v1744, 0.2
      %v1813 = vmul.f32 %v1745, 0.2
      %v1814 = vmul.f32 %v1746, 0.2
      %v1815 = vmul.f32 %v1747, 0.2
      %v1816 = vmul.f32 %v1748, 0.2
      %v1817 = vmul.f32 %v1749, 0.2
      %v1818 = vmul.f32 %v1750, 0.2
      %v1819 = vmul.f32 %v1751, 0.2
      %v1820 = vmul.f32 %v1752, 0.2
      %v1821 = vmul.f32 %v1753, 0.2
      %v1822 = vmul.f32 %v1754, 0.2
      %v1823 = vmul.f32 %v1755, 0.2
      %v1824 = vsel %vm1756, %v1722, %v1790
      %v1825 = vsel %vm1757, %v1723, %v1791
      %v1826 = vsel %vm1758, %v1724, %v1792
      %v1827 = vsel %vm1759, %v1725, %v1793
      %v1828 = vsel %vm1760, %v1726, %v1794
      %v1829 = vsel %vm1761, %v1727, %v1795
      %v1830 = vsel %vm1762, %v1728, %v1796
      %v1831 = vsel %vm1763, %v1729, %v1797
      %v1832 = vsel %vm1764, %v1730, %v1798
      %v1833 = vsel %vm1765, %v1731, %v1799
      %v1834 = vsel %vm1766, %v1732, %v1800
      %v1835 = vsel %vm1767, %v1733, %v1801
      %v1836 = vsel %vm1768, %v1734, %v1802
      %v1837 = vsel %vm1769, %v1735, %v1803
      %v1838 = vsel %vm1770, %v1736, %v1804
      %v1839 = vsel %vm1771, %v1737, %v1805
      %v1840 = vsel %vm1772, %v1738, %v1806
      %v1841 = vsel %vm1773, %v1739, %v1807
      %v1842 = vsel %vm1774, %v1740, %v1808
      %v1843 = vsel %vm1775, %v1741, %v1809
      %v1844 = vsel %vm1776, %v1742, %v1810
      %v1845 = vsel %vm1777, %v1743, %v1811
      %v1846 = vsel %vm1778, %v1744, %v1812
      %v1847 = vsel %vm1779, %v1745, %v1813
      %v1848 = vsel %vm1780, %v1746, %v1814
      %v1849 = vsel %vm1781, %v1747, %v1815
      %v1850 = vsel %vm1782, %v1748, %v1816
      %v1851 = vsel %vm1783, %v1749, %v1817
      %v1852 = vsel %vm1784, %v1750, %v1818
      %v1853 = vsel %vm1785, %v1751, %v1819
      %v1854 = vsel %vm1786, %v1752, %v1820
      %v1855 = vsel %vm1787, %v1753, %v1821
      %v1856 = vsel %vm1788, %v1754, %v1822
      %v1857 = vsel %vm1789, %v1755, %v1823
      %v1858 = vpack.c.bf16 %v1825, %v1824
      %v1859 = vpack.c.bf16 %v1827, %v1826
      %v1860 = vpack.c.bf16 %v1829, %v1828
      %v1861 = vpack.c.bf16 %v1831, %v1830
      %v1862 = vpack.c.bf16 %v1833, %v1832
      %v1863 = vpack.c.bf16 %v1835, %v1834
      %v1864 = vpack.c.bf16 %v1837, %v1836
      %v1865 = vpack.c.bf16 %v1839, %v1838
      %v1866 = vpack.c.bf16 %v1841, %v1840
      %v1867 = vpack.c.bf16 %v1843, %v1842
      %v1868 = vpack.c.bf16 %v1845, %v1844
      %v1869 = vpack.c.bf16 %v1847, %v1846
      %v1870 = vpack.c.bf16 %v1849, %v1848
      %v1871 = vpack.c.bf16 %v1851, %v1850
      %v1872 = vpack.c.bf16 %v1853, %v1852
      %v1873 = vpack.c.bf16 %v1855, %v1854
      %v1874 = vpack.c.bf16 %v1857, %v1856
      %v1892 = vunpack.c.l.b16 %v1858
      %v1893 = vunpack.c.h.b16 %v1858
      %v1894 = vunpack.c.l.b16 %v1859
      %v1895 = vunpack.c.h.b16 %v1859
      %v1896 = vunpack.c.l.b16 %v1860
      %v1897 = vunpack.c.h.b16 %v1860
      %v1898 = vunpack.c.l.b16 %v1861
      %v1899 = vunpack.c.h.b16 %v1861
      %v1900 = vunpack.c.l.b16 %v1862
      %v1901 = vunpack.c.h.b16 %v1862
      %v1902 = vunpack.c.l.b16 %v1863
      %v1903 = vunpack.c.h.b16 %v1863
      %v1904 = vunpack.c.l.b16 %v1864
      %v1905 = vunpack.c.h.b16 %v1864
      %v1906 = vunpack.c.l.b16 %v1865
      %v1907 = vunpack.c.h.b16 %v1865
      %v1908 = vunpack.c.l.b16 %v1866
      %v1909 = vunpack.c.h.b16 %v1866
      %v1910 = vunpack.c.l.b16 %v1867
      %v1911 = vunpack.c.h.b16 %v1867
      %v1912 = vunpack.c.l.b16 %v1868
      %v1913 = vunpack.c.h.b16 %v1868
      %v1914 = vunpack.c.l.b16 %v1869
      %v1915 = vunpack.c.h.b16 %v1869
      %v1916 = vunpack.c.l.b16 %v1870
      %v1917 = vunpack.c.h.b16 %v1870
      %v1918 = vunpack.c.l.b16 %v1871
      %v1919 = vunpack.c.h.b16 %v1871
      %v1920 = vunpack.c.l.b16 %v1872
      %v1921 = vunpack.c.h.b16 %v1872
      %v1922 = vunpack.c.l.b16 %v1873
      %v1923 = vunpack.c.h.b16 %v1873
      %v1924 = vunpack.c.l.b16 %v1874
      %v1925 = vunpack.c.h.b16 %v1874
      %v1926 = vpack.c.b16 %v1892, %v1892
      %v1927 = vpack.c.b16 %v1893, %v1893
      %v1928 = vpack.c.b16 %v1894, %v1894
      %v1929 = vpack.c.b16 %v1895, %v1895
      %v1930 = vpack.c.b16 %v1896, %v1896
      %v1931 = vpack.c.b16 %v1897, %v1897
      %v1932 = vpack.c.b16 %v1898, %v1898
      %v1933 = vpack.c.b16 %v1899, %v1899
      %v1934 = vpack.c.b16 %v1900, %v1900
      %v1935 = vpack.c.b16 %v1901, %v1901
      %v1936 = vpack.c.b16 %v1902, %v1902
      %v1937 = vpack.c.b16 %v1903, %v1903
      %v1938 = vpack.c.b16 %v1904, %v1904
      %v1939 = vpack.c.b16 %v1905, %v1905
      %v1940 = vpack.c.b16 %v1906, %v1906
      %v1941 = vpack.c.b16 %v1907, %v1907
      %v1942 = vpack.c.b16 %v1908, %v1908
      %v1943 = vpack.c.b16 %v1909, %v1909
      %v1944 = vpack.c.b16 %v1910, %v1910
      %v1945 = vpack.c.b16 %v1911, %v1911
      %v1946 = vpack.c.b16 %v1912, %v1912
      %v1947 = vpack.c.b16 %v1913, %v1913
      %v1948 = vpack.c.b16 %v1914, %v1914
      %v1949 = vpack.c.b16 %v1915, %v1915
      %v1950 = vpack.c.b16 %v1916, %v1916
      %v1951 = vpack.c.b16 %v1917, %v1917
      %v1952 = vpack.c.b16 %v1918, %v1918
      %v1953 = vpack.c.b16 %v1919, %v1919
      %v1954 = vpack.c.b16 %v1920, %v1920
      %v1955 = vpack.c.b16 %v1921, %v1921
      %v1956 = vpack.c.b16 %v1922, %v1922
      %v1957 = vpack.c.b16 %v1923, %v1923
      %v1958 = vpack.c.b16 %v1924, %v1924
      %v1959 = vpack.c.b16 %v1925, %v1925
      %1994 = vst [vmem:[%s170] sm:$0xf] %v1926
      %1995 = vst [vmem:[%s170 + $0x4] sm:$0xf] %v1927
      %1996 = vst [vmem:[%s170 + $0x8] sm:$0xf] %v1928
      %1997 = vst [vmem:[%s170 + $0xc] sm:$0xf] %v1929
      %1998 = vst [vmem:[%s170 + $0x10] sm:$0xf] %v1930
      %1999 = vst [vmem:[%s170 + $0x14] sm:$0xf] %v1931
      %2000 = vst [vmem:[%s170 + $0x18] sm:$0xf] %v1932
      %2001 = vst [vmem:[%s170 + $0x1c] sm:$0xf] %v1933
      %2002 = vst [vmem:[%s170 + $0x20] sm:$0xf] %v1934
      %2003 = vst [vmem:[%s170 + $0x24] sm:$0xf] %v1935
      %2004 = vst [vmem:[%s170 + $0x28] sm:$0xf] %v1936
      %2005 = vst [vmem:[%s170 + $0x2c] sm:$0xf] %v1937
      %2006 = vst [vmem:[%s170 + $0x30] sm:$0xf] %v1938
      %2007 = vst [vmem:[%s170 + $0x34] sm:$0xf] %v1939
      %2008 = vst [vmem:[%s170 + $0x38] sm:$0xf] %v1940
      %2009 = vst [vmem:[%s170 + $0x3c] sm:$0xf] %v1941
      %2010 = vst [vmem:[%s170 + $0x40] sm:$0xf] %v1942
      %2011 = vst [vmem:[%s170 + $0x44] sm:$0xf] %v1943
      %2012 = vst [vmem:[%s170 + $0x48] sm:$0xf] %v1944
      %2013 = vst [vmem:[%s170 + $0x4c] sm:$0xf] %v1945
      %2014 = vst [vmem:[%s170 + $0x50] sm:$0xf] %v1946
      %2015 = vst [vmem:[%s170 + $0x54] sm:$0xf] %v1947
      %2016 = vst [vmem:[%s170 + $0x58] sm:$0xf] %v1948
      %2017 = vst [vmem:[%s170 + $0x5c] sm:$0xf] %v1949
      %2018 = vst [vmem:[%s170 + $0x60] sm:$0xf] %v1950
      %2019 = vst [vmem:[%s170 + $0x64] sm:$0xf] %v1951
      %2020 = vst [vmem:[%s170 + $0x68] sm:$0xf] %v1952
      %2021 = vst [vmem:[%s170 + $0x6c] sm:$0xf] %v1953
      %2022 = vst [vmem:[%s170 + $0x70] sm:$0xf] %v1954
      %2023 = vst [vmem:[%s170 + $0x74] sm:$0xf] %v1955
      %2024 = vst [vmem:[%s170 + $0x78] sm:$0xf] %v1956
      %2025 = vst [vmem:[%s170 + $0x7c] sm:$0xf] %v1957
      %2026 = vst [vmem:[%s170 + $0x80] sm:$0xf] %v1958
      %2027 = vst [vmem:[%s170 + $0x84] sm:$0xf] %v1959
      %p2028 = scmp.lt.s32.totalorder %s14, 1
      %s2029 = scalar_select %p2028, %s14, 1
      %s2030 = smul.addr %s2029, 34
      %s2031 = smul.addr %s2030, 4
      %s2032 = scalar_lea.vmem %s3, %s2031
      // Predicated region
      $region33: #{discriminator_forward.8} parent=31 // pred_check
        %p2033 = pneg %p100
      $region34: #{discriminator_forward.8} parent=31 // pred_check_branch
        %2035 = sbr.rel (%p2033) target = $region36
      $region35: #{discriminator_forward.8} parent=31 // pred_region
        _
      $region36: #{discriminator_forward.8} parent=31 // pred_fallthru
        _
    $region32: #{discriminator_forward.8} parent=5 // pred_fallthru
      _
    %p2036 = scmp.le.s32.totalorder 2, %s9
    // Predicated region
    $region37: #{discriminator_forward.8} parent=5 // pred_check
      %p2037 = pneg %p2036
    $region38: #{discriminator_forward.8} parent=5 // pred_check_branch
      %2039 = sbr.rel (%p2037) target = $region40
    $region39: #{discriminator_forward.8} parent=5 // pred_region
      %s2040 = ssub.s32 %s9, 2
      // Predicated region
      $region41: #{discriminator_forward.8} parent=39 // pred_check
        %p2041 = pneg %p106
      $region42: #{discriminator_forward.8} parent=39 // pred_check_branch
        %2043 = sbr.rel (%p2041) target = $region44
      $region43: #{discriminator_forward.8} parent=39 // pred_region
        %p2044 = scmp.lt.s32.totalorder %s15, 1
        %s2045 = scalar_select %p2044, %s15, 1
        %s2046 = smul.addr %s2045, 34
        %s2047 = smul.addr %s2046, 4
        %s2048 = scalar_lea.vmem %s3, %s2047
      $region44: #{discriminator_forward.8} parent=39 // pred_fallthru
        _
    $region40: #{discriminator_forward.8} parent=5 // pred_fallthru
      _
  $region6: #{discriminator_forward.8} parent=0 // loop_footer
    %s13 = sadd.s32 1, %s9
  $region7: #{discriminator_forward.8} parent=0 // loop_footer_branch
    %8 = sbr.rel target = $region3
  $region8: #{discriminator_forward.8} parent=0 // loop_exit
    _

// kernel: discriminator_forward.10
$region0: #{discriminator_forward.10}
  #allocation0 [shape = 'u32[]', space=smem, size = 0x4, offset = 0x4, fixed_abs, tag = 'smem constant byte address 0x4 - core index']
  #allocation1 [shape = 'u32[144,128]{1,0:T(1,128)}', space=vmem, size = 0x12000, scoped, tag = 'internal scratch']
  %s0 = inlined_call_operand.vmem [shape: bf16[2,64,128], index: 0, kind: input, shape index: {}]
  %s1 = inlined_call_operand.vmem [shape: bf16[2,64,128], index: 1, kind: output, shape index: {}]
  %s2 = sld [smem:[#allocation0]]
  $region37: #{discriminator_forward.10} parent=0
    _
  %s4 = ssub.s32 1, %s2
  %s5 = scalar_select 0, %s4, %s2
  loop: start=0, step=1, limit=4
  $region2: #{discriminator_forward.10} parent=0 // loop_pre_header
    _
  $region3: #{discriminator_forward.10} parent=0 // loop_header
    %s7 = sphi 0, %s11
    %p8 = scmp.ge.s32.totalorder %s7, 4
    %s14 = sphi 0, %s26
    %s15 = sphi 0, %s22
    %s16 = sphi 0, %s14
    %s17 = sphi 0, %s15
    %s18 = sphi 0, %s16
    %s19 = sphi 0, %s17
    %s31 = sphi 0, %s33
    %s34 = sphi 0, %s31
    %s35 = sphi 0, %s34
    %s51 = sphi 0, %s35
    %s59 = sphi 0, %s61
    %s62 = sphi 0, %s59
    %s63 = sphi 0, %s62
    %s79 = sphi 0, %s63
  $region4: #{discriminator_forward.10} parent=0 // loop_header_branch
    %10 = sbr.rel (%p8) target = $region8
  $region5: #{discriminator_forward.10} parent=0 // loop_body
    %s12 = ssub.s32 %s7, 1
    %s13 = ssub.s32 %s7, 2
    %s20 = sadd.s32 1, %s15
    %p21 = scmp.ge.s32.totalorder %s20, 1
    %s22 = scalar_select %p21, 0, %s20
    %s23 = sadd.s32 1, %s14
    %s24 = scalar_select %p21, %s23, %s14
    %p25 = scmp.ge.s32.totalorder %s24, 2
    %s26 = scalar_select %p25, 0, %s24
    %s27 = ssub.s32 %s14, %s26
    %s28 = ssub.s32 %s15, %s22
    %s29 = sor.u32 %s27, %s28
    %p30 = scmp.eq.s32.totalorder %s29, 0
    %s32 = sadd.s32 %s31, 1
    %s33 = scalar_select %p30, %s31, %s32
    %p36 = pneg %p30
    %p37 = scmp.eq.s32.totalorder %s7, 1
    %p38 = por %p36, %p37
    %p39 = scmp.ne.s32.totalorder %s31, %s34
    %p40 = scmp.eq.s32.totalorder %s7, 0
    %p41 = por %p39, %p40
    %p42 = scmp.ne.s32.totalorder %s31, %s34
    %p43 = scmp.eq.s32.totalorder %s12, 1
    %p44 = por %p42, %p43
    %p45 = scmp.ne.s32.totalorder %s34, %s35
    %p46 = scmp.eq.s32.totalorder %s12, 0
    %p47 = por %p45, %p46
    %p48 = scmp.ne.s32.totalorder %s34, %s35
    %p49 = scmp.eq.s32.totalorder %s13, 1
    %p50 = por %p48, %p49
    %p52 = scmp.ne.s32.totalorder %s35, %s51
    %p53 = scmp.eq.s32.totalorder %s13, 0
    %p54 = por %p52, %p53
    %s55 = ssub.s32 %s14, %s26
    %s56 = ssub.s32 %s15, %s22
    %s57 = sor.u32 %s55, %s56
    %p58 = scmp.eq.s32.totalorder %s57, 0
    %s60 = sadd.s32 %s59, 1
    %s61 = scalar_select %p58, %s59, %s60
    %p64 = pneg %p58
    %p65 = scmp.eq.s32.totalorder %s7, 1
    %p66 = por %p64, %p65
    %p67 = scmp.ne.s32.totalorder %s59, %s62
    %p68 = scmp.eq.s32.totalorder %s7, 0
    %p69 = por %p67, %p68
    %p70 = scmp.ne.s32.totalorder %s59, %s62
    %p71 = scmp.eq.s32.totalorder %s12, 1
    %p72 = por %p70, %p71
    %p73 = scmp.ne.s32.totalorder %s62, %s63
    %p74 = scmp.eq.s32.totalorder %s12, 0
    %p75 = por %p73, %p74
    %p76 = scmp.ne.s32.totalorder %s62, %s63
    %p77 = scmp.eq.s32.totalorder %s13, 1
    %p78 = por %p76, %p77
    %p80 = scmp.ne.s32.totalorder %s63, %s79
    %p81 = scmp.eq.s32.totalorder %s13, 0
    %p82 = por %p80, %p81
    %p83 = scmp.le.s32.totalorder 1, %s7
    %p84 = scmp.lt.s32.totalorder %s7, 3
    %p85 = pnand %p83, %p84
    %p86 = pneg %p85
    // Predicated region
    $region9: #{discriminator_forward.10} parent=5 // pred_check
      _
    $region10: #{discriminator_forward.10} parent=5 // pred_check_branch
      %88 = sbr.rel (%p85) target = $region12
    $region11: #{discriminator_forward.10} parent=5 // pred_region
      %s89 = ssub.s32 %s7, 1
    $region12: #{discriminator_forward.10} parent=5 // pred_fallthru
      _
    %p90 = scmp.lt.s32.totalorder %s7, 2
    // Predicated region
    $region13: #{discriminator_forward.10} parent=5 // pred_check
      %p91 = pneg %p90
    $region14: #{discriminator_forward.10} parent=5 // pred_check_branch
      %93 = sbr.rel (%p91) target = $region16
    $region15: #{discriminator_forward.10} parent=5 // pred_region
      // Predicated region
      $region17: #{discriminator_forward.10} parent=15 // pred_check
        %p94 = pneg %p41
      $region18: #{discriminator_forward.10} parent=15 // pred_check_branch
        %96 = sbr.rel (%p94) target = $region20
      $region19: #{discriminator_forward.10} parent=15 // pred_region
        %p97 = scmp.lt.s32.totalorder %s14, 1
        %s98 = scalar_select %p97, %s14, 1
        %p99 = scmp.lt.s32.totalorder %s15, 0
        %s100 = scalar_select %p99, %s15, 0
        %s101 = smul.addr %s98, 8
        %s102 = sadd.s32 %s100, %s101
        %s103 = smul.addr %s102, 4
        %s104 = scalar_lea.vmem %s0, %s103
      $region20: #{discriminator_forward.10} parent=15 // pred_fallthru
        _
    $region16: #{discriminator_forward.10} parent=5 // pred_fallthru
      _
    %p105 = scmp.le.s32.totalorder 1, %s7
    %p106 = scmp.lt.s32.totalorder %s7, 3
    %p107 = pnand %p105, %p106
    %p108 = pneg %p107
    // Predicated region
    $region21: #{discriminator_forward.10} parent=5 // pred_check
      _
    $region22: #{discriminator_forward.10} parent=5 // pred_check_branch
      %110 = sbr.rel (%p107) target = $region24
    $region23: #{discriminator_forward.10} parent=5 // pred_region
      %s111 = ssub.s32 %s7, 1
      %p112 = scmp.lt.s32.totalorder %s16, 1
      %s113 = scalar_select %p112, %s16, 1
      %p114 = scmp.lt.s32.totalorder %s17, 0
      %s115 = scalar_select %p114, %s17, 0
      %s116 = smul.addr %s113, 8
      %s117 = sadd.s32 %s115, %s116
      %s118 = smul.addr %s117, 4
      %s119 = scalar_lea.vmem %s0, %s118
      %p120 = pneg %p47
      %p121 = pneg %p44
      %p122 = pneg %p75
      %p123 = pneg %p72
      %p124 = scmp.lt.s32.totalorder %s16, 1
      %s125 = scalar_select %p124, %s16, 1
      %p126 = scmp.lt.s32.totalorder %s17, 0
      %s127 = scalar_select %p126, %s17, 0
      %s128 = smul.addr %s125, 8
      %s129 = sadd.s32 %s127, %s128
      %s130 = smul.addr %s129, 4
      %s131 = scalar_lea.vmem %s1, %s130
      %p132 = scmp.lt.s32.totalorder %s16, 1
      %s133 = scalar_select %p132, %s16, 1
      %p134 = scmp.lt.s32.totalorder %s17, 0
      %s135 = scalar_select %p134, %s17, 0
      %s136 = smul.addr %s133, 8
      %s137 = sadd.s32 %s135, %s136
      %s138 = smul.addr %s137, 4
      %s139 = scalar_lea.vmem %s0, %s138
      %p140 = scmp.lt.s32.totalorder %s16, 1
      %s141 = scalar_select %p140, %s16, 1
      %p142 = scmp.lt.s32.totalorder %s17, 0
      %s143 = scalar_select %p142, %s17, 0
      %s144 = smul.addr %s141, 8
      %s145 = sadd.s32 %s143, %s144
      %s146 = smul.addr %s145, 4
      %s147 = scalar_lea.vmem %s1, %s146
      %v148 = vld [vmem:[%s139] sm:$0xf]
      %v149 = vld [vmem:[%s139 + $0x4] sm:$0xf]
      %v150 = vld [vmem:[%s139 + $0x8] sm:$0xf]
      %v151 = vld [vmem:[%s139 + $0xc] sm:$0xf]
      %v152 = vld [vmem:[%s139 + $0x10] sm:$0xf]
      %v153 = vld [vmem:[%s139 + $0x14] sm:$0xf]
      %v154 = vld [vmem:[%s139 + $0x18] sm:$0xf]
      %v155 = vld [vmem:[%s139 + $0x1c] sm:$0xf]
      %v156 = vunpack.c.l.bf16 %v148
      %v157 = vunpack.c.l.bf16 %v149
      %v158 = vunpack.c.l.bf16 %v150
      %v159 = vunpack.c.l.bf16 %v151
      %v160 = vunpack.c.l.bf16 %v152
      %v161 = vunpack.c.l.bf16 %v153
      %v162 = vunpack.c.l.bf16 %v154
      %v163 = vunpack.c.l.bf16 %v155
      %v164 = vadd.f32 %v156, %v157
      %v165 = vadd.f32 %v164, %v158
      %v166 = vadd.f32 %v165, %v159
      %v167 = vadd.f32 %v166, %v160
      %v168 = vadd.f32 %v167, %v161
      %v169 = vadd.f32 %v168, %v162
      %v170 = vadd.f32 %v169, %v163
      %v171 = vrot.slane %v170, 4
      %v172 = vadd.f32 %v170, %v171
      %v173 = vrot.slane %v172, 2
      %v174 = vadd.f32 %v172, %v173
      %v175 = vrot.slane %v174, 1
      %v176 = vadd.f32 %v174, %v175
      %v177 = vrcp.pop 64.0
      %v178 = vmul.f32 %v176, %v177
      %v179 = vsub.f32 %v156, %v178
      %v180 = vsub.f32 %v157, %v178
      %v181 = vsub.f32 %v158, %v178
      %v182 = vsub.f32 %v159, %v178
      %v183 = vsub.f32 %v160, %v178
      %v184 = vsub.f32 %v161, %v178
      %v185 = vsub.f32 %v162, %v178
      %v186 = vsub.f32 %v163, %v178
      %v187 = vmul.f32 %v179, %v179
      %v188 = vmul.f32 %v180, %v180
      %v189 = vmul.f32 %v181, %v181
      %v190 = vmul.f32 %v182, %v182
      %v191 = vmul.f32 %v183, %v183
      %v192 = vmul.f32 %v184, %v184
      %v193 = vmul.f32 %v185, %v185
      %v194 = vmul.f32 %v186, %v186
      %v195 = vadd.f32 %v187, %v188
      %v196 = vadd.f32 %v195, %v189
      %v197 = vadd.f32 %v196, %v190
      %v198 = vadd.f32 %v197, %v191
      %v199 = vadd.f32 %v198, %v192
      %v200 = vadd.f32 %v199, %v193
      %v201 = vadd.f32 %v200, %v194
      %v202 = vrot.slane %v201, 4
      %v203 = vadd.f32 %v201, %v202
      %v204 = vrot.slane %v203, 2
      %v205 = vadd.f32 %v203, %v204
      %v206 = vrot.slane %v205, 1
      %v207 = vadd.f32 %v205, %v206
      %v208 = vmul.f32 %v207, %v177
      %v209 = vadd.f32 %v208, 1e-05
      %v210 = vrsqrt.pop %v209
      %v211 = vmul.f32 %v179, %v210
      %v212 = vmul.f32 %v180, %v210
      %v213 = vmul.f32 %v181, %v210
      %v214 = vmul.f32 %v182, %v210
      %v215 = vmul.f32 %v183, %v210
      %v216 = vmul.f32 %v184, %v210
      %v217 = vmul.f32 %v185, %v210
      %v218 = vmul.f32 %v186, %v210
      %vm219 = vcmp.ge.f32.partialorder %v211, 0.0
      %vm220 = vcmp.ge.f32.partialorder %v212, 0.0
      %vm221 = vcmp.ge.f32.partialorder %v213, 0.0
      %vm222 = vcmp.ge.f32.partialorder %v214, 0.0
      %vm223 = vcmp.ge.f32.partialorder %v215, 0.0
      %vm224 = vcmp.ge.f32.partialorder %v216, 0.0
      %vm225 = vcmp.ge.f32.partialorder %v217, 0.0
      %vm226 = vcmp.ge.f32.partialorder %v218, 0.0
      %v227 = vmul.f32 %v211, 0.2
      %v228 = vmul.f32 %v212, 0.2
      %v229 = vmul.f32 %v213, 0.2
      %v230 = vmul.f32 %v214, 0.2
      %v231 = vmul.f32 %v215, 0.2
      %v232 = vmul.f32 %v216, 0.2
      %v233 = vmul.f32 %v217, 0.2
      %v234 = vmul.f32 %v218, 0.2
      %v235 = vsel %vm219, %v211, %v227
      %v236 = vsel %vm220, %v212, %v228
      %v237 = vsel %vm221, %v213, %v229
      %v238 = vsel %vm222, %v214, %v230
      %v239 = vsel %vm223, %v215, %v231
      %v240 = vsel %vm224, %v216, %v232
      %v241 = vsel %vm225, %v217, %v233
      %v242 = vsel %vm226, %v218, %v234
      %v243 = vpack.c.bf16 %v236, %v235
      %v244 = vpack.c.bf16 %v238, %v237
      %v245 = vpack.c.bf16 %v240, %v239
      %v246 = vpack.c.bf16 %v242, %v241
      %v251 = vunpack.c.l.b16 %v243
      %v252 = vunpack.c.h.b16 %v243
      %v253 = vunpack.c.l.b16 %v244
      %v254 = vunpack.c.h.b16 %v244
      %v255 = vunpack.c.l.b16 %v245
      %v256 = vunpack.c.h.b16 %v245
      %v257 = vunpack.c.l.b16 %v246
      %v258 = vunpack.c.h.b16 %v246
      %v259 = vpack.c.b16 %v251, %v251
      %v260 = vpack.c.b16 %v252, %v252
      %v261 = vpack.c.b16 %v253, %v253
      %v262 = vpack.c.b16 %v254, %v254
      %v263 = vpack.c.b16 %v255, %v255
      %v264 = vpack.c.b16 %v256, %v256
      %v265 = vpack.c.b16 %v257, %v257
      %v266 = vpack.c.b16 %v258, %v258
      %275 = vst [vmem:[%s147] sm:$0xf] %v259
      %276 = vst [vmem:[%s147 + $0x4] sm:$0xf] %v260
      %277 = vst [vmem:[%s147 + $0x8] sm:$0xf] %v261
      %278 = vst [vmem:[%s147 + $0xc] sm:$0xf] %v262
      %279 = vst [vmem:[%s147 + $0x10] sm:$0xf] %v263
      %280 = vst [vmem:[%s147 + $0x14] sm:$0xf] %v264
      %281 = vst [vmem:[%s147 + $0x18] sm:$0xf] %v265
      %282 = vst [vmem:[%s147 + $0x1c] sm:$0xf] %v266
      %p283 = scmp.lt.s32.totalorder %s16, 1
      %s284 = scalar_select %p283, %s16, 1
      %p285 = scmp.lt.s32.totalorder %s17, 0
      %s286 = scalar_select %p285, %s17, 0
      %s287 = smul.addr %s284, 8
      %s288 = sadd.s32 %s286, %s287
      %s289 = smul.addr %s288, 4
      %s290 = scalar_lea.vmem %s1, %s289
      // Predicated region
      $region25: #{discriminator_forward.10} parent=23 // pred_check
        %p291 = pneg %p72
      $region26: #{discriminator_forward.10} parent=23 // pred_check_branch
        %293 = sbr.rel (%p291) target = $region28
      $region27: #{discriminator_forward.10} parent=23 // pred_region
        _
      $region28: #{discriminator_forward.10} parent=23 // pred_fallthru
        _
    $region24: #{discriminator_forward.10} parent=5 // pred_fallthru
      _
    %p294 = scmp.le.s32.totalorder 2, %s7
    // Predicated region
    $region29: #{discriminator_forward.10} parent=5 // pred_check
      %p295 = pneg %p294
    $region30: #{discriminator_forward.10} parent=5 // pred_check_branch
      %297 = sbr.rel (%p295) target = $region32
    $region31: #{discriminator_forward.10} parent=5 // pred_region
      %s298 = ssub.s32 %s7, 2
      // Predicated region
      $region33: #{discriminator_forward.10} parent=31 // pred_check
        %p299 = pneg %p78
      $region34: #{discriminator_forward.10} parent=31 // pred_check_branch
        %301 = sbr.rel (%p299) target = $region36
      $region35: #{discriminator_forward.10} parent=31 // pred_region
        %p302 = scmp.lt.s32.totalorder %s18, 1
        %s303 = scalar_select %p302, %s18, 1
        %p304 = scmp.lt.s32.totalorder %s19, 0
        %s305 = scalar_select %p304, %s19, 0
        %s306 = smul.addr %s303, 8
        %s307 = sadd.s32 %s305, %s306
        %s308 = smul.addr %s307, 4
        %s309 = scalar_lea.vmem %s1, %s308
      $region36: #{discriminator_forward.10} parent=31 // pred_fallthru
        _
    $region32: #{discriminator_forward.10} parent=5 // pred_fallthru
      _
  $region6: #{discriminator_forward.10} parent=0 // loop_footer
    %s11 = sadd.s32 1, %s7
  $region7: #{discriminator_forward.10} parent=0 // loop_footer_branch
    %6 = sbr.rel target = $region3
  $region8: #{discriminator_forward.10} parent=0 // loop_exit
    _

// kernel: discriminator_forward.9
$region0: #{discriminator_forward.9}
  #allocation0 [shape = 'u32[]', space=smem, size = 0x4, offset = 0x4, fixed_abs, tag = 'smem constant byte address 0x4 - core index']
  #allocation1 [shape = 'u32[144,128]{1,0:T(1,128)}', space=vmem, size = 0x12000, scoped, tag = 'internal scratch']
  %s0 = inlined_call_operand.vmem [shape: bf16[2,90,512], index: 0, kind: input, shape index: {}]
  %s1 = inlined_call_operand.vmem [shape: bf16[4,512,128], index: 1, kind: input, shape index: {}]
  %s2 = inlined_call_operand.vmem [shape: bf16[2,72,128], index: 2, kind: output, shape index: {}]
  %s3 = sld [smem:[#allocation0]]
  $region41: #{discriminator_forward.9} parent=0
    _
  %s5 = ssub.s32 1, %s3
  %s6 = scalar_select 0, %s5, %s3
  loop: start=0, step=1, limit=4
  $region2: #{discriminator_forward.9} parent=0 // loop_pre_header
    _
  $region3: #{discriminator_forward.9} parent=0 // loop_header
    %s8 = sphi 0, %s12
    %p9 = scmp.ge.s32.totalorder %s8, 4
    %s18 = sphi 0, %s20
    %s21 = sphi 0, %s18
    %s22 = sphi 0, %s21
    %s38 = sphi 0, %s22
    %s42 = sphi 0, %s42
    %s44 = sphi 0, %s42
    %s45 = sphi 0, %s44
    %s59 = sphi 0, %s45
    %s65 = sphi 0, %s67
    %s68 = sphi 0, %s65
    %s69 = sphi 0, %s68
    %s85 = sphi 0, %s69
  $region4: #{discriminator_forward.9} parent=0 // loop_header_branch
    %11 = sbr.rel (%p9) target = $region8
  $region5: #{discriminator_forward.9} parent=0 // loop_body
    %s13 = ssub.s32 %s8, 1
    %s14 = ssub.s32 %s8, 2
    %s15 = sadd.s32 %s8, 1
    %s16 = ssub.s32 %s8, %s15
    %p17 = scmp.eq.s32.totalorder %s16, 0
    %s19 = sadd.s32 %s18, 1
    %s20 = scalar_select %p17, %s18, %s19
    %p23 = pneg %p17
    %p24 = scmp.eq.s32.totalorder %s8, 1
    %p25 = por %p23, %p24
    %p26 = scmp.ne.s32.totalorder %s18, %s21
    %p27 = scmp.eq.s32.totalorder %s8, 0
    %p28 = por %p26, %p27
    %p29 = scmp.ne.s32.totalorder %s18, %s21
    %p30 = scmp.eq.s32.totalorder %s13, 1
    %p31 = por %p29, %p30
    %p32 = scmp.ne.s32.totalorder %s21, %s22
    %p33 = scmp.eq.s32.totalorder %s13, 0
    %p34 = por %p32, %p33
    %p35 = scmp.ne.s32.totalorder %s21, %s22
    %p36 = scmp.eq.s32.totalorder %s14, 1
    %p37 = por %p35, %p36
    %p39 = scmp.ne.s32.totalorder %s22, %s38
    %p40 = scmp.eq.s32.totalorder %s14, 0
    %p41 = por %p39, %p40
    %s43 = sadd.s32 %s42, 1
    %p46 = scmp.eq.s32.totalorder %s8, 1
    %p47 = scmp.ne.s32.totalorder %s42, %s44
    %p48 = scmp.eq.s32.totalorder %s8, 0
    %p49 = por %p47, %p48
    %p50 = scmp.ne.s32.totalorder %s42, %s44
    %p51 = scmp.eq.s32.totalorder %s13, 1
    %p52 = por %p50, %p51
    %p53 = scmp.ne.s32.totalorder %s44, %s45
    %p54 = scmp.eq.s32.totalorder %s13, 0
    %p55 = por %p53, %p54
    %p56 = scmp.ne.s32.totalorder %s44, %s45
    %p57 = scmp.eq.s32.totalorder %s14, 1
    %p58 = por %p56, %p57
    %p60 = scmp.ne.s32.totalorder %s45, %s59
    %p61 = scmp.eq.s32.totalorder %s14, 0
    %p62 = por %p60, %p61
    %s63 = ssub.s32 %s8, %s15
    %p64 = scmp.eq.s32.totalorder %s63, 0
    %s66 = sadd.s32 %s65, 1
    %s67 = scalar_select %p64, %s65, %s66
    %p70 = pneg %p64
    %p71 = scmp.eq.s32.totalorder %s8, 1
    %p72 = por %p70, %p71
    %p73 = scmp.ne.s32.totalorder %s65, %s68
    %p74 = scmp.eq.s32.totalorder %s8, 0
    %p75 = por %p73, %p74
    %p76 = scmp.ne.s32.totalorder %s65, %s68
    %p77 = scmp.eq.s32.totalorder %s13, 1
    %p78 = por %p76, %p77
    %p79 = scmp.ne.s32.totalorder %s68, %s69
    %p80 = scmp.eq.s32.totalorder %s13, 0
    %p81 = por %p79, %p80
    %p82 = scmp.ne.s32.totalorder %s68, %s69
    %p83 = scmp.eq.s32.totalorder %s14, 1
    %p84 = por %p82, %p83
    %p86 = scmp.ne.s32.totalorder %s69, %s85
    %p87 = scmp.eq.s32.totalorder %s14, 0
    %p88 = por %p86, %p87
    %p89 = scmp.le.s32.totalorder 1, %s8
    %p90 = scmp.lt.s32.totalorder %s8, 3
    %p91 = pnand %p89, %p90
    %p92 = pneg %p91
    // Predicated region
    $region9: #{discriminator_forward.9} parent=5 // pred_check
      _
    $region10: #{discriminator_forward.9} parent=5 // pred_check_branch
      %94 = sbr.rel (%p91) target = $region12
    $region11: #{discriminator_forward.9} parent=5 // pred_region
      %s95 = ssub.s32 %s8, 1
      // Predicated region
      $region13: #{discriminator_forward.9} parent=11 // pred_check
        %p96 = pneg %p55
      $region14: #{discriminator_forward.9} parent=11 // pred_check_branch
        %98 = sbr.rel (%p96) target = $region16
      $region15: #{discriminator_forward.9} parent=11 // pred_region
        _
      $region16: #{discriminator_forward.9} parent=11 // pred_fallthru
        _
    $region12: #{discriminator_forward.9} parent=5 // pred_fallthru
      _
    %p99 = scmp.lt.s32.totalorder %s8, 2
    // Predicated region
    $region17: #{discriminator_forward.9} parent=5 // pred_check
      %p100 = pneg %p99
    $region18: #{discriminator_forward.9} parent=5 // pred_check_branch
      %102 = sbr.rel (%p100) target = $region20
    $region19: #{discriminator_forward.9} parent=5 // pred_region
      // Predicated region
      $region21: #{discriminator_forward.9} parent=19 // pred_check
        %p103 = pneg %p28
      $region22: #{discriminator_forward.9} parent=19 // pred_check_branch
        %105 = sbr.rel (%p103) target = $region24
      $region23: #{discriminator_forward.9} parent=19 // pred_region
        %p106 = scmp.lt.s32.totalorder %s8, 1
        %s107 = scalar_select %p106, %s8, 1
        %s108 = smul.addr %s107, 48
        %s109 = smul.addr %s108, 4
        %s110 = scalar_lea.vmem %s0, %s109
      $region24: #{discriminator_forward.9} parent=19 // pred_fallthru
        _
    $region20: #{discriminator_forward.9} parent=5 // pred_fallthru
      _
    %p111 = scmp.le.s32.totalorder 1, %s8
    %p112 = scmp.lt.s32.totalorder %s8, 3
    %p113 = pnand %p111, %p112
    %p114 = pneg %p113
    // Predicated region
    $region25: #{discriminator_forward.9} parent=5 // pred_check
      _
    $region26: #{discriminator_forward.9} parent=5 // pred_check_branch
      %116 = sbr.rel (%p113) target = $region28
    $region27: #{discriminator_forward.9} parent=5 // pred_region
      %s117 = ssub.s32 %s8, 1
      %p118 = scmp.lt.s32.totalorder %s13, 1
      %s119 = scalar_select %p118, %s13, 1
      %s120 = smul.addr %s119, 48
      %s121 = smul.addr %s120, 4
      %s122 = scalar_lea.vmem %s0, %s121
      %p123 = pneg %p34
      %p124 = pneg %p31
      %p125 = pneg %p55
      %p126 = pneg %p52
      %p127 = pneg %p81
      %p128 = pneg %p78
      %p129 = scmp.lt.s32.totalorder %s13, 1
      %s130 = scalar_select %p129, %s13, 1
      %s131 = smul.addr %s130, 9
      %s132 = smul.addr %s131, 4
      %s133 = scalar_lea.vmem %s2, %s132
      %p134 = scmp.lt.s32.totalorder %s13, 1
      %s135 = scalar_select %p134, %s13, 1
      %s136 = smul.addr %s135, 48
      %s137 = smul.addr %s136, 4
      %s138 = scalar_lea.vmem %s0, %s137
      %p139 = scmp.lt.s32.totalorder %s13, 1
      %s140 = scalar_select %p139, %s13, 1
      %s141 = smul.addr %s140, 9
      %s142 = smul.addr %s141, 4
      %s143 = scalar_lea.vmem %s2, %s142
      %v145 = vld [vmem:[%s138] sm:$0xff]
      %v146 = vld [vmem:[%s138 + $0x8] sm:$0xff]
      %v147 = vld [vmem:[%s138 + $0x10] sm:$0xff]
      %v148 = vld [vmem:[%s138 + $0x18] sm:$0xff]
      %v149 = vld [vmem:[%s138 + $0x20] sm:$0xff]
      %v150 = vld [vmem:[%s138 + $0x28] sm:$0xff]
      %v151 = vld [vmem:[%s138 + $0x30] sm:$0xff]
      %v152 = vld [vmem:[%s138 + $0x38] sm:$0xff]
      %v153 = vld [vmem:[%s138 + $0x40] sm:$0xff]
      %v154 = vld [vmem:[%s138 + $0x48] sm:$0xff]
      %v155 = vld [vmem:[%s138 + $0x50] sm:$0xff]
      %v156 = vld [vmem:[%s138 + $0x58] sm:$0xff]
      %v157 = vld [vmem:[%s138 + $0x60] sm:$0xff]
      %v158 = vld [vmem:[%s138 + $0x68] sm:$0xff]
      %v159 = vld [vmem:[%s138 + $0x70] sm:$0xff]
      %v160 = vld [vmem:[%s138 + $0x78] sm:$0xff]
      %v161 = vld [vmem:[%s138 + $0x80] sm:$0xff]
      %v162 = vld [vmem:[%s138 + $0x88] sm:$0xff]
      %v163 = vld [vmem:[%s1] sm:$0xf]
      %v164 = vld [vmem:[%s1 + $0x4] sm:$0xf]
      %v165 = vld [vmem:[%s1 + $0x8] sm:$0xf]
      %v166 = vld [vmem:[%s1 + $0xc] sm:$0xf]
      %v167 = vld [vmem:[%s1 + $0x10] sm:$0xf]
      %v168 = vld [vmem:[%s1 + $0x14] sm:$0xf]
      %v169 = vld [vmem:[%s1 + $0x18] sm:$0xf]
      %v170 = vld [vmem:[%s1 + $0x1c] sm:$0xf]
      %v171 = vld [vmem:[%s1 + $0x20] sm:$0xf]
      %v172 = vld [vmem:[%s1 + $0x24] sm:$0xf]
      %v173 = vld [vmem:[%s1 + $0x28] sm:$0xf]
      %v174 = vld [vmem:[%s1 + $0x2c] sm:$0xf]
      %v175 = vld [vmem:[%s1 + $0x30] sm:$0xf]
      %v176 = vld [vmem:[%s1 + $0x34] sm:$0xf]
      %v177 = vld [vmem:[%s1 + $0x38] sm:$0xf]
      %v178 = vld [vmem:[%s1 + $0x3c] sm:$0xf]
      %v179 = vld [vmem:[%s1 + $0x40] sm:$0xf]
      %v180 = vld [vmem:[%s1 + $0x44] sm:$0xf]
      %v181 = vld [vmem:[%s1 + $0x48] sm:$0xf]
      %v182 = vld [vmem:[%s1 + $0x4c] sm:$0xf]
      %v183 = vld [vmem:[%s1 + $0x50] sm:$0xf]
      %v184 = vld [vmem:[%s1 + $0x54] sm:$0xf]
      %v185 = vld [vmem:[%s1 + $0x58] sm:$0xf]
      %v186 = vld [vmem:[%s1 + $0x5c] sm:$0xf]
      %v187 = vld [vmem:[%s1 + $0x60] sm:$0xf]
      %v188 = vld [vmem:[%s1 + $0x64] sm:$0xf]
      %v189 = vld [vmem:[%s1 + $0x68] sm:$0xf]
      %v190 = vld [vmem:[%s1 + $0x6c] sm:$0xf]
      %v191 = vld [vmem:[%s1 + $0x70] sm:$0xf]
      %v192 = vld [vmem:[%s1 + $0x74] sm:$0xf]
      %v193 = vld [vmem:[%s1 + $0x78] sm:$0xf]
      %v194 = vld [vmem:[%s1 + $0x7c] sm:$0xf]
      %v195 = vld [vmem:[%s1 + $0x80] sm:$0xf]
      %v196 = vld [vmem:[%s1 + $0x84] sm:$0xf]
      %v197 = vld [vmem:[%s1 + $0x88] sm:$0xf]
      %v198 = vld [vmem:[%s1 + $0x8c] sm:$0xf]
      %v199 = vld [vmem:[%s1 + $0x90] sm:$0xf]
      %v200 = vld [vmem:[%s1 + $0x94] sm:$0xf]
      %v201 = vld [vmem:[%s1 + $0x98] sm:$0xf]
      %v202 = vld [vmem:[%s1 + $0x9c] sm:$0xf]
      %v203 = vld [vmem:[%s1 + $0xa0] sm:$0xf]
      %v204 = vld [vmem:[%s1 + $0xa4] sm:$0xf]
      %v205 = vld [vmem:[%s1 + $0xa8] sm:$0xf]
      %v206 = vld [vmem:[%s1 + $0xac] sm:$0xf]
      %v207 = vld [vmem:[%s1 + $0xb0] sm:$0xf]
      %v208 = vld [vmem:[%s1 + $0xb4] sm:$0xf]
      %v209 = vld [vmem:[%s1 + $0xb8] sm:$0xf]
      %v210 = vld [vmem:[%s1 + $0xbc] sm:$0xf]
      %v211 = vld [vmem:[%s1 + $0xc0] sm:$0xf]
      %v212 = vld [vmem:[%s1 + $0xc4] sm:$0xf]
      %v213 = vld [vmem:[%s1 + $0xc8] sm:$0xf]
      %v214 = vld [vmem:[%s1 + $0xcc] sm:$0xf]
      %v215 = vld [vmem:[%s1 + $0xd0] sm:$0xf]
      %v216 = vld [vmem:[%s1 + $0xd4] sm:$0xf]
      %v217 = vld [vmem:[%s1 + $0xd8] sm:$0xf]
      %v218 = vld [vmem:[%s1 + $0xdc] sm:$0xf]
      %v219 = vld [vmem:[%s1 + $0xe0] sm:$0xf]
      %v220 = vld [vmem:[%s1 + $0xe4] sm:$0xf]
      %v221 = vld [vmem:[%s1 + $0xe8] sm:$0xf]
      %v222 = vld [vmem:[%s1 + $0xec] sm:$0xf]
      %v223 = vld [vmem:[%s1 + $0xf0] sm:$0xf]
      %v224 = vld [vmem:[%s1 + $0xf4] sm:$0xf]
      %v225 = vld [vmem:[%s1 + $0xf8] sm:$0xf]
      %v226 = vld [vmem:[%s1 + $0xfc] sm:$0xf]
      %v227 = vld [vmem:[%s138 + $0x90] sm:$0x11]
      %v228 = vld [vmem:[%s138 + $0x98] sm:$0x11]
      %s229 = scalar_lea.vmem %s1, 256
      %v230 = vld [vmem:[%s229] sm:$0xf]
      %v231 = vld [vmem:[%s229 + $0x4] sm:$0xf]
      %v232 = vld [vmem:[%s229 + $0x8] sm:$0xf]
      %v233 = vld [vmem:[%s229 + $0xc] sm:$0xf]
      %v234 = vld [vmem:[%s229 + $0x10] sm:$0xf]
      %v235 = vld [vmem:[%s229 + $0x14] sm:$0xf]
      %v236 = vld [vmem:[%s229 + $0x18] sm:$0xf]
      %v237 = vld [vmem:[%s229 + $0x1c] sm:$0xf]
      %v238 = vld [vmem:[%s229 + $0x20] sm:$0xf]
      %v239 = vld [vmem:[%s229 + $0x24] sm:$0xf]
      %v240 = vld [vmem:[%s229 + $0x28] sm:$0xf]
      %v241 = vld [vmem:[%s229 + $0x2c] sm:$0xf]
      %v242 = vld [vmem:[%s229 + $0x30] sm:$0xf]
      %v243 = vld [vmem:[%s229 + $0x34] sm:$0xf]
      %v244 = vld [vmem:[%s229 + $0x38] sm:$0xf]
      %v245 = vld [vmem:[%s229 + $0x3c] sm:$0xf]
      %v246 = vld [vmem:[%s229 + $0x40] sm:$0xf]
      %v247 = vld [vmem:[%s229 + $0x44] sm:$0xf]
      %v248 = vld [vmem:[%s229 + $0x48] sm:$0xf]
      %v249 = vld [vmem:[%s229 + $0x4c] sm:$0xf]
      %v250 = vld [vmem:[%s229 + $0x50] sm:$0xf]
      %v251 = vld [vmem:[%s229 + $0x54] sm:$0xf]
      %v252 = vld [vmem:[%s229 + $0x58] sm:$0xf]
      %v253 = vld [vmem:[%s229 + $0x5c] sm:$0xf]
      %v254 = vld [vmem:[%s229 + $0x60] sm:$0xf]
      %v255 = vld [vmem:[%s229 + $0x64] sm:$0xf]
      %v256 = vld [vmem:[%s229 + $0x68] sm:$0xf]
      %v257 = vld [vmem:[%s229 + $0x6c] sm:$0xf]
      %v258 = vld [vmem:[%s229 + $0x70] sm:$0xf]
      %v259 = vld [vmem:[%s229 + $0x74] sm:$0xf]
      %v260 = vld [vmem:[%s229 + $0x78] sm:$0xf]
      %v261 = vld [vmem:[%s229 + $0x7c] sm:$0xf]
      %v262 = vld [vmem:[%s229 + $0x80] sm:$0xf]
      %v263 = vld [vmem:[%s229 + $0x84] sm:$0xf]
      %v264 = vld [vmem:[%s229 + $0x88] sm:$0xf]
      %v265 = vld [vmem:[%s229 + $0x8c] sm:$0xf]
      %v266 = vld [vmem:[%s229 + $0x90] sm:$0xf]
      %v267 = vld [vmem:[%s229 + $0x94] sm:$0xf]
      %v268 = vld [vmem:[%s229 + $0x98] sm:$0xf]
      %v269 = vld [vmem:[%s229 + $0x9c] sm:$0xf]
      %v270 = vld [vmem:[%s229 + $0xa0] sm:$0xf]
      %v271 = vld [vmem:[%s229 + $0xa4] sm:$0xf]
      %v272 = vld [vmem:[%s229 + $0xa8] sm:$0xf]
      %v273 = vld [vmem:[%s229 + $0xac] sm:$0xf]
      %v274 = vld [vmem:[%s229 + $0xb0] sm:$0xf]
      %v275 = vld [vmem:[%s229 + $0xb4] sm:$0xf]
      %v276 = vld [vmem:[%s229 + $0xb8] sm:$0xf]
      %v277 = vld [vmem:[%s229 + $0xbc] sm:$0xf]
      %v278 = vld [vmem:[%s229 + $0xc0] sm:$0xf]
      %v279 = vld [vmem:[%s229 + $0xc4] sm:$0xf]
      %v280 = vld [vmem:[%s229 + $0xc8] sm:$0xf]
      %v281 = vld [vmem:[%s229 + $0xcc] sm:$0xf]
      %v282 = vld [vmem:[%s229 + $0xd0] sm:$0xf]
      %v283 = vld [vmem:[%s229 + $0xd4] sm:$0xf]
      %v284 = vld [vmem:[%s229 + $0xd8] sm:$0xf]
      %v285 = vld [vmem:[%s229 + $0xdc] sm:$0xf]
      %v286 = vld [vmem:[%s229 + $0xe0] sm:$0xf]
      %v287 = vld [vmem:[%s229 + $0xe4] sm:$0xf]
      %v288 = vld [vmem:[%s229 + $0xe8] sm:$0xf]
      %v289 = vld [vmem:[%s229 + $0xec] sm:$0xf]
      %v290 = vld [vmem:[%s229 + $0xf0] sm:$0xf]
      %v291 = vld [vmem:[%s229 + $0xf4] sm:$0xf]
      %v292 = vld [vmem:[%s229 + $0xf8] sm:$0xf]
      %v293 = vld [vmem:[%s229 + $0xfc] sm:$0xf]
      %v314 = vunpack.c.l.b16 %v145
      %v315 = vunpack.c.h.b16 %v145
      %v316 = vunpack.c.l.b16 %v146
      %v317 = vunpack.c.h.b16 %v146
      %v318 = vunpack.c.l.b16 %v147
      %v319 = vunpack.c.h.b16 %v147
      %v320 = vunpack.c.l.b16 %v148
      %v321 = vunpack.c.h.b16 %v148
      %v322 = vunpack.c.l.b16 %v149
      %v323 = vunpack.c.h.b16 %v149
      %v324 = vunpack.c.l.b16 %v150
      %v325 = vunpack.c.h.b16 %v150
      %v326 = vunpack.c.l.b16 %v151
      %v327 = vunpack.c.h.b16 %v151
      %v328 = vunpack.c.l.b16 %v152
      %v329 = vunpack.c.h.b16 %v152
      %v330 = vunpack.c.l.b16 %v153
      %v331 = vunpack.c.h.b16 %v153
      %v332 = vunpack.c.l.b16 %v154
      %v333 = vunpack.c.h.b16 %v154
      %v334 = vunpack.c.l.b16 %v155
      %v335 = vunpack.c.h.b16 %v155
      %v336 = vunpack.c.l.b16 %v156
      %v337 = vunpack.c.h.b16 %v156
      %v338 = vunpack.c.l.b16 %v157
      %v339 = vunpack.c.h.b16 %v157
      %v340 = vunpack.c.l.b16 %v158
      %v341 = vunpack.c.h.b16 %v158
      %v342 = vunpack.c.l.b16 %v159
      %v343 = vunpack.c.h.b16 %v159
      %v344 = vunpack.c.l.b16 %v160
      %v345 = vunpack.c.h.b16 %v160
      %v346 = vunpack.c.l.b16 %v161
      %v347 = vunpack.c.h.b16 %v161
      %v348 = vunpack.c.l.b16 %v162
      %v349 = vunpack.c.h.b16 %v162
      %v350 = vunpack.c.l.b16 %v227
      %v351 = vunpack.c.h.b16 %v227
      %v352 = vunpack.c.l.b16 %v228
      %v353 = vunpack.c.h.b16 %v228
      %v354 = vpack.c.b16 %v318, %v314
      %v355 = vpack.c.b16 %v319, %v315
      %v356 = vpack.c.b16 %v320, %v316
      %v357 = vpack.c.b16 %v321, %v317
      %v358 = vpack.c.b16 %v326, %v322
      %v359 = vpack.c.b16 %v327, %v323
      %v360 = vpack.c.b16 %v328, %v324
      %v361 = vpack.c.b16 %v329, %v325
      %v362 = vpack.c.b16 %v334, %v330
      %v363 = vpack.c.b16 %v335, %v331
      %v364 = vpack.c.b16 %v336, %v332
      %v365 = vpack.c.b16 %v337, %v333
      %v366 = vpack.c.b16 %v342, %v338
      %v367 = vpack.c.b16 %v343, %v339
      %v368 = vpack.c.b16 %v344, %v340
      %v369 = vpack.c.b16 %v345, %v341
      %v370 = vpack.c.b16 %v350, %v346
      %v371 = vpack.c.b16 %v351, %v347
      %v372 = vpack.c.b16 %v352, %v348
      %v373 = vpack.c.b16 %v353, %v349
      %vm374 = vsmask.f32 7424
      %v376 = vshrl.u32 %v354, 16
      %v378 = vshll.u32 %v354, 16
      %v380 = vrot.slane %v378, 1
      %v381 = vor.u32 %v376, %v380
      %v383 = vshll.u32 %v358, 16
      %v385 = vrot.slane %v383, 1
      %v386 = vsel %vm374, %v381, %v385
      %v388 = vshrl.u32 %v355, 16
      %v390 = vshll.u32 %v355, 16
      %v392 = vrot.slane %v390, 1
      %v393 = vor.u32 %v388, %v392
      %v395 = vshll.u32 %v359, 16
      %v397 = vrot.slane %v395, 1
      %v398 = vsel %vm374, %v393, %v397
      %v400 = vshrl.u32 %v356, 16
      %v402 = vshll.u32 %v356, 16
      %v404 = vrot.slane %v402, 1
      %v405 = vor.u32 %v400, %v404
      %v407 = vshll.u32 %v360, 16
      %v409 = vrot.slane %v407, 1
      %v410 = vsel %vm374, %v405, %v409
      %v412 = vshrl.u32 %v357, 16
      %v414 = vshll.u32 %v357, 16
      %v416 = vrot.slane %v414, 1
      %v417 = vor.u32 %v412, %v416
      %v419 = vshll.u32 %v361, 16
      %v421 = vrot.slane %v419, 1
      %v422 = vsel %vm374, %v417, %v421
      %v423 = vshrl.u32 %v358, 16
      %v425 = vor.u32 %v423, %v385
      %v427 = vshll.u32 %v362, 16
      %v429 = vrot.slane %v427, 1
      %v430 = vsel %vm374, %v425, %v429
      %v431 = vshrl.u32 %v359, 16
      %v433 = vor.u32 %v431, %v397
      %v435 = vshll.u32 %v363, 16
      %v437 = vrot.slane %v435, 1
      %v438 = vsel %vm374, %v433, %v437
      %v439 = vshrl.u32 %v360, 16
      %v441 = vor.u32 %v439, %v409
      %v443 = vshll.u32 %v364, 16
      %v445 = vrot.slane %v443, 1
      %v446 = vsel %vm374, %v441, %v445
      %v447 = vshrl.u32 %v361, 16
      %v449 = vor.u32 %v447, %v421
      %v451 = vshll.u32 %v365, 16
      %v453 = vrot.slane %v451, 1
      %v454 = vsel %vm374, %v449, %v453
      %v455 = vshrl.u32 %v362, 16
      %v457 = vor.u32 %v455, %v429
      %v459 = vshll.u32 %v366, 16
      %v461 = vrot.slane %v459, 1
      %v462 = vsel %vm374, %v457, %v461
      %v463 = vshrl.u32 %v363, 16
      %v465 = vor.u32 %v463, %v437
      %v467 = vshll.u32 %v367, 16
      %v469 = vrot.slane %v467, 1
      %v470 = vsel %vm374, %v465, %v469
      %v471 = vshrl.u32 %v364, 16
      %v473 = vor.u32 %v471, %v445
      %v475 = vshll.u32 %v368, 16
      %v477 = vrot.slane %v475, 1
      %v478 = vsel %vm374, %v473, %v477
      %v479 = vshrl.u32 %v365, 16
      %v481 = vor.u32 %v479, %v453
      %v483 = vshll.u32 %v369, 16
      %v485 = vrot.slane %v483, 1
      %v486 = vsel %vm374, %v481, %v485
      %v487 = vshrl.u32 %v366, 16
      %v489 = vor.u32 %v487, %v461
      %v491 = vshll.u32 %v370, 16
      %v493 = vrot.slane %v491, 1
      %v494 = vsel %vm374, %v489, %v493
      %v495 = vshrl.u32 %v367, 16
      %v497 = vor.u32 %v495, %v469
      %v499 = vshll.u32 %v371, 16
      %v501 = vrot.slane %v499, 1
      %v502 = vsel %vm374, %v497, %v501
      %v503 = vshrl.u32 %v368, 16
      %v505 = vor.u32 %v503, %v477
      %v507 = vshll.u32 %v372, 16
      %v509 = vrot.slane %v507, 1
      %v510 = vsel %vm374, %v505, %v509
      %v511 = vshrl.u32 %v369, 16
      %v513 = vor.u32 %v511, %v485
      %v515 = vshll.u32 %v373, 16
      %v517 = vrot.slane %v515, 1
      %v518 = vsel %vm374, %v513, %v517
      %v519 = vshrl.u32 %v370, 16
      %v521 = vor.u32 %v519, %v493
      %v522 = vshrl.u32 %v371, 16
      %v524 = vor.u32 %v522, %v501
      %v525 = vshrl.u32 %v372, 16
      %v527 = vor.u32 %v525, %v509
      %v528 = vshrl.u32 %v373, 16
      %v530 = vor.u32 %v528, %v517
      %v615 = vunpack.c.l.b16 %v230
      %v616 = vunpack.c.l.b16 %v231
      %v617 = vunpack.c.l.b16 %v232
      %v618 = vunpack.c.l.b16 %v233
      %v619 = vunpack.c.l.b16 %v234
      %v620 = vunpack.c.l.b16 %v235
      %v621 = vunpack.c.l.b16 %v236
      %v622 = vunpack.c.l.b16 %v237
      %v623 = vunpack.c.l.b16 %v238
      %v624 = vunpack.c.l.b16 %v239
      %v625 = vunpack.c.l.b16 %v240
      %v626 = vunpack.c.l.b16 %v241
      %v627 = vunpack.c.l.b16 %v242
      %v628 = vunpack.c.l.b16 %v243
      %v629 = vunpack.c.l.b16 %v244
      %v630 = vunpack.c.l.b16 %v245
      %v631 = vunpack.c.l.b16 %v246
      %v632 = vunpack.c.l.b16 %v247
      %v633 = vunpack.c.l.b16 %v248
      %v634 = vunpack.c.l.b16 %v249
      %v635 = vunpack.c.l.b16 %v250
      %v636 = vunpack.c.l.b16 %v251
      %v637 = vunpack.c.l.b16 %v252
      %v638 = vunpack.c.l.b16 %v253
      %v639 = vunpack.c.l.b16 %v254
      %v640 = vunpack.c.l.b16 %v255
      %v641 = vunpack.c.l.b16 %v256
      %v642 = vunpack.c.l.b16 %v257
      %v643 = vunpack.c.l.b16 %v258
      %v644 = vunpack.c.l.b16 %v259
      %v645 = vunpack.c.l.b16 %v260
      %v646 = vunpack.c.l.b16 %v261
      %v647 = vunpack.c.l.b16 %v262
      %v648 = vunpack.c.l.b16 %v263
      %v649 = vunpack.c.l.b16 %v264
      %v650 = vunpack.c.l.b16 %v265
      %v651 = vunpack.c.l.b16 %v266
      %v652 = vunpack.c.l.b16 %v267
      %v653 = vunpack.c.l.b16 %v268
      %v654 = vunpack.c.l.b16 %v269
      %v655 = vunpack.c.l.b16 %v270
      %v656 = vunpack.c.l.b16 %v271
      %v657 = vunpack.c.l.b16 %v272
      %v658 = vunpack.c.l.b16 %v273
      %v659 = vunpack.c.l.b16 %v274
      %v660 = vunpack.c.l.b16 %v275
      %v661 = vunpack.c.l.b16 %v276
      %v662 = vunpack.c.l.b16 %v277
      %v663 = vunpack.c.l.b16 %v278
      %v664 = vunpack.c.l.b16 %v279
      %v665 = vunpack.c.l.b16 %v280
      %v666 = vunpack.c.l.b16 %v281
      %v667 = vunpack.c.l.b16 %v282
      %v668 = vunpack.c.l.b16 %v283
      %v669 = vunpack.c.l.b16 %v284
      %v670 = vunpack.c.l.b16 %v285
      %v671 = vunpack.c.l.b16 %v286
      %v672 = vunpack.c.l.b16 %v287
      %v673 = vunpack.c.l.b16 %v288
      %v674 = vunpack.c.l.b16 %v289
      %v675 = vunpack.c.l.b16 %v290
      %v676 = vunpack.c.l.b16 %v291
      %v677 = vunpack.c.l.b16 %v292
      %v678 = vunpack.c.l.b16 %v293
      %v679 = vpack.c.b16 %v616, %v615
      %v680 = vpack.c.b16 %v618, %v617
      %v681 = vpack.c.b16 %v620, %v619
      %v682 = vpack.c.b16 %v622, %v621
      %v683 = vpack.c.b16 %v624, %v623
      %v684 = vpack.c.b16 %v626, %v625
      %v685 = vpack.c.b16 %v628, %v627
      %v686 = vpack.c.b16 %v630, %v629
      %v687 = vpack.c.b16 %v632, %v631
      %v688 = vpack.c.b16 %v634, %v633
      %v689 = vpack.c.b16 %v636, %v635
      %v690 = vpack.c.b16 %v638, %v637
      %v691 = vpack.c.b16 %v640, %v639
      %v692 = vpack.c.b16 %v642, %v641
      %v693 = vpack.c.b16 %v644, %v643
      %v694 = vpack.c.b16 %v646, %v645
      %v695 = vpack.c.b16 %v648, %v647
      %v696 = vpack.c.b16 %v650, %v649
      %v697 = vpack.c.b16 %v652, %v651
      %v698 = vpack.c.b16 %v654, %v653
      %v699 = vpack.c.b16 %v656, %v655
      %v700 = vpack.c.b16 %v658, %v657
      %v701 = vpack.c.b16 %v660, %v659
      %v702 = vpack.c.b16 %v662, %v661
      %v703 = vpack.c.b16 %v664, %v663
      %v704 = vpack.c.b16 %v666, %v665
      %v705 = vpack.c.b16 %v668, %v667
      %v706 = vpack.c.b16 %v670, %v669
      %v707 = vpack.c.b16 %v672, %v671
      %v708 = vpack.c.b16 %v674, %v673
      %v709 = vpack.c.b16 %v676, %v675
      %v710 = vpack.c.b16 %v678, %v677
      %743 = vmatprep.subr.bf16.mxu0 0
      %744 = vmatpush1.bf16.msra.mxu0 %v686
      %745 = vmatprep.subr.bf16.mxu0 0
      %746 = vmatpush1.bf16.msra.mxu0 %v685
      %747 = vmatprep.subr.bf16.mxu0 0
      %748 = vmatpush1.bf16.msra.mxu0 %v684
      %749 = vmatprep.subr.bf16.mxu0 0
      %750 = vmatpush1.bf16.msra.mxu0 %v683
      %751 = vmatprep.subr.bf16.mxu0 0
      %752 = vmatpush1.bf16.msra.mxu0 %v682
      %753 = vmatprep.subr.bf16.mxu0 0
      %754 = vmatpush1.bf16.msra.mxu0 %v681
      %755 = vmatprep.subr.bf16.mxu0 0
      %756 = vmatpush1.bf16.msra.mxu0 %v680
      %757 = vmatprep.subr.bf16.mxu0 0
      %758 = vmatpush1.bf16.msra.mxu0 %v679
      %759 = vmatprep.subr.bf16.mxu0 0
      %760 = vmatpush2.bf16.msra.mxu0 %v694
      %761 = vmatprep.subr.bf16.mxu0 0
      %762 = vmatpush2.bf16.msra.mxu0 %v693
      %763 = vmatprep.subr.bf16.mxu0 0
      %764 = vmatpush2.bf16.msra.mxu0 %v692
      %765 = vmatprep.subr.bf16.mxu0 0
      %766 = vmatpush2.bf16.msra.mxu0 %v691
      %767 = vmatprep.subr.bf16.mxu0 0
      %768 = vmatpush2.bf16.msra.mxu0 %v690
      %769 = vmatprep.subr.bf16.mxu0 0
      %770 = vmatpush2.bf16.msra.mxu0 %v689
      %771 = vmatprep.subr.bf16.mxu0 0
      %772 = vmatpush2.bf16.msra.mxu0 %v688
      %773 = vmatprep.subr.bf16.mxu0 0
      %774 = vmatpush2.bf16.msra.mxu0 %v687
      %775 = vmatprep.mubr.bf16.mxu0 %v398
      %776 = vmatmul.mubr.bf16.gmra.mxu0 %v386
      %v777 = vpop.f32.mrf.mxu0
      %v778 = vadd.f32 0.0, %v777
      %v779 = vpop.f32.mrf.mxu0
      %v780 = vpop.f32.mrf.mxu0
      %v781 = vadd.f32 0.0, %v780
      %v782 = vpop.f32.mrf.mxu0
      %783 = vmatprep.mubr.bf16.mxu0 %v438
      %784 = vmatmul.mubr.bf16.gmra.mxu0 %v430
      %v785 = vpop.f32.mrf.mxu0
      %v786 = vadd.f32 0.0, %v785
      %v787 = vpop.f32.mrf.mxu0
      %v788 = vpop.f32.mrf.mxu0
      %v789 = vadd.f32 0.0, %v788
      %v790 = vpop.f32.mrf.mxu0
      %791 = vmatprep.mubr.bf16.mxu0 %v470
      %792 = vmatmul.mubr.bf16.gmra.mxu0 %v462
      %v793 = vpop.f32.mrf.mxu0
      %v794 = vadd.f32 0.0, %v793
      %v795 = vpop.f32.mrf.mxu0
      %v796 = vpop.f32.mrf.mxu0
      %v797 = vadd.f32 0.0, %v796
      %v798 = vpop.f32.mrf.mxu0
      %799 = vmatprep.mubr.bf16.mxu0 %v502
      %800 = vmatmul.mubr.bf16.gmra.mxu0 %v494
      %v801 = vpop.f32.mrf.mxu0
      %v802 = vadd.f32 0.0, %v801
      %v803 = vpop.f32.mrf.mxu0
      %v804 = vpop.f32.mrf.mxu0
      %v805 = vadd.f32 0.0, %v804
      %v806 = vpop.f32.mrf.mxu0
      %807 = vmatprep.mubr.bf16.mxu0 %v524
      %808 = vmatmul.mubr.bf16.gmra.mxu0 %v521
      %v809 = vpop.f32.mrf.mxu0
      %v810 = vadd.f32 0.0, %v809
      %v811 = vpop.f32.mrf.mxu0
      %v812 = vpop.f32.mrf.mxu0
      %v813 = vpop.f32.mrf.mxu0
      %814 = vdwg.mxu0
      %815 = vmatprep.subr.bf16.mxu0 0
      %816 = vmatpush1.bf16.msra.mxu0 %v702
      %817 = vmatprep.subr.bf16.mxu0 0
      %818 = vmatpush1.bf16.msra.mxu0 %v701
      %819 = vmatprep.subr.bf16.mxu0 0
      %820 = vmatpush1.bf16.msra.mxu0 %v700
      %821 = vmatprep.subr.bf16.mxu0 0
      %822 = vmatpush1.bf16.msra.mxu0 %v699
      %823 = vmatprep.subr.bf16.mxu0 0
      %824 = vmatpush1.bf16.msra.mxu0 %v698
      %825 = vmatprep.subr.bf16.mxu0 0
      %826 = vmatpush1.bf16.msra.mxu0 %v697
      %827 = vmatprep.subr.bf16.mxu0 0
      %828 = vmatpush1.bf16.msra.mxu0 %v696
      %829 = vmatprep.subr.bf16.mxu0 0
      %830 = vmatpush1.bf16.msra.mxu0 %v695
      %831 = vmatprep.subr.bf16.mxu0 0
      %832 = vmatpush2.bf16.msra.mxu0 %v710
      %833 = vmatprep.subr.bf16.mxu0 0
      %834 = vmatpush2.bf16.msra.mxu0 %v709
      %835 = vmatprep.subr.bf16.mxu0 0
      %836 = vmatpush2.bf16.msra.mxu0 %v708
      %837 = vmatprep.subr.bf16.mxu0 0
      %838 = vmatpush2.bf16.msra.mxu0 %v707
      %839 = vmatprep.subr.bf16.mxu0 0
      %840 = vmatpush2.bf16.msra.mxu0 %v706
      %841 = vmatprep.subr.bf16.mxu0 0
      %842 = vmatpush2.bf16.msra.mxu0 %v705
      %843 = vmatprep.subr.bf16.mxu0 0
      %844 = vmatpush2.bf16.msra.mxu0 %v704
      %845 = vmatprep.subr.bf16.mxu0 0
      %846 = vmatpush2.bf16.msra.mxu0 %v703
      %847 = vmatprep.mubr.bf16.mxu0 %v422
      %848 = vmatmul.mubr.bf16.gmra.mxu0 %v410
      %v849 = vpop.f32.mrf.mxu0
      %v850 = vadd.f32 %v778, %v849
      %v851 = vpop.f32.mrf.mxu0
      %v852 = vpop.f32.mrf.mxu0
      %v853 = vadd.f32 %v781, %v852
      %v854 = vpop.f32.mrf.mxu0
      %855 = vmatprep.mubr.bf16.mxu0 %v454
      %856 = vmatmul.mubr.bf16.gmra.mxu0 %v446
      %v857 = vpop.f32.mrf.mxu0
      %v858 = vadd.f32 %v786, %v857
      %v859 = vpop.f32.mrf.mxu0
      %v860 = vpop.f32.mrf.mxu0
      %v861 = vadd.f32 %v789, %v860
      %v862 = vpop.f32.mrf.mxu0
      %863 = vmatprep.mubr.bf16.mxu0 %v486
      %864 = vmatmul.mubr.bf16.gmra.mxu0 %v478
      %v865 = vpop.f32.mrf.mxu0
      %v866 = vadd.f32 %v794, %v865
      %v867 = vpop.f32.mrf.mxu0
      %v868 = vpop.f32.mrf.mxu0
      %v869 = vadd.f32 %v797, %v868
      %v870 = vpop.f32.mrf.mxu0
      %871 = vmatprep.mubr.bf16.mxu0 %v518
      %872 = vmatmul.mubr.bf16.gmra.mxu0 %v510
      %v873 = vpop.f32.mrf.mxu0
      %v874 = vadd.f32 %v802, %v873
      %v875 = vpop.f32.mrf.mxu0
      %v876 = vpop.f32.mrf.mxu0
      %v877 = vadd.f32 %v805, %v876
      %v878 = vpop.f32.mrf.mxu0
      %879 = vmatprep.mubr.bf16.mxu0 %v530
      %880 = vmatmul.mubr.bf16.gmra.mxu0 %v527
      %v881 = vpop.f32.mrf.mxu0
      %v882 = vadd.f32 %v810, %v881
      %v883 = vpop.f32.mrf.mxu0
      %v884 = vpop.f32.mrf.mxu0
      %v885 = vpop.f32.mrf.mxu0
      %886 = vdwg.mxu0
      %v887 = vpack.c.b16 %v346, %v346
      %v888 = vpack.c.b16 %v347, %v347
      %v889 = vpack.c.b16 %v348, %v348
      %v890 = vpack.c.b16 %v349, %v349
      %v975 = vunpack.c.l.b16 %v163
      %v976 = vunpack.c.l.b16 %v164
      %v977 = vunpack.c.l.b16 %v165
      %v978 = vunpack.c.l.b16 %v166
      %v979 = vunpack.c.l.b16 %v167
      %v980 = vunpack.c.l.b16 %v168
      %v981 = vunpack.c.l.b16 %v169
      %v982 = vunpack.c.l.b16 %v170
      %v983 = vunpack.c.l.b16 %v171
      %v984 = vunpack.c.l.b16 %v172
      %v985 = vunpack.c.l.b16 %v173
      %v986 = vunpack.c.l.b16 %v174
      %v987 = vunpack.c.l.b16 %v175
      %v988 = vunpack.c.l.b16 %v176
      %v989 = vunpack.c.l.b16 %v177
      %v990 = vunpack.c.l.b16 %v178
      %v991 = vunpack.c.l.b16 %v179
      %v992 = vunpack.c.l.b16 %v180
      %v993 = vunpack.c.l.b16 %v181
      %v994 = vunpack.c.l.b16 %v182
      %v995 = vunpack.c.l.b16 %v183
      %v996 = vunpack.c.l.b16 %v184
      %v997 = vunpack.c.l.b16 %v185
      %v998 = vunpack.c.l.b16 %v186
      %v999 = vunpack.c.l.b16 %v187
      %v1000 = vunpack.c.l.b16 %v188
      %v1001 = vunpack.c.l.b16 %v189
      %v1002 = vunpack.c.l.b16 %v190
      %v1003 = vunpack.c.l.b16 %v191
      %v1004 = vunpack.c.l.b16 %v192
      %v1005 = vunpack.c.l.b16 %v193
      %v1006 = vunpack.c.l.b16 %v194
      %v1007 = vunpack.c.l.b16 %v195
      %v1008 = vunpack.c.l.b16 %v196
      %v1009 = vunpack.c.l.b16 %v197
      %v1010 = vunpack.c.l.b16 %v198
      %v1011 = vunpack.c.l.b16 %v199
      %v1012 = vunpack.c.l.b16 %v200
      %v1013 = vunpack.c.l.b16 %v201
      %v1014 = vunpack.c.l.b16 %v202
      %v1015 = vunpack.c.l.b16 %v203
      %v1016 = vunpack.c.l.b16 %v204
      %v1017 = vunpack.c.l.b16 %v205
      %v1018 = vunpack.c.l.b16 %v206
      %v1019 = vunpack.c.l.b16 %v207
      %v1020 = vunpack.c.l.b16 %v208
      %v1021 = vunpack.c.l.b16 %v209
      %v1022 = vunpack.c.l.b16 %v210
      %v1023 = vunpack.c.l.b16 %v211
      %v1024 = vunpack.c.l.b16 %v212
      %v1025 = vunpack.c.l.b16 %v213
      %v1026 = vunpack.c.l.b16 %v214
      %v1027 = vunpack.c.l.b16 %v215
      %v1028 = vunpack.c.l.b16 %v216
      %v1029 = vunpack.c.l.b16 %v217
      %v1030 = vunpack.c.l.b16 %v218
      %v1031 = vunpack.c.l.b16 %v219
      %v1032 = vunpack.c.l.b16 %v220
      %v1033 = vunpack.c.l.b16 %v221
      %v1034 = vunpack.c.l.b16 %v222
      %v1035 = vunpack.c.l.b16 %v223
      %v1036 = vunpack.c.l.b16 %v224
      %v1037 = vunpack.c.l.b16 %v225
      %v1038 = vunpack.c.l.b16 %v226
      %v1039 = vpack.c.b16 %v976, %v975
      %v1040 = vpack.c.b16 %v978, %v977
      %v1041 = vpack.c.b16 %v980, %v979
      %v1042 = vpack.c.b16 %v982, %v981
      %v1043 = vpack.c.b16 %v984, %v983
      %v1044 = vpack.c.b16 %v986, %v985
      %v1045 = vpack.c.b16 %v988, %v987
      %v1046 = vpack.c.b16 %v990, %v989
      %v1047 = vpack.c.b16 %v992, %v991
      %v1048 = vpack.c.b16 %v994, %v993
      %v1049 = vpack.c.b16 %v996, %v995
      %v1050 = vpack.c.b16 %v998, %v997
      %v1051 = vpack.c.b16 %v1000, %v999
      %v1052 = vpack.c.b16 %v1002, %v1001
      %v1053 = vpack.c.b16 %v1004, %v1003
      %v1054 = vpack.c.b16 %v1006, %v1005
      %v1055 = vpack.c.b16 %v1008, %v1007
      %v1056 = vpack.c.b16 %v1010, %v1009
      %v1057 = vpack.c.b16 %v1012, %v1011
      %v1058 = vpack.c.b16 %v1014, %v1013
      %v1059 = vpack.c.b16 %v1016, %v1015
      %v1060 = vpack.c.b16 %v1018, %v1017
      %v1061 = vpack.c.b16 %v1020, %v1019
      %v1062 = vpack.c.b16 %v1022, %v1021
      %v1063 = vpack.c.b16 %v1024, %v1023
      %v1064 = vpack.c.b16 %v1026, %v1025
      %v1065 = vpack.c.b16 %v1028, %v1027
      %v1066 = vpack.c.b16 %v1030, %v1029
      %v1067 = vpack.c.b16 %v1032, %v1031
      %v1068 = vpack.c.b16 %v1034, %v1033
      %v1069 = vpack.c.b16 %v1036, %v1035
      %v1070 = vpack.c.b16 %v1038, %v1037
      %1103 = vmatprep.subr.bf16.mxu0 0
      %1104 = vmatpush1.bf16.msra.mxu0 %v1046
      %1105 = vmatprep.subr.bf16.mxu0 0
      %1106 = vmatpush1.bf16.msra.mxu0 %v1045
      %1107 = vmatprep.subr.bf16.mxu0 0
      %1108 = vmatpush1.bf16.msra.mxu0 %v1044
      %1109 = vmatprep.subr.bf16.mxu0 0
      %1110 = vmatpush1.bf16.msra.mxu0 %v1043
      %1111 = vmatprep.subr.bf16.mxu0 0
      %1112 = vmatpush1.bf16.msra.mxu0 %v1042
      %1113 = vmatprep.subr.bf16.mxu0 0
      %1114 = vmatpush1.bf16.msra.mxu0 %v1041
      %1115 = vmatprep.subr.bf16.mxu0 0
      %1116 = vmatpush1.bf16.msra.mxu0 %v1040
      %1117 = vmatprep.subr.bf16.mxu0 0
      %1118 = vmatpush1.bf16.msra.mxu0 %v1039
      %1119 = vmatprep.subr.bf16.mxu0 0
      %1120 = vmatpush2.bf16.msra.mxu0 %v1054
      %1121 = vmatprep.subr.bf16.mxu0 0
      %1122 = vmatpush2.bf16.msra.mxu0 %v1053
      %1123 = vmatprep.subr.bf16.mxu0 0
      %1124 = vmatpush2.bf16.msra.mxu0 %v1052
      %1125 = vmatprep.subr.bf16.mxu0 0
      %1126 = vmatpush2.bf16.msra.mxu0 %v1051
      %1127 = vmatprep.subr.bf16.mxu0 0
      %1128 = vmatpush2.bf16.msra.mxu0 %v1050
      %1129 = vmatprep.subr.bf16.mxu0 0
      %1130 = vmatpush2.bf16.msra.mxu0 %v1049
      %1131 = vmatprep.subr.bf16.mxu0 0
      %1132 = vmatpush2.bf16.msra.mxu0 %v1048
      %1133 = vmatprep.subr.bf16.mxu0 0
      %1134 = vmatpush2.bf16.msra.mxu0 %v1047
      %1135 = vmatprep.mubr.bf16.mxu0 %v355
      %1136 = vmatmul.mubr.bf16.gmra.mxu0 %v354
      %v1137 = vpop.f32.mrf.mxu0
      %v1138 = vadd.f32 %v850, %v1137
      %v1139 = vpop.f32.mrf.mxu0
      %v1140 = vpop.f32.mrf.mxu0
      %v1141 = vadd.f32 %v853, %v1140
      %v1142 = vpop.f32.mrf.mxu0
      %1143 = vmatprep.mubr.bf16.mxu0 %v359
      %1144 = vmatmul.mubr.bf16.gmra.mxu0 %v358
      %v1145 = vpop.f32.mrf.mxu0
      %v1146 = vadd.f32 %v858, %v1145
      %v1147 = vpop.f32.mrf.mxu0
      %v1148 = vpop.f32.mrf.mxu0
      %v1149 = vadd.f32 %v861, %v1148
      %v1150 = vpop.f32.mrf.mxu0
      %1151 = vmatprep.mubr.bf16.mxu0 %v363
      %1152 = vmatmul.mubr.bf16.gmra.mxu0 %v362
      %v1153 = vpop.f32.mrf.mxu0
      %v1154 = vadd.f32 %v866, %v1153
      %v1155 = vpop.f32.mrf.mxu0
      %v1156 = vpop.f32.mrf.mxu0
      %v1157 = vadd.f32 %v869, %v1156
      %v1158 = vpop.f32.mrf.mxu0
      %1159 = vmatprep.mubr.bf16.mxu0 %v367
      %1160 = vmatmul.mubr.bf16.gmra.mxu0 %v366
      %v1161 = vpop.f32.mrf.mxu0
      %v1162 = vadd.f32 %v874, %v1161
      %v1163 = vpop.f32.mrf.mxu0
      %v1164 = vpop.f32.mrf.mxu0
      %v1165 = vadd.f32 %v877, %v1164
      %v1166 = vpop.f32.mrf.mxu0
      %1167 = vmatprep.mubr.bf16.mxu0 %v888
      %1168 = vmatmul.mubr.bf16.gmra.mxu0 %v887
      %v1169 = vpop.f32.mrf.mxu0
      %v1170 = vadd.f32 %v882, %v1169
      %v1171 = vpop.f32.mrf.mxu0
      %v1172 = vpop.f32.mrf.mxu0
      %v1173 = vpop.f32.mrf.mxu0
      %1174 = vdwg.mxu0
      %1175 = vmatprep.subr.bf16.mxu0 0
      %1176 = vmatpush1.bf16.msra.mxu0 %v1062
      %1177 = vmatprep.subr.bf16.mxu0 0
      %1178 = vmatpush1.bf16.msra.mxu0 %v1061
      %1179 = vmatprep.subr.bf16.mxu0 0
      %1180 = vmatpush1.bf16.msra.mxu0 %v1060
      %1181 = vmatprep.subr.bf16.mxu0 0
      %1182 = vmatpush1.bf16.msra.mxu0 %v1059
      %1183 = vmatprep.subr.bf16.mxu0 0
      %1184 = vmatpush1.bf16.msra.mxu0 %v1058
      %1185 = vmatprep.subr.bf16.mxu0 0
      %1186 = vmatpush1.bf16.msra.mxu0 %v1057
      %1187 = vmatprep.subr.bf16.mxu0 0
      %1188 = vmatpush1.bf16.msra.mxu0 %v1056
      %1189 = vmatprep.subr.bf16.mxu0 0
      %1190 = vmatpush1.bf16.msra.mxu0 %v1055
      %1191 = vmatprep.subr.bf16.mxu0 0
      %1192 = vmatpush2.bf16.msra.mxu0 %v1070
      %1193 = vmatprep.subr.bf16.mxu0 0
      %1194 = vmatpush2.bf16.msra.mxu0 %v1069
      %1195 = vmatprep.subr.bf16.mxu0 0
      %1196 = vmatpush2.bf16.msra.mxu0 %v1068
      %1197 = vmatprep.subr.bf16.mxu0 0
      %1198 = vmatpush2.bf16.msra.mxu0 %v1067
      %1199 = vmatprep.subr.bf16.mxu0 0
      %1200 = vmatpush2.bf16.msra.mxu0 %v1066
      %1201 = vmatprep.subr.bf16.mxu0 0
      %1202 = vmatpush2.bf16.msra.mxu0 %v1065
      %1203 = vmatprep.subr.bf16.mxu0 0
      %1204 = vmatpush2.bf16.msra.mxu0 %v1064
      %1205 = vmatprep.subr.bf16.mxu0 0
      %1206 = vmatpush2.bf16.msra.mxu0 %v1063
      %1207 = vmatprep.mubr.bf16.mxu0 %v357
      %1208 = vmatmul.mubr.bf16.gmra.mxu0 %v356
      %v1209 = vpop.f32.mrf.mxu0
      %v1210 = vadd.f32 %v1138, %v1209
      %v1211 = vpop.f32.mrf.mxu0
      %v1212 = vpop.f32.mrf.mxu0
      %v1213 = vadd.f32 %v1141, %v1212
      %v1214 = vpop.f32.mrf.mxu0
      %1215 = vmatprep.mubr.bf16.mxu0 %v361
      %1216 = vmatmul.mubr.bf16.gmra.mxu0 %v360
      %v1217 = vpop.f32.mrf.mxu0
      %v1218 = vadd.f32 %v1146, %v1217
      %v1219 = vpop.f32.mrf.mxu0
      %v1220 = vpop.f32.mrf.mxu0
      %v1221 = vadd.f32 %v1149, %v1220
      %v1222 = vpop.f32.mrf.mxu0
      %1223 = vmatprep.mubr.bf16.mxu0 %v365
      %1224 = vmatmul.mubr.bf16.gmra.mxu0 %v364
      %v1225 = vpop.f32.mrf.mxu0
      %v1226 = vadd.f32 %v1154, %v1225
      %v1227 = vpop.f32.mrf.mxu0
      %v1228 = vpop.f32.mrf.mxu0
      %v1229 = vadd.f32 %v1157, %v1228
      %v1230 = vpop.f32.mrf.mxu0
      %1231 = vmatprep.mubr.bf16.mxu0 %v369
      %1232 = vmatmul.mubr.bf16.gmra.mxu0 %v368
      %v1233 = vpop.f32.mrf.mxu0
      %v1234 = vadd.f32 %v1162, %v1233
      %v1235 = vpop.f32.mrf.mxu0
      %v1236 = vpop.f32.mrf.mxu0
      %v1237 = vadd.f32 %v1165, %v1236
      %v1238 = vpop.f32.mrf.mxu0
      %1239 = vmatprep.mubr.bf16.mxu0 %v890
      %1240 = vmatmul.mubr.bf16.gmra.mxu0 %v889
      %v1241 = vpop.f32.mrf.mxu0
      %v1242 = vadd.f32 %v1170, %v1241
      %v1243 = vpop.f32.mrf.mxu0
      %v1244 = vpop.f32.mrf.mxu0
      %v1245 = vpop.f32.mrf.mxu0
      %1246 = vdwg.mxu0
      %v1247 = vld [vmem:[%s138 + $0x10] sm:$0xff]
      %v1248 = vld [vmem:[%s138 + $0x18] sm:$0xff]
      %v1249 = vld [vmem:[%s138 + $0x20] sm:$0xff]
      %v1250 = vld [vmem:[%s138 + $0x28] sm:$0xff]
      %v1251 = vld [vmem:[%s138 + $0x30] sm:$0xff]
      %v1252 = vld [vmem:[%s138 + $0x38] sm:$0xff]
      %v1253 = vld [vmem:[%s138 + $0x40] sm:$0xff]
      %v1254 = vld [vmem:[%s138 + $0x48] sm:$0xff]
      %v1255 = vld [vmem:[%s138 + $0x50] sm:$0xff]
      %v1256 = vld [vmem:[%s138 + $0x58] sm:$0xff]
      %v1257 = vld [vmem:[%s138 + $0x60] sm:$0xff]
      %v1258 = vld [vmem:[%s138 + $0x68] sm:$0xff]
      %v1259 = vld [vmem:[%s138 + $0x70] sm:$0xff]
      %v1260 = vld [vmem:[%s138 + $0x78] sm:$0xff]
      %v1261 = vld [vmem:[%s138 + $0x80] sm:$0xff]
      %v1262 = vld [vmem:[%s138 + $0x88] sm:$0xff]
      %v1263 = vld [vmem:[%s138 + $0x90] sm:$0xff]
      %v1264 = vld [vmem:[%s138 + $0x98] sm:$0xff]
      %v1265 = vld [vmem:[%s138 + $0xa0] sm:$0x11]
      %v1266 = vld [vmem:[%s138 + $0xa8] sm:$0x11]
      %s1267 = scalar_lea.vmem %s1, 512
      %v1268 = vld [vmem:[%s1267] sm:$0xf]
      %v1269 = vld [vmem:[%s1267 + $0x4] sm:$0xf]
      %v1270 = vld [vmem:[%s1267 + $0x8] sm:$0xf]
      %v1271 = vld [vmem:[%s1267 + $0xc] sm:$0xf]
      %v1272 = vld [vmem:[%s1267 + $0x10] sm:$0xf]
      %v1273 = vld [vmem:[%s1267 + $0x14] sm:$0xf]
      %v1274 = vld [vmem:[%s1267 + $0x18] sm:$0xf]
      %v1275 = vld [vmem:[%s1267 + $0x1c] sm:$0xf]
      %v1276 = vld [vmem:[%s1267 + $0x20] sm:$0xf]
      %v1277 = vld [vmem:[%s1267 + $0x24] sm:$0xf]
      %v1278 = vld [vmem:[%s1267 + $0x28] sm:$0xf]
      %v1279 = vld [vmem:[%s1267 + $0x2c] sm:$0xf]
      %v1280 = vld [vmem:[%s1267 + $0x30] sm:$0xf]
      %v1281 = vld [vmem:[%s1267 + $0x34] sm:$0xf]
      %v1282 = vld [vmem:[%s1267 + $0x38] sm:$0xf]
      %v1283 = vld [vmem:[%s1267 + $0x3c] sm:$0xf]
      %v1284 = vld [vmem:[%s1267 + $0x40] sm:$0xf]
      %v1285 = vld [vmem:[%s1267 + $0x44] sm:$0xf]
      %v1286 = vld [vmem:[%s1267 + $0x48] sm:$0xf]
      %v1287 = vld [vmem:[%s1267 + $0x4c] sm:$0xf]
      %v1288 = vld [vmem:[%s1267 + $0x50] sm:$0xf]
      %v1289 = vld [vmem:[%s1267 + $0x54] sm:$0xf]
      %v1290 = vld [vmem:[%s1267 + $0x58] sm:$0xf]
      %v1291 = vld [vmem:[%s1267 + $0x5c] sm:$0xf]
      %v1292 = vld [vmem:[%s1267 + $0x60] sm:$0xf]
      %v1293 = vld [vmem:[%s1267 + $0x64] sm:$0xf]
      %v1294 = vld [vmem:[%s1267 + $0x68] sm:$0xf]
      %v1295 = vld [vmem:[%s1267 + $0x6c] sm:$0xf]
      %v1296 = vld [vmem:[%s1267 + $0x70] sm:$0xf]
      %v1297 = vld [vmem:[%s1267 + $0x74] sm:$0xf]
      %v1298 = vld [vmem:[%s1267 + $0x78] sm:$0xf]
      %v1299 = vld [vmem:[%s1267 + $0x7c] sm:$0xf]
      %v1300 = vld [vmem:[%s1267 + $0x80] sm:$0xf]
      %v1301 = vld [vmem:[%s1267 + $0x84] sm:$0xf]
      %v1302 = vld [vmem:[%s1267 + $0x88] sm:$0xf]
      %v1303 = vld [vmem:[%s1267 + $0x8c] sm:$0xf]
      %v1304 = vld [vmem:[%s1267 + $0x90] sm:$0xf]
      %v1305 = vld [vmem:[%s1267 + $0x94] sm:$0xf]
      %v1306 = vld [vmem:[%s1267 + $0x98] sm:$0xf]
      %v1307 = vld [vmem:[%s1267 + $0x9c] sm:$0xf]
      %v1308 = vld [vmem:[%s1267 + $0xa0] sm:$0xf]
      %v1309 = vld [vmem:[%s1267 + $0xa4] sm:$0xf]
      %v1310 = vld [vmem:[%s1267 + $0xa8] sm:$0xf]
      %v1311 = vld [vmem:[%s1267 + $0xac] sm:$0xf]
      %v1312 = vld [vmem:[%s1267 + $0xb0] sm:$0xf]
      %v1313 = vld [vmem:[%s1267 + $0xb4] sm:$0xf]
      %v1314 = vld [vmem:[%s1267 + $0xb8] sm:$0xf]
      %v1315 = vld [vmem:[%s1267 + $0xbc] sm:$0xf]
      %v1316 = vld [vmem:[%s1267 + $0xc0] sm:$0xf]
      %v1317 = vld [vmem:[%s1267 + $0xc4] sm:$0xf]
      %v1318 = vld [vmem:[%s1267 + $0xc8] sm:$0xf]
      %v1319 = vld [vmem:[%s1267 + $0xcc] sm:$0xf]
      %v1320 = vld [vmem:[%s1267 + $0xd0] sm:$0xf]
      %v1321 = vld [vmem:[%s1267 + $0xd4] sm:$0xf]
      %v1322 = vld [vmem:[%s1267 + $0xd8] sm:$0xf]
      %v1323 = vld [vmem:[%s1267 + $0xdc] sm:$0xf]
      %v1324 = vld [vmem:[%s1267 + $0xe0] sm:$0xf]
      %v1325 = vld [vmem:[%s1267 + $0xe4] sm:$0xf]
      %v1326 = vld [vmem:[%s1267 + $0xe8] sm:$0xf]
      %v1327 = vld [vmem:[%s1267 + $0xec] sm:$0xf]
      %v1328 = vld [vmem:[%s1267 + $0xf0] sm:$0xf]
      %v1329 = vld [vmem:[%s1267 + $0xf4] sm:$0xf]
      %v1330 = vld [vmem:[%s1267 + $0xf8] sm:$0xf]
      %v1331 = vld [vmem:[%s1267 + $0xfc] sm:$0xf]
      %v1352 = vunpack.c.l.b16 %v1247
      %v1353 = vunpack.c.h.b16 %v1247
      %v1354 = vunpack.c.l.b16 %v1248
      %v1355 = vunpack.c.h.b16 %v1248
      %v1356 = vunpack.c.l.b16 %v1249
      %v1357 = vunpack.c.h.b16 %v1249
      %v1358 = vunpack.c.l.b16 %v1250
      %v1359 = vunpack.c.h.b16 %v1250
      %v1360 = vunpack.c.l.b16 %v1251
      %v1361 = vunpack.c.h.b16 %v1251
      %v1362 = vunpack.c.l.b16 %v1252
      %v1363 = vunpack.c.h.b16 %v1252
      %v1364 = vunpack.c.l.b16 %v1253
      %v1365 = vunpack.c.h.b16 %v1253
      %v1366 = vunpack.c.l.b16 %v1254
      %v1367 = vunpack.c.h.b16 %v1254
      %v1368 = vunpack.c.l.b16 %v1255
      %v1369 = vunpack.c.h.b16 %v1255
      %v1370 = vunpack.c.l.b16 %v1256
      %v1371 = vunpack.c.h.b16 %v1256
      %v1372 = vunpack.c.l.b16 %v1257
      %v1373 = vunpack.c.h.b16 %v1257
      %v1374 = vunpack.c.l.b16 %v1258
      %v1375 = vunpack.c.h.b16 %v1258
      %v1376 = vunpack.c.l.b16 %v1259
      %v1377 = vunpack.c.h.b16 %v1259
      %v1378 = vunpack.c.l.b16 %v1260
      %v1379 = vunpack.c.h.b16 %v1260
      %v1380 = vunpack.c.l.b16 %v1261
      %v1381 = vunpack.c.h.b16 %v1261
      %v1382 = vunpack.c.l.b16 %v1262
      %v1383 = vunpack.c.h.b16 %v1262
      %v1384 = vunpack.c.l.b16 %v1263
      %v1385 = vunpack.c.h.b16 %v1263
      %v1386 = vunpack.c.l.b16 %v1264
      %v1387 = vunpack.c.h.b16 %v1264
      %v1388 = vunpack.c.l.b16 %v1265
      %v1389 = vunpack.c.h.b16 %v1265
      %v1390 = vunpack.c.l.b16 %v1266
      %v1391 = vunpack.c.h.b16 %v1266
      %v1392 = vpack.c.b16 %v1356, %v1352
      %v1393 = vpack.c.b16 %v1357, %v1353
      %v1394 = vpack.c.b16 %v1358, %v1354
      %v1395 = vpack.c.b16 %v1359, %v1355
      %v1396 = vpack.c.b16 %v1364, %v1360
      %v1397 = vpack.c.b16 %v1365, %v1361
      %v1398 = vpack.c.b16 %v1366, %v1362
      %v1399 = vpack.c.b16 %v1367, %v1363
      %v1400 = vpack.c.b16 %v1372, %v1368
      %v1401 = vpack.c.b16 %v1373, %v1369
      %v1402 = vpack.c.b16 %v1374, %v1370
      %v1403 = vpack.c.b16 %v1375, %v1371
      %v1404 = vpack.c.b16 %v1380, %v1376
      %v1405 = vpack.c.b16 %v1381, %v1377
      %v1406 = vpack.c.b16 %v1382, %v1378
      %v1407 = vpack.c.b16 %v1383, %v1379
      %v1408 = vpack.c.b16 %v1388, %v1384
      %v1409 = vpack.c.b16 %v1389, %v1385
      %v1410 = vpack.c.b16 %v1390, %v1386
      %v1411 = vpack.c.b16 %v1391, %v1387
      %v1413 = vshrl.u32 %v1392, 16
      %v1415 = vshll.u32 %v1392, 16
      %v1417 = vrot.slane %v1415, 1
      %v1418 = vor.u32 %v1413, %v1417
      %v1420 = vshll.u32 %v1396, 16
      %v1422 = vrot.slane %v1420, 1
      %v1423 = vsel %vm374, %v1418, %v1422
      %v1425 = vshrl.u32 %v1393, 16
      %v1427 = vshll.u32 %v1393, 16
      %v1429 = vrot.slane %v1427, 1
      %v1430 = vor.u32 %v1425, %v1429
      %v1432 = vshll.u32 %v1397, 16
      %v1434 = vrot.slane %v1432, 1
      %v1435 = vsel %vm374, %v1430, %v1434
      %v1437 = vshrl.u32 %v1394, 16
      %v1439 = vshll.u32 %v1394, 16
      %v1441 = vrot.slane %v1439, 1
      %v1442 = vor.u32 %v1437, %v1441
      %v1444 = vshll.u32 %v1398, 16
      %v1446 = vrot.slane %v1444, 1
      %v1447 = vsel %vm374, %v1442, %v1446
      %v1449 = vshrl.u32 %v1395, 16
      %v1451 = vshll.u32 %v1395, 16
      %v1453 = vrot.slane %v1451, 1
      %v1454 = vor.u32 %v1449, %v1453
      %v1456 = vshll.u32 %v1399, 16
      %v1458 = vrot.slane %v1456, 1
      %v1459 = vsel %vm374, %v1454, %v1458
      %v1460 = vshrl.u32 %v1396, 16
      %v1462 = vor.u32 %v1460, %v1422
      %v1464 = vshll.u32 %v1400, 16
      %v1466 = vrot.slane %v1464, 1
      %v1467 = vsel %vm374, %v1462, %v1466
      %v1468 = vshrl.u32 %v1397, 16
      %v1470 = vor.u32 %v1468, %v1434
      %v1472 = vshll.u32 %v1401, 16
      %v1474 = vrot.slane %v1472, 1
      %v1475 = vsel %vm374, %v1470, %v1474
      %v1476 = vshrl.u32 %v1398, 16
      %v1478 = vor.u32 %v1476, %v1446
      %v1480 = vshll.u32 %v1402, 16
      %v1482 = vrot.slane %v1480, 1
      %v1483 = vsel %vm374, %v1478, %v1482
      %v1484 = vshrl.u32 %v1399, 16
      %v1486 = vor.u32 %v1484, %v1458
      %v1488 = vshll.u32 %v1403, 16
      %v1490 = vrot.slane %v1488, 1
      %v1491 = vsel %vm374, %v1486, %v1490
      %v1492 = vshrl.u32 %v1400, 16
      %v1494 = vor.u32 %v1492, %v1466
      %v1496 = vshll.u32 %v1404, 16
      %v1498 = vrot.slane %v1496, 1
      %v1499 = vsel %vm374, %v1494, %v1498
      %v1500 = vshrl.u32 %v1401, 16
      %v1502 = vor.u32 %v1500, %v1474
      %v1504 = vshll.u32 %v1405, 16
      %v1506 = vrot.slane %v1504, 1
      %v1507 = vsel %vm374, %v1502, %v1506
      %v1508 = vshrl.u32 %v1402, 16
      %v1510 = vor.u32 %v1508, %v1482
      %v1512 = vshll.u32 %v1406, 16
      %v1514 = vrot.slane %v1512, 1
      %v1515 = vsel %vm374, %v1510, %v1514
      %v1516 = vshrl.u32 %v1403, 16
      %v1518 = vor.u32 %v1516, %v1490
      %v1520 = vshll.u32 %v1407, 16
      %v1522 = vrot.slane %v1520, 1
      %v1523 = vsel %vm374, %v1518, %v1522
      %v1524 = vshrl.u32 %v1404, 16
      %v1526 = vor.u32 %v1524, %v1498
      %v1528 = vshll.u32 %v1408, 16
      %v1530 = vrot.slane %v1528, 1
      %v1531 = vsel %vm374, %v1526, %v1530
      %v1532 = vshrl.u32 %v1405, 16
      %v1534 = vor.u32 %v1532, %v1506
      %v1536 = vshll.u32 %v1409, 16
      %v1538 = vrot.slane %v1536, 1
      %v1539 = vsel %vm374, %v1534, %v1538
      %v1540 = vshrl.u32 %v1406, 16
      %v1542 = vor.u32 %v1540, %v1514
      %v1544 = vshll.u32 %v1410, 16
      %v1546 = vrot.slane %v1544, 1
      %v1547 = vsel %vm374, %v1542, %v1546
      %v1548 = vshrl.u32 %v1407, 16
      %v1550 = vor.u32 %v1548, %v1522
      %v1552 = vshll.u32 %v1411, 16
      %v1554 = vrot.slane %v1552, 1
      %v1555 = vsel %vm374, %v1550, %v1554
      %v1556 = vshrl.u32 %v1408, 16
      %v1558 = vor.u32 %v1556, %v1530
      %v1559 = vshrl.u32 %v1409, 16
      %v1561 = vor.u32 %v1559, %v1538
      %v1562 = vshrl.u32 %v1410, 16
      %v1564 = vor.u32 %v1562, %v1546
      %v1565 = vshrl.u32 %v1411, 16
      %v1567 = vor.u32 %v1565, %v1554
      %v1652 = vunpack.c.l.b16 %v1268
      %v1653 = vunpack.c.l.b16 %v1269
      %v1654 = vunpack.c.l.b16 %v1270
      %v1655 = vunpack.c.l.b16 %v1271
      %v1656 = vunpack.c.l.b16 %v1272
      %v1657 = vunpack.c.l.b16 %v1273
      %v1658 = vunpack.c.l.b16 %v1274
      %v1659 = vunpack.c.l.b16 %v1275
      %v1660 = vunpack.c.l.b16 %v1276
      %v1661 = vunpack.c.l.b16 %v1277
      %v1662 = vunpack.c.l.b16 %v1278
      %v1663 = vunpack.c.l.b16 %v1279
      %v1664 = vunpack.c.l.b16 %v1280
      %v1665 = vunpack.c.l.b16 %v1281
      %v1666 = vunpack.c.l.b16 %v1282
      %v1667 = vunpack.c.l.b16 %v1283
      %v1668 = vunpack.c.l.b16 %v1284
      %v1669 = vunpack.c.l.b16 %v1285
      %v1670 = vunpack.c.l.b16 %v1286
      %v1671 = vunpack.c.l.b16 %v1287
      %v1672 = vunpack.c.l.b16 %v1288
      %v1673 = vunpack.c.l.b16 %v1289
      %v1674 = vunpack.c.l.b16 %v1290
      %v1675 = vunpack.c.l.b16 %v1291
      %v1676 = vunpack.c.l.b16 %v1292
      %v1677 = vunpack.c.l.b16 %v1293
      %v1678 = vunpack.c.l.b16 %v1294
      %v1679 = vunpack.c.l.b16 %v1295
      %v1680 = vunpack.c.l.b16 %v1296
      %v1681 = vunpack.c.l.b16 %v1297
      %v1682 = vunpack.c.l.b16 %v1298
      %v1683 = vunpack.c.l.b16 %v1299
      %v1684 = vunpack.c.l.b16 %v1300
      %v1685 = vunpack.c.l.b16 %v1301
      %v1686 = vunpack.c.l.b16 %v1302
      %v1687 = vunpack.c.l.b16 %v1303
      %v1688 = vunpack.c.l.b16 %v1304
      %v1689 = vunpack.c.l.b16 %v1305
      %v1690 = vunpack.c.l.b16 %v1306
      %v1691 = vunpack.c.l.b16 %v1307
      %v1692 = vunpack.c.l.b16 %v1308
      %v1693 = vunpack.c.l.b16 %v1309
      %v1694 = vunpack.c.l.b16 %v1310
      %v1695 = vunpack.c.l.b16 %v1311
      %v1696 = vunpack.c.l.b16 %v1312
      %v1697 = vunpack.c.l.b16 %v1313
      %v1698 = vunpack.c.l.b16 %v1314
      %v1699 = vunpack.c.l.b16 %v1315
      %v1700 = vunpack.c.l.b16 %v1316
      %v1701 = vunpack.c.l.b16 %v1317
      %v1702 = vunpack.c.l.b16 %v1318
      %v1703 = vunpack.c.l.b16 %v1319
      %v1704 = vunpack.c.l.b16 %v1320
      %v1705 = vunpack.c.l.b16 %v1321
      %v1706 = vunpack.c.l.b16 %v1322
      %v1707 = vunpack.c.l.b16 %v1323
      %v1708 = vunpack.c.l.b16 %v1324
      %v1709 = vunpack.c.l.b16 %v1325
      %v1710 = vunpack.c.l.b16 %v1326
      %v1711 = vunpack.c.l.b16 %v1327
      %v1712 = vunpack.c.l.b16 %v1328
      %v1713 = vunpack.c.l.b16 %v1329
      %v1714 = vunpack.c.l.b16 %v1330
      %v1715 = vunpack.c.l.b16 %v1331
      %v1716 = vpack.c.b16 %v1653, %v1652
      %v1717 = vpack.c.b16 %v1655, %v1654
      %v1718 = vpack.c.b16 %v1657, %v1656
      %v1719 = vpack.c.b16 %v1659, %v1658
      %v1720 = vpack.c.b16 %v1661, %v1660
      %v1721 = vpack.c.b16 %v1663, %v1662
      %v1722 = vpack.c.b16 %v1665, %v1664
      %v1723 = vpack.c.b16 %v1667, %v1666
      %v1724 = vpack.c.b16 %v1669, %v1668
      %v1725 = vpack.c.b16 %v1671, %v1670
      %v1726 = vpack.c.b16 %v1673, %v1672
      %v1727 = vpack.c.b16 %v1675, %v1674
      %v1728 = vpack.c.b16 %v1677, %v1676
      %v1729 = vpack.c.b16 %v1679, %v1678
      %v1730 = vpack.c.b16 %v1681, %v1680
      %v1731 = vpack.c.b16 %v1683, %v1682
      %v1732 = vpack.c.b16 %v1685, %v1684
      %v1733 = vpack.c.b16 %v1687, %v1686
      %v1734 = vpack.c.b16 %v1689, %v1688
      %v1735 = vpack.c.b16 %v1691, %v1690
      %v1736 = vpack.c.b16 %v1693, %v1692
      %v1737 = vpack.c.b16 %v1695, %v1694
      %v1738 = vpack.c.b16 %v1697, %v1696
      %v1739 = vpack.c.b16 %v1699, %v1698
      %v1740 = vpack.c.b16 %v1701, %v1700
      %v1741 = vpack.c.b16 %v1703, %v1702
      %v1742 = vpack.c.b16 %v1705, %v1704
      %v1743 = vpack.c.b16 %v1707, %v1706
      %v1744 = vpack.c.b16 %v1709, %v1708
      %v1745 = vpack.c.b16 %v1711, %v1710
      %v1746 = vpack.c.b16 %v1713, %v1712
      %v1747 = vpack.c.b16 %v1715, %v1714
      %1780 = vmatprep.subr.bf16.mxu0 0
      %1781 = vmatpush1.bf16.msra.mxu0 %v1723
      %1782 = vmatprep.subr.bf16.mxu0 0
      %1783 = vmatpush1.bf16.msra.mxu0 %v1722
      %1784 = vmatprep.subr.bf16.mxu0 0
      %1785 = vmatpush1.bf16.msra.mxu0 %v1721
      %1786 = vmatprep.subr.bf16.mxu0 0
      %1787 = vmatpush1.bf16.msra.mxu0 %v1720
      %1788 = vmatprep.subr.bf16.mxu0 0
      %1789 = vmatpush1.bf16.msra.mxu0 %v1719
      %1790 = vmatprep.subr.bf16.mxu0 0
      %1791 = vmatpush1.bf16.msra.mxu0 %v1718
      %1792 = vmatprep.subr.bf16.mxu0 0
      %1793 = vmatpush1.bf16.msra.mxu0 %v1717
      %1794 = vmatprep.subr.bf16.mxu0 0
      %1795 = vmatpush1.bf16.msra.mxu0 %v1716
      %1796 = vmatprep.subr.bf16.mxu0 0
      %1797 = vmatpush2.bf16.msra.mxu0 %v1731
      %1798 = vmatprep.subr.bf16.mxu0 0
      %1799 = vmatpush2.bf16.msra.mxu0 %v1730
      %1800 = vmatprep.subr.bf16.mxu0 0
      %1801 = vmatpush2.bf16.msra.mxu0 %v1729
      %1802 = vmatprep.subr.bf16.mxu0 0
      %1803 = vmatpush2.bf16.msra.mxu0 %v1728
      %1804 = vmatprep.subr.bf16.mxu0 0
      %1805 = vmatpush2.bf16.msra.mxu0 %v1727
      %1806 = vmatprep.subr.bf16.mxu0 0
      %1807 = vmatpush2.bf16.msra.mxu0 %v1726
      %1808 = vmatprep.subr.bf16.mxu0 0
      %1809 = vmatpush2.bf16.msra.mxu0 %v1725
      %1810 = vmatprep.subr.bf16.mxu0 0
      %1811 = vmatpush2.bf16.msra.mxu0 %v1724
      %1812 = vmatprep.mubr.bf16.mxu0 %v1435
      %1813 = vmatmul.mubr.bf16.gmra.mxu0 %v1423
      %v1814 = vpop.f32.mrf.mxu0
      %v1815 = vadd.f32 0.0, %v1814
      %v1816 = vpop.f32.mrf.mxu0
      %v1817 = vpop.f32.mrf.mxu0
      %v1818 = vadd.f32 0.0, %v1817
      %v1819 = vpop.f32.mrf.mxu0
      %1820 = vmatprep.mubr.bf16.mxu0 %v1475
      %1821 = vmatmul.mubr.bf16.gmra.mxu0 %v1467
      %v1822 = vpop.f32.mrf.mxu0
      %v1823 = vadd.f32 0.0, %v1822
      %v1824 = vpop.f32.mrf.mxu0
      %v1825 = vpop.f32.mrf.mxu0
      %v1826 = vadd.f32 0.0, %v1825
      %v1827 = vpop.f32.mrf.mxu0
      %1828 = vmatprep.mubr.bf16.mxu0 %v1507
      %1829 = vmatmul.mubr.bf16.gmra.mxu0 %v1499
      %v1830 = vpop.f32.mrf.mxu0
      %v1831 = vadd.f32 0.0, %v1830
      %v1832 = vpop.f32.mrf.mxu0
      %v1833 = vpop.f32.mrf.mxu0
      %v1834 = vadd.f32 0.0, %v1833
      %v1835 = vpop.f32.mrf.mxu0
      %1836 = vmatprep.mubr.bf16.mxu0 %v1539
      %1837 = vmatmul.mubr.bf16.gmra.mxu0 %v1531
      %v1838 = vpop.f32.mrf.mxu0
      %v1839 = vadd.f32 0.0, %v1838
      %v1840 = vpop.f32.mrf.mxu0
      %v1841 = vpop.f32.mrf.mxu0
      %v1842 = vadd.f32 0.0, %v1841
      %v1843 = vpop.f32.mrf.mxu0
      %1844 = vmatprep.mubr.bf16.mxu0 %v1561
      %1845 = vmatmul.mubr.bf16.gmra.mxu0 %v1558
      %v1846 = vpop.f32.mrf.mxu0
      %v1847 = vadd.f32 0.0, %v1846
      %v1848 = vpop.f32.mrf.mxu0
      %v1849 = vpop.f32.mrf.mxu0
      %v1850 = vpop.f32.mrf.mxu0
      %1851 = vdwg.mxu0
      %1852 = vmatprep.subr.bf16.mxu0 0
      %1853 = vmatpush1.bf16.msra.mxu0 %v1739
      %1854 = vmatprep.subr.bf16.mxu0 0
      %1855 = vmatpush1.bf16.msra.mxu0 %v1738
      %1856 = vmatprep.subr.bf16.mxu0 0
      %1857 = vmatpush1.bf16.msra.mxu0 %v1737
      %1858 = vmatprep.subr.bf16.mxu0 0
      %1859 = vmatpush1.bf16.msra.mxu0 %v1736
      %1860 = vmatprep.subr.bf16.mxu0 0
      %1861 = vmatpush1.bf16.msra.mxu0 %v1735
      %1862 = vmatprep.subr.bf16.mxu0 0
      %1863 = vmatpush1.bf16.msra.mxu0 %v1734
      %1864 = vmatprep.subr.bf16.mxu0 0
      %1865 = vmatpush1.bf16.msra.mxu0 %v1733
      %1866 = vmatprep.subr.bf16.mxu0 0
      %1867 = vmatpush1.bf16.msra.mxu0 %v1732
      %1868 = vmatprep.subr.bf16.mxu0 0
      %1869 = vmatpush2.bf16.msra.mxu0 %v1747
      %1870 = vmatprep.subr.bf16.mxu0 0
      %1871 = vmatpush2.bf16.msra.mxu0 %v1746
      %1872 = vmatprep.subr.bf16.mxu0 0
      %1873 = vmatpush2.bf16.msra.mxu0 %v1745
      %1874 = vmatprep.subr.bf16.mxu0 0
      %1875 = vmatpush2.bf16.msra.mxu0 %v1744
      %1876 = vmatprep.subr.bf16.mxu0 0
      %1877 = vmatpush2.bf16.msra.mxu0 %v1743
      %1878 = vmatprep.subr.bf16.mxu0 0
      %1879 = vmatpush2.bf16.msra.mxu0 %v1742
      %1880 = vmatprep.subr.bf16.mxu0 0
      %1881 = vmatpush2.bf16.msra.mxu0 %v1741
      %1882 = vmatprep.subr.bf16.mxu0 0
      %1883 = vmatpush2.bf16.msra.mxu0 %v1740
      %1884 = vmatprep.mubr.bf16.mxu0 %v1459
      %1885 = vmatmul.mubr.bf16.gmra.mxu0 %v1447
      %v1886 = vpop.f32.mrf.mxu0
      %v1887 = vadd.f32 %v1815, %v1886
      %v1888 = vpop.f32.mrf.mxu0
      %v1889 = vpop.f32.mrf.mxu0
      %v1890 = vadd.f32 %v1818, %v1889
      %v1891 = vpop.f32.mrf.mxu0
      %1892 = vmatprep.mubr.bf16.mxu0 %v1491
      %1893 = vmatmul.mubr.bf16.gmra.mxu0 %v1483
      %v1894 = vpop.f32.mrf.mxu0
      %v1895 = vadd.f32 %v1823, %v1894
      %v1896 = vpop.f32.mrf.mxu0
      %v1897 = vpop.f32.mrf.mxu0
      %v1898 = vadd.f32 %v1826, %v1897
      %v1899 = vpop.f32.mrf.mxu0
      %1900 = vmatprep.mubr.bf16.mxu0 %v1523
      %1901 = vmatmul.mubr.bf16.gmra.mxu0 %v1515
      %v1902 = vpop.f32.mrf.mxu0
      %v1903 = vadd.f32 %v1831, %v1902
      %v1904 = vpop.f32.mrf.mxu0
      %v1905 = vpop.f32.mrf.mxu0
      %v1906 = vadd.f32 %v1834, %v1905
      %v1907 = vpop.f32.mrf.mxu0
      %1908 = vmatprep.mubr.bf16.mxu0 %v1555
      %1909 = vmatmul.mubr.bf16.gmra.mxu0 %v1547
      %v1910 = vpop.f32.mrf.mxu0
      %v1911 = vadd.f32 %v1839, %v1910
      %v1912 = vpop.f32.mrf.mxu0
      %v1913 = vpop.f32.mrf.mxu0
      %v1914 = vadd.f32 %v1842, %v1913
      %v1915 = vpop.f32.mrf.mxu0
      %1916 = vmatprep.mubr.bf16.mxu0 %v1567
      %1917 = vmatmul.mubr.bf16.gmra.mxu0 %v1564
      %v1918 = vpop.f32.mrf.mxu0
      %v1919 = vadd.f32 %v1847, %v1918
      %v1920 = vpop.f32.mrf.mxu0
      %v1921 = vpop.f32.mrf.mxu0
      %v1922 = vpop.f32.mrf.mxu0
      %1923 = vdwg.mxu0
      %v1924 = vadd.f32 %v1210, %v1887
      %v1925 = vadd.f32 %v1213, %v1890
      %v1926 = vadd.f32 %v1218, %v1895
      %v1927 = vadd.f32 %v1221, %v1898
      %v1928 = vadd.f32 %v1226, %v1903
      %v1929 = vadd.f32 %v1229, %v1906
      %v1930 = vadd.f32 %v1234, %v1911
      %v1931 = vadd.f32 %v1237, %v1914
      %v1932 = vadd.f32 %v1242, %v1919
      %v1933 = vld [vmem:[%s138 + $0x10] sm:$0xee]
      %v1934 = vld [vmem:[%s138 + $0x18] sm:$0xee]
      %s1935 = scalar_lea.vmem %s1, 768
      %v1936 = vld [vmem:[%s1935] sm:$0xf]
      %v1937 = vld [vmem:[%s1935 + $0x4] sm:$0xf]
      %v1938 = vld [vmem:[%s1935 + $0x8] sm:$0xf]
      %v1939 = vld [vmem:[%s1935 + $0xc] sm:$0xf]
      %v1940 = vld [vmem:[%s1935 + $0x10] sm:$0xf]
      %v1941 = vld [vmem:[%s1935 + $0x14] sm:$0xf]
      %v1942 = vld [vmem:[%s1935 + $0x18] sm:$0xf]
      %v1943 = vld [vmem:[%s1935 + $0x1c] sm:$0xf]
      %v1944 = vld [vmem:[%s1935 + $0x20] sm:$0xf]
      %v1945 = vld [vmem:[%s1935 + $0x24] sm:$0xf]
      %v1946 = vld [vmem:[%s1935 + $0x28] sm:$0xf]
      %v1947 = vld [vmem:[%s1935 + $0x2c] sm:$0xf]
      %v1948 = vld [vmem:[%s1935 + $0x30] sm:$0xf]
      %v1949 = vld [vmem:[%s1935 + $0x34] sm:$0xf]
      %v1950 = vld [vmem:[%s1935 + $0x38] sm:$0xf]
      %v1951 = vld [vmem:[%s1935 + $0x3c] sm:$0xf]
      %v1952 = vld [vmem:[%s1935 + $0x40] sm:$0xf]
      %v1953 = vld [vmem:[%s1935 + $0x44] sm:$0xf]
      %v1954 = vld [vmem:[%s1935 + $0x48] sm:$0xf]
      %v1955 = vld [vmem:[%s1935 + $0x4c] sm:$0xf]
      %v1956 = vld [vmem:[%s1935 + $0x50] sm:$0xf]
      %v1957 = vld [vmem:[%s1935 + $0x54] sm:$0xf]
      %v1958 = vld [vmem:[%s1935 + $0x58] sm:$0xf]
      %v1959 = vld [vmem:[%s1935 + $0x5c] sm:$0xf]
      %v1960 = vld [vmem:[%s1935 + $0x60] sm:$0xf]
      %v1961 = vld [vmem:[%s1935 + $0x64] sm:$0xf]
      %v1962 = vld [vmem:[%s1935 + $0x68] sm:$0xf]
      %v1963 = vld [vmem:[%s1935 + $0x6c] sm:$0xf]
      %v1964 = vld [vmem:[%s1935 + $0x70] sm:$0xf]
      %v1965 = vld [vmem:[%s1935 + $0x74] sm:$0xf]
      %v1966 = vld [vmem:[%s1935 + $0x78] sm:$0xf]
      %v1967 = vld [vmem:[%s1935 + $0x7c] sm:$0xf]
      %v1968 = vld [vmem:[%s1935 + $0x80] sm:$0xf]
      %v1969 = vld [vmem:[%s1935 + $0x84] sm:$0xf]
      %v1970 = vld [vmem:[%s1935 + $0x88] sm:$0xf]
      %v1971 = vld [vmem:[%s1935 + $0x8c] sm:$0xf]
      %v1972 = vld [vmem:[%s1935 + $0x90] sm:$0xf]
      %v1973 = vld [vmem:[%s1935 + $0x94] sm:$0xf]
      %v1974 = vld [vmem:[%s1935 + $0x98] sm:$0xf]
      %v1975 = vld [vmem:[%s1935 + $0x9c] sm:$0xf]
      %v1976 = vld [vmem:[%s1935 + $0xa0] sm:$0xf]
      %v1977 = vld [vmem:[%s1935 + $0xa4] sm:$0xf]
      %v1978 = vld [vmem:[%s1935 + $0xa8] sm:$0xf]
      %v1979 = vld [vmem:[%s1935 + $0xac] sm:$0xf]
      %v1980 = vld [vmem:[%s1935 + $0xb0] sm:$0xf]
      %v1981 = vld [vmem:[%s1935 + $0xb4] sm:$0xf]
      %v1982 = vld [vmem:[%s1935 + $0xb8] sm:$0xf]
      %v1983 = vld [vmem:[%s1935 + $0xbc] sm:$0xf]
      %v1984 = vld [vmem:[%s1935 + $0xc0] sm:$0xf]
      %v1985 = vld [vmem:[%s1935 + $0xc4] sm:$0xf]
      %v1986 = vld [vmem:[%s1935 + $0xc8] sm:$0xf]
      %v1987 = vld [vmem:[%s1935 + $0xcc] sm:$0xf]
      %v1988 = vld [vmem:[%s1935 + $0xd0] sm:$0xf]
      %v1989 = vld [vmem:[%s1935 + $0xd4] sm:$0xf]
      %v1990 = vld [vmem:[%s1935 + $0xd8] sm:$0xf]
      %v1991 = vld [vmem:[%s1935 + $0xdc] sm:$0xf]
      %v1992 = vld [vmem:[%s1935 + $0xe0] sm:$0xf]
      %v1993 = vld [vmem:[%s1935 + $0xe4] sm:$0xf]
      %v1994 = vld [vmem:[%s1935 + $0xe8] sm:$0xf]
      %v1995 = vld [vmem:[%s1935 + $0xec] sm:$0xf]
      %v1996 = vld [vmem:[%s1935 + $0xf0] sm:$0xf]
      %v1997 = vld [vmem:[%s1935 + $0xf4] sm:$0xf]
      %v1998 = vld [vmem:[%s1935 + $0xf8] sm:$0xf]
      %v1999 = vld [vmem:[%s1935 + $0xfc] sm:$0xf]
      %v2002 = vunpack.c.l.b16 %v1933
      %v2003 = vunpack.c.h.b16 %v1933
      %v2004 = vunpack.c.l.b16 %v1934
      %v2005 = vunpack.c.h.b16 %v1934
      %v2006 = vpack.c.b16 %v1356, %v2002
      %v2007 = vpack.c.b16 %v1357, %v2003
      %v2008 = vpack.c.b16 %v1358, %v2004
      %v2009 = vpack.c.b16 %v1359, %v2005
      %vm2010 = vcmask 1046528
      %v2011 = vrot.slane %v2006, 1
      %v2012 = vrot.slane %v1396, 1
      %v2013 = vsel %vm2010, %v2011, %v2012
      %v2014 = vrot.slane %v2007, 1
      %v2015 = vrot.slane %v1397, 1
      %v2016 = vsel %vm2010, %v2014, %v2015
      %v2017 = vrot.slane %v2008, 1
      %v2018 = vrot.slane %v1398, 1
      %v2019 = vsel %vm2010, %v2017, %v2018
      %v2020 = vrot.slane %v2009, 1
      %v2021 = vrot.slane %v1399, 1
      %v2022 = vsel %vm2010, %v2020, %v2021
      %v2023 = vrot.slane %v1400, 1
      %v2024 = vsel %vm2010, %v2012, %v2023
      %v2025 = vrot.slane %v1401, 1
      %v2026 = vsel %vm2010, %v2015, %v2025
      %v2027 = vrot.slane %v1402, 1
      %v2028 = vsel %vm2010, %v2018, %v2027
      %v2029 = vrot.slane %v1403, 1
      %v2030 = vsel %vm2010, %v2021, %v2029
      %v2031 = vrot.slane %v1404, 1
      %v2032 = vsel %vm2010, %v2023, %v2031
      %v2033 = vrot.slane %v1405, 1
      %v2034 = vsel %vm2010, %v2025, %v2033
      %v2035 = vrot.slane %v1406, 1
      %v2036 = vsel %vm2010, %v2027, %v2035
      %v2037 = vrot.slane %v1407, 1
      %v2038 = vsel %vm2010, %v2029, %v2037
      %v2039 = vrot.slane %v1408, 1
      %v2040 = vsel %vm2010, %v2031, %v2039
      %v2041 = vrot.slane %v1409, 1
      %v2042 = vsel %vm2010, %v2033, %v2041
      %v2043 = vrot.slane %v1410, 1
      %v2044 = vsel %vm2010, %v2035, %v2043
      %v2045 = vrot.slane %v1411, 1
      %v2046 = vsel %vm2010, %v2037, %v2045
      %v2131 = vunpack.c.l.b16 %v1936
      %v2132 = vunpack.c.l.b16 %v1937
      %v2133 = vunpack.c.l.b16 %v1938
      %v2134 = vunpack.c.l.b16 %v1939
      %v2135 = vunpack.c.l.b16 %v1940
      %v2136 = vunpack.c.l.b16 %v1941
      %v2137 = vunpack.c.l.b16 %v1942
      %v2138 = vunpack.c.l.b16 %v1943
      %v2139 = vunpack.c.l.b16 %v1944
      %v2140 = vunpack.c.l.b16 %v1945
      %v2141 = vunpack.c.l.b16 %v1946
      %v2142 = vunpack.c.l.b16 %v1947
      %v2143 = vunpack.c.l.b16 %v1948
      %v2144 = vunpack.c.l.b16 %v1949
      %v2145 = vunpack.c.l.b16 %v1950
      %v2146 = vunpack.c.l.b16 %v1951
      %v2147 = vunpack.c.l.b16 %v1952
      %v2148 = vunpack.c.l.b16 %v1953
      %v2149 = vunpack.c.l.b16 %v1954
      %v2150 = vunpack.c.l.b16 %v1955
      %v2151 = vunpack.c.l.b16 %v1956
      %v2152 = vunpack.c.l.b16 %v1957
      %v2153 = vunpack.c.l.b16 %v1958
      %v2154 = vunpack.c.l.b16 %v1959
      %v2155 = vunpack.c.l.b16 %v1960
      %v2156 = vunpack.c.l.b16 %v1961
      %v2157 = vunpack.c.l.b16 %v1962
      %v2158 = vunpack.c.l.b16 %v1963
      %v2159 = vunpack.c.l.b16 %v1964
      %v2160 = vunpack.c.l.b16 %v1965
      %v2161 = vunpack.c.l.b16 %v1966
      %v2162 = vunpack.c.l.b16 %v1967
      %v2163 = vunpack.c.l.b16 %v1968
      %v2164 = vunpack.c.l.b16 %v1969
      %v2165 = vunpack.c.l.b16 %v1970
      %v2166 = vunpack.c.l.b16 %v1971
      %v2167 = vunpack.c.l.b16 %v1972
      %v2168 = vunpack.c.l.b16 %v1973
      %v2169 = vunpack.c.l.b16 %v1974
      %v2170 = vunpack.c.l.b16 %v1975
      %v2171 = vunpack.c.l.b16 %v1976
      %v2172 = vunpack.c.l.b16 %v1977
      %v2173 = vunpack.c.l.b16 %v1978
      %v2174 = vunpack.c.l.b16 %v1979
      %v2175 = vunpack.c.l.b16 %v1980
      %v2176 = vunpack.c.l.b16 %v1981
      %v2177 = vunpack.c.l.b16 %v1982
      %v2178 = vunpack.c.l.b16 %v1983
      %v2179 = vunpack.c.l.b16 %v1984
      %v2180 = vunpack.c.l.b16 %v1985
      %v2181 = vunpack.c.l.b16 %v1986
      %v2182 = vunpack.c.l.b16 %v1987
      %v2183 = vunpack.c.l.b16 %v1988
      %v2184 = vunpack.c.l.b16 %v1989
      %v2185 = vunpack.c.l.b16 %v1990
      %v2186 = vunpack.c.l.b16 %v1991
      %v2187 = vunpack.c.l.b16 %v1992
      %v2188 = vunpack.c.l.b16 %v1993
      %v2189 = vunpack.c.l.b16 %v1994
      %v2190 = vunpack.c.l.b16 %v1995
      %v2191 = vunpack.c.l.b16 %v1996
      %v2192 = vunpack.c.l.b16 %v1997
      %v2193 = vunpack.c.l.b16 %v1998
      %v2194 = vunpack.c.l.b16 %v1999
      %v2195 = vpack.c.b16 %v2132, %v2131
      %v2196 = vpack.c.b16 %v2134, %v2133
      %v2197 = vpack.c.b16 %v2136, %v2135
      %v2198 = vpack.c.b16 %v2138, %v2137
      %v2199 = vpack.c.b16 %v2140, %v2139
      %v2200 = vpack.c.b16 %v2142, %v2141
      %v2201 = vpack.c.b16 %v2144, %v2143
      %v2202 = vpack.c.b16 %v2146, %v2145
      %v2203 = vpack.c.b16 %v2148, %v2147
      %v2204 = vpack.c.b16 %v2150, %v2149
      %v2205 = vpack.c.b16 %v2152, %v2151
      %v2206 = vpack.c.b16 %v2154, %v2153
      %v2207 = vpack.c.b16 %v2156, %v2155
      %v2208 = vpack.c.b16 %v2158, %v2157
      %v2209 = vpack.c.b16 %v2160, %v2159
      %v2210 = vpack.c.b16 %v2162, %v2161
      %v2211 = vpack.c.b16 %v2164, %v2163
      %v2212 = vpack.c.b16 %v2166, %v2165
      %v2213 = vpack.c.b16 %v2168, %v2167
      %v2214 = vpack.c.b16 %v2170, %v2169
      %v2215 = vpack.c.b16 %v2172, %v2171
      %v2216 = vpack.c.b16 %v2174, %v2173
      %v2217 = vpack.c.b16 %v2176, %v2175
      %v2218 = vpack.c.b16 %v2178, %v2177
      %v2219 = vpack.c.b16 %v2180, %v2179
      %v2220 = vpack.c.b16 %v2182, %v2181
      %v2221 = vpack.c.b16 %v2184, %v2183
      %v2222 = vpack.c.b16 %v2186, %v2185
      %v2223 = vpack.c.b16 %v2188, %v2187
      %v2224 = vpack.c.b16 %v2190, %v2189
      %v2225 = vpack.c.b16 %v2192, %v2191
      %v2226 = vpack.c.b16 %v2194, %v2193
      %2259 = vmatprep.subr.bf16.mxu0 0
      %2260 = vmatpush1.bf16.msra.mxu0 %v2202
      %2261 = vmatprep.subr.bf16.mxu0 0
      %2262 = vmatpush1.bf16.msra.mxu0 %v2201
      %2263 = vmatprep.subr.bf16.mxu0 0
      %2264 = vmatpush1.bf16.msra.mxu0 %v2200
      %2265 = vmatprep.subr.bf16.mxu0 0
      %2266 = vmatpush1.bf16.msra.mxu0 %v2199
      %2267 = vmatprep.subr.bf16.mxu0 0
      %2268 = vmatpush1.bf16.msra.mxu0 %v2198
      %2269 = vmatprep.subr.bf16.mxu0 0
      %2270 = vmatpush1.bf16.msra.mxu0 %v2197
      %2271 = vmatprep.subr.bf16.mxu0 0
      %2272 = vmatpush1.bf16.msra.mxu0 %v2196
      %2273 = vmatprep.subr.bf16.mxu0 0
      %2274 = vmatpush1.bf16.msra.mxu0 %v2195
      %2275 = vmatprep.subr.bf16.mxu0 0
      %2276 = vmatpush2.bf16.msra.mxu0 %v2210
      %2277 = vmatprep.subr.bf16.mxu0 0
      %2278 = vmatpush2.bf16.msra.mxu0 %v2209
      %2279 = vmatprep.subr.bf16.mxu0 0
      %2280 = vmatpush2.bf16.msra.mxu0 %v2208
      %2281 = vmatprep.subr.bf16.mxu0 0
      %2282 = vmatpush2.bf16.msra.mxu0 %v2207
      %2283 = vmatprep.subr.bf16.mxu0 0
      %2284 = vmatpush2.bf16.msra.mxu0 %v2206
      %2285 = vmatprep.subr.bf16.mxu0 0
      %2286 = vmatpush2.bf16.msra.mxu0 %v2205
      %2287 = vmatprep.subr.bf16.mxu0 0
      %2288 = vmatpush2.bf16.msra.mxu0 %v2204
      %2289 = vmatprep.subr.bf16.mxu0 0
      %2290 = vmatpush2.bf16.msra.mxu0 %v2203
      %2291 = vmatprep.mubr.bf16.mxu0 %v2016
      %2292 = vmatmul.mubr.bf16.gmra.mxu0 %v2013
      %v2293 = vpop.f32.mrf.mxu0
      %v2294 = vadd.f32 0.0, %v2293
      %v2295 = vpop.f32.mrf.mxu0
      %v2296 = vpop.f32.mrf.mxu0
      %v2297 = vadd.f32 0.0, %v2296
      %v2298 = vpop.f32.mrf.mxu0
      %2299 = vmatprep.mubr.bf16.mxu0 %v2026
      %2300 = vmatmul.mubr.bf16.gmra.mxu0 %v2024
      %v2301 = vpop.f32.mrf.mxu0
      %v2302 = vadd.f32 0.0, %v2301
      %v2303 = vpop.f32.mrf.mxu0
      %v2304 = vpop.f32.mrf.mxu0
      %v2305 = vadd.f32 0.0, %v2304
      %v2306 = vpop.f32.mrf.mxu0
      %2307 = vmatprep.mubr.bf16.mxu0 %v2034
      %2308 = vmatmul.mubr.bf16.gmra.mxu0 %v2032
      %v2309 = vpop.f32.mrf.mxu0
      %v2310 = vadd.f32 0.0, %v2309
      %v2311 = vpop.f32.mrf.mxu0
      %v2312 = vpop.f32.mrf.mxu0
      %v2313 = vadd.f32 0.0, %v2312
      %v2314 = vpop.f32.mrf.mxu0
      %2315 = vmatprep.mubr.bf16.mxu0 %v2042
      %2316 = vmatmul.mubr.bf16.gmra.mxu0 %v2040
      %v2317 = vpop.f32.mrf.mxu0
      %v2318 = vadd.f32 0.0, %v2317
      %v2319 = vpop.f32.mrf.mxu0
      %v2320 = vpop.f32.mrf.mxu0
      %v2321 = vadd.f32 0.0, %v2320
      %v2322 = vpop.f32.mrf.mxu0
      %2323 = vmatprep.mubr.bf16.mxu0 %v2041
      %2324 = vmatmul.mubr.bf16.gmra.mxu0 %v2039
      %v2325 = vpop.f32.mrf.mxu0
      %v2326 = vadd.f32 0.0, %v2325
      %v2327 = vpop.f32.mrf.mxu0
      %v2328 = vpop.f32.mrf.mxu0
      %v2329 = vpop.f32.mrf.mxu0
      %2330 = vdwg.mxu0
      %2331 = vmatprep.subr.bf16.mxu0 0
      %2332 = vmatpush1.bf16.msra.mxu0 %v2218
      %2333 = vmatprep.subr.bf16.mxu0 0
      %2334 = vmatpush1.bf16.msra.mxu0 %v2217
      %2335 = vmatprep.subr.bf16.mxu0 0
      %2336 = vmatpush1.bf16.msra.mxu0 %v2216
      %2337 = vmatprep.subr.bf16.mxu0 0
      %2338 = vmatpush1.bf16.msra.mxu0 %v2215
      %2339 = vmatprep.subr.bf16.mxu0 0
      %2340 = vmatpush1.bf16.msra.mxu0 %v2214
      %2341 = vmatprep.subr.bf16.mxu0 0
      %2342 = vmatpush1.bf16.msra.mxu0 %v2213
      %2343 = vmatprep.subr.bf16.mxu0 0
      %2344 = vmatpush1.bf16.msra.mxu0 %v2212
      %2345 = vmatprep.subr.bf16.mxu0 0
      %2346 = vmatpush1.bf16.msra.mxu0 %v2211
      %2347 = vmatprep.subr.bf16.mxu0 0
      %2348 = vmatpush2.bf16.msra.mxu0 %v2226
      %2349 = vmatprep.subr.bf16.mxu0 0
      %2350 = vmatpush2.bf16.msra.mxu0 %v2225
      %2351 = vmatprep.subr.bf16.mxu0 0
      %2352 = vmatpush2.bf16.msra.mxu0 %v2224
      %2353 = vmatprep.subr.bf16.mxu0 0
      %2354 = vmatpush2.bf16.msra.mxu0 %v2223
      %2355 = vmatprep.subr.bf16.mxu0 0
      %2356 = vmatpush2.bf16.msra.mxu0 %v2222
      %2357 = vmatprep.subr.bf16.mxu0 0
      %2358 = vmatpush2.bf16.msra.mxu0 %v2221
      %2359 = vmatprep.subr.bf16.mxu0 0
      %2360 = vmatpush2.bf16.msra.mxu0 %v2220
      %2361 = vmatprep.subr.bf16.mxu0 0
      %2362 = vmatpush2.bf16.msra.mxu0 %v2219
      %2363 = vmatprep.mubr.bf16.mxu0 %v2022
      %2364 = vmatmul.mubr.bf16.gmra.mxu0 %v2019
      %v2365 = vpop.f32.mrf.mxu0
      %v2366 = vadd.f32 %v2294, %v2365
      %v2367 = vpop.f32.mrf.mxu0
      %v2368 = vpop.f32.mrf.mxu0
      %v2369 = vadd.f32 %v2297, %v2368
      %v2370 = vpop.f32.mrf.mxu0
      %2371 = vmatprep.mubr.bf16.mxu0 %v2030
      %2372 = vmatmul.mubr.bf16.gmra.mxu0 %v2028
      %v2373 = vpop.f32.mrf.mxu0
      %v2374 = vadd.f32 %v2302, %v2373
      %v2375 = vpop.f32.mrf.mxu0
      %v2376 = vpop.f32.mrf.mxu0
      %v2377 = vadd.f32 %v2305, %v2376
      %v2378 = vpop.f32.mrf.mxu0
      %2379 = vmatprep.mubr.bf16.mxu0 %v2038
      %2380 = vmatmul.mubr.bf16.gmra.mxu0 %v2036
      %v2381 = vpop.f32.mrf.mxu0
      %v2382 = vadd.f32 %v2310, %v2381
      %v2383 = vpop.f32.mrf.mxu0
      %v2384 = vpop.f32.mrf.mxu0
      %v2385 = vadd.f32 %v2313, %v2384
      %v2386 = vpop.f32.mrf.mxu0
      %2387 = vmatprep.mubr.bf16.mxu0 %v2046
      %2388 = vmatmul.mubr.bf16.gmra.mxu0 %v2044
      %v2389 = vpop.f32.mrf.mxu0
      %v2390 = vadd.f32 %v2318, %v2389
      %v2391 = vpop.f32.mrf.mxu0
      %v2392 = vpop.f32.mrf.mxu0
      %v2393 = vadd.f32 %v2321, %v2392
      %v2394 = vpop.f32.mrf.mxu0
      %2395 = vmatprep.mubr.bf16.mxu0 %v2045
      %2396 = vmatmul.mubr.bf16.gmra.mxu0 %v2043
      %v2397 = vpop.f32.mrf.mxu0
      %v2398 = vadd.f32 %v2326, %v2397
      %v2399 = vpop.f32.mrf.mxu0
      %v2400 = vpop.f32.mrf.mxu0
      %v2401 = vpop.f32.mrf.mxu0
      %2402 = vdwg.mxu0
      %v2403 = vadd.f32 %v1924, %v2366
      %v2404 = vadd.f32 %v1925, %v2369
      %v2405 = vadd.f32 %v1926, %v2374
      %v2406 = vadd.f32 %v1927, %v2377
      %v2407 = vadd.f32 %v1928, %v2382
      %v2408 = vadd.f32 %v1929, %v2385
      %v2409 = vadd.f32 %v1930, %v2390
      %v2410 = vadd.f32 %v1931, %v2393
      %v2411 = vadd.f32 %v1932, %v2398
      %v2412 = vpack.c.bf16 %v2404, %v2403
      %v2413 = vpack.c.bf16 %v2406, %v2405
      %v2414 = vpack.c.bf16 %v2408, %v2407
      %v2415 = vpack.c.bf16 %v2410, %v2409
      %v2416 = vpack.c.bf16 %v2411, %v2411
      %v2422 = vunpack.c.l.b16 %v2412
      %v2423 = vunpack.c.h.b16 %v2412
      %v2424 = vunpack.c.l.b16 %v2413
      %v2425 = vunpack.c.h.b16 %v2413
      %v2426 = vunpack.c.l.b16 %v2414
      %v2427 = vunpack.c.h.b16 %v2414
      %v2428 = vunpack.c.l.b16 %v2415
      %v2429 = vunpack.c.h.b16 %v2415
      %v2430 = vunpack.c.l.b16 %v2416
      %v2431 = vpack.c.b16 %v2422, %v2422
      %v2432 = vpack.c.b16 %v2423, %v2423
      %v2433 = vpack.c.b16 %v2424, %v2424
      %v2434 = vpack.c.b16 %v2425, %v2425
      %v2435 = vpack.c.b16 %v2426, %v2426
      %v2436 = vpack.c.b16 %v2427, %v2427
      %v2437 = vpack.c.b16 %v2428, %v2428
      %v2438 = vpack.c.b16 %v2429, %v2429
      %v2439 = vpack.c.b16 %v2430, %v2430
      %2449 = vst [vmem:[%s143] sm:$0xf] %v2431
      %2450 = vst [vmem:[%s143 + $0x4] sm:$0xf] %v2432
      %2451 = vst [vmem:[%s143 + $0x8] sm:$0xf] %v2433
      %2452 = vst [vmem:[%s143 + $0xc] sm:$0xf] %v2434
      %2453 = vst [vmem:[%s143 + $0x10] sm:$0xf] %v2435
      %2454 = vst [vmem:[%s143 + $0x14] sm:$0xf] %v2436
      %2455 = vst [vmem:[%s143 + $0x18] sm:$0xf] %v2437
      %2456 = vst [vmem:[%s143 + $0x1c] sm:$0xf] %v2438
      %2457 = vst [vmem:[%s143 + $0x20] sm:$0xf] %v2439
      %p2458 = scmp.lt.s32.totalorder %s13, 1
      %s2459 = scalar_select %p2458, %s13, 1
      %s2460 = smul.addr %s2459, 9
      %s2461 = smul.addr %s2460, 4
      %s2462 = scalar_lea.vmem %s2, %s2461
      // Predicated region
      $region29: #{discriminator_forward.9} parent=27 // pred_check
        %p2463 = pneg %p78
      $region30: #{discriminator_forward.9} parent=27 // pred_check_branch
        %2465 = sbr.rel (%p2463) target = $region32
      $region31: #{discriminator_forward.9} parent=27 // pred_region
        _
      $region32: #{discriminator_forward.9} parent=27 // pred_fallthru
        _
    $region28: #{discriminator_forward.9} parent=5 // pred_fallthru
      _
    %p2466 = scmp.le.s32.totalorder 2, %s8
    // Predicated region
    $region33: #{discriminator_forward.9} parent=5 // pred_check
      %p2467 = pneg %p2466
    $region34: #{discriminator_forward.9} parent=5 // pred_check_branch
      %2469 = sbr.rel (%p2467) target = $region36
    $region35: #{discriminator_forward.9} parent=5 // pred_region
      %s2470 = ssub.s32 %s8, 2
      // Predicated region
      $region37: #{discriminator_forward.9} parent=35 // pred_check
        %p2471 = pneg %p84
      $region38: #{discriminator_forward.9} parent=35 // pred_check_branch
        %2473 = sbr.rel (%p2471) target = $region40
      $region39: #{discriminator_forward.9} parent=35 // pred_region
        %p2474 = scmp.lt.s32.totalorder %s14, 1
        %s2475 = scalar_select %p2474, %s14, 1
        %s2476 = smul.addr %s2475, 9
        %s2477 = smul.addr %s2476, 4
        %s2478 = scalar_lea.vmem %s2, %s2477
      $region40: #{discriminator_forward.9} parent=35 // pred_fallthru
        _
    $region36: #{discriminator_forward.9} parent=5 // pred_fallthru
      _
  $region6: #{discriminator_forward.9} parent=0 // loop_footer
    %s12 = sadd.s32 1, %s8
  $region7: #{discriminator_forward.9} parent=0 // loop_footer_branch
    %7 = sbr.rel target = $region3
  $region8: #{discriminator_forward.9} parent=0 // loop_exit
    _

// kernel: discriminator_forward.12
$region0: #{discriminator_forward.12}
  #allocation0 [shape = 'u32[]', space=smem, size = 0x4, offset = 0x4, fixed_abs, tag = 'smem constant byte address 0x4 - core index']
  #allocation1 [shape = 'u32[144,128]{1,0:T(1,128)}', space=vmem, size = 0x12000, scoped, tag = 'internal scratch']
  %s0 = inlined_call_operand.vmem [shape: bf16[2,16,128], index: 0, kind: input, shape index: {}]
  %s1 = inlined_call_operand.vmem [shape: bf16[2,16,128], index: 1, kind: output, shape index: {}]
  %s2 = sld [smem:[#allocation0]]
  $region37: #{discriminator_forward.12} parent=0
    _
  %s4 = ssub.s32 1, %s2
  %s5 = scalar_select 0, %s4, %s2
  loop: start=0, step=1, limit=4
  $region2: #{discriminator_forward.12} parent=0 // loop_pre_header
    _
  $region3: #{discriminator_forward.12} parent=0 // loop_header
    %s7 = sphi 0, %s11
    %p8 = scmp.ge.s32.totalorder %s7, 4
    %s14 = sphi 0, %s26
    %s15 = sphi 0, %s22
    %s16 = sphi 0, %s14
    %s17 = sphi 0, %s15
    %s18 = sphi 0, %s16
    %s19 = sphi 0, %s17
    %s31 = sphi 0, %s33
    %s34 = sphi 0, %s31
    %s35 = sphi 0, %s34
    %s51 = sphi 0, %s35
    %s59 = sphi 0, %s61
    %s62 = sphi 0, %s59
    %s63 = sphi 0, %s62
    %s79 = sphi 0, %s63
  $region4: #{discriminator_forward.12} parent=0 // loop_header_branch
    %10 = sbr.rel (%p8) target = $region8
  $region5: #{discriminator_forward.12} parent=0 // loop_body
    %s12 = ssub.s32 %s7, 1
    %s13 = ssub.s32 %s7, 2
    %s20 = sadd.s32 1, %s15
    %p21 = scmp.ge.s32.totalorder %s20, 1
    %s22 = scalar_select %p21, 0, %s20
    %s23 = sadd.s32 1, %s14
    %s24 = scalar_select %p21, %s23, %s14
    %p25 = scmp.ge.s32.totalorder %s24, 2
    %s26 = scalar_select %p25, 0, %s24
    %s27 = ssub.s32 %s14, %s26
    %s28 = ssub.s32 %s15, %s22
    %s29 = sor.u32 %s27, %s28
    %p30 = scmp.eq.s32.totalorder %s29, 0
    %s32 = sadd.s32 %s31, 1
    %s33 = scalar_select %p30, %s31, %s32
    %p36 = pneg %p30
    %p37 = scmp.eq.s32.totalorder %s7, 1
    %p38 = por %p36, %p37
    %p39 = scmp.ne.s32.totalorder %s31, %s34
    %p40 = scmp.eq.s32.totalorder %s7, 0
    %p41 = por %p39, %p40
    %p42 = scmp.ne.s32.totalorder %s31, %s34
    %p43 = scmp.eq.s32.totalorder %s12, 1
    %p44 = por %p42, %p43
    %p45 = scmp.ne.s32.totalorder %s34, %s35
    %p46 = scmp.eq.s32.totalorder %s12, 0
    %p47 = por %p45, %p46
    %p48 = scmp.ne.s32.totalorder %s34, %s35
    %p49 = scmp.eq.s32.totalorder %s13, 1
    %p50 = por %p48, %p49
    %p52 = scmp.ne.s32.totalorder %s35, %s51
    %p53 = scmp.eq.s32.totalorder %s13, 0
    %p54 = por %p52, %p53
    %s55 = ssub.s32 %s14, %s26
    %s56 = ssub.s32 %s15, %s22
    %s57 = sor.u32 %s55, %s56
    %p58 = scmp.eq.s32.totalorder %s57, 0
    %s60 = sadd.s32 %s59, 1
    %s61 = scalar_select %p58, %s59, %s60
    %p64 = pneg %p58
    %p65 = scmp.eq.s32.totalorder %s7, 1
    %p66 = por %p64, %p65
    %p67 = scmp.ne.s32.totalorder %s59, %s62
    %p68 = scmp.eq.s32.totalorder %s7, 0
    %p69 = por %p67, %p68
    %p70 = scmp.ne.s32.totalorder %s59, %s62
    %p71 = scmp.eq.s32.totalorder %s12, 1
    %p72 = por %p70, %p71
    %p73 = scmp.ne.s32.totalorder %s62, %s63
    %p74 = scmp.eq.s32.totalorder %s12, 0
    %p75 = por %p73, %p74
    %p76 = scmp.ne.s32.totalorder %s62, %s63
    %p77 = scmp.eq.s32.totalorder %s13, 1
    %p78 = por %p76, %p77
    %p80 = scmp.ne.s32.totalorder %s63, %s79
    %p81 = scmp.eq.s32.totalorder %s13, 0
    %p82 = por %p80, %p81
    %p83 = scmp.le.s32.totalorder 1, %s7
    %p84 = scmp.lt.s32.totalorder %s7, 3
    %p85 = pnand %p83, %p84
    %p86 = pneg %p85
    // Predicated region
    $region9: #{discriminator_forward.12} parent=5 // pred_check
      _
    $region10: #{discriminator_forward.12} parent=5 // pred_check_branch
      %88 = sbr.rel (%p85) target = $region12
    $region11: #{discriminator_forward.12} parent=5 // pred_region
      %s89 = ssub.s32 %s7, 1
    $region12: #{discriminator_forward.12} parent=5 // pred_fallthru
      _
    %p90 = scmp.lt.s32.totalorder %s7, 2
    // Predicated region
    $region13: #{discriminator_forward.12} parent=5 // pred_check
      %p91 = pneg %p90
    $region14: #{discriminator_forward.12} parent=5 // pred_check_branch
      %93 = sbr.rel (%p91) target = $region16
    $region15: #{discriminator_forward.12} parent=5 // pred_region
      // Predicated region
      $region17: #{discriminator_forward.12} parent=15 // pred_check
        %p94 = pneg %p41
      $region18: #{discriminator_forward.12} parent=15 // pred_check_branch
        %96 = sbr.rel (%p94) target = $region20
      $region19: #{discriminator_forward.12} parent=15 // pred_region
        %p97 = scmp.lt.s32.totalorder %s14, 1
        %s98 = scalar_select %p97, %s14, 1
        %p99 = scmp.lt.s32.totalorder %s15, 0
        %s100 = scalar_select %p99, %s15, 0
        %s101 = smul.addr %s98, 2
        %s102 = sadd.s32 %s100, %s101
        %s103 = smul.addr %s102, 4
        %s104 = scalar_lea.vmem %s0, %s103
      $region20: #{discriminator_forward.12} parent=15 // pred_fallthru
        _
    $region16: #{discriminator_forward.12} parent=5 // pred_fallthru
      _
    %p105 = scmp.le.s32.totalorder 1, %s7
    %p106 = scmp.lt.s32.totalorder %s7, 3
    %p107 = pnand %p105, %p106
    %p108 = pneg %p107
    // Predicated region
    $region21: #{discriminator_forward.12} parent=5 // pred_check
      _
    $region22: #{discriminator_forward.12} parent=5 // pred_check_branch
      %110 = sbr.rel (%p107) target = $region24
    $region23: #{discriminator_forward.12} parent=5 // pred_region
      %s111 = ssub.s32 %s7, 1
      %p112 = scmp.lt.s32.totalorder %s16, 1
      %s113 = scalar_select %p112, %s16, 1
      %p114 = scmp.lt.s32.totalorder %s17, 0
      %s115 = scalar_select %p114, %s17, 0
      %s116 = smul.addr %s113, 2
      %s117 = sadd.s32 %s115, %s116
      %s118 = smul.addr %s117, 4
      %s119 = scalar_lea.vmem %s0, %s118
      %p120 = pneg %p47
      %p121 = pneg %p44
      %p122 = pneg %p75
      %p123 = pneg %p72
      %p124 = scmp.lt.s32.totalorder %s16, 1
      %s125 = scalar_select %p124, %s16, 1
      %p126 = scmp.lt.s32.totalorder %s17, 0
      %s127 = scalar_select %p126, %s17, 0
      %s128 = smul.addr %s125, 2
      %s129 = sadd.s32 %s127, %s128
      %s130 = smul.addr %s129, 4
      %s131 = scalar_lea.vmem %s1, %s130
      %p132 = scmp.lt.s32.totalorder %s16, 1
      %s133 = scalar_select %p132, %s16, 1
      %p134 = scmp.lt.s32.totalorder %s17, 0
      %s135 = scalar_select %p134, %s17, 0
      %s136 = smul.addr %s133, 2
      %s137 = sadd.s32 %s135, %s136
      %s138 = smul.addr %s137, 4
      %s139 = scalar_lea.vmem %s0, %s138
      %p140 = scmp.lt.s32.totalorder %s16, 1
      %s141 = scalar_select %p140, %s16, 1
      %p142 = scmp.lt.s32.totalorder %s17, 0
      %s143 = scalar_select %p142, %s17, 0
      %s144 = smul.addr %s141, 2
      %s145 = sadd.s32 %s143, %s144
      %s146 = smul.addr %s145, 4
      %s147 = scalar_lea.vmem %s1, %s146
      %v148 = vld [vmem:[%s139] sm:$0xf]
      %v149 = vld [vmem:[%s139 + $0x4] sm:$0xf]
      %v150 = vunpack.c.l.bf16 %v148
      %v151 = vunpack.c.l.bf16 %v149
      %v152 = vadd.f32 %v150, %v151
      %v153 = vrot.slane %v152, 4
      %v154 = vadd.f32 %v152, %v153
      %v155 = vrot.slane %v154, 2
      %v156 = vadd.f32 %v154, %v155
      %v157 = vrot.slane %v156, 1
      %v158 = vadd.f32 %v156, %v157
      %v159 = vrcp.pop 16.0
      %v160 = vmul.f32 %v158, %v159
      %v161 = vsub.f32 %v150, %v160
      %v162 = vsub.f32 %v151, %v160
      %v163 = vmul.f32 %v161, %v161
      %v164 = vmul.f32 %v162, %v162
      %v165 = vadd.f32 %v163, %v164
      %v166 = vrot.slane %v165, 4
      %v167 = vadd.f32 %v165, %v166
      %v168 = vrot.slane %v167, 2
      %v169 = vadd.f32 %v167, %v168
      %v170 = vrot.slane %v169, 1
      %v171 = vadd.f32 %v169, %v170
      %v172 = vmul.f32 %v171, %v159
      %v173 = vadd.f32 %v172, 1e-05
      %v174 = vrsqrt.pop %v173
      %v175 = vmul.f32 %v161, %v174
      %v176 = vmul.f32 %v162, %v174
      %vm177 = vcmp.ge.f32.partialorder %v175, 0.0
      %vm178 = vcmp.ge.f32.partialorder %v176, 0.0
      %v179 = vmul.f32 %v175, 0.2
      %v180 = vmul.f32 %v176, 0.2
      %v181 = vsel %vm177, %v175, %v179
      %v182 = vsel %vm178, %v176, %v180
      %v183 = vpack.c.bf16 %v182, %v181
      %v185 = vunpack.c.l.b16 %v183
      %v186 = vunpack.c.h.b16 %v183
      %v187 = vpack.c.b16 %v185, %v185
      %v188 = vpack.c.b16 %v186, %v186
      %191 = vst [vmem:[%s147] sm:$0xf] %v187
      %192 = vst [vmem:[%s147 + $0x4] sm:$0xf] %v188
      %p193 = scmp.lt.s32.totalorder %s16, 1
      %s194 = scalar_select %p193, %s16, 1
      %p195 = scmp.lt.s32.totalorder %s17, 0
      %s196 = scalar_select %p195, %s17, 0
      %s197 = smul.addr %s194, 2
      %s198 = sadd.s32 %s196, %s197
      %s199 = smul.addr %s198, 4
      %s200 = scalar_lea.vmem %s1, %s199
      // Predicated region
      $region25: #{discriminator_forward.12} parent=23 // pred_check
        %p201 = pneg %p72
      $region26: #{discriminator_forward.12} parent=23 // pred_check_branch
        %203 = sbr.rel (%p201) target = $region28
      $region27: #{discriminator_forward.12} parent=23 // pred_region
        _
      $region28: #{discriminator_forward.12} parent=23 // pred_fallthru
        _
    $region24: #{discriminator_forward.12} parent=5 // pred_fallthru
      _
    %p204 = scmp.le.s32.totalorder 2, %s7
    // Predicated region
    $region29: #{discriminator_forward.12} parent=5 // pred_check
      %p205 = pneg %p204
    $region30: #{discriminator_forward.12} parent=5 // pred_check_branch
      %207 = sbr.rel (%p205) target = $region32
    $region31: #{discriminator_forward.12} parent=5 // pred_region
      %s208 = ssub.s32 %s7, 2
      // Predicated region
      $region33: #{discriminator_forward.12} parent=31 // pred_check
        %p209 = pneg %p78
      $region34: #{discriminator_forward.12} parent=31 // pred_check_branch
        %211 = sbr.rel (%p209) target = $region36
      $region35: #{discriminator_forward.12} parent=31 // pred_region
        %p212 = scmp.lt.s32.totalorder %s18, 1
        %s213 = scalar_select %p212, %s18, 1
        %p214 = scmp.lt.s32.totalorder %s19, 0
        %s215 = scalar_select %p214, %s19, 0
        %s216 = smul.addr %s213, 2
        %s217 = sadd.s32 %s215, %s216
        %s218 = smul.addr %s217, 4
        %s219 = scalar_lea.vmem %s1, %s218
      $region36: #{discriminator_forward.12} parent=31 // pred_fallthru
        _
    $region32: #{discriminator_forward.12} parent=5 // pred_fallthru
      _
  $region6: #{discriminator_forward.12} parent=0 // loop_footer
    %s11 = sadd.s32 1, %s7
  $region7: #{discriminator_forward.12} parent=0 // loop_footer_branch
    %6 = sbr.rel target = $region3
  $region8: #{discriminator_forward.12} parent=0 // loop_exit
    _

// kernel: discriminator_forward.11
$region0: #{discriminator_forward.11}
  #allocation0 [shape = 'u32[]', space=smem, size = 0x4, offset = 0x4, fixed_abs, tag = 'smem constant byte address 0x4 - core index']
  #allocation1 [shape = 'u32[144,128]{1,0:T(1,128)}', space=vmem, size = 0x12000, scoped, tag = 'internal scratch']
  %s0 = inlined_call_operand.vmem [shape: bf16[2,30,512], index: 0, kind: input, shape index: {}]
  %s1 = inlined_call_operand.vmem [shape: bf16[4,512,128], index: 1, kind: input, shape index: {}]
  %s2 = inlined_call_operand.vmem [shape: bf16[2,20,128], index: 2, kind: output, shape index: {}]
  %s3 = sld [smem:[#allocation0]]
  $region41: #{discriminator_forward.11} parent=0
    _
  %s5 = ssub.s32 1, %s3
  %s6 = scalar_select 0, %s5, %s3
  loop: start=0, step=1, limit=4
  $region2: #{discriminator_forward.11} parent=0 // loop_pre_header
    _
  $region3: #{discriminator_forward.11} parent=0 // loop_header
    %s8 = sphi 0, %s12
    %p9 = scmp.ge.s32.totalorder %s8, 4
    %s18 = sphi 0, %s20
    %s21 = sphi 0, %s18
    %s22 = sphi 0, %s21
    %s38 = sphi 0, %s22
    %s42 = sphi 0, %s42
    %s44 = sphi 0, %s42
    %s45 = sphi 0, %s44
    %s59 = sphi 0, %s45
    %s65 = sphi 0, %s67
    %s68 = sphi 0, %s65
    %s69 = sphi 0, %s68
    %s85 = sphi 0, %s69
  $region4: #{discriminator_forward.11} parent=0 // loop_header_branch
    %11 = sbr.rel (%p9) target = $region8
  $region5: #{discriminator_forward.11} parent=0 // loop_body
    %s13 = ssub.s32 %s8, 1
    %s14 = ssub.s32 %s8, 2
    %s15 = sadd.s32 %s8, 1
    %s16 = ssub.s32 %s8, %s15
    %p17 = scmp.eq.s32.totalorder %s16, 0
    %s19 = sadd.s32 %s18, 1
    %s20 = scalar_select %p17, %s18, %s19
    %p23 = pneg %p17
    %p24 = scmp.eq.s32.totalorder %s8, 1
    %p25 = por %p23, %p24
    %p26 = scmp.ne.s32.totalorder %s18, %s21
    %p27 = scmp.eq.s32.totalorder %s8, 0
    %p28 = por %p26, %p27
    %p29 = scmp.ne.s32.totalorder %s18, %s21
    %p30 = scmp.eq.s32.totalorder %s13, 1
    %p31 = por %p29, %p30
    %p32 = scmp.ne.s32.totalorder %s21, %s22
    %p33 = scmp.eq.s32.totalorder %s13, 0
    %p34 = por %p32, %p33
    %p35 = scmp.ne.s32.totalorder %s21, %s22
    %p36 = scmp.eq.s32.totalorder %s14, 1
    %p37 = por %p35, %p36
    %p39 = scmp.ne.s32.totalorder %s22, %s38
    %p40 = scmp.eq.s32.totalorder %s14, 0
    %p41 = por %p39, %p40
    %s43 = sadd.s32 %s42, 1
    %p46 = scmp.eq.s32.totalorder %s8, 1
    %p47 = scmp.ne.s32.totalorder %s42, %s44
    %p48 = scmp.eq.s32.totalorder %s8, 0
    %p49 = por %p47, %p48
    %p50 = scmp.ne.s32.totalorder %s42, %s44
    %p51 = scmp.eq.s32.totalorder %s13, 1
    %p52 = por %p50, %p51
    %p53 = scmp.ne.s32.totalorder %s44, %s45
    %p54 = scmp.eq.s32.totalorder %s13, 0
    %p55 = por %p53, %p54
    %p56 = scmp.ne.s32.totalorder %s44, %s45
    %p57 = scmp.eq.s32.totalorder %s14, 1
    %p58 = por %p56, %p57
    %p60 = scmp.ne.s32.totalorder %s45, %s59
    %p61 = scmp.eq.s32.totalorder %s14, 0
    %p62 = por %p60, %p61
    %s63 = ssub.s32 %s8, %s15
    %p64 = scmp.eq.s32.totalorder %s63, 0
    %s66 = sadd.s32 %s65, 1
    %s67 = scalar_select %p64, %s65, %s66
    %p70 = pneg %p64
    %p71 = scmp.eq.s32.totalorder %s8, 1
    %p72 = por %p70, %p71
    %p73 = scmp.ne.s32.totalorder %s65, %s68
    %p74 = scmp.eq.s32.totalorder %s8, 0
    %p75 = por %p73, %p74
    %p76 = scmp.ne.s32.totalorder %s65, %s68
    %p77 = scmp.eq.s32.totalorder %s13, 1
    %p78 = por %p76, %p77
    %p79 = scmp.ne.s32.totalorder %s68, %s69
    %p80 = scmp.eq.s32.totalorder %s13, 0
    %p81 = por %p79, %p80
    %p82 = scmp.ne.s32.totalorder %s68, %s69
    %p83 = scmp.eq.s32.totalorder %s14, 1
    %p84 = por %p82, %p83
    %p86 = scmp.ne.s32.totalorder %s69, %s85
    %p87 = scmp.eq.s32.totalorder %s14, 0
    %p88 = por %p86, %p87
    %p89 = scmp.le.s32.totalorder 1, %s8
    %p90 = scmp.lt.s32.totalorder %s8, 3
    %p91 = pnand %p89, %p90
    %p92 = pneg %p91
    // Predicated region
    $region9: #{discriminator_forward.11} parent=5 // pred_check
      _
    $region10: #{discriminator_forward.11} parent=5 // pred_check_branch
      %94 = sbr.rel (%p91) target = $region12
    $region11: #{discriminator_forward.11} parent=5 // pred_region
      %s95 = ssub.s32 %s8, 1
      // Predicated region
      $region13: #{discriminator_forward.11} parent=11 // pred_check
        %p96 = pneg %p55
      $region14: #{discriminator_forward.11} parent=11 // pred_check_branch
        %98 = sbr.rel (%p96) target = $region16
      $region15: #{discriminator_forward.11} parent=11 // pred_region
        _
      $region16: #{discriminator_forward.11} parent=11 // pred_fallthru
        _
    $region12: #{discriminator_forward.11} parent=5 // pred_fallthru
      _
    %p99 = scmp.lt.s32.totalorder %s8, 2
    // Predicated region
    $region17: #{discriminator_forward.11} parent=5 // pred_check
      %p100 = pneg %p99
    $region18: #{discriminator_forward.11} parent=5 // pred_check_branch
      %102 = sbr.rel (%p100) target = $region20
    $region19: #{discriminator_forward.11} parent=5 // pred_region
      // Predicated region
      $region21: #{discriminator_forward.11} parent=19 // pred_check
        %p103 = pneg %p28
      $region22: #{discriminator_forward.11} parent=19 // pred_check_branch
        %105 = sbr.rel (%p103) target = $region24
      $region23: #{discriminator_forward.11} parent=19 // pred_region
        %p106 = scmp.lt.s32.totalorder %s8, 1
        %s107 = scalar_select %p106, %s8, 1
        %s108 = smul.addr %s107, 16
        %s109 = smul.addr %s108, 4
        %s110 = scalar_lea.vmem %s0, %s109
      $region24: #{discriminator_forward.11} parent=19 // pred_fallthru
        _
    $region20: #{discriminator_forward.11} parent=5 // pred_fallthru
      _
    %p111 = scmp.le.s32.totalorder 1, %s8
    %p112 = scmp.lt.s32.totalorder %s8, 3
    %p113 = pnand %p111, %p112
    %p114 = pneg %p113
    // Predicated region
    $region25: #{discriminator_forward.11} parent=5 // pred_check
      _
    $region26: #{discriminator_forward.11} parent=5 // pred_check_branch
      %116 = sbr.rel (%p113) target = $region28
    $region27: #{discriminator_forward.11} parent=5 // pred_region
      %s117 = ssub.s32 %s8, 1
      %p118 = scmp.lt.s32.totalorder %s13, 1
      %s119 = scalar_select %p118, %s13, 1
      %s120 = smul.addr %s119, 16
      %s121 = smul.addr %s120, 4
      %s122 = scalar_lea.vmem %s0, %s121
      %p123 = pneg %p34
      %p124 = pneg %p31
      %p125 = pneg %p55
      %p126 = pneg %p52
      %p127 = pneg %p81
      %p128 = pneg %p78
      %p129 = scmp.lt.s32.totalorder %s13, 1
      %s130 = scalar_select %p129, %s13, 1
      %s131 = smul.addr %s130, 3
      %s132 = smul.addr %s131, 4
      %s133 = scalar_lea.vmem %s2, %s132
      %p134 = scmp.lt.s32.totalorder %s13, 1
      %s135 = scalar_select %p134, %s13, 1
      %s136 = smul.addr %s135, 16
      %s137 = smul.addr %s136, 4
      %s138 = scalar_lea.vmem %s0, %s137
      %p139 = scmp.lt.s32.totalorder %s13, 1
      %s140 = scalar_select %p139, %s13, 1
      %s141 = smul.addr %s140, 3
      %s142 = smul.addr %s141, 4
      %s143 = scalar_lea.vmem %s2, %s142
      %v145 = vld [vmem:[%s138] sm:$0xff]
      %v146 = vld [vmem:[%s138 + $0x8] sm:$0xff]
      %v147 = vld [vmem:[%s138 + $0x10] sm:$0xff]
      %v148 = vld [vmem:[%s138 + $0x18] sm:$0xff]
      %v149 = vld [vmem:[%s138 + $0x20] sm:$0x33]
      %v150 = vld [vmem:[%s138 + $0x28] sm:$0x33]
      %v151 = vld [vmem:[%s1] sm:$0xf]
      %v152 = vld [vmem:[%s1 + $0x4] sm:$0xf]
      %v153 = vld [vmem:[%s1 + $0x8] sm:$0xf]
      %v154 = vld [vmem:[%s1 + $0xc] sm:$0xf]
      %v155 = vld [vmem:[%s1 + $0x10] sm:$0xf]
      %v156 = vld [vmem:[%s1 + $0x14] sm:$0xf]
      %v157 = vld [vmem:[%s1 + $0x18] sm:$0xf]
      %v158 = vld [vmem:[%s1 + $0x1c] sm:$0xf]
      %v159 = vld [vmem:[%s1 + $0x20] sm:$0xf]
      %v160 = vld [vmem:[%s1 + $0x24] sm:$0xf]
      %v161 = vld [vmem:[%s1 + $0x28] sm:$0xf]
      %v162 = vld [vmem:[%s1 + $0x2c] sm:$0xf]
      %v163 = vld [vmem:[%s1 + $0x30] sm:$0xf]
      %v164 = vld [vmem:[%s1 + $0x34] sm:$0xf]
      %v165 = vld [vmem:[%s1 + $0x38] sm:$0xf]
      %v166 = vld [vmem:[%s1 + $0x3c] sm:$0xf]
      %v167 = vld [vmem:[%s1 + $0x40] sm:$0xf]
      %v168 = vld [vmem:[%s1 + $0x44] sm:$0xf]
      %v169 = vld [vmem:[%s1 + $0x48] sm:$0xf]
      %v170 = vld [vmem:[%s1 + $0x4c] sm:$0xf]
      %v171 = vld [vmem:[%s1 + $0x50] sm:$0xf]
      %v172 = vld [vmem:[%s1 + $0x54] sm:$0xf]
      %v173 = vld [vmem:[%s1 + $0x58] sm:$0xf]
      %v174 = vld [vmem:[%s1 + $0x5c] sm:$0xf]
      %v175 = vld [vmem:[%s1 + $0x60] sm:$0xf]
      %v176 = vld [vmem:[%s1 + $0x64] sm:$0xf]
      %v177 = vld [vmem:[%s1 + $0x68] sm:$0xf]
      %v178 = vld [vmem:[%s1 + $0x6c] sm:$0xf]
      %v179 = vld [vmem:[%s1 + $0x70] sm:$0xf]
      %v180 = vld [vmem:[%s1 + $0x74] sm:$0xf]
      %v181 = vld [vmem:[%s1 + $0x78] sm:$0xf]
      %v182 = vld [vmem:[%s1 + $0x7c] sm:$0xf]
      %v183 = vld [vmem:[%s1 + $0x80] sm:$0xf]
      %v184 = vld [vmem:[%s1 + $0x84] sm:$0xf]
      %v185 = vld [vmem:[%s1 + $0x88] sm:$0xf]
      %v186 = vld [vmem:[%s1 + $0x8c] sm:$0xf]
      %v187 = vld [vmem:[%s1 + $0x90] sm:$0xf]
      %v188 = vld [vmem:[%s1 + $0x94] sm:$0xf]
      %v189 = vld [vmem:[%s1 + $0x98] sm:$0xf]
      %v190 = vld [vmem:[%s1 + $0x9c] sm:$0xf]
      %v191 = vld [vmem:[%s1 + $0xa0] sm:$0xf]
      %v192 = vld [vmem:[%s1 + $0xa4] sm:$0xf]
      %v193 = vld [vmem:[%s1 + $0xa8] sm:$0xf]
      %v194 = vld [vmem:[%s1 + $0xac] sm:$0xf]
      %v195 = vld [vmem:[%s1 + $0xb0] sm:$0xf]
      %v196 = vld [vmem:[%s1 + $0xb4] sm:$0xf]
      %v197 = vld [vmem:[%s1 + $0xb8] sm:$0xf]
      %v198 = vld [vmem:[%s1 + $0xbc] sm:$0xf]
      %v199 = vld [vmem:[%s1 + $0xc0] sm:$0xf]
      %v200 = vld [vmem:[%s1 + $0xc4] sm:$0xf]
      %v201 = vld [vmem:[%s1 + $0xc8] sm:$0xf]
      %v202 = vld [vmem:[%s1 + $0xcc] sm:$0xf]
      %v203 = vld [vmem:[%s1 + $0xd0] sm:$0xf]
      %v204 = vld [vmem:[%s1 + $0xd4] sm:$0xf]
      %v205 = vld [vmem:[%s1 + $0xd8] sm:$0xf]
      %v206 = vld [vmem:[%s1 + $0xdc] sm:$0xf]
      %v207 = vld [vmem:[%s1 + $0xe0] sm:$0xf]
      %v208 = vld [vmem:[%s1 + $0xe4] sm:$0xf]
      %v209 = vld [vmem:[%s1 + $0xe8] sm:$0xf]
      %v210 = vld [vmem:[%s1 + $0xec] sm:$0xf]
      %v211 = vld [vmem:[%s1 + $0xf0] sm:$0xf]
      %v212 = vld [vmem:[%s1 + $0xf4] sm:$0xf]
      %v213 = vld [vmem:[%s1 + $0xf8] sm:$0xf]
      %v214 = vld [vmem:[%s1 + $0xfc] sm:$0xf]
      %v215 = vld [vmem:[%s138 + $0x20] sm:$0x77]
      %v216 = vld [vmem:[%s138 + $0x28] sm:$0x77]
      %s217 = scalar_lea.vmem %s1, 256
      %v218 = vld [vmem:[%s217] sm:$0xf]
      %v219 = vld [vmem:[%s217 + $0x4] sm:$0xf]
      %v220 = vld [vmem:[%s217 + $0x8] sm:$0xf]
      %v221 = vld [vmem:[%s217 + $0xc] sm:$0xf]
      %v222 = vld [vmem:[%s217 + $0x10] sm:$0xf]
      %v223 = vld [vmem:[%s217 + $0x14] sm:$0xf]
      %v224 = vld [vmem:[%s217 + $0x18] sm:$0xf]
      %v225 = vld [vmem:[%s217 + $0x1c] sm:$0xf]
      %v226 = vld [vmem:[%s217 + $0x20] sm:$0xf]
      %v227 = vld [vmem:[%s217 + $0x24] sm:$0xf]
      %v228 = vld [vmem:[%s217 + $0x28] sm:$0xf]
      %v229 = vld [vmem:[%s217 + $0x2c] sm:$0xf]
      %v230 = vld [vmem:[%s217 + $0x30] sm:$0xf]
      %v231 = vld [vmem:[%s217 + $0x34] sm:$0xf]
      %v232 = vld [vmem:[%s217 + $0x38] sm:$0xf]
      %v233 = vld [vmem:[%s217 + $0x3c] sm:$0xf]
      %v234 = vld [vmem:[%s217 + $0x40] sm:$0xf]
      %v235 = vld [vmem:[%s217 + $0x44] sm:$0xf]
      %v236 = vld [vmem:[%s217 + $0x48] sm:$0xf]
      %v237 = vld [vmem:[%s217 + $0x4c] sm:$0xf]
      %v238 = vld [vmem:[%s217 + $0x50] sm:$0xf]
      %v239 = vld [vmem:[%s217 + $0x54] sm:$0xf]
      %v240 = vld [vmem:[%s217 + $0x58] sm:$0xf]
      %v241 = vld [vmem:[%s217 + $0x5c] sm:$0xf]
      %v242 = vld [vmem:[%s217 + $0x60] sm:$0xf]
      %v243 = vld [vmem:[%s217 + $0x64] sm:$0xf]
      %v244 = vld [vmem:[%s217 + $0x68] sm:$0xf]
      %v245 = vld [vmem:[%s217 + $0x6c] sm:$0xf]
      %v246 = vld [vmem:[%s217 + $0x70] sm:$0xf]
      %v247 = vld [vmem:[%s217 + $0x74] sm:$0xf]
      %v248 = vld [vmem:[%s217 + $0x78] sm:$0xf]
      %v249 = vld [vmem:[%s217 + $0x7c] sm:$0xf]
      %v250 = vld [vmem:[%s217 + $0x80] sm:$0xf]
      %v251 = vld [vmem:[%s217 + $0x84] sm:$0xf]
      %v252 = vld [vmem:[%s217 + $0x88] sm:$0xf]
      %v253 = vld [vmem:[%s217 + $0x8c] sm:$0xf]
      %v254 = vld [vmem:[%s217 + $0x90] sm:$0xf]
      %v255 = vld [vmem:[%s217 + $0x94] sm:$0xf]
      %v256 = vld [vmem:[%s217 + $0x98] sm:$0xf]
      %v257 = vld [vmem:[%s217 + $0x9c] sm:$0xf]
      %v258 = vld [vmem:[%s217 + $0xa0] sm:$0xf]
      %v259 = vld [vmem:[%s217 + $0xa4] sm:$0xf]
      %v260 = vld [vmem:[%s217 + $0xa8] sm:$0xf]
      %v261 = vld [vmem:[%s217 + $0xac] sm:$0xf]
      %v262 = vld [vmem:[%s217 + $0xb0] sm:$0xf]
      %v263 = vld [vmem:[%s217 + $0xb4] sm:$0xf]
      %v264 = vld [vmem:[%s217 + $0xb8] sm:$0xf]
      %v265 = vld [vmem:[%s217 + $0xbc] sm:$0xf]
      %v266 = vld [vmem:[%s217 + $0xc0] sm:$0xf]
      %v267 = vld [vmem:[%s217 + $0xc4] sm:$0xf]
      %v268 = vld [vmem:[%s217 + $0xc8] sm:$0xf]
      %v269 = vld [vmem:[%s217 + $0xcc] sm:$0xf]
      %v270 = vld [vmem:[%s217 + $0xd0] sm:$0xf]
      %v271 = vld [vmem:[%s217 + $0xd4] sm:$0xf]
      %v272 = vld [vmem:[%s217 + $0xd8] sm:$0xf]
      %v273 = vld [vmem:[%s217 + $0xdc] sm:$0xf]
      %v274 = vld [vmem:[%s217 + $0xe0] sm:$0xf]
      %v275 = vld [vmem:[%s217 + $0xe4] sm:$0xf]
      %v276 = vld [vmem:[%s217 + $0xe8] sm:$0xf]
      %v277 = vld [vmem:[%s217 + $0xec] sm:$0xf]
      %v278 = vld [vmem:[%s217 + $0xf0] sm:$0xf]
      %v279 = vld [vmem:[%s217 + $0xf4] sm:$0xf]
      %v280 = vld [vmem:[%s217 + $0xf8] sm:$0xf]
      %v281 = vld [vmem:[%s217 + $0xfc] sm:$0xf]
      %v288 = vunpack.c.l.b16 %v145
      %v289 = vunpack.c.h.b16 %v145
      %v290 = vunpack.c.l.b16 %v146
      %v291 = vunpack.c.h.b16 %v146
      %v292 = vunpack.c.l.b16 %v147
      %v293 = vunpack.c.h.b16 %v147
      %v294 = vunpack.c.l.b16 %v148
      %v295 = vunpack.c.h.b16 %v148
      %v296 = vunpack.c.l.b16 %v215
      %v297 = vunpack.c.h.b16 %v215
      %v298 = vunpack.c.l.b16 %v216
      %v299 = vunpack.c.h.b16 %v216
      %v300 = vpack.c.b16 %v292, %v288
      %v301 = vpack.c.b16 %v293, %v289
      %v302 = vpack.c.b16 %v294, %v290
      %v303 = vpack.c.b16 %v295, %v291
      %v304 = vpack.c.b16 %v296, %v296
      %v305 = vpack.c.b16 %v297, %v297
      %v306 = vpack.c.b16 %v298, %v298
      %v307 = vpack.c.b16 %v299, %v299
      %vm308 = vsmask.f32 7424
      %v310 = vshrl.u32 %v300, 16
      %v312 = vshll.u32 %v300, 16
      %v314 = vrot.slane %v312, 1
      %v315 = vor.u32 %v310, %v314
      %v317 = vshll.u32 %v304, 16
      %v319 = vrot.slane %v317, 1
      %v320 = vsel %vm308, %v315, %v319
      %v322 = vshrl.u32 %v301, 16
      %v324 = vshll.u32 %v301, 16
      %v326 = vrot.slane %v324, 1
      %v327 = vor.u32 %v322, %v326
      %v329 = vshll.u32 %v305, 16
      %v331 = vrot.slane %v329, 1
      %v332 = vsel %vm308, %v327, %v331
      %v334 = vshrl.u32 %v302, 16
      %v336 = vshll.u32 %v302, 16
      %v338 = vrot.slane %v336, 1
      %v339 = vor.u32 %v334, %v338
      %v341 = vshll.u32 %v306, 16
      %v343 = vrot.slane %v341, 1
      %v344 = vsel %vm308, %v339, %v343
      %v346 = vshrl.u32 %v303, 16
      %v348 = vshll.u32 %v303, 16
      %v350 = vrot.slane %v348, 1
      %v351 = vor.u32 %v346, %v350
      %v353 = vshll.u32 %v307, 16
      %v355 = vrot.slane %v353, 1
      %v356 = vsel %vm308, %v351, %v355
      %v357 = vshrl.u32 %v304, 16
      %v359 = vor.u32 %v357, %v319
      %v360 = vshrl.u32 %v305, 16
      %v362 = vor.u32 %v360, %v331
      %v363 = vshrl.u32 %v306, 16
      %v365 = vor.u32 %v363, %v343
      %v366 = vshrl.u32 %v307, 16
      %v368 = vor.u32 %v366, %v355
      %v441 = vunpack.c.l.b16 %v218
      %v442 = vunpack.c.l.b16 %v219
      %v443 = vunpack.c.l.b16 %v220
      %v444 = vunpack.c.l.b16 %v221
      %v445 = vunpack.c.l.b16 %v222
      %v446 = vunpack.c.l.b16 %v223
      %v447 = vunpack.c.l.b16 %v224
      %v448 = vunpack.c.l.b16 %v225
      %v449 = vunpack.c.l.b16 %v226
      %v450 = vunpack.c.l.b16 %v227
      %v451 = vunpack.c.l.b16 %v228
      %v452 = vunpack.c.l.b16 %v229
      %v453 = vunpack.c.l.b16 %v230
      %v454 = vunpack.c.l.b16 %v231
      %v455 = vunpack.c.l.b16 %v232
      %v456 = vunpack.c.l.b16 %v233
      %v457 = vunpack.c.l.b16 %v234
      %v458 = vunpack.c.l.b16 %v235
      %v459 = vunpack.c.l.b16 %v236
      %v460 = vunpack.c.l.b16 %v237
      %v461 = vunpack.c.l.b16 %v238
      %v462 = vunpack.c.l.b16 %v239
      %v463 = vunpack.c.l.b16 %v240
      %v464 = vunpack.c.l.b16 %v241
      %v465 = vunpack.c.l.b16 %v242
      %v466 = vunpack.c.l.b16 %v243
      %v467 = vunpack.c.l.b16 %v244
      %v468 = vunpack.c.l.b16 %v245
      %v469 = vunpack.c.l.b16 %v246
      %v470 = vunpack.c.l.b16 %v247
      %v471 = vunpack.c.l.b16 %v248
      %v472 = vunpack.c.l.b16 %v249
      %v473 = vunpack.c.l.b16 %v250
      %v474 = vunpack.c.l.b16 %v251
      %v475 = vunpack.c.l.b16 %v252
      %v476 = vunpack.c.l.b16 %v253
      %v477 = vunpack.c.l.b16 %v254
      %v478 = vunpack.c.l.b16 %v255
      %v479 = vunpack.c.l.b16 %v256
      %v480 = vunpack.c.l.b16 %v257
      %v481 = vunpack.c.l.b16 %v258
      %v482 = vunpack.c.l.b16 %v259
      %v483 = vunpack.c.l.b16 %v260
      %v484 = vunpack.c.l.b16 %v261
      %v485 = vunpack.c.l.b16 %v262
      %v486 = vunpack.c.l.b16 %v263
      %v487 = vunpack.c.l.b16 %v264
      %v488 = vunpack.c.l.b16 %v265
      %v489 = vunpack.c.l.b16 %v266
      %v490 = vunpack.c.l.b16 %v267
      %v491 = vunpack.c.l.b16 %v268
      %v492 = vunpack.c.l.b16 %v269
      %v493 = vunpack.c.l.b16 %v270
      %v494 = vunpack.c.l.b16 %v271
      %v495 = vunpack.c.l.b16 %v272
      %v496 = vunpack.c.l.b16 %v273
      %v497 = vunpack.c.l.b16 %v274
      %v498 = vunpack.c.l.b16 %v275
      %v499 = vunpack.c.l.b16 %v276
      %v500 = vunpack.c.l.b16 %v277
      %v501 = vunpack.c.l.b16 %v278
      %v502 = vunpack.c.l.b16 %v279
      %v503 = vunpack.c.l.b16 %v280
      %v504 = vunpack.c.l.b16 %v281
      %v505 = vpack.c.b16 %v442, %v441
      %v506 = vpack.c.b16 %v444, %v443
      %v507 = vpack.c.b16 %v446, %v445
      %v508 = vpack.c.b16 %v448, %v447
      %v509 = vpack.c.b16 %v450, %v449
      %v510 = vpack.c.b16 %v452, %v451
      %v511 = vpack.c.b16 %v454, %v453
      %v512 = vpack.c.b16 %v456, %v455
      %v513 = vpack.c.b16 %v458, %v457
      %v514 = vpack.c.b16 %v460, %v459
      %v515 = vpack.c.b16 %v462, %v461
      %v516 = vpack.c.b16 %v464, %v463
      %v517 = vpack.c.b16 %v466, %v465
      %v518 = vpack.c.b16 %v468, %v467
      %v519 = vpack.c.b16 %v470, %v469
      %v520 = vpack.c.b16 %v472, %v471
      %v521 = vpack.c.b16 %v474, %v473
      %v522 = vpack.c.b16 %v476, %v475
      %v523 = vpack.c.b16 %v478, %v477
      %v524 = vpack.c.b16 %v480, %v479
      %v525 = vpack.c.b16 %v482, %v481
      %v526 = vpack.c.b16 %v484, %v483
      %v527 = vpack.c.b16 %v486, %v485
      %v528 = vpack.c.b16 %v488, %v487
      %v529 = vpack.c.b16 %v490, %v489
      %v530 = vpack.c.b16 %v492, %v491
      %v531 = vpack.c.b16 %v494, %v493
      %v532 = vpack.c.b16 %v496, %v495
      %v533 = vpack.c.b16 %v498, %v497
      %v534 = vpack.c.b16 %v500, %v499
      %v535 = vpack.c.b16 %v502, %v501
      %v536 = vpack.c.b16 %v504, %v503
      %569 = vmatprep.subr.bf16.mxu0 0
      %570 = vmatpush1.bf16.msra.mxu0 %v512
      %571 = vmatprep.subr.bf16.mxu0 0
      %572 = vmatpush1.bf16.msra.mxu0 %v511
      %573 = vmatprep.subr.bf16.mxu0 0
      %574 = vmatpush1.bf16.msra.mxu0 %v510
      %575 = vmatprep.subr.bf16.mxu0 0
      %576 = vmatpush1.bf16.msra.mxu0 %v509
      %577 = vmatprep.subr.bf16.mxu0 0
      %578 = vmatpush1.bf16.msra.mxu0 %v508
      %579 = vmatprep.subr.bf16.mxu0 0
      %580 = vmatpush1.bf16.msra.mxu0 %v507
      %581 = vmatprep.subr.bf16.mxu0 0
      %582 = vmatpush1.bf16.msra.mxu0 %v506
      %583 = vmatprep.subr.bf16.mxu0 0
      %584 = vmatpush1.bf16.msra.mxu0 %v505
      %585 = vmatprep.subr.bf16.mxu0 0
      %586 = vmatpush2.bf16.msra.mxu0 %v520
      %587 = vmatprep.subr.bf16.mxu0 0
      %588 = vmatpush2.bf16.msra.mxu0 %v519
      %589 = vmatprep.subr.bf16.mxu0 0
      %590 = vmatpush2.bf16.msra.mxu0 %v518
      %591 = vmatprep.subr.bf16.mxu0 0
      %592 = vmatpush2.bf16.msra.mxu0 %v517
      %593 = vmatprep.subr.bf16.mxu0 0
      %594 = vmatpush2.bf16.msra.mxu0 %v516
      %595 = vmatprep.subr.bf16.mxu0 0
      %596 = vmatpush2.bf16.msra.mxu0 %v515
      %597 = vmatprep.subr.bf16.mxu0 0
      %598 = vmatpush2.bf16.msra.mxu0 %v514
      %599 = vmatprep.subr.bf16.mxu0 0
      %600 = vmatpush2.bf16.msra.mxu0 %v513
      %601 = vmatprep.mubr.bf16.mxu0 %v332
      %602 = vmatmul.mubr.bf16.gmra.mxu0 %v320
      %v603 = vpop.f32.mrf.mxu0
      %v604 = vadd.f32 0.0, %v603
      %v605 = vpop.f32.mrf.mxu0
      %v606 = vpop.f32.mrf.mxu0
      %v607 = vadd.f32 0.0, %v606
      %v608 = vpop.f32.mrf.mxu0
      %609 = vmatprep.mubr.bf16.mxu0 %v362
      %610 = vmatmul.mubr.bf16.gmra.mxu0 %v359
      %v611 = vpop.f32.mrf.mxu0
      %v612 = vadd.f32 0.0, %v611
      %v613 = vpop.f32.mrf.mxu0
      %v614 = vpop.f32.mrf.mxu0
      %v615 = vpop.f32.mrf.mxu0
      %616 = vdwg.mxu0
      %617 = vmatprep.subr.bf16.mxu0 0
      %618 = vmatpush1.bf16.msra.mxu0 %v528
      %619 = vmatprep.subr.bf16.mxu0 0
      %620 = vmatpush1.bf16.msra.mxu0 %v527
      %621 = vmatprep.subr.bf16.mxu0 0
      %622 = vmatpush1.bf16.msra.mxu0 %v526
      %623 = vmatprep.subr.bf16.mxu0 0
      %624 = vmatpush1.bf16.msra.mxu0 %v525
      %625 = vmatprep.subr.bf16.mxu0 0
      %626 = vmatpush1.bf16.msra.mxu0 %v524
      %627 = vmatprep.subr.bf16.mxu0 0
      %628 = vmatpush1.bf16.msra.mxu0 %v523
      %629 = vmatprep.subr.bf16.mxu0 0
      %630 = vmatpush1.bf16.msra.mxu0 %v522
      %631 = vmatprep.subr.bf16.mxu0 0
      %632 = vmatpush1.bf16.msra.mxu0 %v521
      %633 = vmatprep.subr.bf16.mxu0 0
      %634 = vmatpush2.bf16.msra.mxu0 %v536
      %635 = vmatprep.subr.bf16.mxu0 0
      %636 = vmatpush2.bf16.msra.mxu0 %v535
      %637 = vmatprep.subr.bf16.mxu0 0
      %638 = vmatpush2.bf16.msra.mxu0 %v534
      %639 = vmatprep.subr.bf16.mxu0 0
      %640 = vmatpush2.bf16.msra.mxu0 %v533
      %641 = vmatprep.subr.bf16.mxu0 0
      %642 = vmatpush2.bf16.msra.mxu0 %v532
      %643 = vmatprep.subr.bf16.mxu0 0
      %644 = vmatpush2.bf16.msra.mxu0 %v531
      %645 = vmatprep.subr.bf16.mxu0 0
      %646 = vmatpush2.bf16.msra.mxu0 %v530
      %647 = vmatprep.subr.bf16.mxu0 0
      %648 = vmatpush2.bf16.msra.mxu0 %v529
      %649 = vmatprep.mubr.bf16.mxu0 %v356
      %650 = vmatmul.mubr.bf16.gmra.mxu0 %v344
      %v651 = vpop.f32.mrf.mxu0
      %v652 = vadd.f32 %v604, %v651
      %v653 = vpop.f32.mrf.mxu0
      %v654 = vpop.f32.mrf.mxu0
      %v655 = vadd.f32 %v607, %v654
      %v656 = vpop.f32.mrf.mxu0
      %657 = vmatprep.mubr.bf16.mxu0 %v368
      %658 = vmatmul.mubr.bf16.gmra.mxu0 %v365
      %v659 = vpop.f32.mrf.mxu0
      %v660 = vadd.f32 %v612, %v659
      %v661 = vpop.f32.mrf.mxu0
      %v662 = vpop.f32.mrf.mxu0
      %v663 = vpop.f32.mrf.mxu0
      %664 = vdwg.mxu0
      %v667 = vunpack.c.l.b16 %v149
      %v668 = vunpack.c.h.b16 %v149
      %v669 = vunpack.c.l.b16 %v150
      %v670 = vunpack.c.h.b16 %v150
      %v671 = vpack.c.b16 %v667, %v667
      %v672 = vpack.c.b16 %v668, %v668
      %v673 = vpack.c.b16 %v669, %v669
      %v674 = vpack.c.b16 %v670, %v670
      %v747 = vunpack.c.l.b16 %v151
      %v748 = vunpack.c.l.b16 %v152
      %v749 = vunpack.c.l.b16 %v153
      %v750 = vunpack.c.l.b16 %v154
      %v751 = vunpack.c.l.b16 %v155
      %v752 = vunpack.c.l.b16 %v156
      %v753 = vunpack.c.l.b16 %v157
      %v754 = vunpack.c.l.b16 %v158
      %v755 = vunpack.c.l.b16 %v159
      %v756 = vunpack.c.l.b16 %v160
      %v757 = vunpack.c.l.b16 %v161
      %v758 = vunpack.c.l.b16 %v162
      %v759 = vunpack.c.l.b16 %v163
      %v760 = vunpack.c.l.b16 %v164
      %v761 = vunpack.c.l.b16 %v165
      %v762 = vunpack.c.l.b16 %v166
      %v763 = vunpack.c.l.b16 %v167
      %v764 = vunpack.c.l.b16 %v168
      %v765 = vunpack.c.l.b16 %v169
      %v766 = vunpack.c.l.b16 %v170
      %v767 = vunpack.c.l.b16 %v171
      %v768 = vunpack.c.l.b16 %v172
      %v769 = vunpack.c.l.b16 %v173
      %v770 = vunpack.c.l.b16 %v174
      %v771 = vunpack.c.l.b16 %v175
      %v772 = vunpack.c.l.b16 %v176
      %v773 = vunpack.c.l.b16 %v177
      %v774 = vunpack.c.l.b16 %v178
      %v775 = vunpack.c.l.b16 %v179
      %v776 = vunpack.c.l.b16 %v180
      %v777 = vunpack.c.l.b16 %v181
      %v778 = vunpack.c.l.b16 %v182
      %v779 = vunpack.c.l.b16 %v183
      %v780 = vunpack.c.l.b16 %v184
      %v781 = vunpack.c.l.b16 %v185
      %v782 = vunpack.c.l.b16 %v186
      %v783 = vunpack.c.l.b16 %v187
      %v784 = vunpack.c.l.b16 %v188
      %v785 = vunpack.c.l.b16 %v189
      %v786 = vunpack.c.l.b16 %v190
      %v787 = vunpack.c.l.b16 %v191
      %v788 = vunpack.c.l.b16 %v192
      %v789 = vunpack.c.l.b16 %v193
      %v790 = vunpack.c.l.b16 %v194
      %v791 = vunpack.c.l.b16 %v195
      %v792 = vunpack.c.l.b16 %v196
      %v793 = vunpack.c.l.b16 %v197
      %v794 = vunpack.c.l.b16 %v198
      %v795 = vunpack.c.l.b16 %v199
      %v796 = vunpack.c.l.b16 %v200
      %v797 = vunpack.c.l.b16 %v201
      %v798 = vunpack.c.l.b16 %v202
      %v799 = vunpack.c.l.b16 %v203
      %v800 = vunpack.c.l.b16 %v204
      %v801 = vunpack.c.l.b16 %v205
      %v802 = vunpack.c.l.b16 %v206
      %v803 = vunpack.c.l.b16 %v207
      %v804 = vunpack.c.l.b16 %v208
      %v805 = vunpack.c.l.b16 %v209
      %v806 = vunpack.c.l.b16 %v210
      %v807 = vunpack.c.l.b16 %v211
      %v808 = vunpack.c.l.b16 %v212
      %v809 = vunpack.c.l.b16 %v213
      %v810 = vunpack.c.l.b16 %v214
      %v811 = vpack.c.b16 %v748, %v747
      %v812 = vpack.c.b16 %v750, %v749
      %v813 = vpack.c.b16 %v752, %v751
      %v814 = vpack.c.b16 %v754, %v753
      %v815 = vpack.c.b16 %v756, %v755
      %v816 = vpack.c.b16 %v758, %v757
      %v817 = vpack.c.b16 %v760, %v759
      %v818 = vpack.c.b16 %v762, %v761
      %v819 = vpack.c.b16 %v764, %v763
      %v820 = vpack.c.b16 %v766, %v765
      %v821 = vpack.c.b16 %v768, %v767
      %v822 = vpack.c.b16 %v770, %v769
      %v823 = vpack.c.b16 %v772, %v771
      %v824 = vpack.c.b16 %v774, %v773
      %v825 = vpack.c.b16 %v776, %v775
      %v826 = vpack.c.b16 %v778, %v777
      %v827 = vpack.c.b16 %v780, %v779
      %v828 = vpack.c.b16 %v782, %v781
      %v829 = vpack.c.b16 %v784, %v783
      %v830 = vpack.c.b16 %v786, %v785
      %v831 = vpack.c.b16 %v788, %v787
      %v832 = vpack.c.b16 %v790, %v789
      %v833 = vpack.c.b16 %v792, %v791
      %v834 = vpack.c.b16 %v794, %v793
      %v835 = vpack.c.b16 %v796, %v795
      %v836 = vpack.c.b16 %v798, %v797
      %v837 = vpack.c.b16 %v800, %v799
      %v838 = vpack.c.b16 %v802, %v801
      %v839 = vpack.c.b16 %v804, %v803
      %v840 = vpack.c.b16 %v806, %v805
      %v841 = vpack.c.b16 %v808, %v807
      %v842 = vpack.c.b16 %v810, %v809
      %875 = vmatprep.subr.bf16.mxu0 0
      %876 = vmatpush1.bf16.msra.mxu0 %v818
      %877 = vmatprep.subr.bf16.mxu0 0
      %878 = vmatpush1.bf16.msra.mxu0 %v817
      %879 = vmatprep.subr.bf16.mxu0 0
      %880 = vmatpush1.bf16.msra.mxu0 %v816
      %881 = vmatprep.subr.bf16.mxu0 0
      %882 = vmatpush1.bf16.msra.mxu0 %v815
      %883 = vmatprep.subr.bf16.mxu0 0
      %884 = vmatpush1.bf16.msra.mxu0 %v814
      %885 = vmatprep.subr.bf16.mxu0 0
      %886 = vmatpush1.bf16.msra.mxu0 %v813
      %887 = vmatprep.subr.bf16.mxu0 0
      %888 = vmatpush1.bf16.msra.mxu0 %v812
      %889 = vmatprep.subr.bf16.mxu0 0
      %890 = vmatpush1.bf16.msra.mxu0 %v811
      %891 = vmatprep.subr.bf16.mxu0 0
      %892 = vmatpush2.bf16.msra.mxu0 %v826
      %893 = vmatprep.subr.bf16.mxu0 0
      %894 = vmatpush2.bf16.msra.mxu0 %v825
      %895 = vmatprep.subr.bf16.mxu0 0
      %896 = vmatpush2.bf16.msra.mxu0 %v824
      %897 = vmatprep.subr.bf16.mxu0 0
      %898 = vmatpush2.bf16.msra.mxu0 %v823
      %899 = vmatprep.subr.bf16.mxu0 0
      %900 = vmatpush2.bf16.msra.mxu0 %v822
      %901 = vmatprep.subr.bf16.mxu0 0
      %902 = vmatpush2.bf16.msra.mxu0 %v821
      %903 = vmatprep.subr.bf16.mxu0 0
      %904 = vmatpush2.bf16.msra.mxu0 %v820
      %905 = vmatprep.subr.bf16.mxu0 0
      %906 = vmatpush2.bf16.msra.mxu0 %v819
      %907 = vmatprep.mubr.bf16.mxu0 %v301
      %908 = vmatmul.mubr.bf16.gmra.mxu0 %v300
      %v909 = vpop.f32.mrf.mxu0
      %v910 = vadd.f32 %v652, %v909
      %v911 = vpop.f32.mrf.mxu0
      %v912 = vpop.f32.mrf.mxu0
      %v913 = vadd.f32 %v655, %v912
      %v914 = vpop.f32.mrf.mxu0
      %915 = vmatprep.mubr.bf16.mxu0 %v672
      %916 = vmatmul.mubr.bf16.gmra.mxu0 %v671
      %v917 = vpop.f32.mrf.mxu0
      %v918 = vadd.f32 %v660, %v917
      %v919 = vpop.f32.mrf.mxu0
      %v920 = vpop.f32.mrf.mxu0
      %v921 = vpop.f32.mrf.mxu0
      %922 = vdwg.mxu0
      %923 = vmatprep.subr.bf16.mxu0 0
      %924 = vmatpush1.bf16.msra.mxu0 %v834
      %925 = vmatprep.subr.bf16.mxu0 0
      %926 = vmatpush1.bf16.msra.mxu0 %v833
      %927 = vmatprep.subr.bf16.mxu0 0
      %928 = vmatpush1.bf16.msra.mxu0 %v832
      %929 = vmatprep.subr.bf16.mxu0 0
      %930 = vmatpush1.bf16.msra.mxu0 %v831
      %931 = vmatprep.subr.bf16.mxu0 0
      %932 = vmatpush1.bf16.msra.mxu0 %v830
      %933 = vmatprep.subr.bf16.mxu0 0
      %934 = vmatpush1.bf16.msra.mxu0 %v829
      %935 = vmatprep.subr.bf16.mxu0 0
      %936 = vmatpush1.bf16.msra.mxu0 %v828
      %937 = vmatprep.subr.bf16.mxu0 0
      %938 = vmatpush1.bf16.msra.mxu0 %v827
      %939 = vmatprep.subr.bf16.mxu0 0
      %940 = vmatpush2.bf16.msra.mxu0 %v842
      %941 = vmatprep.subr.bf16.mxu0 0
      %942 = vmatpush2.bf16.msra.mxu0 %v841
      %943 = vmatprep.subr.bf16.mxu0 0
      %944 = vmatpush2.bf16.msra.mxu0 %v840
      %945 = vmatprep.subr.bf16.mxu0 0
      %946 = vmatpush2.bf16.msra.mxu0 %v839
      %947 = vmatprep.subr.bf16.mxu0 0
      %948 = vmatpush2.bf16.msra.mxu0 %v838
      %949 = vmatprep.subr.bf16.mxu0 0
      %950 = vmatpush2.bf16.msra.mxu0 %v837
      %951 = vmatprep.subr.bf16.mxu0 0
      %952 = vmatpush2.bf16.msra.mxu0 %v836
      %953 = vmatprep.subr.bf16.mxu0 0
      %954 = vmatpush2.bf16.msra.mxu0 %v835
      %955 = vmatprep.mubr.bf16.mxu0 %v303
      %956 = vmatmul.mubr.bf16.gmra.mxu0 %v302
      %v957 = vpop.f32.mrf.mxu0
      %v958 = vadd.f32 %v910, %v957
      %v959 = vpop.f32.mrf.mxu0
      %v960 = vpop.f32.mrf.mxu0
      %v961 = vadd.f32 %v913, %v960
      %v962 = vpop.f32.mrf.mxu0
      %963 = vmatprep.mubr.bf16.mxu0 %v674
      %964 = vmatmul.mubr.bf16.gmra.mxu0 %v673
      %v965 = vpop.f32.mrf.mxu0
      %v966 = vadd.f32 %v918, %v965
      %v967 = vpop.f32.mrf.mxu0
      %v968 = vpop.f32.mrf.mxu0
      %v969 = vpop.f32.mrf.mxu0
      %970 = vdwg.mxu0
      %v971 = vld [vmem:[%s138] sm:$0xcc]
      %v972 = vld [vmem:[%s138 + $0x8] sm:$0xcc]
      %v973 = vld [vmem:[%s138 + $0x10] sm:$0xff]
      %v974 = vld [vmem:[%s138 + $0x18] sm:$0xff]
      %v975 = vld [vmem:[%s138 + $0x20] sm:$0xff]
      %v976 = vld [vmem:[%s138 + $0x28] sm:$0xff]
      %v977 = vld [vmem:[%s138 + $0x30] sm:$0x11]
      %v978 = vld [vmem:[%s138 + $0x38] sm:$0x11]
      %s979 = scalar_lea.vmem %s1, 512
      %v980 = vld [vmem:[%s979] sm:$0xf]
      %v981 = vld [vmem:[%s979 + $0x4] sm:$0xf]
      %v982 = vld [vmem:[%s979 + $0x8] sm:$0xf]
      %v983 = vld [vmem:[%s979 + $0xc] sm:$0xf]
      %v984 = vld [vmem:[%s979 + $0x10] sm:$0xf]
      %v985 = vld [vmem:[%s979 + $0x14] sm:$0xf]
      %v986 = vld [vmem:[%s979 + $0x18] sm:$0xf]
      %v987 = vld [vmem:[%s979 + $0x1c] sm:$0xf]
      %v988 = vld [vmem:[%s979 + $0x20] sm:$0xf]
      %v989 = vld [vmem:[%s979 + $0x24] sm:$0xf]
      %v990 = vld [vmem:[%s979 + $0x28] sm:$0xf]
      %v991 = vld [vmem:[%s979 + $0x2c] sm:$0xf]
      %v992 = vld [vmem:[%s979 + $0x30] sm:$0xf]
      %v993 = vld [vmem:[%s979 + $0x34] sm:$0xf]
      %v994 = vld [vmem:[%s979 + $0x38] sm:$0xf]
      %v995 = vld [vmem:[%s979 + $0x3c] sm:$0xf]
      %v996 = vld [vmem:[%s979 + $0x40] sm:$0xf]
      %v997 = vld [vmem:[%s979 + $0x44] sm:$0xf]
      %v998 = vld [vmem:[%s979 + $0x48] sm:$0xf]
      %v999 = vld [vmem:[%s979 + $0x4c] sm:$0xf]
      %v1000 = vld [vmem:[%s979 + $0x50] sm:$0xf]
      %v1001 = vld [vmem:[%s979 + $0x54] sm:$0xf]
      %v1002 = vld [vmem:[%s979 + $0x58] sm:$0xf]
      %v1003 = vld [vmem:[%s979 + $0x5c] sm:$0xf]
      %v1004 = vld [vmem:[%s979 + $0x60] sm:$0xf]
      %v1005 = vld [vmem:[%s979 + $0x64] sm:$0xf]
      %v1006 = vld [vmem:[%s979 + $0x68] sm:$0xf]
      %v1007 = vld [vmem:[%s979 + $0x6c] sm:$0xf]
      %v1008 = vld [vmem:[%s979 + $0x70] sm:$0xf]
      %v1009 = vld [vmem:[%s979 + $0x74] sm:$0xf]
      %v1010 = vld [vmem:[%s979 + $0x78] sm:$0xf]
      %v1011 = vld [vmem:[%s979 + $0x7c] sm:$0xf]
      %v1012 = vld [vmem:[%s979 + $0x80] sm:$0xf]
      %v1013 = vld [vmem:[%s979 + $0x84] sm:$0xf]
      %v1014 = vld [vmem:[%s979 + $0x88] sm:$0xf]
      %v1015 = vld [vmem:[%s979 + $0x8c] sm:$0xf]
      %v1016 = vld [vmem:[%s979 + $0x90] sm:$0xf]
      %v1017 = vld [vmem:[%s979 + $0x94] sm:$0xf]
      %v1018 = vld [vmem:[%s979 + $0x98] sm:$0xf]
      %v1019 = vld [vmem:[%s979 + $0x9c] sm:$0xf]
      %v1020 = vld [vmem:[%s979 + $0xa0] sm:$0xf]
      %v1021 = vld [vmem:[%s979 + $0xa4] sm:$0xf]
      %v1022 = vld [vmem:[%s979 + $0xa8] sm:$0xf]
      %v1023 = vld [vmem:[%s979 + $0xac] sm:$0xf]
      %v1024 = vld [vmem:[%s979 + $0xb0] sm:$0xf]
      %v1025 = vld [vmem:[%s979 + $0xb4] sm:$0xf]
      %v1026 = vld [vmem:[%s979 + $0xb8] sm:$0xf]
      %v1027 = vld [vmem:[%s979 + $0xbc] sm:$0xf]
      %v1028 = vld [vmem:[%s979 + $0xc0] sm:$0xf]
      %v1029 = vld [vmem:[%s979 + $0xc4] sm:$0xf]
      %v1030 = vld [vmem:[%s979 + $0xc8] sm:$0xf]
      %v1031 = vld [vmem:[%s979 + $0xcc] sm:$0xf]
      %v1032 = vld [vmem:[%s979 + $0xd0] sm:$0xf]
      %v1033 = vld [vmem:[%s979 + $0xd4] sm:$0xf]
      %v1034 = vld [vmem:[%s979 + $0xd8] sm:$0xf]
      %v1035 = vld [vmem:[%s979 + $0xdc] sm:$0xf]
      %v1036 = vld [vmem:[%s979 + $0xe0] sm:$0xf]
      %v1037 = vld [vmem:[%s979 + $0xe4] sm:$0xf]
      %v1038 = vld [vmem:[%s979 + $0xe8] sm:$0xf]
      %v1039 = vld [vmem:[%s979 + $0xec] sm:$0xf]
      %v1040 = vld [vmem:[%s979 + $0xf0] sm:$0xf]
      %v1041 = vld [vmem:[%s979 + $0xf4] sm:$0xf]
      %v1042 = vld [vmem:[%s979 + $0xf8] sm:$0xf]
      %v1043 = vld [vmem:[%s979 + $0xfc] sm:$0xf]
      %v1052 = vunpack.c.l.b16 %v971
      %v1053 = vunpack.c.h.b16 %v971
      %v1054 = vunpack.c.l.b16 %v972
      %v1055 = vunpack.c.h.b16 %v972
      %v1056 = vunpack.c.l.b16 %v973
      %v1057 = vunpack.c.h.b16 %v973
      %v1058 = vunpack.c.l.b16 %v974
      %v1059 = vunpack.c.h.b16 %v974
      %v1060 = vunpack.c.l.b16 %v975
      %v1061 = vunpack.c.h.b16 %v975
      %v1062 = vunpack.c.l.b16 %v976
      %v1063 = vunpack.c.h.b16 %v976
      %v1064 = vunpack.c.l.b16 %v977
      %v1065 = vunpack.c.h.b16 %v977
      %v1066 = vunpack.c.l.b16 %v978
      %v1067 = vunpack.c.h.b16 %v978
      %v1068 = vpack.c.b16 %v1056, %v1052
      %v1069 = vpack.c.b16 %v1057, %v1053
      %v1070 = vpack.c.b16 %v1058, %v1054
      %v1071 = vpack.c.b16 %v1059, %v1055
      %v1072 = vpack.c.b16 %v1064, %v1060
      %v1073 = vpack.c.b16 %v1065, %v1061
      %v1074 = vpack.c.b16 %v1066, %v1062
      %v1075 = vpack.c.b16 %v1067, %v1063
      %vm1076 = vsmask.f32 5376
      %v1078 = vshrl.u32 %v1068, 16
      %v1080 = vrot.slane %v1078, 2
      %v1081 = vshll.u32 %v1068, 16
      %v1083 = vrot.slane %v1081, 3
      %v1084 = vor.u32 %v1080, %v1083
      %v1086 = vshrl.u32 %v1072, 16
      %v1088 = vrot.slane %v1086, 2
      %v1089 = vshll.u32 %v1072, 16
      %v1091 = vrot.slane %v1089, 3
      %v1092 = vor.u32 %v1088, %v1091
      %v1093 = vsel %vm1076, %v1084, %v1092
      %v1095 = vshrl.u32 %v1069, 16
      %v1097 = vrot.slane %v1095, 2
      %v1098 = vshll.u32 %v1069, 16
      %v1100 = vrot.slane %v1098, 3
      %v1101 = vor.u32 %v1097, %v1100
      %v1103 = vshrl.u32 %v1073, 16
      %v1105 = vrot.slane %v1103, 2
      %v1106 = vshll.u32 %v1073, 16
      %v1108 = vrot.slane %v1106, 3
      %v1109 = vor.u32 %v1105, %v1108
      %v1110 = vsel %vm1076, %v1101, %v1109
      %v1112 = vshrl.u32 %v1070, 16
      %v1114 = vrot.slane %v1112, 2
      %v1115 = vshll.u32 %v1070, 16
      %v1117 = vrot.slane %v1115, 3
      %v1118 = vor.u32 %v1114, %v1117
      %v1120 = vshrl.u32 %v1074, 16
      %v1122 = vrot.slane %v1120, 2
      %v1123 = vshll.u32 %v1074, 16
      %v1125 = vrot.slane %v1123, 3
      %v1126 = vor.u32 %v1122, %v1125
      %v1127 = vsel %vm1076, %v1118, %v1126
      %v1129 = vshrl.u32 %v1071, 16
      %v1131 = vrot.slane %v1129, 2
      %v1132 = vshll.u32 %v1071, 16
      %v1134 = vrot.slane %v1132, 3
      %v1135 = vor.u32 %v1131, %v1134
      %v1137 = vshrl.u32 %v1075, 16
      %v1139 = vrot.slane %v1137, 2
      %v1140 = vshll.u32 %v1075, 16
      %v1142 = vrot.slane %v1140, 3
      %v1143 = vor.u32 %v1139, %v1142
      %v1144 = vsel %vm1076, %v1135, %v1143
      %v1217 = vunpack.c.l.b16 %v980
      %v1218 = vunpack.c.l.b16 %v981
      %v1219 = vunpack.c.l.b16 %v982
      %v1220 = vunpack.c.l.b16 %v983
      %v1221 = vunpack.c.l.b16 %v984
      %v1222 = vunpack.c.l.b16 %v985
      %v1223 = vunpack.c.l.b16 %v986
      %v1224 = vunpack.c.l.b16 %v987
      %v1225 = vunpack.c.l.b16 %v988
      %v1226 = vunpack.c.l.b16 %v989
      %v1227 = vunpack.c.l.b16 %v990
      %v1228 = vunpack.c.l.b16 %v991
      %v1229 = vunpack.c.l.b16 %v992
      %v1230 = vunpack.c.l.b16 %v993
      %v1231 = vunpack.c.l.b16 %v994
      %v1232 = vunpack.c.l.b16 %v995
      %v1233 = vunpack.c.l.b16 %v996
      %v1234 = vunpack.c.l.b16 %v997
      %v1235 = vunpack.c.l.b16 %v998
      %v1236 = vunpack.c.l.b16 %v999
      %v1237 = vunpack.c.l.b16 %v1000
      %v1238 = vunpack.c.l.b16 %v1001
      %v1239 = vunpack.c.l.b16 %v1002
      %v1240 = vunpack.c.l.b16 %v1003
      %v1241 = vunpack.c.l.b16 %v1004
      %v1242 = vunpack.c.l.b16 %v1005
      %v1243 = vunpack.c.l.b16 %v1006
      %v1244 = vunpack.c.l.b16 %v1007
      %v1245 = vunpack.c.l.b16 %v1008
      %v1246 = vunpack.c.l.b16 %v1009
      %v1247 = vunpack.c.l.b16 %v1010
      %v1248 = vunpack.c.l.b16 %v1011
      %v1249 = vunpack.c.l.b16 %v1012
      %v1250 = vunpack.c.l.b16 %v1013
      %v1251 = vunpack.c.l.b16 %v1014
      %v1252 = vunpack.c.l.b16 %v1015
      %v1253 = vunpack.c.l.b16 %v1016
      %v1254 = vunpack.c.l.b16 %v1017
      %v1255 = vunpack.c.l.b16 %v1018
      %v1256 = vunpack.c.l.b16 %v1019
      %v1257 = vunpack.c.l.b16 %v1020
      %v1258 = vunpack.c.l.b16 %v1021
      %v1259 = vunpack.c.l.b16 %v1022
      %v1260 = vunpack.c.l.b16 %v1023
      %v1261 = vunpack.c.l.b16 %v1024
      %v1262 = vunpack.c.l.b16 %v1025
      %v1263 = vunpack.c.l.b16 %v1026
      %v1264 = vunpack.c.l.b16 %v1027
      %v1265 = vunpack.c.l.b16 %v1028
      %v1266 = vunpack.c.l.b16 %v1029
      %v1267 = vunpack.c.l.b16 %v1030
      %v1268 = vunpack.c.l.b16 %v1031
      %v1269 = vunpack.c.l.b16 %v1032
      %v1270 = vunpack.c.l.b16 %v1033
      %v1271 = vunpack.c.l.b16 %v1034
      %v1272 = vunpack.c.l.b16 %v1035
      %v1273 = vunpack.c.l.b16 %v1036
      %v1274 = vunpack.c.l.b16 %v1037
      %v1275 = vunpack.c.l.b16 %v1038
      %v1276 = vunpack.c.l.b16 %v1039
      %v1277 = vunpack.c.l.b16 %v1040
      %v1278 = vunpack.c.l.b16 %v1041
      %v1279 = vunpack.c.l.b16 %v1042
      %v1280 = vunpack.c.l.b16 %v1043
      %v1281 = vpack.c.b16 %v1218, %v1217
      %v1282 = vpack.c.b16 %v1220, %v1219
      %v1283 = vpack.c.b16 %v1222, %v1221
      %v1284 = vpack.c.b16 %v1224, %v1223
      %v1285 = vpack.c.b16 %v1226, %v1225
      %v1286 = vpack.c.b16 %v1228, %v1227
      %v1287 = vpack.c.b16 %v1230, %v1229
      %v1288 = vpack.c.b16 %v1232, %v1231
      %v1289 = vpack.c.b16 %v1234, %v1233
      %v1290 = vpack.c.b16 %v1236, %v1235
      %v1291 = vpack.c.b16 %v1238, %v1237
      %v1292 = vpack.c.b16 %v1240, %v1239
      %v1293 = vpack.c.b16 %v1242, %v1241
      %v1294 = vpack.c.b16 %v1244, %v1243
      %v1295 = vpack.c.b16 %v1246, %v1245
      %v1296 = vpack.c.b16 %v1248, %v1247
      %v1297 = vpack.c.b16 %v1250, %v1249
      %v1298 = vpack.c.b16 %v1252, %v1251
      %v1299 = vpack.c.b16 %v1254, %v1253
      %v1300 = vpack.c.b16 %v1256, %v1255
      %v1301 = vpack.c.b16 %v1258, %v1257
      %v1302 = vpack.c.b16 %v1260, %v1259
      %v1303 = vpack.c.b16 %v1262, %v1261
      %v1304 = vpack.c.b16 %v1264, %v1263
      %v1305 = vpack.c.b16 %v1266, %v1265
      %v1306 = vpack.c.b16 %v1268, %v1267
      %v1307 = vpack.c.b16 %v1270, %v1269
      %v1308 = vpack.c.b16 %v1272, %v1271
      %v1309 = vpack.c.b16 %v1274, %v1273
      %v1310 = vpack.c.b16 %v1276, %v1275
      %v1311 = vpack.c.b16 %v1278, %v1277
      %v1312 = vpack.c.b16 %v1280, %v1279
      %1345 = vmatprep.subr.bf16.mxu0 0
      %1346 = vmatpush1.bf16.msra.mxu0 %v1288
      %1347 = vmatprep.subr.bf16.mxu0 0
      %1348 = vmatpush1.bf16.msra.mxu0 %v1287
      %1349 = vmatprep.subr.bf16.mxu0 0
      %1350 = vmatpush1.bf16.msra.mxu0 %v1286
      %1351 = vmatprep.subr.bf16.mxu0 0
      %1352 = vmatpush1.bf16.msra.mxu0 %v1285
      %1353 = vmatprep.subr.bf16.mxu0 0
      %1354 = vmatpush1.bf16.msra.mxu0 %v1284
      %1355 = vmatprep.subr.bf16.mxu0 0
      %1356 = vmatpush1.bf16.msra.mxu0 %v1283
      %1357 = vmatprep.subr.bf16.mxu0 0
      %1358 = vmatpush1.bf16.msra.mxu0 %v1282
      %1359 = vmatprep.subr.bf16.mxu0 0
      %1360 = vmatpush1.bf16.msra.mxu0 %v1281
      %1361 = vmatprep.subr.bf16.mxu0 0
      %1362 = vmatpush2.bf16.msra.mxu0 %v1296
      %1363 = vmatprep.subr.bf16.mxu0 0
      %1364 = vmatpush2.bf16.msra.mxu0 %v1295
      %1365 = vmatprep.subr.bf16.mxu0 0
      %1366 = vmatpush2.bf16.msra.mxu0 %v1294
      %1367 = vmatprep.subr.bf16.mxu0 0
      %1368 = vmatpush2.bf16.msra.mxu0 %v1293
      %1369 = vmatprep.subr.bf16.mxu0 0
      %1370 = vmatpush2.bf16.msra.mxu0 %v1292
      %1371 = vmatprep.subr.bf16.mxu0 0
      %1372 = vmatpush2.bf16.msra.mxu0 %v1291
      %1373 = vmatprep.subr.bf16.mxu0 0
      %1374 = vmatpush2.bf16.msra.mxu0 %v1290
      %1375 = vmatprep.subr.bf16.mxu0 0
      %1376 = vmatpush2.bf16.msra.mxu0 %v1289
      %1377 = vmatprep.mubr.bf16.mxu0 %v1110
      %1378 = vmatmul.mubr.bf16.gmra.mxu0 %v1093
      %v1379 = vpop.f32.mrf.mxu0
      %v1380 = vadd.f32 0.0, %v1379
      %v1381 = vpop.f32.mrf.mxu0
      %v1382 = vpop.f32.mrf.mxu0
      %v1383 = vadd.f32 0.0, %v1382
      %v1384 = vpop.f32.mrf.mxu0
      %1385 = vmatprep.mubr.bf16.mxu0 %v1109
      %1386 = vmatmul.mubr.bf16.gmra.mxu0 %v1092
      %v1387 = vpop.f32.mrf.mxu0
      %v1388 = vadd.f32 0.0, %v1387
      %v1389 = vpop.f32.mrf.mxu0
      %v1390 = vpop.f32.mrf.mxu0
      %v1391 = vpop.f32.mrf.mxu0
      %1392 = vdwg.mxu0
      %1393 = vmatprep.subr.bf16.mxu0 0
      %1394 = vmatpush1.bf16.msra.mxu0 %v1304
      %1395 = vmatprep.subr.bf16.mxu0 0
      %1396 = vmatpush1.bf16.msra.mxu0 %v1303
      %1397 = vmatprep.subr.bf16.mxu0 0
      %1398 = vmatpush1.bf16.msra.mxu0 %v1302
      %1399 = vmatprep.subr.bf16.mxu0 0
      %1400 = vmatpush1.bf16.msra.mxu0 %v1301
      %1401 = vmatprep.subr.bf16.mxu0 0
      %1402 = vmatpush1.bf16.msra.mxu0 %v1300
      %1403 = vmatprep.subr.bf16.mxu0 0
      %1404 = vmatpush1.bf16.msra.mxu0 %v1299
      %1405 = vmatprep.subr.bf16.mxu0 0
      %1406 = vmatpush1.bf16.msra.mxu0 %v1298
      %1407 = vmatprep.subr.bf16.mxu0 0
      %1408 = vmatpush1.bf16.msra.mxu0 %v1297
      %1409 = vmatprep.subr.bf16.mxu0 0
      %1410 = vmatpush2.bf16.msra.mxu0 %v1312
      %1411 = vmatprep.subr.bf16.mxu0 0
      %1412 = vmatpush2.bf16.msra.mxu0 %v1311
      %1413 = vmatprep.subr.bf16.mxu0 0
      %1414 = vmatpush2.bf16.msra.mxu0 %v1310
      %1415 = vmatprep.subr.bf16.mxu0 0
      %1416 = vmatpush2.bf16.msra.mxu0 %v1309
      %1417 = vmatprep.subr.bf16.mxu0 0
      %1418 = vmatpush2.bf16.msra.mxu0 %v1308
      %1419 = vmatprep.subr.bf16.mxu0 0
      %1420 = vmatpush2.bf16.msra.mxu0 %v1307
      %1421 = vmatprep.subr.bf16.mxu0 0
      %1422 = vmatpush2.bf16.msra.mxu0 %v1306
      %1423 = vmatprep.subr.bf16.mxu0 0
      %1424 = vmatpush2.bf16.msra.mxu0 %v1305
      %1425 = vmatprep.mubr.bf16.mxu0 %v1144
      %1426 = vmatmul.mubr.bf16.gmra.mxu0 %v1127
      %v1427 = vpop.f32.mrf.mxu0
      %v1428 = vadd.f32 %v1380, %v1427
      %v1429 = vpop.f32.mrf.mxu0
      %v1430 = vpop.f32.mrf.mxu0
      %v1431 = vadd.f32 %v1383, %v1430
      %v1432 = vpop.f32.mrf.mxu0
      %1433 = vmatprep.mubr.bf16.mxu0 %v1143
      %1434 = vmatmul.mubr.bf16.gmra.mxu0 %v1126
      %v1435 = vpop.f32.mrf.mxu0
      %v1436 = vadd.f32 %v1388, %v1435
      %v1437 = vpop.f32.mrf.mxu0
      %v1438 = vpop.f32.mrf.mxu0
      %v1439 = vpop.f32.mrf.mxu0
      %1440 = vdwg.mxu0
      %v1441 = vadd.f32 %v958, %v1428
      %v1442 = vadd.f32 %v961, %v1431
      %v1443 = vadd.f32 %v966, %v1436
      %v1444 = vld [vmem:[%s138] sm:$0x88]
      %v1445 = vld [vmem:[%s138 + $0x8] sm:$0x88]
      %s1446 = scalar_lea.vmem %s1, 768
      %v1447 = vld [vmem:[%s1446] sm:$0xf]
      %v1448 = vld [vmem:[%s1446 + $0x4] sm:$0xf]
      %v1449 = vld [vmem:[%s1446 + $0x8] sm:$0xf]
      %v1450 = vld [vmem:[%s1446 + $0xc] sm:$0xf]
      %v1451 = vld [vmem:[%s1446 + $0x10] sm:$0xf]
      %v1452 = vld [vmem:[%s1446 + $0x14] sm:$0xf]
      %v1453 = vld [vmem:[%s1446 + $0x18] sm:$0xf]
      %v1454 = vld [vmem:[%s1446 + $0x1c] sm:$0xf]
      %v1455 = vld [vmem:[%s1446 + $0x20] sm:$0xf]
      %v1456 = vld [vmem:[%s1446 + $0x24] sm:$0xf]
      %v1457 = vld [vmem:[%s1446 + $0x28] sm:$0xf]
      %v1458 = vld [vmem:[%s1446 + $0x2c] sm:$0xf]
      %v1459 = vld [vmem:[%s1446 + $0x30] sm:$0xf]
      %v1460 = vld [vmem:[%s1446 + $0x34] sm:$0xf]
      %v1461 = vld [vmem:[%s1446 + $0x38] sm:$0xf]
      %v1462 = vld [vmem:[%s1446 + $0x3c] sm:$0xf]
      %v1463 = vld [vmem:[%s1446 + $0x40] sm:$0xf]
      %v1464 = vld [vmem:[%s1446 + $0x44] sm:$0xf]
      %v1465 = vld [vmem:[%s1446 + $0x48] sm:$0xf]
      %v1466 = vld [vmem:[%s1446 + $0x4c] sm:$0xf]
      %v1467 = vld [vmem:[%s1446 + $0x50] sm:$0xf]
      %v1468 = vld [vmem:[%s1446 + $0x54] sm:$0xf]
      %v1469 = vld [vmem:[%s1446 + $0x58] sm:$0xf]
      %v1470 = vld [vmem:[%s1446 + $0x5c] sm:$0xf]
      %v1471 = vld [vmem:[%s1446 + $0x60] sm:$0xf]
      %v1472 = vld [vmem:[%s1446 + $0x64] sm:$0xf]
      %v1473 = vld [vmem:[%s1446 + $0x68] sm:$0xf]
      %v1474 = vld [vmem:[%s1446 + $0x6c] sm:$0xf]
      %v1475 = vld [vmem:[%s1446 + $0x70] sm:$0xf]
      %v1476 = vld [vmem:[%s1446 + $0x74] sm:$0xf]
      %v1477 = vld [vmem:[%s1446 + $0x78] sm:$0xf]
      %v1478 = vld [vmem:[%s1446 + $0x7c] sm:$0xf]
      %v1479 = vld [vmem:[%s1446 + $0x80] sm:$0xf]
      %v1480 = vld [vmem:[%s1446 + $0x84] sm:$0xf]
      %v1481 = vld [vmem:[%s1446 + $0x88] sm:$0xf]
      %v1482 = vld [vmem:[%s1446 + $0x8c] sm:$0xf]
      %v1483 = vld [vmem:[%s1446 + $0x90] sm:$0xf]
      %v1484 = vld [vmem:[%s1446 + $0x94] sm:$0xf]
      %v1485 = vld [vmem:[%s1446 + $0x98] sm:$0xf]
      %v1486 = vld [vmem:[%s1446 + $0x9c] sm:$0xf]
      %v1487 = vld [vmem:[%s1446 + $0xa0] sm:$0xf]
      %v1488 = vld [vmem:[%s1446 + $0xa4] sm:$0xf]
      %v1489 = vld [vmem:[%s1446 + $0xa8] sm:$0xf]
      %v1490 = vld [vmem:[%s1446 + $0xac] sm:$0xf]
      %v1491 = vld [vmem:[%s1446 + $0xb0] sm:$0xf]
      %v1492 = vld [vmem:[%s1446 + $0xb4] sm:$0xf]
      %v1493 = vld [vmem:[%s1446 + $0xb8] sm:$0xf]
      %v1494 = vld [vmem:[%s1446 + $0xbc] sm:$0xf]
      %v1495 = vld [vmem:[%s1446 + $0xc0] sm:$0xf]
      %v1496 = vld [vmem:[%s1446 + $0xc4] sm:$0xf]
      %v1497 = vld [vmem:[%s1446 + $0xc8] sm:$0xf]
      %v1498 = vld [vmem:[%s1446 + $0xcc] sm:$0xf]
      %v1499 = vld [vmem:[%s1446 + $0xd0] sm:$0xf]
      %v1500 = vld [vmem:[%s1446 + $0xd4] sm:$0xf]
      %v1501 = vld [vmem:[%s1446 + $0xd8] sm:$0xf]
      %v1502 = vld [vmem:[%s1446 + $0xdc] sm:$0xf]
      %v1503 = vld [vmem:[%s1446 + $0xe0] sm:$0xf]
      %v1504 = vld [vmem:[%s1446 + $0xe4] sm:$0xf]
      %v1505 = vld [vmem:[%s1446 + $0xe8] sm:$0xf]
      %v1506 = vld [vmem:[%s1446 + $0xec] sm:$0xf]
      %v1507 = vld [vmem:[%s1446 + $0xf0] sm:$0xf]
      %v1508 = vld [vmem:[%s1446 + $0xf4] sm:$0xf]
      %v1509 = vld [vmem:[%s1446 + $0xf8] sm:$0xf]
      %v1510 = vld [vmem:[%s1446 + $0xfc] sm:$0xf]
      %v1513 = vunpack.c.l.b16 %v1444
      %v1514 = vunpack.c.h.b16 %v1444
      %v1515 = vunpack.c.l.b16 %v1445
      %v1516 = vunpack.c.h.b16 %v1445
      %v1517 = vpack.c.b16 %v1056, %v1513
      %v1518 = vpack.c.b16 %v1057, %v1514
      %v1519 = vpack.c.b16 %v1058, %v1515
      %v1520 = vpack.c.b16 %v1059, %v1516
      %vm1521 = vcmask 1044480
      %v1522 = vrot.slane %v1517, 3
      %v1523 = vrot.slane %v1072, 3
      %v1524 = vsel %vm1521, %v1522, %v1523
      %v1525 = vrot.slane %v1518, 3
      %v1526 = vrot.slane %v1073, 3
      %v1527 = vsel %vm1521, %v1525, %v1526
      %v1528 = vrot.slane %v1519, 3
      %v1529 = vrot.slane %v1074, 3
      %v1530 = vsel %vm1521, %v1528, %v1529
      %v1531 = vrot.slane %v1520, 3
      %v1532 = vrot.slane %v1075, 3
      %v1533 = vsel %vm1521, %v1531, %v1532
      %v1606 = vunpack.c.l.b16 %v1447
      %v1607 = vunpack.c.l.b16 %v1448
      %v1608 = vunpack.c.l.b16 %v1449
      %v1609 = vunpack.c.l.b16 %v1450
      %v1610 = vunpack.c.l.b16 %v1451
      %v1611 = vunpack.c.l.b16 %v1452
      %v1612 = vunpack.c.l.b16 %v1453
      %v1613 = vunpack.c.l.b16 %v1454
      %v1614 = vunpack.c.l.b16 %v1455
      %v1615 = vunpack.c.l.b16 %v1456
      %v1616 = vunpack.c.l.b16 %v1457
      %v1617 = vunpack.c.l.b16 %v1458
      %v1618 = vunpack.c.l.b16 %v1459
      %v1619 = vunpack.c.l.b16 %v1460
      %v1620 = vunpack.c.l.b16 %v1461
      %v1621 = vunpack.c.l.b16 %v1462
      %v1622 = vunpack.c.l.b16 %v1463
      %v1623 = vunpack.c.l.b16 %v1464
      %v1624 = vunpack.c.l.b16 %v1465
      %v1625 = vunpack.c.l.b16 %v1466
      %v1626 = vunpack.c.l.b16 %v1467
      %v1627 = vunpack.c.l.b16 %v1468
      %v1628 = vunpack.c.l.b16 %v1469
      %v1629 = vunpack.c.l.b16 %v1470
      %v1630 = vunpack.c.l.b16 %v1471
      %v1631 = vunpack.c.l.b16 %v1472
      %v1632 = vunpack.c.l.b16 %v1473
      %v1633 = vunpack.c.l.b16 %v1474
      %v1634 = vunpack.c.l.b16 %v1475
      %v1635 = vunpack.c.l.b16 %v1476
      %v1636 = vunpack.c.l.b16 %v1477
      %v1637 = vunpack.c.l.b16 %v1478
      %v1638 = vunpack.c.l.b16 %v1479
      %v1639 = vunpack.c.l.b16 %v1480
      %v1640 = vunpack.c.l.b16 %v1481
      %v1641 = vunpack.c.l.b16 %v1482
      %v1642 = vunpack.c.l.b16 %v1483
      %v1643 = vunpack.c.l.b16 %v1484
      %v1644 = vunpack.c.l.b16 %v1485
      %v1645 = vunpack.c.l.b16 %v1486
      %v1646 = vunpack.c.l.b16 %v1487
      %v1647 = vunpack.c.l.b16 %v1488
      %v1648 = vunpack.c.l.b16 %v1489
      %v1649 = vunpack.c.l.b16 %v1490
      %v1650 = vunpack.c.l.b16 %v1491
      %v1651 = vunpack.c.l.b16 %v1492
      %v1652 = vunpack.c.l.b16 %v1493
      %v1653 = vunpack.c.l.b16 %v1494
      %v1654 = vunpack.c.l.b16 %v1495
      %v1655 = vunpack.c.l.b16 %v1496
      %v1656 = vunpack.c.l.b16 %v1497
      %v1657 = vunpack.c.l.b16 %v1498
      %v1658 = vunpack.c.l.b16 %v1499
      %v1659 = vunpack.c.l.b16 %v1500
      %v1660 = vunpack.c.l.b16 %v1501
      %v1661 = vunpack.c.l.b16 %v1502
      %v1662 = vunpack.c.l.b16 %v1503
      %v1663 = vunpack.c.l.b16 %v1504
      %v1664 = vunpack.c.l.b16 %v1505
      %v1665 = vunpack.c.l.b16 %v1506
      %v1666 = vunpack.c.l.b16 %v1507
      %v1667 = vunpack.c.l.b16 %v1508
      %v1668 = vunpack.c.l.b16 %v1509
      %v1669 = vunpack.c.l.b16 %v1510
      %v1670 = vpack.c.b16 %v1607, %v1606
      %v1671 = vpack.c.b16 %v1609, %v1608
      %v1672 = vpack.c.b16 %v1611, %v1610
      %v1673 = vpack.c.b16 %v1613, %v1612
      %v1674 = vpack.c.b16 %v1615, %v1614
      %v1675 = vpack.c.b16 %v1617, %v1616
      %v1676 = vpack.c.b16 %v1619, %v1618
      %v1677 = vpack.c.b16 %v1621, %v1620
      %v1678 = vpack.c.b16 %v1623, %v1622
      %v1679 = vpack.c.b16 %v1625, %v1624
      %v1680 = vpack.c.b16 %v1627, %v1626
      %v1681 = vpack.c.b16 %v1629, %v1628
      %v1682 = vpack.c.b16 %v1631, %v1630
      %v1683 = vpack.c.b16 %v1633, %v1632
      %v1684 = vpack.c.b16 %v1635, %v1634
      %v1685 = vpack.c.b16 %v1637, %v1636
      %v1686 = vpack.c.b16 %v1639, %v1638
      %v1687 = vpack.c.b16 %v1641, %v1640
      %v1688 = vpack.c.b16 %v1643, %v1642
      %v1689 = vpack.c.b16 %v1645, %v1644
      %v1690 = vpack.c.b16 %v1647, %v1646
      %v1691 = vpack.c.b16 %v1649, %v1648
      %v1692 = vpack.c.b16 %v1651, %v1650
      %v1693 = vpack.c.b16 %v1653, %v1652
      %v1694 = vpack.c.b16 %v1655, %v1654
      %v1695 = vpack.c.b16 %v1657, %v1656
      %v1696 = vpack.c.b16 %v1659, %v1658
      %v1697 = vpack.c.b16 %v1661, %v1660
      %v1698 = vpack.c.b16 %v1663, %v1662
      %v1699 = vpack.c.b16 %v1665, %v1664
      %v1700 = vpack.c.b16 %v1667, %v1666
      %v1701 = vpack.c.b16 %v1669, %v1668
      %1734 = vmatprep.subr.bf16.mxu0 0
      %1735 = vmatpush1.bf16.msra.mxu0 %v1677
      %1736 = vmatprep.subr.bf16.mxu0 0
      %1737 = vmatpush1.bf16.msra.mxu0 %v1676
      %1738 = vmatprep.subr.bf16.mxu0 0
      %1739 = vmatpush1.bf16.msra.mxu0 %v1675
      %1740 = vmatprep.subr.bf16.mxu0 0
      %1741 = vmatpush1.bf16.msra.mxu0 %v1674
      %1742 = vmatprep.subr.bf16.mxu0 0
      %1743 = vmatpush1.bf16.msra.mxu0 %v1673
      %1744 = vmatprep.subr.bf16.mxu0 0
      %1745 = vmatpush1.bf16.msra.mxu0 %v1672
      %1746 = vmatprep.subr.bf16.mxu0 0
      %1747 = vmatpush1.bf16.msra.mxu0 %v1671
      %1748 = vmatprep.subr.bf16.mxu0 0
      %1749 = vmatpush1.bf16.msra.mxu0 %v1670
      %1750 = vmatprep.subr.bf16.mxu0 0
      %1751 = vmatpush2.bf16.msra.mxu0 %v1685
      %1752 = vmatprep.subr.bf16.mxu0 0
      %1753 = vmatpush2.bf16.msra.mxu0 %v1684
      %1754 = vmatprep.subr.bf16.mxu0 0
      %1755 = vmatpush2.bf16.msra.mxu0 %v1683
      %1756 = vmatprep.subr.bf16.mxu0 0
      %1757 = vmatpush2.bf16.msra.mxu0 %v1682
      %1758 = vmatprep.subr.bf16.mxu0 0
      %1759 = vmatpush2.bf16.msra.mxu0 %v1681
      %1760 = vmatprep.subr.bf16.mxu0 0
      %1761 = vmatpush2.bf16.msra.mxu0 %v1680
      %1762 = vmatprep.subr.bf16.mxu0 0
      %1763 = vmatpush2.bf16.msra.mxu0 %v1679
      %1764 = vmatprep.subr.bf16.mxu0 0
      %1765 = vmatpush2.bf16.msra.mxu0 %v1678
      %1766 = vmatprep.mubr.bf16.mxu0 %v1527
      %1767 = vmatmul.mubr.bf16.gmra.mxu0 %v1524
      %v1768 = vpop.f32.mrf.mxu0
      %v1769 = vadd.f32 0.0, %v1768
      %v1770 = vpop.f32.mrf.mxu0
      %v1771 = vpop.f32.mrf.mxu0
      %v1772 = vadd.f32 0.0, %v1771
      %v1773 = vpop.f32.mrf.mxu0
      %1774 = vmatprep.mubr.bf16.mxu0 %v1526
      %1775 = vmatmul.mubr.bf16.gmra.mxu0 %v1523
      %v1776 = vpop.f32.mrf.mxu0
      %v1777 = vadd.f32 0.0, %v1776
      %v1778 = vpop.f32.mrf.mxu0
      %v1779 = vpop.f32.mrf.mxu0
      %v1780 = vpop.f32.mrf.mxu0
      %1781 = vdwg.mxu0
      %1782 = vmatprep.subr.bf16.mxu0 0
      %1783 = vmatpush1.bf16.msra.mxu0 %v1693
      %1784 = vmatprep.subr.bf16.mxu0 0
      %1785 = vmatpush1.bf16.msra.mxu0 %v1692
      %1786 = vmatprep.subr.bf16.mxu0 0
      %1787 = vmatpush1.bf16.msra.mxu0 %v1691
      %1788 = vmatprep.subr.bf16.mxu0 0
      %1789 = vmatpush1.bf16.msra.mxu0 %v1690
      %1790 = vmatprep.subr.bf16.mxu0 0
      %1791 = vmatpush1.bf16.msra.mxu0 %v1689
      %1792 = vmatprep.subr.bf16.mxu0 0
      %1793 = vmatpush1.bf16.msra.mxu0 %v1688
      %1794 = vmatprep.subr.bf16.mxu0 0
      %1795 = vmatpush1.bf16.msra.mxu0 %v1687
      %1796 = vmatprep.subr.bf16.mxu0 0
      %1797 = vmatpush1.bf16.msra.mxu0 %v1686
      %1798 = vmatprep.subr.bf16.mxu0 0
      %1799 = vmatpush2.bf16.msra.mxu0 %v1701
      %1800 = vmatprep.subr.bf16.mxu0 0
      %1801 = vmatpush2.bf16.msra.mxu0 %v1700
      %1802 = vmatprep.subr.bf16.mxu0 0
      %1803 = vmatpush2.bf16.msra.mxu0 %v1699
      %1804 = vmatprep.subr.bf16.mxu0 0
      %1805 = vmatpush2.bf16.msra.mxu0 %v1698
      %1806 = vmatprep.subr.bf16.mxu0 0
      %1807 = vmatpush2.bf16.msra.mxu0 %v1697
      %1808 = vmatprep.subr.bf16.mxu0 0
      %1809 = vmatpush2.bf16.msra.mxu0 %v1696
      %1810 = vmatprep.subr.bf16.mxu0 0
      %1811 = vmatpush2.bf16.msra.mxu0 %v1695
      %1812 = vmatprep.subr.bf16.mxu0 0
      %1813 = vmatpush2.bf16.msra.mxu0 %v1694
      %1814 = vmatprep.mubr.bf16.mxu0 %v1533
      %1815 = vmatmul.mubr.bf16.gmra.mxu0 %v1530
      %v1816 = vpop.f32.mrf.mxu0
      %v1817 = vadd.f32 %v1769, %v1816
      %v1818 = vpop.f32.mrf.mxu0
      %v1819 = vpop.f32.mrf.mxu0
      %v1820 = vadd.f32 %v1772, %v1819
      %v1821 = vpop.f32.mrf.mxu0
      %1822 = vmatprep.mubr.bf16.mxu0 %v1532
      %1823 = vmatmul.mubr.bf16.gmra.mxu0 %v1529
      %v1824 = vpop.f32.mrf.mxu0
      %v1825 = vadd.f32 %v1777, %v1824
      %v1826 = vpop.f32.mrf.mxu0
      %v1827 = vpop.f32.mrf.mxu0
      %v1828 = vpop.f32.mrf.mxu0
      %1829 = vdwg.mxu0
      %v1830 = vadd.f32 %v1441, %v1817
      %v1831 = vadd.f32 %v1442, %v1820
      %v1832 = vadd.f32 %v1443, %v1825
      %v1833 = vpack.c.bf16 %v1831, %v1830
      %v1834 = vpack.c.bf16 %v1832, %v1832
      %v1837 = vunpack.c.l.b16 %v1833
      %v1838 = vunpack.c.h.b16 %v1833
      %v1839 = vunpack.c.l.b16 %v1834
      %v1840 = vpack.c.b16 %v1837, %v1837
      %v1841 = vpack.c.b16 %v1838, %v1838
      %v1842 = vpack.c.b16 %v1839, %v1839
      %1846 = vst [vmem:[%s143] sm:$0xf] %v1840
      %1847 = vst [vmem:[%s143 + $0x4] sm:$0xf] %v1841
      %1848 = vst [vmem:[%s143 + $0x8] sm:$0x3] %v1842
      %p1849 = scmp.lt.s32.totalorder %s13, 1
      %s1850 = scalar_select %p1849, %s13, 1
      %s1851 = smul.addr %s1850, 3
      %s1852 = smul.addr %s1851, 4
      %s1853 = scalar_lea.vmem %s2, %s1852
      // Predicated region
      $region29: #{discriminator_forward.11} parent=27 // pred_check
        %p1854 = pneg %p78
      $region30: #{discriminator_forward.11} parent=27 // pred_check_branch
        %1856 = sbr.rel (%p1854) target = $region32
      $region31: #{discriminator_forward.11} parent=27 // pred_region
        _
      $region32: #{discriminator_forward.11} parent=27 // pred_fallthru
        _
    $region28: #{discriminator_forward.11} parent=5 // pred_fallthru
      _
    %p1857 = scmp.le.s32.totalorder 2, %s8
    // Predicated region
    $region33: #{discriminator_forward.11} parent=5 // pred_check
      %p1858 = pneg %p1857
    $region34: #{discriminator_forward.11} parent=5 // pred_check_branch
      %1860 = sbr.rel (%p1858) target = $region36
    $region35: #{discriminator_forward.11} parent=5 // pred_region
      %s1861 = ssub.s32 %s8, 2
      // Predicated region
      $region37: #{discriminator_forward.11} parent=35 // pred_check
        %p1862 = pneg %p84
      $region38: #{discriminator_forward.11} parent=35 // pred_check_branch
        %1864 = sbr.rel (%p1862) target = $region40
      $region39: #{discriminator_forward.11} parent=35 // pred_region
        %p1865 = scmp.lt.s32.totalorder %s14, 1
        %s1866 = scalar_select %p1865, %s14, 1
        %s1867 = smul.addr %s1866, 3
        %s1868 = smul.addr %s1867, 4
        %s1869 = scalar_lea.vmem %s2, %s1868
      $region40: #{discriminator_forward.11} parent=35 // pred_fallthru
        _
    $region36: #{discriminator_forward.11} parent=5 // pred_fallthru
      _
  $region6: #{discriminator_forward.11} parent=0 // loop_footer
    %s12 = sadd.s32 1, %s8
  $region7: #{discriminator_forward.11} parent=0 // loop_footer_branch
    %7 = sbr.rel target = $region3
  $region8: #{discriminator_forward.11} parent=0 // loop_exit
    _

// kernel: discriminator_forward.14
$region0: #{discriminator_forward.14}
  #allocation0 [shape = 'u32[]', space=smem, size = 0x4, offset = 0x4, fixed_abs, tag = 'smem constant byte address 0x4 - core index']
  #allocation1 [shape = 'u32[144,128]{1,0:T(1,128)}', space=vmem, size = 0x12000, scoped, tag = 'internal scratch']
  %s0 = inlined_call_operand.vmem [shape: bf16[2,9,128], index: 0, kind: input, shape index: {}]
  %s1 = inlined_call_operand.vmem [shape: bf16[2,9,128], index: 1, kind: output, shape index: {}]
  %s2 = sld [smem:[#allocation0]]
  $region37: #{discriminator_forward.14} parent=0
    _
  %s4 = ssub.s32 1, %s2
  %s5 = scalar_select 0, %s4, %s2
  loop: start=0, step=1, limit=4
  $region2: #{discriminator_forward.14} parent=0 // loop_pre_header
    _
  $region3: #{discriminator_forward.14} parent=0 // loop_header
    %s7 = sphi 0, %s11
    %p8 = scmp.ge.s32.totalorder %s7, 4
    %s14 = sphi 0, %s26
    %s15 = sphi 0, %s22
    %s16 = sphi 0, %s14
    %s17 = sphi 0, %s15
    %s18 = sphi 0, %s16
    %s19 = sphi 0, %s17
    %s31 = sphi 0, %s33
    %s34 = sphi 0, %s31
    %s35 = sphi 0, %s34
    %s51 = sphi 0, %s35
    %s59 = sphi 0, %s61
    %s62 = sphi 0, %s59
    %s63 = sphi 0, %s62
    %s79 = sphi 0, %s63
  $region4: #{discriminator_forward.14} parent=0 // loop_header_branch
    %10 = sbr.rel (%p8) target = $region8
  $region5: #{discriminator_forward.14} parent=0 // loop_body
    %s12 = ssub.s32 %s7, 1
    %s13 = ssub.s32 %s7, 2
    %s20 = sadd.s32 1, %s15
    %p21 = scmp.ge.s32.totalorder %s20, 1
    %s22 = scalar_select %p21, 0, %s20
    %s23 = sadd.s32 1, %s14
    %s24 = scalar_select %p21, %s23, %s14
    %p25 = scmp.ge.s32.totalorder %s24, 2
    %s26 = scalar_select %p25, 0, %s24
    %s27 = ssub.s32 %s14, %s26
    %s28 = ssub.s32 %s15, %s22
    %s29 = sor.u32 %s27, %s28
    %p30 = scmp.eq.s32.totalorder %s29, 0
    %s32 = sadd.s32 %s31, 1
    %s33 = scalar_select %p30, %s31, %s32
    %p36 = pneg %p30
    %p37 = scmp.eq.s32.totalorder %s7, 1
    %p38 = por %p36, %p37
    %p39 = scmp.ne.s32.totalorder %s31, %s34
    %p40 = scmp.eq.s32.totalorder %s7, 0
    %p41 = por %p39, %p40
    %p42 = scmp.ne.s32.totalorder %s31, %s34
    %p43 = scmp.eq.s32.totalorder %s12, 1
    %p44 = por %p42, %p43
    %p45 = scmp.ne.s32.totalorder %s34, %s35
    %p46 = scmp.eq.s32.totalorder %s12, 0
    %p47 = por %p45, %p46
    %p48 = scmp.ne.s32.totalorder %s34, %s35
    %p49 = scmp.eq.s32.totalorder %s13, 1
    %p50 = por %p48, %p49
    %p52 = scmp.ne.s32.totalorder %s35, %s51
    %p53 = scmp.eq.s32.totalorder %s13, 0
    %p54 = por %p52, %p53
    %s55 = ssub.s32 %s14, %s26
    %s56 = ssub.s32 %s15, %s22
    %s57 = sor.u32 %s55, %s56
    %p58 = scmp.eq.s32.totalorder %s57, 0
    %s60 = sadd.s32 %s59, 1
    %s61 = scalar_select %p58, %s59, %s60
    %p64 = pneg %p58
    %p65 = scmp.eq.s32.totalorder %s7, 1
    %p66 = por %p64, %p65
    %p67 = scmp.ne.s32.totalorder %s59, %s62
    %p68 = scmp.eq.s32.totalorder %s7, 0
    %p69 = por %p67, %p68
    %p70 = scmp.ne.s32.totalorder %s59, %s62
    %p71 = scmp.eq.s32.totalorder %s12, 1
    %p72 = por %p70, %p71
    %p73 = scmp.ne.s32.totalorder %s62, %s63
    %p74 = scmp.eq.s32.totalorder %s12, 0
    %p75 = por %p73, %p74
    %p76 = scmp.ne.s32.totalorder %s62, %s63
    %p77 = scmp.eq.s32.totalorder %s13, 1
    %p78 = por %p76, %p77
    %p80 = scmp.ne.s32.totalorder %s63, %s79
    %p81 = scmp.eq.s32.totalorder %s13, 0
    %p82 = por %p80, %p81
    %p83 = scmp.le.s32.totalorder 1, %s7
    %p84 = scmp.lt.s32.totalorder %s7, 3
    %p85 = pnand %p83, %p84
    %p86 = pneg %p85
    // Predicated region
    $region9: #{discriminator_forward.14} parent=5 // pred_check
      _
    $region10: #{discriminator_forward.14} parent=5 // pred_check_branch
      %88 = sbr.rel (%p85) target = $region12
    $region11: #{discriminator_forward.14} parent=5 // pred_region
      %s89 = ssub.s32 %s7, 1
    $region12: #{discriminator_forward.14} parent=5 // pred_fallthru
      _
    %p90 = scmp.lt.s32.totalorder %s7, 2
    // Predicated region
    $region13: #{discriminator_forward.14} parent=5 // pred_check
      %p91 = pneg %p90
    $region14: #{discriminator_forward.14} parent=5 // pred_check_branch
      %93 = sbr.rel (%p91) target = $region16
    $region15: #{discriminator_forward.14} parent=5 // pred_region
      // Predicated region
      $region17: #{discriminator_forward.14} parent=15 // pred_check
        %p94 = pneg %p41
      $region18: #{discriminator_forward.14} parent=15 // pred_check_branch
        %96 = sbr.rel (%p94) target = $region20
      $region19: #{discriminator_forward.14} parent=15 // pred_region
        %p97 = scmp.lt.s32.totalorder %s14, 1
        %s98 = scalar_select %p97, %s14, 1
        %p99 = scmp.lt.s32.totalorder %s15, 0
        %s100 = scalar_select %p99, %s15, 0
        %s101 = smul.addr %s98, 2
        %s102 = sadd.s32 %s100, %s101
        %s103 = smul.addr %s102, 4
        %s104 = scalar_lea.vmem %s0, %s103
      $region20: #{discriminator_forward.14} parent=15 // pred_fallthru
        _
    $region16: #{discriminator_forward.14} parent=5 // pred_fallthru
      _
    %p105 = scmp.le.s32.totalorder 1, %s7
    %p106 = scmp.lt.s32.totalorder %s7, 3
    %p107 = pnand %p105, %p106
    %p108 = pneg %p107
    // Predicated region
    $region21: #{discriminator_forward.14} parent=5 // pred_check
      _
    $region22: #{discriminator_forward.14} parent=5 // pred_check_branch
      %110 = sbr.rel (%p107) target = $region24
    $region23: #{discriminator_forward.14} parent=5 // pred_region
      %s111 = ssub.s32 %s7, 1
      %p112 = scmp.lt.s32.totalorder %s16, 1
      %s113 = scalar_select %p112, %s16, 1
      %p114 = scmp.lt.s32.totalorder %s17, 0
      %s115 = scalar_select %p114, %s17, 0
      %s116 = smul.addr %s113, 2
      %s117 = sadd.s32 %s115, %s116
      %s118 = smul.addr %s117, 4
      %s119 = scalar_lea.vmem %s0, %s118
      %p120 = pneg %p47
      %p121 = pneg %p44
      %p122 = pneg %p75
      %p123 = pneg %p72
      %p124 = scmp.lt.s32.totalorder %s16, 1
      %s125 = scalar_select %p124, %s16, 1
      %p126 = scmp.lt.s32.totalorder %s17, 0
      %s127 = scalar_select %p126, %s17, 0
      %s128 = smul.addr %s125, 2
      %s129 = sadd.s32 %s127, %s128
      %s130 = smul.addr %s129, 4
      %s131 = scalar_lea.vmem %s1, %s130
      %p132 = scmp.lt.s32.totalorder %s16, 1
      %s133 = scalar_select %p132, %s16, 1
      %p134 = scmp.lt.s32.totalorder %s17, 0
      %s135 = scalar_select %p134, %s17, 0
      %s136 = smul.addr %s133, 2
      %s137 = sadd.s32 %s135, %s136
      %s138 = smul.addr %s137, 4
      %s139 = scalar_lea.vmem %s0, %s138
      %p140 = scmp.lt.s32.totalorder %s16, 1
      %s141 = scalar_select %p140, %s16, 1
      %p142 = scmp.lt.s32.totalorder %s17, 0
      %s143 = scalar_select %p142, %s17, 0
      %s144 = smul.addr %s141, 2
      %s145 = sadd.s32 %s143, %s144
      %s146 = smul.addr %s145, 4
      %s147 = scalar_lea.vmem %s1, %s146
      %v148 = vld [vmem:[%s139] sm:$0xf]
      %v149 = vld [vmem:[%s139 + $0x4] sm:$0x1]
      %v150 = vunpack.c.l.bf16 %v148
      %v151 = vunpack.c.l.bf16 %v149
      %vm152 = vcmask 1040384
      %v153 = vsel %vm152, %v151, 0.0
      %v154 = vadd.f32 %v150, %v153
      %v155 = vrot.slane %v154, 4
      %v156 = vadd.f32 %v154, %v155
      %v157 = vrot.slane %v156, 2
      %v158 = vadd.f32 %v156, %v157
      %v159 = vrot.slane %v158, 1
      %v160 = vadd.f32 %v158, %v159
      %v161 = vrcp.pop 9.0
      %v162 = vmul.f32 %v160, %v161
      %v163 = vsub.f32 %v150, %v162
      %v164 = vsub.f32 %v151, %v162
      %v165 = vmul.f32 %v163, %v163
      %v166 = vmul.f32 %v164, %v164
      %v167 = vsel %vm152, %v166, 0.0
      %v168 = vadd.f32 %v165, %v167
      %v169 = vrot.slane %v168, 4
      %v170 = vadd.f32 %v168, %v169
      %v171 = vrot.slane %v170, 2
      %v172 = vadd.f32 %v170, %v171
      %v173 = vrot.slane %v172, 1
      %v174 = vadd.f32 %v172, %v173
      %v175 = vmul.f32 %v174, %v161
      %v176 = vadd.f32 %v175, 1e-05
      %v177 = vrsqrt.pop %v176
      %v178 = vmul.f32 %v163, %v177
      %v179 = vmul.f32 %v164, %v177
      %vm180 = vcmp.ge.f32.partialorder %v178, 0.0
      %vm181 = vcmp.ge.f32.partialorder %v179, 0.0
      %v182 = vmul.f32 %v178, 0.2
      %v183 = vmul.f32 %v179, 0.2
      %v184 = vsel %vm180, %v178, %v182
      %v185 = vsel %vm181, %v179, %v183
      %v186 = vpack.c.bf16 %v185, %v184
      %v188 = vunpack.c.l.b16 %v186
      %v189 = vunpack.c.h.b16 %v186
      %v190 = vpack.c.b16 %v188, %v188
      %v191 = vpack.c.b16 %v189, %v189
      %194 = vst [vmem:[%s147] sm:$0xf] %v190
      %vm195 = vcmask 1040384
      %vm196 = vsmask.f32 256
      %vm197 = vmand %vm195, %vm196
      %v198 = vld [vmem:[%s147 + $0x4] sm:$0x1]
      %v199 = vsel %vm197, %v191, %v198
      %200 = vst [vmem:[%s147 + $0x4] sm:$0x1] %v199
      %p201 = scmp.lt.s32.totalorder %s16, 1
      %s202 = scalar_select %p201, %s16, 1
      %p203 = scmp.lt.s32.totalorder %s17, 0
      %s204 = scalar_select %p203, %s17, 0
      %s205 = smul.addr %s202, 2
      %s206 = sadd.s32 %s204, %s205
      %s207 = smul.addr %s206, 4
      %s208 = scalar_lea.vmem %s1, %s207
      // Predicated region
      $region25: #{discriminator_forward.14} parent=23 // pred_check
        %p209 = pneg %p72
      $region26: #{discriminator_forward.14} parent=23 // pred_check_branch
        %211 = sbr.rel (%p209) target = $region28
      $region27: #{discriminator_forward.14} parent=23 // pred_region
        _
      $region28: #{discriminator_forward.14} parent=23 // pred_fallthru
        _
    $region24: #{discriminator_forward.14} parent=5 // pred_fallthru
      _
    %p212 = scmp.le.s32.totalorder 2, %s7
    // Predicated region
    $region29: #{discriminator_forward.14} parent=5 // pred_check
      %p213 = pneg %p212
    $region30: #{discriminator_forward.14} parent=5 // pred_check_branch
      %215 = sbr.rel (%p213) target = $region32
    $region31: #{discriminator_forward.14} parent=5 // pred_region
      %s216 = ssub.s32 %s7, 2
      // Predicated region
      $region33: #{discriminator_forward.14} parent=31 // pred_check
        %p217 = pneg %p78
      $region34: #{discriminator_forward.14} parent=31 // pred_check_branch
        %219 = sbr.rel (%p217) target = $region36
      $region35: #{discriminator_forward.14} parent=31 // pred_region
        %p220 = scmp.lt.s32.totalorder %s18, 1
        %s221 = scalar_select %p220, %s18, 1
        %p222 = scmp.lt.s32.totalorder %s19, 0
        %s223 = scalar_select %p222, %s19, 0
        %s224 = smul.addr %s221, 2
        %s225 = sadd.s32 %s223, %s224
        %s226 = smul.addr %s225, 4
        %s227 = scalar_lea.vmem %s1, %s226
      $region36: #{discriminator_forward.14} parent=31 // pred_fallthru
        _
    $region32: #{discriminator_forward.14} parent=5 // pred_fallthru
      _
  $region6: #{discriminator_forward.14} parent=0 // loop_footer
    %s11 = sadd.s32 1, %s7
  $region7: #{discriminator_forward.14} parent=0 // loop_footer_branch
    %6 = sbr.rel target = $region3
  $region8: #{discriminator_forward.14} parent=0 // loop_exit
    _

// kernel: discriminator_forward.13
$region0: #{discriminator_forward.13}
  #allocation0 [shape = 'u32[]', space=smem, size = 0x4, offset = 0x4, fixed_abs, tag = 'smem constant byte address 0x4 - core index']
  #allocation1 [shape = 'u32[144,128]{1,0:T(1,128)}', space=vmem, size = 0x12000, scoped, tag = 'internal scratch']
  %s0 = inlined_call_operand.vmem [shape: bf16[2,42,128], index: 0, kind: input, shape index: {}]
  %s1 = inlined_call_operand.vmem [shape: bf16[16,128,128], index: 1, kind: input, shape index: {}]
  %s2 = inlined_call_operand.vmem [shape: bf16[2,18,128], index: 2, kind: output, shape index: {}]
  %s3 = sld [smem:[#allocation0]]
  $region41: #{discriminator_forward.13} parent=0
    _
  %s5 = ssub.s32 1, %s3
  %s6 = scalar_select 0, %s5, %s3
  loop: start=0, step=1, limit=4
  $region2: #{discriminator_forward.13} parent=0 // loop_pre_header
    _
  $region3: #{discriminator_forward.13} parent=0 // loop_header
    %s8 = sphi 0, %s12
    %p9 = scmp.ge.s32.totalorder %s8, 4
    %s18 = sphi 0, %s20
    %s21 = sphi 0, %s18
    %s22 = sphi 0, %s21
    %s38 = sphi 0, %s22
    %s42 = sphi 0, %s42
    %s44 = sphi 0, %s42
    %s45 = sphi 0, %s44
    %s59 = sphi 0, %s45
    %s65 = sphi 0, %s67
    %s68 = sphi 0, %s65
    %s69 = sphi 0, %s68
    %s85 = sphi 0, %s69
  $region4: #{discriminator_forward.13} parent=0 // loop_header_branch
    %11 = sbr.rel (%p9) target = $region8
  $region5: #{discriminator_forward.13} parent=0 // loop_body
    %s13 = ssub.s32 %s8, 1
    %s14 = ssub.s32 %s8, 2
    %s15 = sadd.s32 %s8, 1
    %s16 = ssub.s32 %s8, %s15
    %p17 = scmp.eq.s32.totalorder %s16, 0
    %s19 = sadd.s32 %s18, 1
    %s20 = scalar_select %p17, %s18, %s19
    %p23 = pneg %p17
    %p24 = scmp.eq.s32.totalorder %s8, 1
    %p25 = por %p23, %p24
    %p26 = scmp.ne.s32.totalorder %s18, %s21
    %p27 = scmp.eq.s32.totalorder %s8, 0
    %p28 = por %p26, %p27
    %p29 = scmp.ne.s32.totalorder %s18, %s21
    %p30 = scmp.eq.s32.totalorder %s13, 1
    %p31 = por %p29, %p30
    %p32 = scmp.ne.s32.totalorder %s21, %s22
    %p33 = scmp.eq.s32.totalorder %s13, 0
    %p34 = por %p32, %p33
    %p35 = scmp.ne.s32.totalorder %s21, %s22
    %p36 = scmp.eq.s32.totalorder %s14, 1
    %p37 = por %p35, %p36
    %p39 = scmp.ne.s32.totalorder %s22, %s38
    %p40 = scmp.eq.s32.totalorder %s14, 0
    %p41 = por %p39, %p40
    %s43 = sadd.s32 %s42, 1
    %p46 = scmp.eq.s32.totalorder %s8, 1
    %p47 = scmp.ne.s32.totalorder %s42, %s44
    %p48 = scmp.eq.s32.totalorder %s8, 0
    %p49 = por %p47, %p48
    %p50 = scmp.ne.s32.totalorder %s42, %s44
    %p51 = scmp.eq.s32.totalorder %s13, 1
    %p52 = por %p50, %p51
    %p53 = scmp.ne.s32.totalorder %s44, %s45
    %p54 = scmp.eq.s32.totalorder %s13, 0
    %p55 = por %p53, %p54
    %p56 = scmp.ne.s32.totalorder %s44, %s45
    %p57 = scmp.eq.s32.totalorder %s14, 1
    %p58 = por %p56, %p57
    %p60 = scmp.ne.s32.totalorder %s45, %s59
    %p61 = scmp.eq.s32.totalorder %s14, 0
    %p62 = por %p60, %p61
    %s63 = ssub.s32 %s8, %s15
    %p64 = scmp.eq.s32.totalorder %s63, 0
    %s66 = sadd.s32 %s65, 1
    %s67 = scalar_select %p64, %s65, %s66
    %p70 = pneg %p64
    %p71 = scmp.eq.s32.totalorder %s8, 1
    %p72 = por %p70, %p71
    %p73 = scmp.ne.s32.totalorder %s65, %s68
    %p74 = scmp.eq.s32.totalorder %s8, 0
    %p75 = por %p73, %p74
    %p76 = scmp.ne.s32.totalorder %s65, %s68
    %p77 = scmp.eq.s32.totalorder %s13, 1
    %p78 = por %p76, %p77
    %p79 = scmp.ne.s32.totalorder %s68, %s69
    %p80 = scmp.eq.s32.totalorder %s13, 0
    %p81 = por %p79, %p80
    %p82 = scmp.ne.s32.totalorder %s68, %s69
    %p83 = scmp.eq.s32.totalorder %s14, 1
    %p84 = por %p82, %p83
    %p86 = scmp.ne.s32.totalorder %s69, %s85
    %p87 = scmp.eq.s32.totalorder %s14, 0
    %p88 = por %p86, %p87
    %p89 = scmp.le.s32.totalorder 1, %s8
    %p90 = scmp.lt.s32.totalorder %s8, 3
    %p91 = pnand %p89, %p90
    %p92 = pneg %p91
    // Predicated region
    $region9: #{discriminator_forward.13} parent=5 // pred_check
      _
    $region10: #{discriminator_forward.13} parent=5 // pred_check_branch
      %94 = sbr.rel (%p91) target = $region12
    $region11: #{discriminator_forward.13} parent=5 // pred_region
      %s95 = ssub.s32 %s8, 1
      // Predicated region
      $region13: #{discriminator_forward.13} parent=11 // pred_check
        %p96 = pneg %p55
      $region14: #{discriminator_forward.13} parent=11 // pred_check_branch
        %98 = sbr.rel (%p96) target = $region16
      $region15: #{discriminator_forward.13} parent=11 // pred_region
        _
      $region16: #{discriminator_forward.13} parent=11 // pred_fallthru
        _
    $region12: #{discriminator_forward.13} parent=5 // pred_fallthru
      _
    %p99 = scmp.lt.s32.totalorder %s8, 2
    // Predicated region
    $region17: #{discriminator_forward.13} parent=5 // pred_check
      %p100 = pneg %p99
    $region18: #{discriminator_forward.13} parent=5 // pred_check_branch
      %102 = sbr.rel (%p100) target = $region20
    $region19: #{discriminator_forward.13} parent=5 // pred_region
      // Predicated region
      $region21: #{discriminator_forward.13} parent=19 // pred_check
        %p103 = pneg %p28
      $region22: #{discriminator_forward.13} parent=19 // pred_check_branch
        %105 = sbr.rel (%p103) target = $region24
      $region23: #{discriminator_forward.13} parent=19 // pred_region
        %p106 = scmp.lt.s32.totalorder %s8, 1
        %s107 = scalar_select %p106, %s8, 1
        %s108 = smul.addr %s107, 6
        %s109 = smul.addr %s108, 4
        %s110 = scalar_lea.vmem %s0, %s109
      $region24: #{discriminator_forward.13} parent=19 // pred_fallthru
        _
    $region20: #{discriminator_forward.13} parent=5 // pred_fallthru
      _
    %p111 = scmp.le.s32.totalorder 1, %s8
    %p112 = scmp.lt.s32.totalorder %s8, 3
    %p113 = pnand %p111, %p112
    %p114 = pneg %p113
    // Predicated region
    $region25: #{discriminator_forward.13} parent=5 // pred_check
      _
    $region26: #{discriminator_forward.13} parent=5 // pred_check_branch
      %116 = sbr.rel (%p113) target = $region28
    $region27: #{discriminator_forward.13} parent=5 // pred_region
      %s117 = ssub.s32 %s8, 1
      %p118 = scmp.lt.s32.totalorder %s13, 1
      %s119 = scalar_select %p118, %s13, 1
      %s120 = smul.addr %s119, 6
      %s121 = smul.addr %s120, 4
      %s122 = scalar_lea.vmem %s0, %s121
      %p123 = pneg %p34
      %p124 = pneg %p31
      %p125 = pneg %p55
      %p126 = pneg %p52
      %p127 = pneg %p81
      %p128 = pneg %p78
      %p129 = scmp.lt.s32.totalorder %s13, 1
      %s130 = scalar_select %p129, %s13, 1
      %s131 = smul.addr %s130, 3
      %s132 = smul.addr %s131, 4
      %s133 = scalar_lea.vmem %s2, %s132
      %p134 = scmp.lt.s32.totalorder %s13, 1
      %s135 = scalar_select %p134, %s13, 1
      %s136 = smul.addr %s135, 6
      %s137 = smul.addr %s136, 4
      %s138 = scalar_lea.vmem %s0, %s137
      %p139 = scmp.lt.s32.totalorder %s13, 1
      %s140 = scalar_select %p139, %s13, 1
      %s141 = smul.addr %s140, 3
      %s142 = smul.addr %s141, 4
      %s143 = scalar_lea.vmem %s2, %s142
      %v145 = vld [vmem:[%s138] sm:$0xf]
      %v146 = vld [vmem:[%s138 + $0x4] sm:$0xf]
      %v147 = vld [vmem:[%s138 + $0x8] sm:$0x1]
      %v148 = vld [vmem:[%s1] sm:$0xf]
      %v149 = vld [vmem:[%s1 + $0x4] sm:$0xf]
      %v150 = vld [vmem:[%s1 + $0x8] sm:$0xf]
      %v151 = vld [vmem:[%s1 + $0xc] sm:$0xf]
      %v152 = vld [vmem:[%s1 + $0x10] sm:$0xf]
      %v153 = vld [vmem:[%s1 + $0x14] sm:$0xf]
      %v154 = vld [vmem:[%s1 + $0x18] sm:$0xf]
      %v155 = vld [vmem:[%s1 + $0x1c] sm:$0xf]
      %v156 = vld [vmem:[%s1 + $0x20] sm:$0xf]
      %v157 = vld [vmem:[%s1 + $0x24] sm:$0xf]
      %v158 = vld [vmem:[%s1 + $0x28] sm:$0xf]
      %v159 = vld [vmem:[%s1 + $0x2c] sm:$0xf]
      %v160 = vld [vmem:[%s1 + $0x30] sm:$0xf]
      %v161 = vld [vmem:[%s1 + $0x34] sm:$0xf]
      %v162 = vld [vmem:[%s1 + $0x38] sm:$0xf]
      %v163 = vld [vmem:[%s1 + $0x3c] sm:$0xf]
      %v164 = vld [vmem:[%s138 + $0x8] sm:$0x3]
      %s165 = scalar_lea.vmem %s1, 64
      %v166 = vld [vmem:[%s165] sm:$0xf]
      %v167 = vld [vmem:[%s165 + $0x4] sm:$0xf]
      %v168 = vld [vmem:[%s165 + $0x8] sm:$0xf]
      %v169 = vld [vmem:[%s165 + $0xc] sm:$0xf]
      %v170 = vld [vmem:[%s165 + $0x10] sm:$0xf]
      %v171 = vld [vmem:[%s165 + $0x14] sm:$0xf]
      %v172 = vld [vmem:[%s165 + $0x18] sm:$0xf]
      %v173 = vld [vmem:[%s165 + $0x1c] sm:$0xf]
      %v174 = vld [vmem:[%s165 + $0x20] sm:$0xf]
      %v175 = vld [vmem:[%s165 + $0x24] sm:$0xf]
      %v176 = vld [vmem:[%s165 + $0x28] sm:$0xf]
      %v177 = vld [vmem:[%s165 + $0x2c] sm:$0xf]
      %v178 = vld [vmem:[%s165 + $0x30] sm:$0xf]
      %v179 = vld [vmem:[%s165 + $0x34] sm:$0xf]
      %v180 = vld [vmem:[%s165 + $0x38] sm:$0xf]
      %v181 = vld [vmem:[%s165 + $0x3c] sm:$0xf]
      %v185 = vunpack.c.l.b16 %v145
      %v186 = vunpack.c.l.b16 %v146
      %v187 = vunpack.c.l.b16 %v164
      %v188 = vpack.c.b16 %v186, %v185
      %v189 = vpack.c.b16 %v187, %v187
      %vm190 = vsmask.f32 7424
      %v192 = vshrl.u32 %v188, 16
      %v194 = vshll.u32 %v188, 16
      %v196 = vrot.slane %v194, 1
      %v197 = vor.u32 %v192, %v196
      %v199 = vshll.u32 %v189, 16
      %v201 = vrot.slane %v199, 1
      %v202 = vsel %vm190, %v197, %v201
      %v203 = vshrl.u32 %v189, 16
      %v205 = vor.u32 %v203, %v201
      %v224 = vunpack.c.l.b16 %v166
      %v225 = vunpack.c.l.b16 %v167
      %v226 = vunpack.c.l.b16 %v168
      %v227 = vunpack.c.l.b16 %v169
      %v228 = vunpack.c.l.b16 %v170
      %v229 = vunpack.c.l.b16 %v171
      %v230 = vunpack.c.l.b16 %v172
      %v231 = vunpack.c.l.b16 %v173
      %v232 = vunpack.c.l.b16 %v174
      %v233 = vunpack.c.l.b16 %v175
      %v234 = vunpack.c.l.b16 %v176
      %v235 = vunpack.c.l.b16 %v177
      %v236 = vunpack.c.l.b16 %v178
      %v237 = vunpack.c.l.b16 %v179
      %v238 = vunpack.c.l.b16 %v180
      %v239 = vunpack.c.l.b16 %v181
      %v240 = vpack.c.b16 %v225, %v224
      %v241 = vpack.c.b16 %v227, %v226
      %v242 = vpack.c.b16 %v229, %v228
      %v243 = vpack.c.b16 %v231, %v230
      %v244 = vpack.c.b16 %v233, %v232
      %v245 = vpack.c.b16 %v235, %v234
      %v246 = vpack.c.b16 %v237, %v236
      %v247 = vpack.c.b16 %v239, %v238
      %256 = vmatprep.subr.bf16.mxu0 0
      %257 = vmatpush1.bf16.msra.mxu0 %v247
      %258 = vmatprep.subr.bf16.mxu0 0
      %259 = vmatpush1.bf16.msra.mxu0 %v246
      %260 = vmatprep.subr.bf16.mxu0 0
      %261 = vmatpush1.bf16.msra.mxu0 %v245
      %262 = vmatprep.subr.bf16.mxu0 0
      %263 = vmatpush1.bf16.msra.mxu0 %v244
      %264 = vmatprep.subr.bf16.mxu0 0
      %265 = vmatpush1.bf16.msra.mxu0 %v243
      %266 = vmatprep.subr.bf16.mxu0 0
      %267 = vmatpush1.bf16.msra.mxu0 %v242
      %268 = vmatprep.subr.bf16.mxu0 0
      %269 = vmatpush1.bf16.msra.mxu0 %v241
      %270 = vmatprep.subr.bf16.mxu0 0
      %271 = vmatpush1.bf16.msra.mxu0 %v240
      %272 = vmatprep.subr.bf16.mxu0 0
      %273 = vmatpush2.bf16.msra.mxu0 0
      %274 = vmatprep.subr.bf16.mxu0 0
      %275 = vmatpush2.bf16.msra.mxu0 0
      %276 = vmatprep.subr.bf16.mxu0 0
      %277 = vmatpush2.bf16.msra.mxu0 0
      %278 = vmatprep.subr.bf16.mxu0 0
      %279 = vmatpush2.bf16.msra.mxu0 0
      %280 = vmatprep.subr.bf16.mxu0 0
      %281 = vmatpush2.bf16.msra.mxu0 0
      %282 = vmatprep.subr.bf16.mxu0 0
      %283 = vmatpush2.bf16.msra.mxu0 0
      %284 = vmatprep.subr.bf16.mxu0 0
      %285 = vmatpush2.bf16.msra.mxu0 0
      %286 = vmatprep.subr.bf16.mxu0 0
      %287 = vmatpush2.bf16.msra.mxu0 0
      %288 = vmatprep.mubr.bf16.mxu0 0
      %289 = vmatmul.mubr.bf16.gmra.mxu0 %v202
      %v290 = vpop.f32.mrf.mxu0
      %v291 = vadd.f32 0.0, %v290
      %v292 = vpop.f32.mrf.mxu0
      %v293 = vpop.f32.mrf.mxu0
      %v294 = vadd.f32 0.0, %v293
      %v295 = vpop.f32.mrf.mxu0
      %296 = vmatprep.mubr.bf16.mxu0 0
      %297 = vmatmul.mubr.bf16.gmra.mxu0 %v205
      %v298 = vpop.f32.mrf.mxu0
      %v299 = vadd.f32 0.0, %v298
      %v300 = vpop.f32.mrf.mxu0
      %v301 = vpop.f32.mrf.mxu0
      %v302 = vpop.f32.mrf.mxu0
      %303 = vdwg.mxu0
      %v305 = vunpack.c.l.b16 %v147
      %v306 = vpack.c.b16 %v305, %v305
      %v325 = vunpack.c.l.b16 %v148
      %v326 = vunpack.c.l.b16 %v149
      %v327 = vunpack.c.l.b16 %v150
      %v328 = vunpack.c.l.b16 %v151
      %v329 = vunpack.c.l.b16 %v152
      %v330 = vunpack.c.l.b16 %v153
      %v331 = vunpack.c.l.b16 %v154
      %v332 = vunpack.c.l.b16 %v155
      %v333 = vunpack.c.l.b16 %v156
      %v334 = vunpack.c.l.b16 %v157
      %v335 = vunpack.c.l.b16 %v158
      %v336 = vunpack.c.l.b16 %v159
      %v337 = vunpack.c.l.b16 %v160
      %v338 = vunpack.c.l.b16 %v161
      %v339 = vunpack.c.l.b16 %v162
      %v340 = vunpack.c.l.b16 %v163
      %v341 = vpack.c.b16 %v326, %v325
      %v342 = vpack.c.b16 %v328, %v327
      %v343 = vpack.c.b16 %v330, %v329
      %v344 = vpack.c.b16 %v332, %v331
      %v345 = vpack.c.b16 %v334, %v333
      %v346 = vpack.c.b16 %v336, %v335
      %v347 = vpack.c.b16 %v338, %v337
      %v348 = vpack.c.b16 %v340, %v339
      %357 = vmatprep.subr.bf16.mxu0 0
      %358 = vmatpush1.bf16.msra.mxu0 %v348
      %359 = vmatprep.subr.bf16.mxu0 0
      %360 = vmatpush1.bf16.msra.mxu0 %v347
      %361 = vmatprep.subr.bf16.mxu0 0
      %362 = vmatpush1.bf16.msra.mxu0 %v346
      %363 = vmatprep.subr.bf16.mxu0 0
      %364 = vmatpush1.bf16.msra.mxu0 %v345
      %365 = vmatprep.subr.bf16.mxu0 0
      %366 = vmatpush1.bf16.msra.mxu0 %v344
      %367 = vmatprep.subr.bf16.mxu0 0
      %368 = vmatpush1.bf16.msra.mxu0 %v343
      %369 = vmatprep.subr.bf16.mxu0 0
      %370 = vmatpush1.bf16.msra.mxu0 %v342
      %371 = vmatprep.subr.bf16.mxu0 0
      %372 = vmatpush1.bf16.msra.mxu0 %v341
      %373 = vmatprep.subr.bf16.mxu0 0
      %374 = vmatpush2.bf16.msra.mxu0 0
      %375 = vmatprep.subr.bf16.mxu0 0
      %376 = vmatpush2.bf16.msra.mxu0 0
      %377 = vmatprep.subr.bf16.mxu0 0
      %378 = vmatpush2.bf16.msra.mxu0 0
      %379 = vmatprep.subr.bf16.mxu0 0
      %380 = vmatpush2.bf16.msra.mxu0 0
      %381 = vmatprep.subr.bf16.mxu0 0
      %382 = vmatpush2.bf16.msra.mxu0 0
      %383 = vmatprep.subr.bf16.mxu0 0
      %384 = vmatpush2.bf16.msra.mxu0 0
      %385 = vmatprep.subr.bf16.mxu0 0
      %386 = vmatpush2.bf16.msra.mxu0 0
      %387 = vmatprep.subr.bf16.mxu0 0
      %388 = vmatpush2.bf16.msra.mxu0 0
      %389 = vmatprep.mubr.bf16.mxu0 0
      %390 = vmatmul.mubr.bf16.gmra.mxu0 %v188
      %v391 = vpop.f32.mrf.mxu0
      %v392 = vadd.f32 %v291, %v391
      %v393 = vpop.f32.mrf.mxu0
      %v394 = vpop.f32.mrf.mxu0
      %v395 = vadd.f32 %v294, %v394
      %v396 = vpop.f32.mrf.mxu0
      %397 = vmatprep.mubr.bf16.mxu0 0
      %398 = vmatmul.mubr.bf16.gmra.mxu0 %v306
      %v399 = vpop.f32.mrf.mxu0
      %v400 = vadd.f32 %v299, %v399
      %v401 = vpop.f32.mrf.mxu0
      %v402 = vpop.f32.mrf.mxu0
      %v403 = vpop.f32.mrf.mxu0
      %404 = vdwg.mxu0
      %v405 = vld [vmem:[%s138] sm:$0xe]
      %s406 = scalar_lea.vmem %s1, 128
      %v407 = vld [vmem:[%s406] sm:$0xf]
      %v408 = vld [vmem:[%s406 + $0x4] sm:$0xf]
      %v409 = vld [vmem:[%s406 + $0x8] sm:$0xf]
      %v410 = vld [vmem:[%s406 + $0xc] sm:$0xf]
      %v411 = vld [vmem:[%s406 + $0x10] sm:$0xf]
      %v412 = vld [vmem:[%s406 + $0x14] sm:$0xf]
      %v413 = vld [vmem:[%s406 + $0x18] sm:$0xf]
      %v414 = vld [vmem:[%s406 + $0x1c] sm:$0xf]
      %v415 = vld [vmem:[%s406 + $0x20] sm:$0xf]
      %v416 = vld [vmem:[%s406 + $0x24] sm:$0xf]
      %v417 = vld [vmem:[%s406 + $0x28] sm:$0xf]
      %v418 = vld [vmem:[%s406 + $0x2c] sm:$0xf]
      %v419 = vld [vmem:[%s406 + $0x30] sm:$0xf]
      %v420 = vld [vmem:[%s406 + $0x34] sm:$0xf]
      %v421 = vld [vmem:[%s406 + $0x38] sm:$0xf]
      %v422 = vld [vmem:[%s406 + $0x3c] sm:$0xf]
      %v424 = vunpack.c.l.b16 %v405
      %v425 = vpack.c.b16 %v186, %v424
      %vm426 = vcmask 1046528
      %v427 = vrot.slane %v425, 1
      %v428 = vrot.slane %v189, 1
      %v429 = vsel %vm426, %v427, %v428
      %v448 = vunpack.c.l.b16 %v407
      %v449 = vunpack.c.l.b16 %v408
      %v450 = vunpack.c.l.b16 %v409
      %v451 = vunpack.c.l.b16 %v410
      %v452 = vunpack.c.l.b16 %v411
      %v453 = vunpack.c.l.b16 %v412
      %v454 = vunpack.c.l.b16 %v413
      %v455 = vunpack.c.l.b16 %v414
      %v456 = vunpack.c.l.b16 %v415
      %v457 = vunpack.c.l.b16 %v416
      %v458 = vunpack.c.l.b16 %v417
      %v459 = vunpack.c.l.b16 %v418
      %v460 = vunpack.c.l.b16 %v419
      %v461 = vunpack.c.l.b16 %v420
      %v462 = vunpack.c.l.b16 %v421
      %v463 = vunpack.c.l.b16 %v422
      %v464 = vpack.c.b16 %v449, %v448
      %v465 = vpack.c.b16 %v451, %v450
      %v466 = vpack.c.b16 %v453, %v452
      %v467 = vpack.c.b16 %v455, %v454
      %v468 = vpack.c.b16 %v457, %v456
      %v469 = vpack.c.b16 %v459, %v458
      %v470 = vpack.c.b16 %v461, %v460
      %v471 = vpack.c.b16 %v463, %v462
      %480 = vmatprep.subr.bf16.mxu0 0
      %481 = vmatpush1.bf16.msra.mxu0 %v471
      %482 = vmatprep.subr.bf16.mxu0 0
      %483 = vmatpush1.bf16.msra.mxu0 %v470
      %484 = vmatprep.subr.bf16.mxu0 0
      %485 = vmatpush1.bf16.msra.mxu0 %v469
      %486 = vmatprep.subr.bf16.mxu0 0
      %487 = vmatpush1.bf16.msra.mxu0 %v468
      %488 = vmatprep.subr.bf16.mxu0 0
      %489 = vmatpush1.bf16.msra.mxu0 %v467
      %490 = vmatprep.subr.bf16.mxu0 0
      %491 = vmatpush1.bf16.msra.mxu0 %v466
      %492 = vmatprep.subr.bf16.mxu0 0
      %493 = vmatpush1.bf16.msra.mxu0 %v465
      %494 = vmatprep.subr.bf16.mxu0 0
      %495 = vmatpush1.bf16.msra.mxu0 %v464
      %496 = vmatprep.subr.bf16.mxu0 0
      %497 = vmatpush2.bf16.msra.mxu0 0
      %498 = vmatprep.subr.bf16.mxu0 0
      %499 = vmatpush2.bf16.msra.mxu0 0
      %500 = vmatprep.subr.bf16.mxu0 0
      %501 = vmatpush2.bf16.msra.mxu0 0
      %502 = vmatprep.subr.bf16.mxu0 0
      %503 = vmatpush2.bf16.msra.mxu0 0
      %504 = vmatprep.subr.bf16.mxu0 0
      %505 = vmatpush2.bf16.msra.mxu0 0
      %506 = vmatprep.subr.bf16.mxu0 0
      %507 = vmatpush2.bf16.msra.mxu0 0
      %508 = vmatprep.subr.bf16.mxu0 0
      %509 = vmatpush2.bf16.msra.mxu0 0
      %510 = vmatprep.subr.bf16.mxu0 0
      %511 = vmatpush2.bf16.msra.mxu0 0
      %512 = vmatprep.mubr.bf16.mxu0 0
      %513 = vmatmul.mubr.bf16.gmra.mxu0 %v429
      %v514 = vpop.f32.mrf.mxu0
      %v515 = vadd.f32 0.0, %v514
      %v516 = vpop.f32.mrf.mxu0
      %v517 = vpop.f32.mrf.mxu0
      %v518 = vadd.f32 0.0, %v517
      %v519 = vpop.f32.mrf.mxu0
      %520 = vmatprep.mubr.bf16.mxu0 0
      %521 = vmatmul.mubr.bf16.gmra.mxu0 %v428
      %v522 = vpop.f32.mrf.mxu0
      %v523 = vadd.f32 0.0, %v522
      %v524 = vpop.f32.mrf.mxu0
      %v525 = vpop.f32.mrf.mxu0
      %v526 = vpop.f32.mrf.mxu0
      %527 = vdwg.mxu0
      %v528 = vadd.f32 %v392, %v515
      %v529 = vadd.f32 %v395, %v518
      %v530 = vadd.f32 %v400, %v523
      %v531 = vld [vmem:[%s138 + $0x8] sm:$0x7]
      %s532 = scalar_lea.vmem %s1, 192
      %v533 = vld [vmem:[%s532] sm:$0xf]
      %v534 = vld [vmem:[%s532 + $0x4] sm:$0xf]
      %v535 = vld [vmem:[%s532 + $0x8] sm:$0xf]
      %v536 = vld [vmem:[%s532 + $0xc] sm:$0xf]
      %v537 = vld [vmem:[%s532 + $0x10] sm:$0xf]
      %v538 = vld [vmem:[%s532 + $0x14] sm:$0xf]
      %v539 = vld [vmem:[%s532 + $0x18] sm:$0xf]
      %v540 = vld [vmem:[%s532 + $0x1c] sm:$0xf]
      %v541 = vld [vmem:[%s532 + $0x20] sm:$0xf]
      %v542 = vld [vmem:[%s532 + $0x24] sm:$0xf]
      %v543 = vld [vmem:[%s532 + $0x28] sm:$0xf]
      %v544 = vld [vmem:[%s532 + $0x2c] sm:$0xf]
      %v545 = vld [vmem:[%s532 + $0x30] sm:$0xf]
      %v546 = vld [vmem:[%s532 + $0x34] sm:$0xf]
      %v547 = vld [vmem:[%s532 + $0x38] sm:$0xf]
      %v548 = vld [vmem:[%s532 + $0x3c] sm:$0xf]
      %v550 = vunpack.c.l.b16 %v531
      %v551 = vpack.c.b16 %v550, %v550
      %vm552 = vsmask.f32 6400
      %v554 = vshrl.u32 %v425, 16
      %v556 = vrot.slane %v554, 1
      %v557 = vshll.u32 %v425, 16
      %v559 = vrot.slane %v557, 2
      %v560 = vor.u32 %v556, %v559
      %v562 = vshrl.u32 %v551, 16
      %v564 = vrot.slane %v562, 1
      %v565 = vshll.u32 %v551, 16
      %v567 = vrot.slane %v565, 2
      %v568 = vor.u32 %v564, %v567
      %v569 = vsel %vm552, %v560, %v568
      %v588 = vunpack.c.l.b16 %v533
      %v589 = vunpack.c.l.b16 %v534
      %v590 = vunpack.c.l.b16 %v535
      %v591 = vunpack.c.l.b16 %v536
      %v592 = vunpack.c.l.b16 %v537
      %v593 = vunpack.c.l.b16 %v538
      %v594 = vunpack.c.l.b16 %v539
      %v595 = vunpack.c.l.b16 %v540
      %v596 = vunpack.c.l.b16 %v541
      %v597 = vunpack.c.l.b16 %v542
      %v598 = vunpack.c.l.b16 %v543
      %v599 = vunpack.c.l.b16 %v544
      %v600 = vunpack.c.l.b16 %v545
      %v601 = vunpack.c.l.b16 %v546
      %v602 = vunpack.c.l.b16 %v547
      %v603 = vunpack.c.l.b16 %v548
      %v604 = vpack.c.b16 %v589, %v588
      %v605 = vpack.c.b16 %v591, %v590
      %v606 = vpack.c.b16 %v593, %v592
      %v607 = vpack.c.b16 %v595, %v594
      %v608 = vpack.c.b16 %v597, %v596
      %v609 = vpack.c.b16 %v599, %v598
      %v610 = vpack.c.b16 %v601, %v600
      %v611 = vpack.c.b16 %v603, %v602
      %620 = vmatprep.subr.bf16.mxu0 0
      %621 = vmatpush1.bf16.msra.mxu0 %v611
      %622 = vmatprep.subr.bf16.mxu0 0
      %623 = vmatpush1.bf16.msra.mxu0 %v610
      %624 = vmatprep.subr.bf16.mxu0 0
      %625 = vmatpush1.bf16.msra.mxu0 %v609
      %626 = vmatprep.subr.bf16.mxu0 0
      %627 = vmatpush1.bf16.msra.mxu0 %v608
      %628 = vmatprep.subr.bf16.mxu0 0
      %629 = vmatpush1.bf16.msra.mxu0 %v607
      %630 = vmatprep.subr.bf16.mxu0 0
      %631 = vmatpush1.bf16.msra.mxu0 %v606
      %632 = vmatprep.subr.bf16.mxu0 0
      %633 = vmatpush1.bf16.msra.mxu0 %v605
      %634 = vmatprep.subr.bf16.mxu0 0
      %635 = vmatpush1.bf16.msra.mxu0 %v604
      %636 = vmatprep.subr.bf16.mxu0 0
      %637 = vmatpush2.bf16.msra.mxu0 0
      %638 = vmatprep.subr.bf16.mxu0 0
      %639 = vmatpush2.bf16.msra.mxu0 0
      %640 = vmatprep.subr.bf16.mxu0 0
      %641 = vmatpush2.bf16.msra.mxu0 0
      %642 = vmatprep.subr.bf16.mxu0 0
      %643 = vmatpush2.bf16.msra.mxu0 0
      %644 = vmatprep.subr.bf16.mxu0 0
      %645 = vmatpush2.bf16.msra.mxu0 0
      %646 = vmatprep.subr.bf16.mxu0 0
      %647 = vmatpush2.bf16.msra.mxu0 0
      %648 = vmatprep.subr.bf16.mxu0 0
      %649 = vmatpush2.bf16.msra.mxu0 0
      %650 = vmatprep.subr.bf16.mxu0 0
      %651 = vmatpush2.bf16.msra.mxu0 0
      %652 = vmatprep.mubr.bf16.mxu0 0
      %653 = vmatmul.mubr.bf16.gmra.mxu0 %v569
      %v654 = vpop.f32.mrf.mxu0
      %v655 = vadd.f32 0.0, %v654
      %v656 = vpop.f32.mrf.mxu0
      %v657 = vpop.f32.mrf.mxu0
      %v658 = vadd.f32 0.0, %v657
      %v659 = vpop.f32.mrf.mxu0
      %660 = vmatprep.mubr.bf16.mxu0 0
      %661 = vmatmul.mubr.bf16.gmra.mxu0 %v568
      %v662 = vpop.f32.mrf.mxu0
      %v663 = vadd.f32 0.0, %v662
      %v664 = vpop.f32.mrf.mxu0
      %v665 = vpop.f32.mrf.mxu0
      %v666 = vpop.f32.mrf.mxu0
      %667 = vdwg.mxu0
      %v668 = vadd.f32 %v528, %v655
      %v669 = vadd.f32 %v529, %v658
      %v670 = vadd.f32 %v530, %v663
      %v671 = vld [vmem:[%s138] sm:$0x8]
      %v672 = vld [vmem:[%s138 + $0x8] sm:$0xf]
      %s673 = scalar_lea.vmem %s1, 256
      %v674 = vld [vmem:[%s673] sm:$0xf]
      %v675 = vld [vmem:[%s673 + $0x4] sm:$0xf]
      %v676 = vld [vmem:[%s673 + $0x8] sm:$0xf]
      %v677 = vld [vmem:[%s673 + $0xc] sm:$0xf]
      %v678 = vld [vmem:[%s673 + $0x10] sm:$0xf]
      %v679 = vld [vmem:[%s673 + $0x14] sm:$0xf]
      %v680 = vld [vmem:[%s673 + $0x18] sm:$0xf]
      %v681 = vld [vmem:[%s673 + $0x1c] sm:$0xf]
      %v682 = vld [vmem:[%s673 + $0x20] sm:$0xf]
      %v683 = vld [vmem:[%s673 + $0x24] sm:$0xf]
      %v684 = vld [vmem:[%s673 + $0x28] sm:$0xf]
      %v685 = vld [vmem:[%s673 + $0x2c] sm:$0xf]
      %v686 = vld [vmem:[%s673 + $0x30] sm:$0xf]
      %v687 = vld [vmem:[%s673 + $0x34] sm:$0xf]
      %v688 = vld [vmem:[%s673 + $0x38] sm:$0xf]
      %v689 = vld [vmem:[%s673 + $0x3c] sm:$0xf]
      %v692 = vunpack.c.l.b16 %v671
      %v693 = vunpack.c.l.b16 %v672
      %v694 = vpack.c.b16 %v186, %v692
      %v695 = vpack.c.b16 %v693, %v693
      %vm696 = vcmask 1044480
      %v697 = vrot.slane %v694, 3
      %v698 = vrot.slane %v695, 3
      %v699 = vsel %vm696, %v697, %v698
      %v718 = vunpack.c.l.b16 %v674
      %v719 = vunpack.c.l.b16 %v675
      %v720 = vunpack.c.l.b16 %v676
      %v721 = vunpack.c.l.b16 %v677
      %v722 = vunpack.c.l.b16 %v678
      %v723 = vunpack.c.l.b16 %v679
      %v724 = vunpack.c.l.b16 %v680
      %v725 = vunpack.c.l.b16 %v681
      %v726 = vunpack.c.l.b16 %v682
      %v727 = vunpack.c.l.b16 %v683
      %v728 = vunpack.c.l.b16 %v684
      %v729 = vunpack.c.l.b16 %v685
      %v730 = vunpack.c.l.b16 %v686
      %v731 = vunpack.c.l.b16 %v687
      %v732 = vunpack.c.l.b16 %v688
      %v733 = vunpack.c.l.b16 %v689
      %v734 = vpack.c.b16 %v719, %v718
      %v735 = vpack.c.b16 %v721, %v720
      %v736 = vpack.c.b16 %v723, %v722
      %v737 = vpack.c.b16 %v725, %v724
      %v738 = vpack.c.b16 %v727, %v726
      %v739 = vpack.c.b16 %v729, %v728
      %v740 = vpack.c.b16 %v731, %v730
      %v741 = vpack.c.b16 %v733, %v732
      %750 = vmatprep.subr.bf16.mxu0 0
      %751 = vmatpush1.bf16.msra.mxu0 %v741
      %752 = vmatprep.subr.bf16.mxu0 0
      %753 = vmatpush1.bf16.msra.mxu0 %v740
      %754 = vmatprep.subr.bf16.mxu0 0
      %755 = vmatpush1.bf16.msra.mxu0 %v739
      %756 = vmatprep.subr.bf16.mxu0 0
      %757 = vmatpush1.bf16.msra.mxu0 %v738
      %758 = vmatprep.subr.bf16.mxu0 0
      %759 = vmatpush1.bf16.msra.mxu0 %v737
      %760 = vmatprep.subr.bf16.mxu0 0
      %761 = vmatpush1.bf16.msra.mxu0 %v736
      %762 = vmatprep.subr.bf16.mxu0 0
      %763 = vmatpush1.bf16.msra.mxu0 %v735
      %764 = vmatprep.subr.bf16.mxu0 0
      %765 = vmatpush1.bf16.msra.mxu0 %v734
      %766 = vmatprep.subr.bf16.mxu0 0
      %767 = vmatpush2.bf16.msra.mxu0 0
      %768 = vmatprep.subr.bf16.mxu0 0
      %769 = vmatpush2.bf16.msra.mxu0 0
      %770 = vmatprep.subr.bf16.mxu0 0
      %771 = vmatpush2.bf16.msra.mxu0 0
      %772 = vmatprep.subr.bf16.mxu0 0
      %773 = vmatpush2.bf16.msra.mxu0 0
      %774 = vmatprep.subr.bf16.mxu0 0
      %775 = vmatpush2.bf16.msra.mxu0 0
      %776 = vmatprep.subr.bf16.mxu0 0
      %777 = vmatpush2.bf16.msra.mxu0 0
      %778 = vmatprep.subr.bf16.mxu0 0
      %779 = vmatpush2.bf16.msra.mxu0 0
      %780 = vmatprep.subr.bf16.mxu0 0
      %781 = vmatpush2.bf16.msra.mxu0 0
      %782 = vmatprep.mubr.bf16.mxu0 0
      %783 = vmatmul.mubr.bf16.gmra.mxu0 %v699
      %v784 = vpop.f32.mrf.mxu0
      %v785 = vadd.f32 0.0, %v784
      %v786 = vpop.f32.mrf.mxu0
      %v787 = vpop.f32.mrf.mxu0
      %v788 = vadd.f32 0.0, %v787
      %v789 = vpop.f32.mrf.mxu0
      %790 = vmatprep.mubr.bf16.mxu0 0
      %791 = vmatmul.mubr.bf16.gmra.mxu0 %v698
      %v792 = vpop.f32.mrf.mxu0
      %v793 = vadd.f32 0.0, %v792
      %v794 = vpop.f32.mrf.mxu0
      %v795 = vpop.f32.mrf.mxu0
      %v796 = vpop.f32.mrf.mxu0
      %797 = vdwg.mxu0
      %v798 = vadd.f32 %v668, %v785
      %v799 = vadd.f32 %v669, %v788
      %v800 = vadd.f32 %v670, %v793
      %v801 = vld [vmem:[%s138] sm:$0x8]
      %v802 = vld [vmem:[%s138 + $0x4] sm:$0xf]
      %v803 = vld [vmem:[%s138 + $0x8] sm:$0xf]
      %v804 = vld [vmem:[%s138 + $0xc] sm:$0x1]
      %s805 = scalar_lea.vmem %s1, 320
      %v806 = vld [vmem:[%s805] sm:$0xf]
      %v807 = vld [vmem:[%s805 + $0x4] sm:$0xf]
      %v808 = vld [vmem:[%s805 + $0x8] sm:$0xf]
      %v809 = vld [vmem:[%s805 + $0xc] sm:$0xf]
      %v810 = vld [vmem:[%s805 + $0x10] sm:$0xf]
      %v811 = vld [vmem:[%s805 + $0x14] sm:$0xf]
      %v812 = vld [vmem:[%s805 + $0x18] sm:$0xf]
      %v813 = vld [vmem:[%s805 + $0x1c] sm:$0xf]
      %v814 = vld [vmem:[%s805 + $0x20] sm:$0xf]
      %v815 = vld [vmem:[%s805 + $0x24] sm:$0xf]
      %v816 = vld [vmem:[%s805 + $0x28] sm:$0xf]
      %v817 = vld [vmem:[%s805 + $0x2c] sm:$0xf]
      %v818 = vld [vmem:[%s805 + $0x30] sm:$0xf]
      %v819 = vld [vmem:[%s805 + $0x34] sm:$0xf]
      %v820 = vld [vmem:[%s805 + $0x38] sm:$0xf]
      %v821 = vld [vmem:[%s805 + $0x3c] sm:$0xf]
      %v826 = vunpack.c.l.b16 %v801
      %v827 = vunpack.c.l.b16 %v802
      %v828 = vunpack.c.l.b16 %v803
      %v829 = vunpack.c.l.b16 %v804
      %v830 = vpack.c.b16 %v827, %v826
      %v831 = vpack.c.b16 %v829, %v828
      %vm832 = vsmask.f32 4352
      %v834 = vshrl.u32 %v830, 16
      %v836 = vrot.slane %v834, 3
      %v837 = vshll.u32 %v830, 16
      %v839 = vrot.slane %v837, 4
      %v840 = vor.u32 %v836, %v839
      %v842 = vshrl.u32 %v831, 16
      %v844 = vrot.slane %v842, 3
      %v845 = vshll.u32 %v831, 16
      %v847 = vrot.slane %v845, 4
      %v848 = vor.u32 %v844, %v847
      %v849 = vsel %vm832, %v840, %v848
      %v868 = vunpack.c.l.b16 %v806
      %v869 = vunpack.c.l.b16 %v807
      %v870 = vunpack.c.l.b16 %v808
      %v871 = vunpack.c.l.b16 %v809
      %v872 = vunpack.c.l.b16 %v810
      %v873 = vunpack.c.l.b16 %v811
      %v874 = vunpack.c.l.b16 %v812
      %v875 = vunpack.c.l.b16 %v813
      %v876 = vunpack.c.l.b16 %v814
      %v877 = vunpack.c.l.b16 %v815
      %v878 = vunpack.c.l.b16 %v816
      %v879 = vunpack.c.l.b16 %v817
      %v880 = vunpack.c.l.b16 %v818
      %v881 = vunpack.c.l.b16 %v819
      %v882 = vunpack.c.l.b16 %v820
      %v883 = vunpack.c.l.b16 %v821
      %v884 = vpack.c.b16 %v869, %v868
      %v885 = vpack.c.b16 %v871, %v870
      %v886 = vpack.c.b16 %v873, %v872
      %v887 = vpack.c.b16 %v875, %v874
      %v888 = vpack.c.b16 %v877, %v876
      %v889 = vpack.c.b16 %v879, %v878
      %v890 = vpack.c.b16 %v881, %v880
      %v891 = vpack.c.b16 %v883, %v882
      %900 = vmatprep.subr.bf16.mxu0 0
      %901 = vmatpush1.bf16.msra.mxu0 %v891
      %902 = vmatprep.subr.bf16.mxu0 0
      %903 = vmatpush1.bf16.msra.mxu0 %v890
      %904 = vmatprep.subr.bf16.mxu0 0
      %905 = vmatpush1.bf16.msra.mxu0 %v889
      %906 = vmatprep.subr.bf16.mxu0 0
      %907 = vmatpush1.bf16.msra.mxu0 %v888
      %908 = vmatprep.subr.bf16.mxu0 0
      %909 = vmatpush1.bf16.msra.mxu0 %v887
      %910 = vmatprep.subr.bf16.mxu0 0
      %911 = vmatpush1.bf16.msra.mxu0 %v886
      %912 = vmatprep.subr.bf16.mxu0 0
      %913 = vmatpush1.bf16.msra.mxu0 %v885
      %914 = vmatprep.subr.bf16.mxu0 0
      %915 = vmatpush1.bf16.msra.mxu0 %v884
      %916 = vmatprep.subr.bf16.mxu0 0
      %917 = vmatpush2.bf16.msra.mxu0 0
      %918 = vmatprep.subr.bf16.mxu0 0
      %919 = vmatpush2.bf16.msra.mxu0 0
      %920 = vmatprep.subr.bf16.mxu0 0
      %921 = vmatpush2.bf16.msra.mxu0 0
      %922 = vmatprep.subr.bf16.mxu0 0
      %923 = vmatpush2.bf16.msra.mxu0 0
      %924 = vmatprep.subr.bf16.mxu0 0
      %925 = vmatpush2.bf16.msra.mxu0 0
      %926 = vmatprep.subr.bf16.mxu0 0
      %927 = vmatpush2.bf16.msra.mxu0 0
      %928 = vmatprep.subr.bf16.mxu0 0
      %929 = vmatpush2.bf16.msra.mxu0 0
      %930 = vmatprep.subr.bf16.mxu0 0
      %931 = vmatpush2.bf16.msra.mxu0 0
      %932 = vmatprep.mubr.bf16.mxu0 0
      %933 = vmatmul.mubr.bf16.gmra.mxu0 %v849
      %v934 = vpop.f32.mrf.mxu0
      %v935 = vadd.f32 0.0, %v934
      %v936 = vpop.f32.mrf.mxu0
      %v937 = vpop.f32.mrf.mxu0
      %v938 = vadd.f32 0.0, %v937
      %v939 = vpop.f32.mrf.mxu0
      %940 = vmatprep.mubr.bf16.mxu0 0
      %941 = vmatmul.mubr.bf16.gmra.mxu0 %v848
      %v942 = vpop.f32.mrf.mxu0
      %v943 = vadd.f32 0.0, %v942
      %v944 = vpop.f32.mrf.mxu0
      %v945 = vpop.f32.mrf.mxu0
      %v946 = vpop.f32.mrf.mxu0
      %947 = vdwg.mxu0
      %v948 = vadd.f32 %v798, %v935
      %v949 = vadd.f32 %v799, %v938
      %v950 = vadd.f32 %v800, %v943
      %s951 = scalar_lea.vmem %s1, 384
      %v952 = vld [vmem:[%s951] sm:$0xf]
      %v953 = vld [vmem:[%s951 + $0x4] sm:$0xf]
      %v954 = vld [vmem:[%s951 + $0x8] sm:$0xf]
      %v955 = vld [vmem:[%s951 + $0xc] sm:$0xf]
      %v956 = vld [vmem:[%s951 + $0x10] sm:$0xf]
      %v957 = vld [vmem:[%s951 + $0x14] sm:$0xf]
      %v958 = vld [vmem:[%s951 + $0x18] sm:$0xf]
      %v959 = vld [vmem:[%s951 + $0x1c] sm:$0xf]
      %v960 = vld [vmem:[%s951 + $0x20] sm:$0xf]
      %v961 = vld [vmem:[%s951 + $0x24] sm:$0xf]
      %v962 = vld [vmem:[%s951 + $0x28] sm:$0xf]
      %v963 = vld [vmem:[%s951 + $0x2c] sm:$0xf]
      %v964 = vld [vmem:[%s951 + $0x30] sm:$0xf]
      %v965 = vld [vmem:[%s951 + $0x34] sm:$0xf]
      %v966 = vld [vmem:[%s951 + $0x38] sm:$0xf]
      %v967 = vld [vmem:[%s951 + $0x3c] sm:$0xf]
      %v968 = vpack.c.b16 %v828, %v827
      %v969 = vpack.c.b16 %v829, %v829
      %v988 = vunpack.c.l.b16 %v952
      %v989 = vunpack.c.l.b16 %v953
      %v990 = vunpack.c.l.b16 %v954
      %v991 = vunpack.c.l.b16 %v955
      %v992 = vunpack.c.l.b16 %v956
      %v993 = vunpack.c.l.b16 %v957
      %v994 = vunpack.c.l.b16 %v958
      %v995 = vunpack.c.l.b16 %v959
      %v996 = vunpack.c.l.b16 %v960
      %v997 = vunpack.c.l.b16 %v961
      %v998 = vunpack.c.l.b16 %v962
      %v999 = vunpack.c.l.b16 %v963
      %v1000 = vunpack.c.l.b16 %v964
      %v1001 = vunpack.c.l.b16 %v965
      %v1002 = vunpack.c.l.b16 %v966
      %v1003 = vunpack.c.l.b16 %v967
      %v1004 = vpack.c.b16 %v989, %v988
      %v1005 = vpack.c.b16 %v991, %v990
      %v1006 = vpack.c.b16 %v993, %v992
      %v1007 = vpack.c.b16 %v995, %v994
      %v1008 = vpack.c.b16 %v997, %v996
      %v1009 = vpack.c.b16 %v999, %v998
      %v1010 = vpack.c.b16 %v1001, %v1000
      %v1011 = vpack.c.b16 %v1003, %v1002
      %1020 = vmatprep.subr.bf16.mxu0 0
      %1021 = vmatpush1.bf16.msra.mxu0 %v1011
      %1022 = vmatprep.subr.bf16.mxu0 0
      %1023 = vmatpush1.bf16.msra.mxu0 %v1010
      %1024 = vmatprep.subr.bf16.mxu0 0
      %1025 = vmatpush1.bf16.msra.mxu0 %v1009
      %1026 = vmatprep.subr.bf16.mxu0 0
      %1027 = vmatpush1.bf16.msra.mxu0 %v1008
      %1028 = vmatprep.subr.bf16.mxu0 0
      %1029 = vmatpush1.bf16.msra.mxu0 %v1007
      %1030 = vmatprep.subr.bf16.mxu0 0
      %1031 = vmatpush1.bf16.msra.mxu0 %v1006
      %1032 = vmatprep.subr.bf16.mxu0 0
      %1033 = vmatpush1.bf16.msra.mxu0 %v1005
      %1034 = vmatprep.subr.bf16.mxu0 0
      %1035 = vmatpush1.bf16.msra.mxu0 %v1004
      %1036 = vmatprep.subr.bf16.mxu0 0
      %1037 = vmatpush2.bf16.msra.mxu0 0
      %1038 = vmatprep.subr.bf16.mxu0 0
      %1039 = vmatpush2.bf16.msra.mxu0 0
      %1040 = vmatprep.subr.bf16.mxu0 0
      %1041 = vmatpush2.bf16.msra.mxu0 0
      %1042 = vmatprep.subr.bf16.mxu0 0
      %1043 = vmatpush2.bf16.msra.mxu0 0
      %1044 = vmatprep.subr.bf16.mxu0 0
      %1045 = vmatpush2.bf16.msra.mxu0 0
      %1046 = vmatprep.subr.bf16.mxu0 0
      %1047 = vmatpush2.bf16.msra.mxu0 0
      %1048 = vmatprep.subr.bf16.mxu0 0
      %1049 = vmatpush2.bf16.msra.mxu0 0
      %1050 = vmatprep.subr.bf16.mxu0 0
      %1051 = vmatpush2.bf16.msra.mxu0 0
      %1052 = vmatprep.mubr.bf16.mxu0 0
      %1053 = vmatmul.mubr.bf16.gmra.mxu0 %v968
      %v1054 = vpop.f32.mrf.mxu0
      %v1055 = vadd.f32 0.0, %v1054
      %v1056 = vpop.f32.mrf.mxu0
      %v1057 = vpop.f32.mrf.mxu0
      %v1058 = vadd.f32 0.0, %v1057
      %v1059 = vpop.f32.mrf.mxu0
      %1060 = vmatprep.mubr.bf16.mxu0 0
      %1061 = vmatmul.mubr.bf16.gmra.mxu0 %v969
      %v1062 = vpop.f32.mrf.mxu0
      %v1063 = vadd.f32 0.0, %v1062
      %v1064 = vpop.f32.mrf.mxu0
      %v1065 = vpop.f32.mrf.mxu0
      %v1066 = vpop.f32.mrf.mxu0
      %1067 = vdwg.mxu0
      %v1068 = vadd.f32 %v948, %v1055
      %v1069 = vadd.f32 %v949, %v1058
      %v1070 = vadd.f32 %v950, %v1063
      %v1071 = vld [vmem:[%s138 + $0xc] sm:$0x3]
      %s1072 = scalar_lea.vmem %s1, 448
      %v1073 = vld [vmem:[%s1072] sm:$0xf]
      %v1074 = vld [vmem:[%s1072 + $0x4] sm:$0xf]
      %v1075 = vld [vmem:[%s1072 + $0x8] sm:$0xf]
      %v1076 = vld [vmem:[%s1072 + $0xc] sm:$0xf]
      %v1077 = vld [vmem:[%s1072 + $0x10] sm:$0xf]
      %v1078 = vld [vmem:[%s1072 + $0x14] sm:$0xf]
      %v1079 = vld [vmem:[%s1072 + $0x18] sm:$0xf]
      %v1080 = vld [vmem:[%s1072 + $0x1c] sm:$0xf]
      %v1081 = vld [vmem:[%s1072 + $0x20] sm:$0xf]
      %v1082 = vld [vmem:[%s1072 + $0x24] sm:$0xf]
      %v1083 = vld [vmem:[%s1072 + $0x28] sm:$0xf]
      %v1084 = vld [vmem:[%s1072 + $0x2c] sm:$0xf]
      %v1085 = vld [vmem:[%s1072 + $0x30] sm:$0xf]
      %v1086 = vld [vmem:[%s1072 + $0x34] sm:$0xf]
      %v1087 = vld [vmem:[%s1072 + $0x38] sm:$0xf]
      %v1088 = vld [vmem:[%s1072 + $0x3c] sm:$0xf]
      %v1090 = vunpack.c.l.b16 %v1071
      %v1091 = vpack.c.b16 %v1090, %v1090
      %v1093 = vshrl.u32 %v968, 16
      %v1095 = vshll.u32 %v968, 16
      %v1097 = vrot.slane %v1095, 1
      %v1098 = vor.u32 %v1093, %v1097
      %v1100 = vshll.u32 %v1091, 16
      %v1102 = vrot.slane %v1100, 1
      %v1103 = vsel %vm190, %v1098, %v1102
      %v1104 = vshrl.u32 %v1091, 16
      %v1106 = vor.u32 %v1104, %v1102
      %v1125 = vunpack.c.l.b16 %v1073
      %v1126 = vunpack.c.l.b16 %v1074
      %v1127 = vunpack.c.l.b16 %v1075
      %v1128 = vunpack.c.l.b16 %v1076
      %v1129 = vunpack.c.l.b16 %v1077
      %v1130 = vunpack.c.l.b16 %v1078
      %v1131 = vunpack.c.l.b16 %v1079
      %v1132 = vunpack.c.l.b16 %v1080
      %v1133 = vunpack.c.l.b16 %v1081
      %v1134 = vunpack.c.l.b16 %v1082
      %v1135 = vunpack.c.l.b16 %v1083
      %v1136 = vunpack.c.l.b16 %v1084
      %v1137 = vunpack.c.l.b16 %v1085
      %v1138 = vunpack.c.l.b16 %v1086
      %v1139 = vunpack.c.l.b16 %v1087
      %v1140 = vunpack.c.l.b16 %v1088
      %v1141 = vpack.c.b16 %v1126, %v1125
      %v1142 = vpack.c.b16 %v1128, %v1127
      %v1143 = vpack.c.b16 %v1130, %v1129
      %v1144 = vpack.c.b16 %v1132, %v1131
      %v1145 = vpack.c.b16 %v1134, %v1133
      %v1146 = vpack.c.b16 %v1136, %v1135
      %v1147 = vpack.c.b16 %v1138, %v1137
      %v1148 = vpack.c.b16 %v1140, %v1139
      %1157 = vmatprep.subr.bf16.mxu0 0
      %1158 = vmatpush1.bf16.msra.mxu0 %v1148
      %1159 = vmatprep.subr.bf16.mxu0 0
      %1160 = vmatpush1.bf16.msra.mxu0 %v1147
      %1161 = vmatprep.subr.bf16.mxu0 0
      %1162 = vmatpush1.bf16.msra.mxu0 %v1146
      %1163 = vmatprep.subr.bf16.mxu0 0
      %1164 = vmatpush1.bf16.msra.mxu0 %v1145
      %1165 = vmatprep.subr.bf16.mxu0 0
      %1166 = vmatpush1.bf16.msra.mxu0 %v1144
      %1167 = vmatprep.subr.bf16.mxu0 0
      %1168 = vmatpush1.bf16.msra.mxu0 %v1143
      %1169 = vmatprep.subr.bf16.mxu0 0
      %1170 = vmatpush1.bf16.msra.mxu0 %v1142
      %1171 = vmatprep.subr.bf16.mxu0 0
      %1172 = vmatpush1.bf16.msra.mxu0 %v1141
      %1173 = vmatprep.subr.bf16.mxu0 0
      %1174 = vmatpush2.bf16.msra.mxu0 0
      %1175 = vmatprep.subr.bf16.mxu0 0
      %1176 = vmatpush2.bf16.msra.mxu0 0
      %1177 = vmatprep.subr.bf16.mxu0 0
      %1178 = vmatpush2.bf16.msra.mxu0 0
      %1179 = vmatprep.subr.bf16.mxu0 0
      %1180 = vmatpush2.bf16.msra.mxu0 0
      %1181 = vmatprep.subr.bf16.mxu0 0
      %1182 = vmatpush2.bf16.msra.mxu0 0
      %1183 = vmatprep.subr.bf16.mxu0 0
      %1184 = vmatpush2.bf16.msra.mxu0 0
      %1185 = vmatprep.subr.bf16.mxu0 0
      %1186 = vmatpush2.bf16.msra.mxu0 0
      %1187 = vmatprep.subr.bf16.mxu0 0
      %1188 = vmatpush2.bf16.msra.mxu0 0
      %1189 = vmatprep.mubr.bf16.mxu0 0
      %1190 = vmatmul.mubr.bf16.gmra.mxu0 %v1103
      %v1191 = vpop.f32.mrf.mxu0
      %v1192 = vadd.f32 0.0, %v1191
      %v1193 = vpop.f32.mrf.mxu0
      %v1194 = vpop.f32.mrf.mxu0
      %v1195 = vadd.f32 0.0, %v1194
      %v1196 = vpop.f32.mrf.mxu0
      %1197 = vmatprep.mubr.bf16.mxu0 0
      %1198 = vmatmul.mubr.bf16.gmra.mxu0 %v1106
      %v1199 = vpop.f32.mrf.mxu0
      %v1200 = vadd.f32 0.0, %v1199
      %v1201 = vpop.f32.mrf.mxu0
      %v1202 = vpop.f32.mrf.mxu0
      %v1203 = vpop.f32.mrf.mxu0
      %1204 = vdwg.mxu0
      %v1205 = vadd.f32 %v1068, %v1192
      %v1206 = vadd.f32 %v1069, %v1195
      %v1207 = vadd.f32 %v1070, %v1200
      %v1208 = vld [vmem:[%s138 + $0x4] sm:$0xc]
      %v1209 = vld [vmem:[%s138 + $0xc] sm:$0x7]
      %s1210 = scalar_lea.vmem %s1, 512
      %v1211 = vld [vmem:[%s1210] sm:$0xf]
      %v1212 = vld [vmem:[%s1210 + $0x4] sm:$0xf]
      %v1213 = vld [vmem:[%s1210 + $0x8] sm:$0xf]
      %v1214 = vld [vmem:[%s1210 + $0xc] sm:$0xf]
      %v1215 = vld [vmem:[%s1210 + $0x10] sm:$0xf]
      %v1216 = vld [vmem:[%s1210 + $0x14] sm:$0xf]
      %v1217 = vld [vmem:[%s1210 + $0x18] sm:$0xf]
      %v1218 = vld [vmem:[%s1210 + $0x1c] sm:$0xf]
      %v1219 = vld [vmem:[%s1210 + $0x20] sm:$0xf]
      %v1220 = vld [vmem:[%s1210 + $0x24] sm:$0xf]
      %v1221 = vld [vmem:[%s1210 + $0x28] sm:$0xf]
      %v1222 = vld [vmem:[%s1210 + $0x2c] sm:$0xf]
      %v1223 = vld [vmem:[%s1210 + $0x30] sm:$0xf]
      %v1224 = vld [vmem:[%s1210 + $0x34] sm:$0xf]
      %v1225 = vld [vmem:[%s1210 + $0x38] sm:$0xf]
      %v1226 = vld [vmem:[%s1210 + $0x3c] sm:$0xf]
      %v1229 = vunpack.c.l.b16 %v1208
      %v1230 = vunpack.c.l.b16 %v1209
      %v1231 = vpack.c.b16 %v828, %v1229
      %v1232 = vpack.c.b16 %v1230, %v1230
      %vm1233 = vcmask 1045504
      %v1234 = vrot.slane %v1231, 2
      %v1235 = vrot.slane %v1232, 2
      %v1236 = vsel %vm1233, %v1234, %v1235
      %v1255 = vunpack.c.l.b16 %v1211
      %v1256 = vunpack.c.l.b16 %v1212
      %v1257 = vunpack.c.l.b16 %v1213
      %v1258 = vunpack.c.l.b16 %v1214
      %v1259 = vunpack.c.l.b16 %v1215
      %v1260 = vunpack.c.l.b16 %v1216
      %v1261 = vunpack.c.l.b16 %v1217
      %v1262 = vunpack.c.l.b16 %v1218
      %v1263 = vunpack.c.l.b16 %v1219
      %v1264 = vunpack.c.l.b16 %v1220
      %v1265 = vunpack.c.l.b16 %v1221
      %v1266 = vunpack.c.l.b16 %v1222
      %v1267 = vunpack.c.l.b16 %v1223
      %v1268 = vunpack.c.l.b16 %v1224
      %v1269 = vunpack.c.l.b16 %v1225
      %v1270 = vunpack.c.l.b16 %v1226
      %v1271 = vpack.c.b16 %v1256, %v1255
      %v1272 = vpack.c.b16 %v1258, %v1257
      %v1273 = vpack.c.b16 %v1260, %v1259
      %v1274 = vpack.c.b16 %v1262, %v1261
      %v1275 = vpack.c.b16 %v1264, %v1263
      %v1276 = vpack.c.b16 %v1266, %v1265
      %v1277 = vpack.c.b16 %v1268, %v1267
      %v1278 = vpack.c.b16 %v1270, %v1269
      %1287 = vmatprep.subr.bf16.mxu0 0
      %1288 = vmatpush1.bf16.msra.mxu0 %v1278
      %1289 = vmatprep.subr.bf16.mxu0 0
      %1290 = vmatpush1.bf16.msra.mxu0 %v1277
      %1291 = vmatprep.subr.bf16.mxu0 0
      %1292 = vmatpush1.bf16.msra.mxu0 %v1276
      %1293 = vmatprep.subr.bf16.mxu0 0
      %1294 = vmatpush1.bf16.msra.mxu0 %v1275
      %1295 = vmatprep.subr.bf16.mxu0 0
      %1296 = vmatpush1.bf16.msra.mxu0 %v1274
      %1297 = vmatprep.subr.bf16.mxu0 0
      %1298 = vmatpush1.bf16.msra.mxu0 %v1273
      %1299 = vmatprep.subr.bf16.mxu0 0
      %1300 = vmatpush1.bf16.msra.mxu0 %v1272
      %1301 = vmatprep.subr.bf16.mxu0 0
      %1302 = vmatpush1.bf16.msra.mxu0 %v1271
      %1303 = vmatprep.subr.bf16.mxu0 0
      %1304 = vmatpush2.bf16.msra.mxu0 0
      %1305 = vmatprep.subr.bf16.mxu0 0
      %1306 = vmatpush2.bf16.msra.mxu0 0
      %1307 = vmatprep.subr.bf16.mxu0 0
      %1308 = vmatpush2.bf16.msra.mxu0 0
      %1309 = vmatprep.subr.bf16.mxu0 0
      %1310 = vmatpush2.bf16.msra.mxu0 0
      %1311 = vmatprep.subr.bf16.mxu0 0
      %1312 = vmatpush2.bf16.msra.mxu0 0
      %1313 = vmatprep.subr.bf16.mxu0 0
      %1314 = vmatpush2.bf16.msra.mxu0 0
      %1315 = vmatprep.subr.bf16.mxu0 0
      %1316 = vmatpush2.bf16.msra.mxu0 0
      %1317 = vmatprep.subr.bf16.mxu0 0
      %1318 = vmatpush2.bf16.msra.mxu0 0
      %1319 = vmatprep.mubr.bf16.mxu0 0
      %1320 = vmatmul.mubr.bf16.gmra.mxu0 %v1236
      %v1321 = vpop.f32.mrf.mxu0
      %v1322 = vadd.f32 0.0, %v1321
      %v1323 = vpop.f32.mrf.mxu0
      %v1324 = vpop.f32.mrf.mxu0
      %v1325 = vadd.f32 0.0, %v1324
      %v1326 = vpop.f32.mrf.mxu0
      %1327 = vmatprep.mubr.bf16.mxu0 0
      %1328 = vmatmul.mubr.bf16.gmra.mxu0 %v1235
      %v1329 = vpop.f32.mrf.mxu0
      %v1330 = vadd.f32 0.0, %v1329
      %v1331 = vpop.f32.mrf.mxu0
      %v1332 = vpop.f32.mrf.mxu0
      %v1333 = vpop.f32.mrf.mxu0
      %1334 = vdwg.mxu0
      %v1335 = vadd.f32 %v1205, %v1322
      %v1336 = vadd.f32 %v1206, %v1325
      %v1337 = vadd.f32 %v1207, %v1330
      %v1338 = vld [vmem:[%s138 + $0xc] sm:$0xf]
      %s1339 = scalar_lea.vmem %s1, 576
      %v1340 = vld [vmem:[%s1339] sm:$0xf]
      %v1341 = vld [vmem:[%s1339 + $0x4] sm:$0xf]
      %v1342 = vld [vmem:[%s1339 + $0x8] sm:$0xf]
      %v1343 = vld [vmem:[%s1339 + $0xc] sm:$0xf]
      %v1344 = vld [vmem:[%s1339 + $0x10] sm:$0xf]
      %v1345 = vld [vmem:[%s1339 + $0x14] sm:$0xf]
      %v1346 = vld [vmem:[%s1339 + $0x18] sm:$0xf]
      %v1347 = vld [vmem:[%s1339 + $0x1c] sm:$0xf]
      %v1348 = vld [vmem:[%s1339 + $0x20] sm:$0xf]
      %v1349 = vld [vmem:[%s1339 + $0x24] sm:$0xf]
      %v1350 = vld [vmem:[%s1339 + $0x28] sm:$0xf]
      %v1351 = vld [vmem:[%s1339 + $0x2c] sm:$0xf]
      %v1352 = vld [vmem:[%s1339 + $0x30] sm:$0xf]
      %v1353 = vld [vmem:[%s1339 + $0x34] sm:$0xf]
      %v1354 = vld [vmem:[%s1339 + $0x38] sm:$0xf]
      %v1355 = vld [vmem:[%s1339 + $0x3c] sm:$0xf]
      %v1357 = vunpack.c.l.b16 %v1338
      %v1358 = vpack.c.b16 %v1357, %v1357
      %vm1359 = vsmask.f32 5376
      %v1361 = vshrl.u32 %v1231, 16
      %v1363 = vrot.slane %v1361, 2
      %v1364 = vshll.u32 %v1231, 16
      %v1366 = vrot.slane %v1364, 3
      %v1367 = vor.u32 %v1363, %v1366
      %v1369 = vshrl.u32 %v1358, 16
      %v1371 = vrot.slane %v1369, 2
      %v1372 = vshll.u32 %v1358, 16
      %v1374 = vrot.slane %v1372, 3
      %v1375 = vor.u32 %v1371, %v1374
      %v1376 = vsel %vm1359, %v1367, %v1375
      %v1395 = vunpack.c.l.b16 %v1340
      %v1396 = vunpack.c.l.b16 %v1341
      %v1397 = vunpack.c.l.b16 %v1342
      %v1398 = vunpack.c.l.b16 %v1343
      %v1399 = vunpack.c.l.b16 %v1344
      %v1400 = vunpack.c.l.b16 %v1345
      %v1401 = vunpack.c.l.b16 %v1346
      %v1402 = vunpack.c.l.b16 %v1347
      %v1403 = vunpack.c.l.b16 %v1348
      %v1404 = vunpack.c.l.b16 %v1349
      %v1405 = vunpack.c.l.b16 %v1350
      %v1406 = vunpack.c.l.b16 %v1351
      %v1407 = vunpack.c.l.b16 %v1352
      %v1408 = vunpack.c.l.b16 %v1353
      %v1409 = vunpack.c.l.b16 %v1354
      %v1410 = vunpack.c.l.b16 %v1355
      %v1411 = vpack.c.b16 %v1396, %v1395
      %v1412 = vpack.c.b16 %v1398, %v1397
      %v1413 = vpack.c.b16 %v1400, %v1399
      %v1414 = vpack.c.b16 %v1402, %v1401
      %v1415 = vpack.c.b16 %v1404, %v1403
      %v1416 = vpack.c.b16 %v1406, %v1405
      %v1417 = vpack.c.b16 %v1408, %v1407
      %v1418 = vpack.c.b16 %v1410, %v1409
      %1427 = vmatprep.subr.bf16.mxu0 0
      %1428 = vmatpush1.bf16.msra.mxu0 %v1418
      %1429 = vmatprep.subr.bf16.mxu0 0
      %1430 = vmatpush1.bf16.msra.mxu0 %v1417
      %1431 = vmatprep.subr.bf16.mxu0 0
      %1432 = vmatpush1.bf16.msra.mxu0 %v1416
      %1433 = vmatprep.subr.bf16.mxu0 0
      %1434 = vmatpush1.bf16.msra.mxu0 %v1415
      %1435 = vmatprep.subr.bf16.mxu0 0
      %1436 = vmatpush1.bf16.msra.mxu0 %v1414
      %1437 = vmatprep.subr.bf16.mxu0 0
      %1438 = vmatpush1.bf16.msra.mxu0 %v1413
      %1439 = vmatprep.subr.bf16.mxu0 0
      %1440 = vmatpush1.bf16.msra.mxu0 %v1412
      %1441 = vmatprep.subr.bf16.mxu0 0
      %1442 = vmatpush1.bf16.msra.mxu0 %v1411
      %1443 = vmatprep.subr.bf16.mxu0 0
      %1444 = vmatpush2.bf16.msra.mxu0 0
      %1445 = vmatprep.subr.bf16.mxu0 0
      %1446 = vmatpush2.bf16.msra.mxu0 0
      %1447 = vmatprep.subr.bf16.mxu0 0
      %1448 = vmatpush2.bf16.msra.mxu0 0
      %1449 = vmatprep.subr.bf16.mxu0 0
      %1450 = vmatpush2.bf16.msra.mxu0 0
      %1451 = vmatprep.subr.bf16.mxu0 0
      %1452 = vmatpush2.bf16.msra.mxu0 0
      %1453 = vmatprep.subr.bf16.mxu0 0
      %1454 = vmatpush2.bf16.msra.mxu0 0
      %1455 = vmatprep.subr.bf16.mxu0 0
      %1456 = vmatpush2.bf16.msra.mxu0 0
      %1457 = vmatprep.subr.bf16.mxu0 0
      %1458 = vmatpush2.bf16.msra.mxu0 0
      %1459 = vmatprep.mubr.bf16.mxu0 0
      %1460 = vmatmul.mubr.bf16.gmra.mxu0 %v1376
      %v1461 = vpop.f32.mrf.mxu0
      %v1462 = vadd.f32 0.0, %v1461
      %v1463 = vpop.f32.mrf.mxu0
      %v1464 = vpop.f32.mrf.mxu0
      %v1465 = vadd.f32 0.0, %v1464
      %v1466 = vpop.f32.mrf.mxu0
      %1467 = vmatprep.mubr.bf16.mxu0 0
      %1468 = vmatmul.mubr.bf16.gmra.mxu0 %v1375
      %v1469 = vpop.f32.mrf.mxu0
      %v1470 = vadd.f32 0.0, %v1469
      %v1471 = vpop.f32.mrf.mxu0
      %v1472 = vpop.f32.mrf.mxu0
      %v1473 = vpop.f32.mrf.mxu0
      %1474 = vdwg.mxu0
      %v1475 = vadd.f32 %v1335, %v1462
      %v1476 = vadd.f32 %v1336, %v1465
      %v1477 = vadd.f32 %v1337, %v1470
      %v1478 = vld [vmem:[%s138 + $0x4] sm:$0x8]
      %s1479 = scalar_lea.vmem %s1, 640
      %v1480 = vld [vmem:[%s1479] sm:$0xf]
      %v1481 = vld [vmem:[%s1479 + $0x4] sm:$0xf]
      %v1482 = vld [vmem:[%s1479 + $0x8] sm:$0xf]
      %v1483 = vld [vmem:[%s1479 + $0xc] sm:$0xf]
      %v1484 = vld [vmem:[%s1479 + $0x10] sm:$0xf]
      %v1485 = vld [vmem:[%s1479 + $0x14] sm:$0xf]
      %v1486 = vld [vmem:[%s1479 + $0x18] sm:$0xf]
      %v1487 = vld [vmem:[%s1479 + $0x1c] sm:$0xf]
      %v1488 = vld [vmem:[%s1479 + $0x20] sm:$0xf]
      %v1489 = vld [vmem:[%s1479 + $0x24] sm:$0xf]
      %v1490 = vld [vmem:[%s1479 + $0x28] sm:$0xf]
      %v1491 = vld [vmem:[%s1479 + $0x2c] sm:$0xf]
      %v1492 = vld [vmem:[%s1479 + $0x30] sm:$0xf]
      %v1493 = vld [vmem:[%s1479 + $0x34] sm:$0xf]
      %v1494 = vld [vmem:[%s1479 + $0x38] sm:$0xf]
      %v1495 = vld [vmem:[%s1479 + $0x3c] sm:$0xf]
      %v1497 = vunpack.c.l.b16 %v1478
      %v1498 = vpack.c.b16 %v828, %v1497
      %v1499 = vrot.slane %v1498, 3
      %v1500 = vrot.slane %v1358, 3
      %v1501 = vsel %vm696, %v1499, %v1500
      %v1520 = vunpack.c.l.b16 %v1480
      %v1521 = vunpack.c.l.b16 %v1481
      %v1522 = vunpack.c.l.b16 %v1482
      %v1523 = vunpack.c.l.b16 %v1483
      %v1524 = vunpack.c.l.b16 %v1484
      %v1525 = vunpack.c.l.b16 %v1485
      %v1526 = vunpack.c.l.b16 %v1486
      %v1527 = vunpack.c.l.b16 %v1487
      %v1528 = vunpack.c.l.b16 %v1488
      %v1529 = vunpack.c.l.b16 %v1489
      %v1530 = vunpack.c.l.b16 %v1490
      %v1531 = vunpack.c.l.b16 %v1491
      %v1532 = vunpack.c.l.b16 %v1492
      %v1533 = vunpack.c.l.b16 %v1493
      %v1534 = vunpack.c.l.b16 %v1494
      %v1535 = vunpack.c.l.b16 %v1495
      %v1536 = vpack.c.b16 %v1521, %v1520
      %v1537 = vpack.c.b16 %v1523, %v1522
      %v1538 = vpack.c.b16 %v1525, %v1524
      %v1539 = vpack.c.b16 %v1527, %v1526
      %v1540 = vpack.c.b16 %v1529, %v1528
      %v1541 = vpack.c.b16 %v1531, %v1530
      %v1542 = vpack.c.b16 %v1533, %v1532
      %v1543 = vpack.c.b16 %v1535, %v1534
      %1552 = vmatprep.subr.bf16.mxu0 0
      %1553 = vmatpush1.bf16.msra.mxu0 %v1543
      %1554 = vmatprep.subr.bf16.mxu0 0
      %1555 = vmatpush1.bf16.msra.mxu0 %v1542
      %1556 = vmatprep.subr.bf16.mxu0 0
      %1557 = vmatpush1.bf16.msra.mxu0 %v1541
      %1558 = vmatprep.subr.bf16.mxu0 0
      %1559 = vmatpush1.bf16.msra.mxu0 %v1540
      %1560 = vmatprep.subr.bf16.mxu0 0
      %1561 = vmatpush1.bf16.msra.mxu0 %v1539
      %1562 = vmatprep.subr.bf16.mxu0 0
      %1563 = vmatpush1.bf16.msra.mxu0 %v1538
      %1564 = vmatprep.subr.bf16.mxu0 0
      %1565 = vmatpush1.bf16.msra.mxu0 %v1537
      %1566 = vmatprep.subr.bf16.mxu0 0
      %1567 = vmatpush1.bf16.msra.mxu0 %v1536
      %1568 = vmatprep.subr.bf16.mxu0 0
      %1569 = vmatpush2.bf16.msra.mxu0 0
      %1570 = vmatprep.subr.bf16.mxu0 0
      %1571 = vmatpush2.bf16.msra.mxu0 0
      %1572 = vmatprep.subr.bf16.mxu0 0
      %1573 = vmatpush2.bf16.msra.mxu0 0
      %1574 = vmatprep.subr.bf16.mxu0 0
      %1575 = vmatpush2.bf16.msra.mxu0 0
      %1576 = vmatprep.subr.bf16.mxu0 0
      %1577 = vmatpush2.bf16.msra.mxu0 0
      %1578 = vmatprep.subr.bf16.mxu0 0
      %1579 = vmatpush2.bf16.msra.mxu0 0
      %1580 = vmatprep.subr.bf16.mxu0 0
      %1581 = vmatpush2.bf16.msra.mxu0 0
      %1582 = vmatprep.subr.bf16.mxu0 0
      %1583 = vmatpush2.bf16.msra.mxu0 0
      %1584 = vmatprep.mubr.bf16.mxu0 0
      %1585 = vmatmul.mubr.bf16.gmra.mxu0 %v1501
      %v1586 = vpop.f32.mrf.mxu0
      %v1587 = vadd.f32 0.0, %v1586
      %v1588 = vpop.f32.mrf.mxu0
      %v1589 = vpop.f32.mrf.mxu0
      %v1590 = vadd.f32 0.0, %v1589
      %v1591 = vpop.f32.mrf.mxu0
      %1592 = vmatprep.mubr.bf16.mxu0 0
      %1593 = vmatmul.mubr.bf16.gmra.mxu0 %v1500
      %v1594 = vpop.f32.mrf.mxu0
      %v1595 = vadd.f32 0.0, %v1594
      %v1596 = vpop.f32.mrf.mxu0
      %v1597 = vpop.f32.mrf.mxu0
      %v1598 = vpop.f32.mrf.mxu0
      %1599 = vdwg.mxu0
      %v1600 = vadd.f32 %v1475, %v1587
      %v1601 = vadd.f32 %v1476, %v1590
      %v1602 = vadd.f32 %v1477, %v1595
      %v1603 = vld [vmem:[%s138 + $0x4] sm:$0x8]
      %v1604 = vld [vmem:[%s138 + $0x8] sm:$0xf]
      %v1605 = vld [vmem:[%s138 + $0xc] sm:$0xf]
      %v1606 = vld [vmem:[%s138 + $0x10] sm:$0x1]
      %s1607 = scalar_lea.vmem %s1, 704
      %v1608 = vld [vmem:[%s1607] sm:$0xf]
      %v1609 = vld [vmem:[%s1607 + $0x4] sm:$0xf]
      %v1610 = vld [vmem:[%s1607 + $0x8] sm:$0xf]
      %v1611 = vld [vmem:[%s1607 + $0xc] sm:$0xf]
      %v1612 = vld [vmem:[%s1607 + $0x10] sm:$0xf]
      %v1613 = vld [vmem:[%s1607 + $0x14] sm:$0xf]
      %v1614 = vld [vmem:[%s1607 + $0x18] sm:$0xf]
      %v1615 = vld [vmem:[%s1607 + $0x1c] sm:$0xf]
      %v1616 = vld [vmem:[%s1607 + $0x20] sm:$0xf]
      %v1617 = vld [vmem:[%s1607 + $0x24] sm:$0xf]
      %v1618 = vld [vmem:[%s1607 + $0x28] sm:$0xf]
      %v1619 = vld [vmem:[%s1607 + $0x2c] sm:$0xf]
      %v1620 = vld [vmem:[%s1607 + $0x30] sm:$0xf]
      %v1621 = vld [vmem:[%s1607 + $0x34] sm:$0xf]
      %v1622 = vld [vmem:[%s1607 + $0x38] sm:$0xf]
      %v1623 = vld [vmem:[%s1607 + $0x3c] sm:$0xf]
      %v1628 = vunpack.c.l.b16 %v1603
      %v1629 = vunpack.c.l.b16 %v1604
      %v1630 = vunpack.c.l.b16 %v1605
      %v1631 = vunpack.c.l.b16 %v1606
      %v1632 = vpack.c.b16 %v1629, %v1628
      %v1633 = vpack.c.b16 %v1631, %v1630
      %v1635 = vshrl.u32 %v1632, 16
      %v1637 = vrot.slane %v1635, 3
      %v1638 = vshll.u32 %v1632, 16
      %v1640 = vrot.slane %v1638, 4
      %v1641 = vor.u32 %v1637, %v1640
      %v1643 = vshrl.u32 %v1633, 16
      %v1645 = vrot.slane %v1643, 3
      %v1646 = vshll.u32 %v1633, 16
      %v1648 = vrot.slane %v1646, 4
      %v1649 = vor.u32 %v1645, %v1648
      %v1650 = vsel %vm832, %v1641, %v1649
      %v1669 = vunpack.c.l.b16 %v1608
      %v1670 = vunpack.c.l.b16 %v1609
      %v1671 = vunpack.c.l.b16 %v1610
      %v1672 = vunpack.c.l.b16 %v1611
      %v1673 = vunpack.c.l.b16 %v1612
      %v1674 = vunpack.c.l.b16 %v1613
      %v1675 = vunpack.c.l.b16 %v1614
      %v1676 = vunpack.c.l.b16 %v1615
      %v1677 = vunpack.c.l.b16 %v1616
      %v1678 = vunpack.c.l.b16 %v1617
      %v1679 = vunpack.c.l.b16 %v1618
      %v1680 = vunpack.c.l.b16 %v1619
      %v1681 = vunpack.c.l.b16 %v1620
      %v1682 = vunpack.c.l.b16 %v1621
      %v1683 = vunpack.c.l.b16 %v1622
      %v1684 = vunpack.c.l.b16 %v1623
      %v1685 = vpack.c.b16 %v1670, %v1669
      %v1686 = vpack.c.b16 %v1672, %v1671
      %v1687 = vpack.c.b16 %v1674, %v1673
      %v1688 = vpack.c.b16 %v1676, %v1675
      %v1689 = vpack.c.b16 %v1678, %v1677
      %v1690 = vpack.c.b16 %v1680, %v1679
      %v1691 = vpack.c.b16 %v1682, %v1681
      %v1692 = vpack.c.b16 %v1684, %v1683
      %1701 = vmatprep.subr.bf16.mxu0 0
      %1702 = vmatpush1.bf16.msra.mxu0 %v1692
      %1703 = vmatprep.subr.bf16.mxu0 0
      %1704 = vmatpush1.bf16.msra.mxu0 %v1691
      %1705 = vmatprep.subr.bf16.mxu0 0
      %1706 = vmatpush1.bf16.msra.mxu0 %v1690
      %1707 = vmatprep.subr.bf16.mxu0 0
      %1708 = vmatpush1.bf16.msra.mxu0 %v1689
      %1709 = vmatprep.subr.bf16.mxu0 0
      %1710 = vmatpush1.bf16.msra.mxu0 %v1688
      %1711 = vmatprep.subr.bf16.mxu0 0
      %1712 = vmatpush1.bf16.msra.mxu0 %v1687
      %1713 = vmatprep.subr.bf16.mxu0 0
      %1714 = vmatpush1.bf16.msra.mxu0 %v1686
      %1715 = vmatprep.subr.bf16.mxu0 0
      %1716 = vmatpush1.bf16.msra.mxu0 %v1685
      %1717 = vmatprep.subr.bf16.mxu0 0
      %1718 = vmatpush2.bf16.msra.mxu0 0
      %1719 = vmatprep.subr.bf16.mxu0 0
      %1720 = vmatpush2.bf16.msra.mxu0 0
      %1721 = vmatprep.subr.bf16.mxu0 0
      %1722 = vmatpush2.bf16.msra.mxu0 0
      %1723 = vmatprep.subr.bf16.mxu0 0
      %1724 = vmatpush2.bf16.msra.mxu0 0
      %1725 = vmatprep.subr.bf16.mxu0 0
      %1726 = vmatpush2.bf16.msra.mxu0 0
      %1727 = vmatprep.subr.bf16.mxu0 0
      %1728 = vmatpush2.bf16.msra.mxu0 0
      %1729 = vmatprep.subr.bf16.mxu0 0
      %1730 = vmatpush2.bf16.msra.mxu0 0
      %1731 = vmatprep.subr.bf16.mxu0 0
      %1732 = vmatpush2.bf16.msra.mxu0 0
      %1733 = vmatprep.mubr.bf16.mxu0 0
      %1734 = vmatmul.mubr.bf16.gmra.mxu0 %v1650
      %v1735 = vpop.f32.mrf.mxu0
      %v1736 = vadd.f32 0.0, %v1735
      %v1737 = vpop.f32.mrf.mxu0
      %v1738 = vpop.f32.mrf.mxu0
      %v1739 = vadd.f32 0.0, %v1738
      %v1740 = vpop.f32.mrf.mxu0
      %1741 = vmatprep.mubr.bf16.mxu0 0
      %1742 = vmatmul.mubr.bf16.gmra.mxu0 %v1649
      %v1743 = vpop.f32.mrf.mxu0
      %v1744 = vadd.f32 0.0, %v1743
      %v1745 = vpop.f32.mrf.mxu0
      %v1746 = vpop.f32.mrf.mxu0
      %v1747 = vpop.f32.mrf.mxu0
      %1748 = vdwg.mxu0
      %v1749 = vadd.f32 %v1600, %v1736
      %v1750 = vadd.f32 %v1601, %v1739
      %v1751 = vadd.f32 %v1602, %v1744
      %v1752 = vld [vmem:[%s138 + $0x8] sm:$0xe]
      %v1753 = vld [vmem:[%s138 + $0x10] sm:$0x3]
      %s1754 = scalar_lea.vmem %s1, 768
      %v1755 = vld [vmem:[%s1754] sm:$0xf]
      %v1756 = vld [vmem:[%s1754 + $0x4] sm:$0xf]
      %v1757 = vld [vmem:[%s1754 + $0x8] sm:$0xf]
      %v1758 = vld [vmem:[%s1754 + $0xc] sm:$0xf]
      %v1759 = vld [vmem:[%s1754 + $0x10] sm:$0xf]
      %v1760 = vld [vmem:[%s1754 + $0x14] sm:$0xf]
      %v1761 = vld [vmem:[%s1754 + $0x18] sm:$0xf]
      %v1762 = vld [vmem:[%s1754 + $0x1c] sm:$0xf]
      %v1763 = vld [vmem:[%s1754 + $0x20] sm:$0xf]
      %v1764 = vld [vmem:[%s1754 + $0x24] sm:$0xf]
      %v1765 = vld [vmem:[%s1754 + $0x28] sm:$0xf]
      %v1766 = vld [vmem:[%s1754 + $0x2c] sm:$0xf]
      %v1767 = vld [vmem:[%s1754 + $0x30] sm:$0xf]
      %v1768 = vld [vmem:[%s1754 + $0x34] sm:$0xf]
      %v1769 = vld [vmem:[%s1754 + $0x38] sm:$0xf]
      %v1770 = vld [vmem:[%s1754 + $0x3c] sm:$0xf]
      %v1773 = vunpack.c.l.b16 %v1752
      %v1774 = vunpack.c.l.b16 %v1753
      %v1775 = vpack.c.b16 %v1630, %v1773
      %v1776 = vpack.c.b16 %v1774, %v1774
      %v1777 = vrot.slane %v1775, 1
      %v1778 = vrot.slane %v1776, 1
      %v1779 = vsel %vm426, %v1777, %v1778
      %v1798 = vunpack.c.l.b16 %v1755
      %v1799 = vunpack.c.l.b16 %v1756
      %v1800 = vunpack.c.l.b16 %v1757
      %v1801 = vunpack.c.l.b16 %v1758
      %v1802 = vunpack.c.l.b16 %v1759
      %v1803 = vunpack.c.l.b16 %v1760
      %v1804 = vunpack.c.l.b16 %v1761
      %v1805 = vunpack.c.l.b16 %v1762
      %v1806 = vunpack.c.l.b16 %v1763
      %v1807 = vunpack.c.l.b16 %v1764
      %v1808 = vunpack.c.l.b16 %v1765
      %v1809 = vunpack.c.l.b16 %v1766
      %v1810 = vunpack.c.l.b16 %v1767
      %v1811 = vunpack.c.l.b16 %v1768
      %v1812 = vunpack.c.l.b16 %v1769
      %v1813 = vunpack.c.l.b16 %v1770
      %v1814 = vpack.c.b16 %v1799, %v1798
      %v1815 = vpack.c.b16 %v1801, %v1800
      %v1816 = vpack.c.b16 %v1803, %v1802
      %v1817 = vpack.c.b16 %v1805, %v1804
      %v1818 = vpack.c.b16 %v1807, %v1806
      %v1819 = vpack.c.b16 %v1809, %v1808
      %v1820 = vpack.c.b16 %v1811, %v1810
      %v1821 = vpack.c.b16 %v1813, %v1812
      %1830 = vmatprep.subr.bf16.mxu0 0
      %1831 = vmatpush1.bf16.msra.mxu0 %v1821
      %1832 = vmatprep.subr.bf16.mxu0 0
      %1833 = vmatpush1.bf16.msra.mxu0 %v1820
      %1834 = vmatprep.subr.bf16.mxu0 0
      %1835 = vmatpush1.bf16.msra.mxu0 %v1819
      %1836 = vmatprep.subr.bf16.mxu0 0
      %1837 = vmatpush1.bf16.msra.mxu0 %v1818
      %1838 = vmatprep.subr.bf16.mxu0 0
      %1839 = vmatpush1.bf16.msra.mxu0 %v1817
      %1840 = vmatprep.subr.bf16.mxu0 0
      %1841 = vmatpush1.bf16.msra.mxu0 %v1816
      %1842 = vmatprep.subr.bf16.mxu0 0
      %1843 = vmatpush1.bf16.msra.mxu0 %v1815
      %1844 = vmatprep.subr.bf16.mxu0 0
      %1845 = vmatpush1.bf16.msra.mxu0 %v1814
      %1846 = vmatprep.subr.bf16.mxu0 0
      %1847 = vmatpush2.bf16.msra.mxu0 0
      %1848 = vmatprep.subr.bf16.mxu0 0
      %1849 = vmatpush2.bf16.msra.mxu0 0
      %1850 = vmatprep.subr.bf16.mxu0 0
      %1851 = vmatpush2.bf16.msra.mxu0 0
      %1852 = vmatprep.subr.bf16.mxu0 0
      %1853 = vmatpush2.bf16.msra.mxu0 0
      %1854 = vmatprep.subr.bf16.mxu0 0
      %1855 = vmatpush2.bf16.msra.mxu0 0
      %1856 = vmatprep.subr.bf16.mxu0 0
      %1857 = vmatpush2.bf16.msra.mxu0 0
      %1858 = vmatprep.subr.bf16.mxu0 0
      %1859 = vmatpush2.bf16.msra.mxu0 0
      %1860 = vmatprep.subr.bf16.mxu0 0
      %1861 = vmatpush2.bf16.msra.mxu0 0
      %1862 = vmatprep.mubr.bf16.mxu0 0
      %1863 = vmatmul.mubr.bf16.gmra.mxu0 %v1779
      %v1864 = vpop.f32.mrf.mxu0
      %v1865 = vadd.f32 0.0, %v1864
      %v1866 = vpop.f32.mrf.mxu0
      %v1867 = vpop.f32.mrf.mxu0
      %v1868 = vadd.f32 0.0, %v1867
      %v1869 = vpop.f32.mrf.mxu0
      %1870 = vmatprep.mubr.bf16.mxu0 0
      %1871 = vmatmul.mubr.bf16.gmra.mxu0 %v1778
      %v1872 = vpop.f32.mrf.mxu0
      %v1873 = vadd.f32 0.0, %v1872
      %v1874 = vpop.f32.mrf.mxu0
      %v1875 = vpop.f32.mrf.mxu0
      %v1876 = vpop.f32.mrf.mxu0
      %1877 = vdwg.mxu0
      %v1878 = vadd.f32 %v1749, %v1865
      %v1879 = vadd.f32 %v1750, %v1868
      %v1880 = vadd.f32 %v1751, %v1873
      %v1881 = vld [vmem:[%s138 + $0x10] sm:$0x7]
      %s1882 = scalar_lea.vmem %s1, 832
      %v1883 = vld [vmem:[%s1882] sm:$0xf]
      %v1884 = vld [vmem:[%s1882 + $0x4] sm:$0xf]
      %v1885 = vld [vmem:[%s1882 + $0x8] sm:$0xf]
      %v1886 = vld [vmem:[%s1882 + $0xc] sm:$0xf]
      %v1887 = vld [vmem:[%s1882 + $0x10] sm:$0xf]
      %v1888 = vld [vmem:[%s1882 + $0x14] sm:$0xf]
      %v1889 = vld [vmem:[%s1882 + $0x18] sm:$0xf]
      %v1890 = vld [vmem:[%s1882 + $0x1c] sm:$0xf]
      %v1891 = vld [vmem:[%s1882 + $0x20] sm:$0xf]
      %v1892 = vld [vmem:[%s1882 + $0x24] sm:$0xf]
      %v1893 = vld [vmem:[%s1882 + $0x28] sm:$0xf]
      %v1894 = vld [vmem:[%s1882 + $0x2c] sm:$0xf]
      %v1895 = vld [vmem:[%s1882 + $0x30] sm:$0xf]
      %v1896 = vld [vmem:[%s1882 + $0x34] sm:$0xf]
      %v1897 = vld [vmem:[%s1882 + $0x38] sm:$0xf]
      %v1898 = vld [vmem:[%s1882 + $0x3c] sm:$0xf]
      %v1900 = vunpack.c.l.b16 %v1881
      %v1901 = vpack.c.b16 %v1900, %v1900
      %v1903 = vshrl.u32 %v1775, 16
      %v1905 = vrot.slane %v1903, 1
      %v1906 = vshll.u32 %v1775, 16
      %v1908 = vrot.slane %v1906, 2
      %v1909 = vor.u32 %v1905, %v1908
      %v1911 = vshrl.u32 %v1901, 16
      %v1913 = vrot.slane %v1911, 1
      %v1914 = vshll.u32 %v1901, 16
      %v1916 = vrot.slane %v1914, 2
      %v1917 = vor.u32 %v1913, %v1916
      %v1918 = vsel %vm552, %v1909, %v1917
      %v1937 = vunpack.c.l.b16 %v1883
      %v1938 = vunpack.c.l.b16 %v1884
      %v1939 = vunpack.c.l.b16 %v1885
      %v1940 = vunpack.c.l.b16 %v1886
      %v1941 = vunpack.c.l.b16 %v1887
      %v1942 = vunpack.c.l.b16 %v1888
      %v1943 = vunpack.c.l.b16 %v1889
      %v1944 = vunpack.c.l.b16 %v1890
      %v1945 = vunpack.c.l.b16 %v1891
      %v1946 = vunpack.c.l.b16 %v1892
      %v1947 = vunpack.c.l.b16 %v1893
      %v1948 = vunpack.c.l.b16 %v1894
      %v1949 = vunpack.c.l.b16 %v1895
      %v1950 = vunpack.c.l.b16 %v1896
      %v1951 = vunpack.c.l.b16 %v1897
      %v1952 = vunpack.c.l.b16 %v1898
      %v1953 = vpack.c.b16 %v1938, %v1937
      %v1954 = vpack.c.b16 %v1940, %v1939
      %v1955 = vpack.c.b16 %v1942, %v1941
      %v1956 = vpack.c.b16 %v1944, %v1943
      %v1957 = vpack.c.b16 %v1946, %v1945
      %v1958 = vpack.c.b16 %v1948, %v1947
      %v1959 = vpack.c.b16 %v1950, %v1949
      %v1960 = vpack.c.b16 %v1952, %v1951
      %1969 = vmatprep.subr.bf16.mxu0 0
      %1970 = vmatpush1.bf16.msra.mxu0 %v1960
      %1971 = vmatprep.subr.bf16.mxu0 0
      %1972 = vmatpush1.bf16.msra.mxu0 %v1959
      %1973 = vmatprep.subr.bf16.mxu0 0
      %1974 = vmatpush1.bf16.msra.mxu0 %v1958
      %1975 = vmatprep.subr.bf16.mxu0 0
      %1976 = vmatpush1.bf16.msra.mxu0 %v1957
      %1977 = vmatprep.subr.bf16.mxu0 0
      %1978 = vmatpush1.bf16.msra.mxu0 %v1956
      %1979 = vmatprep.subr.bf16.mxu0 0
      %1980 = vmatpush1.bf16.msra.mxu0 %v1955
      %1981 = vmatprep.subr.bf16.mxu0 0
      %1982 = vmatpush1.bf16.msra.mxu0 %v1954
      %1983 = vmatprep.subr.bf16.mxu0 0
      %1984 = vmatpush1.bf16.msra.mxu0 %v1953
      %1985 = vmatprep.subr.bf16.mxu0 0
      %1986 = vmatpush2.bf16.msra.mxu0 0
      %1987 = vmatprep.subr.bf16.mxu0 0
      %1988 = vmatpush2.bf16.msra.mxu0 0
      %1989 = vmatprep.subr.bf16.mxu0 0
      %1990 = vmatpush2.bf16.msra.mxu0 0
      %1991 = vmatprep.subr.bf16.mxu0 0
      %1992 = vmatpush2.bf16.msra.mxu0 0
      %1993 = vmatprep.subr.bf16.mxu0 0
      %1994 = vmatpush2.bf16.msra.mxu0 0
      %1995 = vmatprep.subr.bf16.mxu0 0
      %1996 = vmatpush2.bf16.msra.mxu0 0
      %1997 = vmatprep.subr.bf16.mxu0 0
      %1998 = vmatpush2.bf16.msra.mxu0 0
      %1999 = vmatprep.subr.bf16.mxu0 0
      %2000 = vmatpush2.bf16.msra.mxu0 0
      %2001 = vmatprep.mubr.bf16.mxu0 0
      %2002 = vmatmul.mubr.bf16.gmra.mxu0 %v1918
      %v2003 = vpop.f32.mrf.mxu0
      %v2004 = vadd.f32 0.0, %v2003
      %v2005 = vpop.f32.mrf.mxu0
      %v2006 = vpop.f32.mrf.mxu0
      %v2007 = vadd.f32 0.0, %v2006
      %v2008 = vpop.f32.mrf.mxu0
      %2009 = vmatprep.mubr.bf16.mxu0 0
      %2010 = vmatmul.mubr.bf16.gmra.mxu0 %v1917
      %v2011 = vpop.f32.mrf.mxu0
      %v2012 = vadd.f32 0.0, %v2011
      %v2013 = vpop.f32.mrf.mxu0
      %v2014 = vpop.f32.mrf.mxu0
      %v2015 = vpop.f32.mrf.mxu0
      %2016 = vdwg.mxu0
      %v2017 = vadd.f32 %v1878, %v2004
      %v2018 = vadd.f32 %v1879, %v2007
      %v2019 = vadd.f32 %v1880, %v2012
      %v2020 = vld [vmem:[%s138 + $0x8] sm:$0xc]
      %s2021 = scalar_lea.vmem %s1, 896
      %v2022 = vld [vmem:[%s2021] sm:$0xf]
      %v2023 = vld [vmem:[%s2021 + $0x4] sm:$0xf]
      %v2024 = vld [vmem:[%s2021 + $0x8] sm:$0xf]
      %v2025 = vld [vmem:[%s2021 + $0xc] sm:$0xf]
      %v2026 = vld [vmem:[%s2021 + $0x10] sm:$0xf]
      %v2027 = vld [vmem:[%s2021 + $0x14] sm:$0xf]
      %v2028 = vld [vmem:[%s2021 + $0x18] sm:$0xf]
      %v2029 = vld [vmem:[%s2021 + $0x1c] sm:$0xf]
      %v2030 = vld [vmem:[%s2021 + $0x20] sm:$0xf]
      %v2031 = vld [vmem:[%s2021 + $0x24] sm:$0xf]
      %v2032 = vld [vmem:[%s2021 + $0x28] sm:$0xf]
      %v2033 = vld [vmem:[%s2021 + $0x2c] sm:$0xf]
      %v2034 = vld [vmem:[%s2021 + $0x30] sm:$0xf]
      %v2035 = vld [vmem:[%s2021 + $0x34] sm:$0xf]
      %v2036 = vld [vmem:[%s2021 + $0x38] sm:$0xf]
      %v2037 = vld [vmem:[%s2021 + $0x3c] sm:$0xf]
      %v2039 = vunpack.c.l.b16 %v2020
      %v2040 = vpack.c.b16 %v1630, %v2039
      %v2041 = vrot.slane %v2040, 2
      %v2042 = vrot.slane %v1901, 2
      %v2043 = vsel %vm1233, %v2041, %v2042
      %v2062 = vunpack.c.l.b16 %v2022
      %v2063 = vunpack.c.l.b16 %v2023
      %v2064 = vunpack.c.l.b16 %v2024
      %v2065 = vunpack.c.l.b16 %v2025
      %v2066 = vunpack.c.l.b16 %v2026
      %v2067 = vunpack.c.l.b16 %v2027
      %v2068 = vunpack.c.l.b16 %v2028
      %v2069 = vunpack.c.l.b16 %v2029
      %v2070 = vunpack.c.l.b16 %v2030
      %v2071 = vunpack.c.l.b16 %v2031
      %v2072 = vunpack.c.l.b16 %v2032
      %v2073 = vunpack.c.l.b16 %v2033
      %v2074 = vunpack.c.l.b16 %v2034
      %v2075 = vunpack.c.l.b16 %v2035
      %v2076 = vunpack.c.l.b16 %v2036
      %v2077 = vunpack.c.l.b16 %v2037
      %v2078 = vpack.c.b16 %v2063, %v2062
      %v2079 = vpack.c.b16 %v2065, %v2064
      %v2080 = vpack.c.b16 %v2067, %v2066
      %v2081 = vpack.c.b16 %v2069, %v2068
      %v2082 = vpack.c.b16 %v2071, %v2070
      %v2083 = vpack.c.b16 %v2073, %v2072
      %v2084 = vpack.c.b16 %v2075, %v2074
      %v2085 = vpack.c.b16 %v2077, %v2076
      %2094 = vmatprep.subr.bf16.mxu0 0
      %2095 = vmatpush1.bf16.msra.mxu0 %v2085
      %2096 = vmatprep.subr.bf16.mxu0 0
      %2097 = vmatpush1.bf16.msra.mxu0 %v2084
      %2098 = vmatprep.subr.bf16.mxu0 0
      %2099 = vmatpush1.bf16.msra.mxu0 %v2083
      %2100 = vmatprep.subr.bf16.mxu0 0
      %2101 = vmatpush1.bf16.msra.mxu0 %v2082
      %2102 = vmatprep.subr.bf16.mxu0 0
      %2103 = vmatpush1.bf16.msra.mxu0 %v2081
      %2104 = vmatprep.subr.bf16.mxu0 0
      %2105 = vmatpush1.bf16.msra.mxu0 %v2080
      %2106 = vmatprep.subr.bf16.mxu0 0
      %2107 = vmatpush1.bf16.msra.mxu0 %v2079
      %2108 = vmatprep.subr.bf16.mxu0 0
      %2109 = vmatpush1.bf16.msra.mxu0 %v2078
      %2110 = vmatprep.subr.bf16.mxu0 0
      %2111 = vmatpush2.bf16.msra.mxu0 0
      %2112 = vmatprep.subr.bf16.mxu0 0
      %2113 = vmatpush2.bf16.msra.mxu0 0
      %2114 = vmatprep.subr.bf16.mxu0 0
      %2115 = vmatpush2.bf16.msra.mxu0 0
      %2116 = vmatprep.subr.bf16.mxu0 0
      %2117 = vmatpush2.bf16.msra.mxu0 0
      %2118 = vmatprep.subr.bf16.mxu0 0
      %2119 = vmatpush2.bf16.msra.mxu0 0
      %2120 = vmatprep.subr.bf16.mxu0 0
      %2121 = vmatpush2.bf16.msra.mxu0 0
      %2122 = vmatprep.subr.bf16.mxu0 0
      %2123 = vmatpush2.bf16.msra.mxu0 0
      %2124 = vmatprep.subr.bf16.mxu0 0
      %2125 = vmatpush2.bf16.msra.mxu0 0
      %2126 = vmatprep.mubr.bf16.mxu0 0
      %2127 = vmatmul.mubr.bf16.gmra.mxu0 %v2043
      %v2128 = vpop.f32.mrf.mxu0
      %v2129 = vadd.f32 0.0, %v2128
      %v2130 = vpop.f32.mrf.mxu0
      %v2131 = vpop.f32.mrf.mxu0
      %v2132 = vadd.f32 0.0, %v2131
      %v2133 = vpop.f32.mrf.mxu0
      %2134 = vmatprep.mubr.bf16.mxu0 0
      %2135 = vmatmul.mubr.bf16.gmra.mxu0 %v2042
      %v2136 = vpop.f32.mrf.mxu0
      %v2137 = vadd.f32 0.0, %v2136
      %v2138 = vpop.f32.mrf.mxu0
      %v2139 = vpop.f32.mrf.mxu0
      %v2140 = vpop.f32.mrf.mxu0
      %2141 = vdwg.mxu0
      %v2142 = vadd.f32 %v2017, %v2129
      %v2143 = vadd.f32 %v2018, %v2132
      %v2144 = vadd.f32 %v2019, %v2137
      %v2145 = vld [vmem:[%s138 + $0x10] sm:$0xf]
      %s2146 = scalar_lea.vmem %s1, 960
      %v2147 = vld [vmem:[%s2146] sm:$0xf]
      %v2148 = vld [vmem:[%s2146 + $0x4] sm:$0xf]
      %v2149 = vld [vmem:[%s2146 + $0x8] sm:$0xf]
      %v2150 = vld [vmem:[%s2146 + $0xc] sm:$0xf]
      %v2151 = vld [vmem:[%s2146 + $0x10] sm:$0xf]
      %v2152 = vld [vmem:[%s2146 + $0x14] sm:$0xf]
      %v2153 = vld [vmem:[%s2146 + $0x18] sm:$0xf]
      %v2154 = vld [vmem:[%s2146 + $0x1c] sm:$0xf]
      %v2155 = vld [vmem:[%s2146 + $0x20] sm:$0xf]
      %v2156 = vld [vmem:[%s2146 + $0x24] sm:$0xf]
      %v2157 = vld [vmem:[%s2146 + $0x28] sm:$0xf]
      %v2158 = vld [vmem:[%s2146 + $0x2c] sm:$0xf]
      %v2159 = vld [vmem:[%s2146 + $0x30] sm:$0xf]
      %v2160 = vld [vmem:[%s2146 + $0x34] sm:$0xf]
      %v2161 = vld [vmem:[%s2146 + $0x38] sm:$0xf]
      %v2162 = vld [vmem:[%s2146 + $0x3c] sm:$0xf]
      %v2164 = vunpack.c.l.b16 %v2145
      %v2165 = vpack.c.b16 %v2164, %v2164
      %v2167 = vshrl.u32 %v2040, 16
      %v2169 = vrot.slane %v2167, 2
      %v2170 = vshll.u32 %v2040, 16
      %v2172 = vrot.slane %v2170, 3
      %v2173 = vor.u32 %v2169, %v2172
      %v2175 = vshrl.u32 %v2165, 16
      %v2177 = vrot.slane %v2175, 2
      %v2178 = vshll.u32 %v2165, 16
      %v2180 = vrot.slane %v2178, 3
      %v2181 = vor.u32 %v2177, %v2180
      %v2182 = vsel %vm1359, %v2173, %v2181
      %v2201 = vunpack.c.l.b16 %v2147
      %v2202 = vunpack.c.l.b16 %v2148
      %v2203 = vunpack.c.l.b16 %v2149
      %v2204 = vunpack.c.l.b16 %v2150
      %v2205 = vunpack.c.l.b16 %v2151
      %v2206 = vunpack.c.l.b16 %v2152
      %v2207 = vunpack.c.l.b16 %v2153
      %v2208 = vunpack.c.l.b16 %v2154
      %v2209 = vunpack.c.l.b16 %v2155
      %v2210 = vunpack.c.l.b16 %v2156
      %v2211 = vunpack.c.l.b16 %v2157
      %v2212 = vunpack.c.l.b16 %v2158
      %v2213 = vunpack.c.l.b16 %v2159
      %v2214 = vunpack.c.l.b16 %v2160
      %v2215 = vunpack.c.l.b16 %v2161
      %v2216 = vunpack.c.l.b16 %v2162
      %v2217 = vpack.c.b16 %v2202, %v2201
      %v2218 = vpack.c.b16 %v2204, %v2203
      %v2219 = vpack.c.b16 %v2206, %v2205
      %v2220 = vpack.c.b16 %v2208, %v2207
      %v2221 = vpack.c.b16 %v2210, %v2209
      %v2222 = vpack.c.b16 %v2212, %v2211
      %v2223 = vpack.c.b16 %v2214, %v2213
      %v2224 = vpack.c.b16 %v2216, %v2215
      %2233 = vmatprep.subr.bf16.mxu0 0
      %2234 = vmatpush1.bf16.msra.mxu0 %v2224
      %2235 = vmatprep.subr.bf16.mxu0 0
      %2236 = vmatpush1.bf16.msra.mxu0 %v2223
      %2237 = vmatprep.subr.bf16.mxu0 0
      %2238 = vmatpush1.bf16.msra.mxu0 %v2222
      %2239 = vmatprep.subr.bf16.mxu0 0
      %2240 = vmatpush1.bf16.msra.mxu0 %v2221
      %2241 = vmatprep.subr.bf16.mxu0 0
      %2242 = vmatpush1.bf16.msra.mxu0 %v2220
      %2243 = vmatprep.subr.bf16.mxu0 0
      %2244 = vmatpush1.bf16.msra.mxu0 %v2219
      %2245 = vmatprep.subr.bf16.mxu0 0
      %2246 = vmatpush1.bf16.msra.mxu0 %v2218
      %2247 = vmatprep.subr.bf16.mxu0 0
      %2248 = vmatpush1.bf16.msra.mxu0 %v2217
      %2249 = vmatprep.subr.bf16.mxu0 0
      %2250 = vmatpush2.bf16.msra.mxu0 0
      %2251 = vmatprep.subr.bf16.mxu0 0
      %2252 = vmatpush2.bf16.msra.mxu0 0
      %2253 = vmatprep.subr.bf16.mxu0 0
      %2254 = vmatpush2.bf16.msra.mxu0 0
      %2255 = vmatprep.subr.bf16.mxu0 0
      %2256 = vmatpush2.bf16.msra.mxu0 0
      %2257 = vmatprep.subr.bf16.mxu0 0
      %2258 = vmatpush2.bf16.msra.mxu0 0
      %2259 = vmatprep.subr.bf16.mxu0 0
      %2260 = vmatpush2.bf16.msra.mxu0 0
      %2261 = vmatprep.subr.bf16.mxu0 0
      %2262 = vmatpush2.bf16.msra.mxu0 0
      %2263 = vmatprep.subr.bf16.mxu0 0
      %2264 = vmatpush2.bf16.msra.mxu0 0
      %2265 = vmatprep.mubr.bf16.mxu0 0
      %2266 = vmatmul.mubr.bf16.gmra.mxu0 %v2182
      %v2267 = vpop.f32.mrf.mxu0
      %v2268 = vadd.f32 0.0, %v2267
      %v2269 = vpop.f32.mrf.mxu0
      %v2270 = vpop.f32.mrf.mxu0
      %v2271 = vadd.f32 0.0, %v2270
      %v2272 = vpop.f32.mrf.mxu0
      %2273 = vmatprep.mubr.bf16.mxu0 0
      %2274 = vmatmul.mubr.bf16.gmra.mxu0 %v2181
      %v2275 = vpop.f32.mrf.mxu0
      %v2276 = vadd.f32 0.0, %v2275
      %v2277 = vpop.f32.mrf.mxu0
      %v2278 = vpop.f32.mrf.mxu0
      %v2279 = vpop.f32.mrf.mxu0
      %2280 = vdwg.mxu0
      %v2281 = vadd.f32 %v2142, %v2268
      %v2282 = vadd.f32 %v2143, %v2271
      %v2283 = vadd.f32 %v2144, %v2276
      %v2284 = vpack.c.bf16 %v2282, %v2281
      %v2285 = vpack.c.bf16 %v2283, %v2283
      %v2288 = vunpack.c.l.b16 %v2284
      %v2289 = vunpack.c.h.b16 %v2284
      %v2290 = vunpack.c.l.b16 %v2285
      %v2291 = vpack.c.b16 %v2288, %v2288
      %v2292 = vpack.c.b16 %v2289, %v2289
      %v2293 = vpack.c.b16 %v2290, %v2290
      %2297 = vst [vmem:[%s143] sm:$0xf] %v2291
      %2298 = vst [vmem:[%s143 + $0x4] sm:$0xf] %v2292
      %2299 = vst [vmem:[%s143 + $0x8] sm:$0x1] %v2293
      %p2300 = scmp.lt.s32.totalorder %s13, 1
      %s2301 = scalar_select %p2300, %s13, 1
      %s2302 = smul.addr %s2301, 3
      %s2303 = smul.addr %s2302, 4
      %s2304 = scalar_lea.vmem %s2, %s2303
      // Predicated region
      $region29: #{discriminator_forward.13} parent=27 // pred_check
        %p2305 = pneg %p78
      $region30: #{discriminator_forward.13} parent=27 // pred_check_branch
        %2307 = sbr.rel (%p2305) target = $region32
      $region31: #{discriminator_forward.13} parent=27 // pred_region
        _
      $region32: #{discriminator_forward.13} parent=27 // pred_fallthru
        _
    $region28: #{discriminator_forward.13} parent=5 // pred_fallthru
      _
    %p2308 = scmp.le.s32.totalorder 2, %s8
    // Predicated region
    $region33: #{discriminator_forward.13} parent=5 // pred_check
      %p2309 = pneg %p2308
    $region34: #{discriminator_forward.13} parent=5 // pred_check_branch
      %2311 = sbr.rel (%p2309) target = $region36
    $region35: #{discriminator_forward.13} parent=5 // pred_region
      %s2312 = ssub.s32 %s8, 2
      // Predicated region
      $region37: #{discriminator_forward.13} parent=35 // pred_check
        %p2313 = pneg %p84
      $region38: #{discriminator_forward.13} parent=35 // pred_check_branch
        %2315 = sbr.rel (%p2313) target = $region40
      $region39: #{discriminator_forward.13} parent=35 // pred_region
        %p2316 = scmp.lt.s32.totalorder %s14, 1
        %s2317 = scalar_select %p2316, %s14, 1
        %s2318 = smul.addr %s2317, 3
        %s2319 = smul.addr %s2318, 4
        %s2320 = scalar_lea.vmem %s2, %s2319
      $region40: #{discriminator_forward.13} parent=35 // pred_fallthru
        _
    $region36: #{discriminator_forward.13} parent=5 // pred_fallthru
      _
  $region6: #{discriminator_forward.13} parent=0 // loop_footer
    %s12 = sadd.s32 1, %s8
  $region7: #{discriminator_forward.13} parent=0 // loop_footer_branch
    %7 = sbr.rel target = $region3
  $region8: #{discriminator_forward.13} parent=0 // loop_exit
    _

// kernel: discriminator_forward.15
$region0: #{discriminator_forward.15}
  #allocation0 [shape = 'u32[]', space=smem, size = 0x4, offset = 0x4, fixed_abs, tag = 'smem constant byte address 0x4 - core index']
  #allocation1 [shape = 'u32[144,128]{1,0:T(1,128)}', space=vmem, size = 0x12000, scoped, tag = 'internal scratch']
  %s0 = inlined_call_operand.vmem [shape: bf16[2,30,128], index: 0, kind: input, shape index: {}]
  %s1 = inlined_call_operand.vmem [shape: bf16[16,128,128], index: 1, kind: input, shape index: {}]
  %s2 = inlined_call_operand.vmem [shape: f32[1,128], index: 2, kind: input, shape index: {}]
  %s3 = inlined_call_operand.vmem [shape: f32[2,10,128], index: 3, kind: output, shape index: {}]
  %s4 = sld [smem:[#allocation0]]
  $region45: #{discriminator_forward.15} parent=0
    _
  %s6 = ssub.s32 1, %s4
  %s7 = scalar_select 0, %s6, %s4
  loop: start=0, step=1, limit=4
  $region2: #{discriminator_forward.15} parent=0 // loop_pre_header
    _
  $region3: #{discriminator_forward.15} parent=0 // loop_header
    %s9 = sphi 0, %s13
    %p10 = scmp.ge.s32.totalorder %s9, 4
    %s19 = sphi 0, %s21
    %s22 = sphi 0, %s19
    %s23 = sphi 0, %s22
    %s39 = sphi 0, %s23
    %s43 = sphi 0, %s43
    %s45 = sphi 0, %s43
    %s46 = sphi 0, %s45
    %s60 = sphi 0, %s46
    %s64 = sphi 0, %s64
    %s66 = sphi 0, %s64
    %s67 = sphi 0, %s66
    %s81 = sphi 0, %s67
    %s87 = sphi 0, %s89
    %s90 = sphi 0, %s87
    %s91 = sphi 0, %s90
    %s107 = sphi 0, %s91
  $region4: #{discriminator_forward.15} parent=0 // loop_header_branch
    %12 = sbr.rel (%p10) target = $region8
  $region5: #{discriminator_forward.15} parent=0 // loop_body
    %s14 = ssub.s32 %s9, 1
    %s15 = ssub.s32 %s9, 2
    %s16 = sadd.s32 %s9, 1
    %s17 = ssub.s32 %s9, %s16
    %p18 = scmp.eq.s32.totalorder %s17, 0
    %s20 = sadd.s32 %s19, 1
    %s21 = scalar_select %p18, %s19, %s20
    %p24 = pneg %p18
    %p25 = scmp.eq.s32.totalorder %s9, 1
    %p26 = por %p24, %p25
    %p27 = scmp.ne.s32.totalorder %s19, %s22
    %p28 = scmp.eq.s32.totalorder %s9, 0
    %p29 = por %p27, %p28
    %p30 = scmp.ne.s32.totalorder %s19, %s22
    %p31 = scmp.eq.s32.totalorder %s14, 1
    %p32 = por %p30, %p31
    %p33 = scmp.ne.s32.totalorder %s22, %s23
    %p34 = scmp.eq.s32.totalorder %s14, 0
    %p35 = por %p33, %p34
    %p36 = scmp.ne.s32.totalorder %s22, %s23
    %p37 = scmp.eq.s32.totalorder %s15, 1
    %p38 = por %p36, %p37
    %p40 = scmp.ne.s32.totalorder %s23, %s39
    %p41 = scmp.eq.s32.totalorder %s15, 0
    %p42 = por %p40, %p41
    %s44 = sadd.s32 %s43, 1
    %p47 = scmp.eq.s32.totalorder %s9, 1
    %p48 = scmp.ne.s32.totalorder %s43, %s45
    %p49 = scmp.eq.s32.totalorder %s9, 0
    %p50 = por %p48, %p49
    %p51 = scmp.ne.s32.totalorder %s43, %s45
    %p52 = scmp.eq.s32.totalorder %s14, 1
    %p53 = por %p51, %p52
    %p54 = scmp.ne.s32.totalorder %s45, %s46
    %p55 = scmp.eq.s32.totalorder %s14, 0
    %p56 = por %p54, %p55
    %p57 = scmp.ne.s32.totalorder %s45, %s46
    %p58 = scmp.eq.s32.totalorder %s15, 1
    %p59 = por %p57, %p58
    %p61 = scmp.ne.s32.totalorder %s46, %s60
    %p62 = scmp.eq.s32.totalorder %s15, 0
    %p63 = por %p61, %p62
    %s65 = sadd.s32 %s64, 1
    %p68 = scmp.eq.s32.totalorder %s9, 1
    %p69 = scmp.ne.s32.totalorder %s64, %s66
    %p70 = scmp.eq.s32.totalorder %s9, 0
    %p71 = por %p69, %p70
    %p72 = scmp.ne.s32.totalorder %s64, %s66
    %p73 = scmp.eq.s32.totalorder %s14, 1
    %p74 = por %p72, %p73
    %p75 = scmp.ne.s32.totalorder %s66, %s67
    %p76 = scmp.eq.s32.totalorder %s14, 0
    %p77 = por %p75, %p76
    %p78 = scmp.ne.s32.totalorder %s66, %s67
    %p79 = scmp.eq.s32.totalorder %s15, 1
    %p80 = por %p78, %p79
    %p82 = scmp.ne.s32.totalorder %s67, %s81
    %p83 = scmp.eq.s32.totalorder %s15, 0
    %p84 = por %p82, %p83
    %s85 = ssub.s32 %s9, %s16
    %p86 = scmp.eq.s32.totalorder %s85, 0
    %s88 = sadd.s32 %s87, 1
    %s89 = scalar_select %p86, %s87, %s88
    %p92 = pneg %p86
    %p93 = scmp.eq.s32.totalorder %s9, 1
    %p94 = por %p92, %p93
    %p95 = scmp.ne.s32.totalorder %s87, %s90
    %p96 = scmp.eq.s32.totalorder %s9, 0
    %p97 = por %p95, %p96
    %p98 = scmp.ne.s32.totalorder %s87, %s90
    %p99 = scmp.eq.s32.totalorder %s14, 1
    %p100 = por %p98, %p99
    %p101 = scmp.ne.s32.totalorder %s90, %s91
    %p102 = scmp.eq.s32.totalorder %s14, 0
    %p103 = por %p101, %p102
    %p104 = scmp.ne.s32.totalorder %s90, %s91
    %p105 = scmp.eq.s32.totalorder %s15, 1
    %p106 = por %p104, %p105
    %p108 = scmp.ne.s32.totalorder %s91, %s107
    %p109 = scmp.eq.s32.totalorder %s15, 0
    %p110 = por %p108, %p109
    %p111 = scmp.le.s32.totalorder 1, %s9
    %p112 = scmp.lt.s32.totalorder %s9, 3
    %p113 = pnand %p111, %p112
    %p114 = pneg %p113
    // Predicated region
    $region9: #{discriminator_forward.15} parent=5 // pred_check
      _
    $region10: #{discriminator_forward.15} parent=5 // pred_check_branch
      %116 = sbr.rel (%p113) target = $region12
    $region11: #{discriminator_forward.15} parent=5 // pred_region
      %s117 = ssub.s32 %s9, 1
      // Predicated region
      $region13: #{discriminator_forward.15} parent=11 // pred_check
        %p118 = pneg %p56
      $region14: #{discriminator_forward.15} parent=11 // pred_check_branch
        %120 = sbr.rel (%p118) target = $region16
      $region15: #{discriminator_forward.15} parent=11 // pred_region
        _
      $region16: #{discriminator_forward.15} parent=11 // pred_fallthru
        _
      // Predicated region
      $region17: #{discriminator_forward.15} parent=11 // pred_check
        %p121 = pneg %p77
      $region18: #{discriminator_forward.15} parent=11 // pred_check_branch
        %123 = sbr.rel (%p121) target = $region20
      $region19: #{discriminator_forward.15} parent=11 // pred_region
        _
      $region20: #{discriminator_forward.15} parent=11 // pred_fallthru
        _
    $region12: #{discriminator_forward.15} parent=5 // pred_fallthru
      _
    %p124 = scmp.lt.s32.totalorder %s9, 2
    // Predicated region
    $region21: #{discriminator_forward.15} parent=5 // pred_check
      %p125 = pneg %p124
    $region22: #{discriminator_forward.15} parent=5 // pred_check_branch
      %127 = sbr.rel (%p125) target = $region24
    $region23: #{discriminator_forward.15} parent=5 // pred_region
      // Predicated region
      $region25: #{discriminator_forward.15} parent=23 // pred_check
        %p128 = pneg %p29
      $region26: #{discriminator_forward.15} parent=23 // pred_check_branch
        %130 = sbr.rel (%p128) target = $region28
      $region27: #{discriminator_forward.15} parent=23 // pred_region
        %p131 = scmp.lt.s32.totalorder %s9, 1
        %s132 = scalar_select %p131, %s9, 1
        %s133 = smul.addr %s132, 4
        %s134 = smul.addr %s133, 4
        %s135 = scalar_lea.vmem %s0, %s134
      $region28: #{discriminator_forward.15} parent=23 // pred_fallthru
        _
    $region24: #{discriminator_forward.15} parent=5 // pred_fallthru
      _
    %p136 = scmp.le.s32.totalorder 1, %s9
    %p137 = scmp.lt.s32.totalorder %s9, 3
    %p138 = pnand %p136, %p137
    %p139 = pneg %p138
    // Predicated region
    $region29: #{discriminator_forward.15} parent=5 // pred_check
      _
    $region30: #{discriminator_forward.15} parent=5 // pred_check_branch
      %141 = sbr.rel (%p138) target = $region32
    $region31: #{discriminator_forward.15} parent=5 // pred_region
      %s142 = ssub.s32 %s9, 1
      %p143 = scmp.lt.s32.totalorder %s14, 1
      %s144 = scalar_select %p143, %s14, 1
      %s145 = smul.addr %s144, 4
      %s146 = smul.addr %s145, 4
      %s147 = scalar_lea.vmem %s0, %s146
      %p148 = pneg %p35
      %p149 = pneg %p32
      %p150 = pneg %p56
      %p151 = pneg %p53
      %p152 = pneg %p77
      %p153 = pneg %p74
      %p154 = pneg %p103
      %p155 = pneg %p100
      %p156 = scmp.lt.s32.totalorder %s14, 1
      %s157 = scalar_select %p156, %s14, 1
      %s158 = smul.addr %s157, 2
      %s159 = smul.addr %s158, 8
      %s160 = scalar_lea.vmem %s3, %s159
      %p161 = scmp.lt.s32.totalorder %s14, 1
      %s162 = scalar_select %p161, %s14, 1
      %s163 = smul.addr %s162, 4
      %s164 = smul.addr %s163, 4
      %s165 = scalar_lea.vmem %s0, %s164
      %p166 = scmp.lt.s32.totalorder %s14, 1
      %s167 = scalar_select %p166, %s14, 1
      %s168 = smul.addr %s167, 2
      %s169 = smul.addr %s168, 8
      %s170 = scalar_lea.vmem %s3, %s169
      %v172 = vld [vmem:[%s165] sm:$0xf]
      %v173 = vld [vmem:[%s165 + $0x4] sm:$0x1]
      %v174 = vld [vmem:[%s1] sm:$0xf]
      %v175 = vld [vmem:[%s1 + $0x4] sm:$0xf]
      %v176 = vld [vmem:[%s1 + $0x8] sm:$0xf]
      %v177 = vld [vmem:[%s1 + $0xc] sm:$0xf]
      %v178 = vld [vmem:[%s1 + $0x10] sm:$0xf]
      %v179 = vld [vmem:[%s1 + $0x14] sm:$0xf]
      %v180 = vld [vmem:[%s1 + $0x18] sm:$0xf]
      %v181 = vld [vmem:[%s1 + $0x1c] sm:$0xf]
      %v182 = vld [vmem:[%s1 + $0x20] sm:$0xf]
      %v183 = vld [vmem:[%s1 + $0x24] sm:$0xf]
      %v184 = vld [vmem:[%s1 + $0x28] sm:$0xf]
      %v185 = vld [vmem:[%s1 + $0x2c] sm:$0xf]
      %v186 = vld [vmem:[%s1 + $0x30] sm:$0xf]
      %v187 = vld [vmem:[%s1 + $0x34] sm:$0xf]
      %v188 = vld [vmem:[%s1 + $0x38] sm:$0xf]
      %v189 = vld [vmem:[%s1 + $0x3c] sm:$0xf]
      %v190 = vld [vmem:[%s165 + $0x4] sm:$0x3]
      %s191 = scalar_lea.vmem %s1, 64
      %v192 = vld [vmem:[%s191] sm:$0xf]
      %v193 = vld [vmem:[%s191 + $0x4] sm:$0xf]
      %v194 = vld [vmem:[%s191 + $0x8] sm:$0xf]
      %v195 = vld [vmem:[%s191 + $0xc] sm:$0xf]
      %v196 = vld [vmem:[%s191 + $0x10] sm:$0xf]
      %v197 = vld [vmem:[%s191 + $0x14] sm:$0xf]
      %v198 = vld [vmem:[%s191 + $0x18] sm:$0xf]
      %v199 = vld [vmem:[%s191 + $0x1c] sm:$0xf]
      %v200 = vld [vmem:[%s191 + $0x20] sm:$0xf]
      %v201 = vld [vmem:[%s191 + $0x24] sm:$0xf]
      %v202 = vld [vmem:[%s191 + $0x28] sm:$0xf]
      %v203 = vld [vmem:[%s191 + $0x2c] sm:$0xf]
      %v204 = vld [vmem:[%s191 + $0x30] sm:$0xf]
      %v205 = vld [vmem:[%s191 + $0x34] sm:$0xf]
      %v206 = vld [vmem:[%s191 + $0x38] sm:$0xf]
      %v207 = vld [vmem:[%s191 + $0x3c] sm:$0xf]
      %v210 = vunpack.c.l.b16 %v172
      %v211 = vunpack.c.l.b16 %v190
      %v212 = vpack.c.b16 %v211, %v210
      %v214 = vshrl.u32 %v212, 16
      %v216 = vshll.u32 %v212, 16
      %v218 = vrot.slane %v216, 1
      %v219 = vor.u32 %v214, %v218
      %v237 = vunpack.c.l.b16 %v192
      %v238 = vunpack.c.l.b16 %v193
      %v239 = vunpack.c.l.b16 %v194
      %v240 = vunpack.c.l.b16 %v195
      %v241 = vunpack.c.l.b16 %v196
      %v242 = vunpack.c.l.b16 %v197
      %v243 = vunpack.c.l.b16 %v198
      %v244 = vunpack.c.l.b16 %v199
      %v245 = vunpack.c.l.b16 %v200
      %v246 = vunpack.c.l.b16 %v201
      %v247 = vunpack.c.l.b16 %v202
      %v248 = vunpack.c.l.b16 %v203
      %v249 = vunpack.c.l.b16 %v204
      %v250 = vunpack.c.l.b16 %v205
      %v251 = vunpack.c.l.b16 %v206
      %v252 = vunpack.c.l.b16 %v207
      %v253 = vpack.c.b16 %v238, %v237
      %v254 = vpack.c.b16 %v240, %v239
      %v255 = vpack.c.b16 %v242, %v241
      %v256 = vpack.c.b16 %v244, %v243
      %v257 = vpack.c.b16 %v246, %v245
      %v258 = vpack.c.b16 %v248, %v247
      %v259 = vpack.c.b16 %v250, %v249
      %v260 = vpack.c.b16 %v252, %v251
      %269 = vmatprep.subr.bf16.mxu0 0
      %270 = vmatpush1.bf16.msra.mxu0 %v260
      %271 = vmatprep.subr.bf16.mxu0 0
      %272 = vmatpush1.bf16.msra.mxu0 %v259
      %273 = vmatprep.subr.bf16.mxu0 0
      %274 = vmatpush1.bf16.msra.mxu0 %v258
      %275 = vmatprep.subr.bf16.mxu0 0
      %276 = vmatpush1.bf16.msra.mxu0 %v257
      %277 = vmatprep.subr.bf16.mxu0 0
      %278 = vmatpush1.bf16.msra.mxu0 %v256
      %279 = vmatprep.subr.bf16.mxu0 0
      %280 = vmatpush1.bf16.msra.mxu0 %v255
      %281 = vmatprep.subr.bf16.mxu0 0
      %282 = vmatpush1.bf16.msra.mxu0 %v254
      %283 = vmatprep.subr.bf16.mxu0 0
      %284 = vmatpush1.bf16.msra.mxu0 %v253
      %285 = vmatprep.subr.bf16.mxu0 0
      %286 = vmatpush2.bf16.msra.mxu0 0
      %287 = vmatprep.subr.bf16.mxu0 0
      %288 = vmatpush2.bf16.msra.mxu0 0
      %289 = vmatprep.subr.bf16.mxu0 0
      %290 = vmatpush2.bf16.msra.mxu0 0
      %291 = vmatprep.subr.bf16.mxu0 0
      %292 = vmatpush2.bf16.msra.mxu0 0
      %293 = vmatprep.subr.bf16.mxu0 0
      %294 = vmatpush2.bf16.msra.mxu0 0
      %295 = vmatprep.subr.bf16.mxu0 0
      %296 = vmatpush2.bf16.msra.mxu0 0
      %297 = vmatprep.subr.bf16.mxu0 0
      %298 = vmatpush2.bf16.msra.mxu0 0
      %299 = vmatprep.subr.bf16.mxu0 0
      %300 = vmatpush2.bf16.msra.mxu0 0
      %301 = vmatprep.mubr.bf16.mxu0 0
      %302 = vmatmul.mubr.bf16.gmra.mxu0 %v219
      %v303 = vpop.f32.mrf.mxu0
      %v304 = vadd.f32 0.0, %v303
      %v305 = vpop.f32.mrf.mxu0
      %v306 = vpop.f32.mrf.mxu0
      %v307 = vadd.f32 0.0, %v306
      %v308 = vpop.f32.mrf.mxu0
      %309 = vdwg.mxu0
      %v311 = vunpack.c.l.b16 %v173
      %v312 = vpack.c.b16 %v311, %v210
      %v330 = vunpack.c.l.b16 %v174
      %v331 = vunpack.c.l.b16 %v175
      %v332 = vunpack.c.l.b16 %v176
      %v333 = vunpack.c.l.b16 %v177
      %v334 = vunpack.c.l.b16 %v178
      %v335 = vunpack.c.l.b16 %v179
      %v336 = vunpack.c.l.b16 %v180
      %v337 = vunpack.c.l.b16 %v181
      %v338 = vunpack.c.l.b16 %v182
      %v339 = vunpack.c.l.b16 %v183
      %v340 = vunpack.c.l.b16 %v184
      %v341 = vunpack.c.l.b16 %v185
      %v342 = vunpack.c.l.b16 %v186
      %v343 = vunpack.c.l.b16 %v187
      %v344 = vunpack.c.l.b16 %v188
      %v345 = vunpack.c.l.b16 %v189
      %v346 = vpack.c.b16 %v331, %v330
      %v347 = vpack.c.b16 %v333, %v332
      %v348 = vpack.c.b16 %v335, %v334
      %v349 = vpack.c.b16 %v337, %v336
      %v350 = vpack.c.b16 %v339, %v338
      %v351 = vpack.c.b16 %v341, %v340
      %v352 = vpack.c.b16 %v343, %v342
      %v353 = vpack.c.b16 %v345, %v344
      %362 = vmatprep.subr.bf16.mxu0 0
      %363 = vmatpush1.bf16.msra.mxu0 %v353
      %364 = vmatprep.subr.bf16.mxu0 0
      %365 = vmatpush1.bf16.msra.mxu0 %v352
      %366 = vmatprep.subr.bf16.mxu0 0
      %367 = vmatpush1.bf16.msra.mxu0 %v351
      %368 = vmatprep.subr.bf16.mxu0 0
      %369 = vmatpush1.bf16.msra.mxu0 %v350
      %370 = vmatprep.subr.bf16.mxu0 0
      %371 = vmatpush1.bf16.msra.mxu0 %v349
      %372 = vmatprep.subr.bf16.mxu0 0
      %373 = vmatpush1.bf16.msra.mxu0 %v348
      %374 = vmatprep.subr.bf16.mxu0 0
      %375 = vmatpush1.bf16.msra.mxu0 %v347
      %376 = vmatprep.subr.bf16.mxu0 0
      %377 = vmatpush1.bf16.msra.mxu0 %v346
      %378 = vmatprep.subr.bf16.mxu0 0
      %379 = vmatpush2.bf16.msra.mxu0 0
      %380 = vmatprep.subr.bf16.mxu0 0
      %381 = vmatpush2.bf16.msra.mxu0 0
      %382 = vmatprep.subr.bf16.mxu0 0
      %383 = vmatpush2.bf16.msra.mxu0 0
      %384 = vmatprep.subr.bf16.mxu0 0
      %385 = vmatpush2.bf16.msra.mxu0 0
      %386 = vmatprep.subr.bf16.mxu0 0
      %387 = vmatpush2.bf16.msra.mxu0 0
      %388 = vmatprep.subr.bf16.mxu0 0
      %389 = vmatpush2.bf16.msra.mxu0 0
      %390 = vmatprep.subr.bf16.mxu0 0
      %391 = vmatpush2.bf16.msra.mxu0 0
      %392 = vmatprep.subr.bf16.mxu0 0
      %393 = vmatpush2.bf16.msra.mxu0 0
      %394 = vmatprep.mubr.bf16.mxu0 0
      %395 = vmatmul.mubr.bf16.gmra.mxu0 %v312
      %v396 = vpop.f32.mrf.mxu0
      %v397 = vadd.f32 %v304, %v396
      %v398 = vpop.f32.mrf.mxu0
      %v399 = vpop.f32.mrf.mxu0
      %v400 = vadd.f32 %v307, %v399
      %v401 = vpop.f32.mrf.mxu0
      %402 = vdwg.mxu0
      %v403 = vld [vmem:[%s165] sm:$0xe]
      %s404 = scalar_lea.vmem %s1, 128
      %v405 = vld [vmem:[%s404] sm:$0xf]
      %v406 = vld [vmem:[%s404 + $0x4] sm:$0xf]
      %v407 = vld [vmem:[%s404 + $0x8] sm:$0xf]
      %v408 = vld [vmem:[%s404 + $0xc] sm:$0xf]
      %v409 = vld [vmem:[%s404 + $0x10] sm:$0xf]
      %v410 = vld [vmem:[%s404 + $0x14] sm:$0xf]
      %v411 = vld [vmem:[%s404 + $0x18] sm:$0xf]
      %v412 = vld [vmem:[%s404 + $0x1c] sm:$0xf]
      %v413 = vld [vmem:[%s404 + $0x20] sm:$0xf]
      %v414 = vld [vmem:[%s404 + $0x24] sm:$0xf]
      %v415 = vld [vmem:[%s404 + $0x28] sm:$0xf]
      %v416 = vld [vmem:[%s404 + $0x2c] sm:$0xf]
      %v417 = vld [vmem:[%s404 + $0x30] sm:$0xf]
      %v418 = vld [vmem:[%s404 + $0x34] sm:$0xf]
      %v419 = vld [vmem:[%s404 + $0x38] sm:$0xf]
      %v420 = vld [vmem:[%s404 + $0x3c] sm:$0xf]
      %v422 = vunpack.c.l.b16 %v403
      %v423 = vpack.c.b16 %v211, %v422
      %v424 = vrot.slane %v423, 1
      %v442 = vunpack.c.l.b16 %v405
      %v443 = vunpack.c.l.b16 %v406
      %v444 = vunpack.c.l.b16 %v407
      %v445 = vunpack.c.l.b16 %v408
      %v446 = vunpack.c.l.b16 %v409
      %v447 = vunpack.c.l.b16 %v410
      %v448 = vunpack.c.l.b16 %v411
      %v449 = vunpack.c.l.b16 %v412
      %v450 = vunpack.c.l.b16 %v413
      %v451 = vunpack.c.l.b16 %v414
      %v452 = vunpack.c.l.b16 %v415
      %v453 = vunpack.c.l.b16 %v416
      %v454 = vunpack.c.l.b16 %v417
      %v455 = vunpack.c.l.b16 %v418
      %v456 = vunpack.c.l.b16 %v419
      %v457 = vunpack.c.l.b16 %v420
      %v458 = vpack.c.b16 %v443, %v442
      %v459 = vpack.c.b16 %v445, %v444
      %v460 = vpack.c.b16 %v447, %v446
      %v461 = vpack.c.b16 %v449, %v448
      %v462 = vpack.c.b16 %v451, %v450
      %v463 = vpack.c.b16 %v453, %v452
      %v464 = vpack.c.b16 %v455, %v454
      %v465 = vpack.c.b16 %v457, %v456
      %474 = vmatprep.subr.bf16.mxu0 0
      %475 = vmatpush1.bf16.msra.mxu0 %v465
      %476 = vmatprep.subr.bf16.mxu0 0
      %477 = vmatpush1.bf16.msra.mxu0 %v464
      %478 = vmatprep.subr.bf16.mxu0 0
      %479 = vmatpush1.bf16.msra.mxu0 %v463
      %480 = vmatprep.subr.bf16.mxu0 0
      %481 = vmatpush1.bf16.msra.mxu0 %v462
      %482 = vmatprep.subr.bf16.mxu0 0
      %483 = vmatpush1.bf16.msra.mxu0 %v461
      %484 = vmatprep.subr.bf16.mxu0 0
      %485 = vmatpush1.bf16.msra.mxu0 %v460
      %486 = vmatprep.subr.bf16.mxu0 0
      %487 = vmatpush1.bf16.msra.mxu0 %v459
      %488 = vmatprep.subr.bf16.mxu0 0
      %489 = vmatpush1.bf16.msra.mxu0 %v458
      %490 = vmatprep.subr.bf16.mxu0 0
      %491 = vmatpush2.bf16.msra.mxu0 0
      %492 = vmatprep.subr.bf16.mxu0 0
      %493 = vmatpush2.bf16.msra.mxu0 0
      %494 = vmatprep.subr.bf16.mxu0 0
      %495 = vmatpush2.bf16.msra.mxu0 0
      %496 = vmatprep.subr.bf16.mxu0 0
      %497 = vmatpush2.bf16.msra.mxu0 0
      %498 = vmatprep.subr.bf16.mxu0 0
      %499 = vmatpush2.bf16.msra.mxu0 0
      %500 = vmatprep.subr.bf16.mxu0 0
      %501 = vmatpush2.bf16.msra.mxu0 0
      %502 = vmatprep.subr.bf16.mxu0 0
      %503 = vmatpush2.bf16.msra.mxu0 0
      %504 = vmatprep.subr.bf16.mxu0 0
      %505 = vmatpush2.bf16.msra.mxu0 0
      %506 = vmatprep.mubr.bf16.mxu0 0
      %507 = vmatmul.mubr.bf16.gmra.mxu0 %v424
      %v508 = vpop.f32.mrf.mxu0
      %v509 = vadd.f32 0.0, %v508
      %v510 = vpop.f32.mrf.mxu0
      %v511 = vpop.f32.mrf.mxu0
      %v512 = vadd.f32 0.0, %v511
      %v513 = vpop.f32.mrf.mxu0
      %514 = vdwg.mxu0
      %v515 = vadd.f32 %v397, %v509
      %v516 = vadd.f32 %v400, %v512
      %v517 = vld [vmem:[%s165 + $0x4] sm:$0x7]
      %s518 = scalar_lea.vmem %s1, 192
      %v519 = vld [vmem:[%s518] sm:$0xf]
      %v520 = vld [vmem:[%s518 + $0x4] sm:$0xf]
      %v521 = vld [vmem:[%s518 + $0x8] sm:$0xf]
      %v522 = vld [vmem:[%s518 + $0xc] sm:$0xf]
      %v523 = vld [vmem:[%s518 + $0x10] sm:$0xf]
      %v524 = vld [vmem:[%s518 + $0x14] sm:$0xf]
      %v525 = vld [vmem:[%s518 + $0x18] sm:$0xf]
      %v526 = vld [vmem:[%s518 + $0x1c] sm:$0xf]
      %v527 = vld [vmem:[%s518 + $0x20] sm:$0xf]
      %v528 = vld [vmem:[%s518 + $0x24] sm:$0xf]
      %v529 = vld [vmem:[%s518 + $0x28] sm:$0xf]
      %v530 = vld [vmem:[%s518 + $0x2c] sm:$0xf]
      %v531 = vld [vmem:[%s518 + $0x30] sm:$0xf]
      %v532 = vld [vmem:[%s518 + $0x34] sm:$0xf]
      %v533 = vld [vmem:[%s518 + $0x38] sm:$0xf]
      %v534 = vld [vmem:[%s518 + $0x3c] sm:$0xf]
      %v536 = vunpack.c.l.b16 %v517
      %v537 = vpack.c.b16 %v536, %v422
      %v539 = vshrl.u32 %v537, 16
      %v541 = vrot.slane %v539, 1
      %v542 = vshll.u32 %v537, 16
      %v544 = vrot.slane %v542, 2
      %v545 = vor.u32 %v541, %v544
      %v563 = vunpack.c.l.b16 %v519
      %v564 = vunpack.c.l.b16 %v520
      %v565 = vunpack.c.l.b16 %v521
      %v566 = vunpack.c.l.b16 %v522
      %v567 = vunpack.c.l.b16 %v523
      %v568 = vunpack.c.l.b16 %v524
      %v569 = vunpack.c.l.b16 %v525
      %v570 = vunpack.c.l.b16 %v526
      %v571 = vunpack.c.l.b16 %v527
      %v572 = vunpack.c.l.b16 %v528
      %v573 = vunpack.c.l.b16 %v529
      %v574 = vunpack.c.l.b16 %v530
      %v575 = vunpack.c.l.b16 %v531
      %v576 = vunpack.c.l.b16 %v532
      %v577 = vunpack.c.l.b16 %v533
      %v578 = vunpack.c.l.b16 %v534
      %v579 = vpack.c.b16 %v564, %v563
      %v580 = vpack.c.b16 %v566, %v565
      %v581 = vpack.c.b16 %v568, %v567
      %v582 = vpack.c.b16 %v570, %v569
      %v583 = vpack.c.b16 %v572, %v571
      %v584 = vpack.c.b16 %v574, %v573
      %v585 = vpack.c.b16 %v576, %v575
      %v586 = vpack.c.b16 %v578, %v577
      %595 = vmatprep.subr.bf16.mxu0 0
      %596 = vmatpush1.bf16.msra.mxu0 %v586
      %597 = vmatprep.subr.bf16.mxu0 0
      %598 = vmatpush1.bf16.msra.mxu0 %v585
      %599 = vmatprep.subr.bf16.mxu0 0
      %600 = vmatpush1.bf16.msra.mxu0 %v584
      %601 = vmatprep.subr.bf16.mxu0 0
      %602 = vmatpush1.bf16.msra.mxu0 %v583
      %603 = vmatprep.subr.bf16.mxu0 0
      %604 = vmatpush1.bf16.msra.mxu0 %v582
      %605 = vmatprep.subr.bf16.mxu0 0
      %606 = vmatpush1.bf16.msra.mxu0 %v581
      %607 = vmatprep.subr.bf16.mxu0 0
      %608 = vmatpush1.bf16.msra.mxu0 %v580
      %609 = vmatprep.subr.bf16.mxu0 0
      %610 = vmatpush1.bf16.msra.mxu0 %v579
      %611 = vmatprep.subr.bf16.mxu0 0
      %612 = vmatpush2.bf16.msra.mxu0 0
      %613 = vmatprep.subr.bf16.mxu0 0
      %614 = vmatpush2.bf16.msra.mxu0 0
      %615 = vmatprep.subr.bf16.mxu0 0
      %616 = vmatpush2.bf16.msra.mxu0 0
      %617 = vmatprep.subr.bf16.mxu0 0
      %618 = vmatpush2.bf16.msra.mxu0 0
      %619 = vmatprep.subr.bf16.mxu0 0
      %620 = vmatpush2.bf16.msra.mxu0 0
      %621 = vmatprep.subr.bf16.mxu0 0
      %622 = vmatpush2.bf16.msra.mxu0 0
      %623 = vmatprep.subr.bf16.mxu0 0
      %624 = vmatpush2.bf16.msra.mxu0 0
      %625 = vmatprep.subr.bf16.mxu0 0
      %626 = vmatpush2.bf16.msra.mxu0 0
      %627 = vmatprep.mubr.bf16.mxu0 0
      %628 = vmatmul.mubr.bf16.gmra.mxu0 %v545
      %v629 = vpop.f32.mrf.mxu0
      %v630 = vadd.f32 0.0, %v629
      %v631 = vpop.f32.mrf.mxu0
      %v632 = vpop.f32.mrf.mxu0
      %v633 = vadd.f32 0.0, %v632
      %v634 = vpop.f32.mrf.mxu0
      %635 = vdwg.mxu0
      %v636 = vadd.f32 %v515, %v630
      %v637 = vadd.f32 %v516, %v633
      %v638 = vld [vmem:[%s165] sm:$0xc]
      %v639 = vld [vmem:[%s165 + $0x4] sm:$0xf]
      %s640 = scalar_lea.vmem %s1, 256
      %v641 = vld [vmem:[%s640] sm:$0xf]
      %v642 = vld [vmem:[%s640 + $0x4] sm:$0xf]
      %v643 = vld [vmem:[%s640 + $0x8] sm:$0xf]
      %v644 = vld [vmem:[%s640 + $0xc] sm:$0xf]
      %v645 = vld [vmem:[%s640 + $0x10] sm:$0xf]
      %v646 = vld [vmem:[%s640 + $0x14] sm:$0xf]
      %v647 = vld [vmem:[%s640 + $0x18] sm:$0xf]
      %v648 = vld [vmem:[%s640 + $0x1c] sm:$0xf]
      %v649 = vld [vmem:[%s640 + $0x20] sm:$0xf]
      %v650 = vld [vmem:[%s640 + $0x24] sm:$0xf]
      %v651 = vld [vmem:[%s640 + $0x28] sm:$0xf]
      %v652 = vld [vmem:[%s640 + $0x2c] sm:$0xf]
      %v653 = vld [vmem:[%s640 + $0x30] sm:$0xf]
      %v654 = vld [vmem:[%s640 + $0x34] sm:$0xf]
      %v655 = vld [vmem:[%s640 + $0x38] sm:$0xf]
      %v656 = vld [vmem:[%s640 + $0x3c] sm:$0xf]
      %v659 = vunpack.c.l.b16 %v638
      %v660 = vunpack.c.l.b16 %v639
      %v661 = vpack.c.b16 %v660, %v659
      %v663 = vshrl.u32 %v661, 16
      %v665 = vrot.slane %v663, 2
      %v666 = vshll.u32 %v661, 16
      %v668 = vrot.slane %v666, 3
      %v669 = vor.u32 %v665, %v668
      %v687 = vunpack.c.l.b16 %v641
      %v688 = vunpack.c.l.b16 %v642
      %v689 = vunpack.c.l.b16 %v643
      %v690 = vunpack.c.l.b16 %v644
      %v691 = vunpack.c.l.b16 %v645
      %v692 = vunpack.c.l.b16 %v646
      %v693 = vunpack.c.l.b16 %v647
      %v694 = vunpack.c.l.b16 %v648
      %v695 = vunpack.c.l.b16 %v649
      %v696 = vunpack.c.l.b16 %v650
      %v697 = vunpack.c.l.b16 %v651
      %v698 = vunpack.c.l.b16 %v652
      %v699 = vunpack.c.l.b16 %v653
      %v700 = vunpack.c.l.b16 %v654
      %v701 = vunpack.c.l.b16 %v655
      %v702 = vunpack.c.l.b16 %v656
      %v703 = vpack.c.b16 %v688, %v687
      %v704 = vpack.c.b16 %v690, %v689
      %v705 = vpack.c.b16 %v692, %v691
      %v706 = vpack.c.b16 %v694, %v693
      %v707 = vpack.c.b16 %v696, %v695
      %v708 = vpack.c.b16 %v698, %v697
      %v709 = vpack.c.b16 %v700, %v699
      %v710 = vpack.c.b16 %v702, %v701
      %719 = vmatprep.subr.bf16.mxu0 0
      %720 = vmatpush1.bf16.msra.mxu0 %v710
      %721 = vmatprep.subr.bf16.mxu0 0
      %722 = vmatpush1.bf16.msra.mxu0 %v709
      %723 = vmatprep.subr.bf16.mxu0 0
      %724 = vmatpush1.bf16.msra.mxu0 %v708
      %725 = vmatprep.subr.bf16.mxu0 0
      %726 = vmatpush1.bf16.msra.mxu0 %v707
      %727 = vmatprep.subr.bf16.mxu0 0
      %728 = vmatpush1.bf16.msra.mxu0 %v706
      %729 = vmatprep.subr.bf16.mxu0 0
      %730 = vmatpush1.bf16.msra.mxu0 %v705
      %731 = vmatprep.subr.bf16.mxu0 0
      %732 = vmatpush1.bf16.msra.mxu0 %v704
      %733 = vmatprep.subr.bf16.mxu0 0
      %734 = vmatpush1.bf16.msra.mxu0 %v703
      %735 = vmatprep.subr.bf16.mxu0 0
      %736 = vmatpush2.bf16.msra.mxu0 0
      %737 = vmatprep.subr.bf16.mxu0 0
      %738 = vmatpush2.bf16.msra.mxu0 0
      %739 = vmatprep.subr.bf16.mxu0 0
      %740 = vmatpush2.bf16.msra.mxu0 0
      %741 = vmatprep.subr.bf16.mxu0 0
      %742 = vmatpush2.bf16.msra.mxu0 0
      %743 = vmatprep.subr.bf16.mxu0 0
      %744 = vmatpush2.bf16.msra.mxu0 0
      %745 = vmatprep.subr.bf16.mxu0 0
      %746 = vmatpush2.bf16.msra.mxu0 0
      %747 = vmatprep.subr.bf16.mxu0 0
      %748 = vmatpush2.bf16.msra.mxu0 0
      %749 = vmatprep.subr.bf16.mxu0 0
      %750 = vmatpush2.bf16.msra.mxu0 0
      %751 = vmatprep.mubr.bf16.mxu0 0
      %752 = vmatmul.mubr.bf16.gmra.mxu0 %v669
      %v753 = vpop.f32.mrf.mxu0
      %v754 = vadd.f32 0.0, %v753
      %v755 = vpop.f32.mrf.mxu0
      %v756 = vpop.f32.mrf.mxu0
      %v757 = vadd.f32 0.0, %v756
      %v758 = vpop.f32.mrf.mxu0
      %759 = vdwg.mxu0
      %v760 = vadd.f32 %v636, %v754
      %v761 = vadd.f32 %v637, %v757
      %v762 = vld [vmem:[%s165] sm:$0x8]
      %s763 = scalar_lea.vmem %s1, 320
      %v764 = vld [vmem:[%s763] sm:$0xf]
      %v765 = vld [vmem:[%s763 + $0x4] sm:$0xf]
      %v766 = vld [vmem:[%s763 + $0x8] sm:$0xf]
      %v767 = vld [vmem:[%s763 + $0xc] sm:$0xf]
      %v768 = vld [vmem:[%s763 + $0x10] sm:$0xf]
      %v769 = vld [vmem:[%s763 + $0x14] sm:$0xf]
      %v770 = vld [vmem:[%s763 + $0x18] sm:$0xf]
      %v771 = vld [vmem:[%s763 + $0x1c] sm:$0xf]
      %v772 = vld [vmem:[%s763 + $0x20] sm:$0xf]
      %v773 = vld [vmem:[%s763 + $0x24] sm:$0xf]
      %v774 = vld [vmem:[%s763 + $0x28] sm:$0xf]
      %v775 = vld [vmem:[%s763 + $0x2c] sm:$0xf]
      %v776 = vld [vmem:[%s763 + $0x30] sm:$0xf]
      %v777 = vld [vmem:[%s763 + $0x34] sm:$0xf]
      %v778 = vld [vmem:[%s763 + $0x38] sm:$0xf]
      %v779 = vld [vmem:[%s763 + $0x3c] sm:$0xf]
      %v781 = vunpack.c.l.b16 %v762
      %v782 = vpack.c.b16 %v660, %v781
      %v783 = vrot.slane %v782, 3
      %v801 = vunpack.c.l.b16 %v764
      %v802 = vunpack.c.l.b16 %v765
      %v803 = vunpack.c.l.b16 %v766
      %v804 = vunpack.c.l.b16 %v767
      %v805 = vunpack.c.l.b16 %v768
      %v806 = vunpack.c.l.b16 %v769
      %v807 = vunpack.c.l.b16 %v770
      %v808 = vunpack.c.l.b16 %v771
      %v809 = vunpack.c.l.b16 %v772
      %v810 = vunpack.c.l.b16 %v773
      %v811 = vunpack.c.l.b16 %v774
      %v812 = vunpack.c.l.b16 %v775
      %v813 = vunpack.c.l.b16 %v776
      %v814 = vunpack.c.l.b16 %v777
      %v815 = vunpack.c.l.b16 %v778
      %v816 = vunpack.c.l.b16 %v779
      %v817 = vpack.c.b16 %v802, %v801
      %v818 = vpack.c.b16 %v804, %v803
      %v819 = vpack.c.b16 %v806, %v805
      %v820 = vpack.c.b16 %v808, %v807
      %v821 = vpack.c.b16 %v810, %v809
      %v822 = vpack.c.b16 %v812, %v811
      %v823 = vpack.c.b16 %v814, %v813
      %v824 = vpack.c.b16 %v816, %v815
      %833 = vmatprep.subr.bf16.mxu0 0
      %834 = vmatpush1.bf16.msra.mxu0 %v824
      %835 = vmatprep.subr.bf16.mxu0 0
      %836 = vmatpush1.bf16.msra.mxu0 %v823
      %837 = vmatprep.subr.bf16.mxu0 0
      %838 = vmatpush1.bf16.msra.mxu0 %v822
      %839 = vmatprep.subr.bf16.mxu0 0
      %840 = vmatpush1.bf16.msra.mxu0 %v821
      %841 = vmatprep.subr.bf16.mxu0 0
      %842 = vmatpush1.bf16.msra.mxu0 %v820
      %843 = vmatprep.subr.bf16.mxu0 0
      %844 = vmatpush1.bf16.msra.mxu0 %v819
      %845 = vmatprep.subr.bf16.mxu0 0
      %846 = vmatpush1.bf16.msra.mxu0 %v818
      %847 = vmatprep.subr.bf16.mxu0 0
      %848 = vmatpush1.bf16.msra.mxu0 %v817
      %849 = vmatprep.subr.bf16.mxu0 0
      %850 = vmatpush2.bf16.msra.mxu0 0
      %851 = vmatprep.subr.bf16.mxu0 0
      %852 = vmatpush2.bf16.msra.mxu0 0
      %853 = vmatprep.subr.bf16.mxu0 0
      %854 = vmatpush2.bf16.msra.mxu0 0
      %855 = vmatprep.subr.bf16.mxu0 0
      %856 = vmatpush2.bf16.msra.mxu0 0
      %857 = vmatprep.subr.bf16.mxu0 0
      %858 = vmatpush2.bf16.msra.mxu0 0
      %859 = vmatprep.subr.bf16.mxu0 0
      %860 = vmatpush2.bf16.msra.mxu0 0
      %861 = vmatprep.subr.bf16.mxu0 0
      %862 = vmatpush2.bf16.msra.mxu0 0
      %863 = vmatprep.subr.bf16.mxu0 0
      %864 = vmatpush2.bf16.msra.mxu0 0
      %865 = vmatprep.mubr.bf16.mxu0 0
      %866 = vmatmul.mubr.bf16.gmra.mxu0 %v783
      %v867 = vpop.f32.mrf.mxu0
      %v868 = vadd.f32 0.0, %v867
      %v869 = vpop.f32.mrf.mxu0
      %v870 = vpop.f32.mrf.mxu0
      %v871 = vadd.f32 0.0, %v870
      %v872 = vpop.f32.mrf.mxu0
      %873 = vdwg.mxu0
      %v874 = vadd.f32 %v760, %v868
      %v875 = vadd.f32 %v761, %v871
      %v876 = vld [vmem:[%s165] sm:$0x8]
      %v877 = vld [vmem:[%s165 + $0x4] sm:$0xf]
      %v878 = vld [vmem:[%s165 + $0x8] sm:$0x1]
      %s879 = scalar_lea.vmem %s1, 384
      %v880 = vld [vmem:[%s879] sm:$0xf]
      %v881 = vld [vmem:[%s879 + $0x4] sm:$0xf]
      %v882 = vld [vmem:[%s879 + $0x8] sm:$0xf]
      %v883 = vld [vmem:[%s879 + $0xc] sm:$0xf]
      %v884 = vld [vmem:[%s879 + $0x10] sm:$0xf]
      %v885 = vld [vmem:[%s879 + $0x14] sm:$0xf]
      %v886 = vld [vmem:[%s879 + $0x18] sm:$0xf]
      %v887 = vld [vmem:[%s879 + $0x1c] sm:$0xf]
      %v888 = vld [vmem:[%s879 + $0x20] sm:$0xf]
      %v889 = vld [vmem:[%s879 + $0x24] sm:$0xf]
      %v890 = vld [vmem:[%s879 + $0x28] sm:$0xf]
      %v891 = vld [vmem:[%s879 + $0x2c] sm:$0xf]
      %v892 = vld [vmem:[%s879 + $0x30] sm:$0xf]
      %v893 = vld [vmem:[%s879 + $0x34] sm:$0xf]
      %v894 = vld [vmem:[%s879 + $0x38] sm:$0xf]
      %v895 = vld [vmem:[%s879 + $0x3c] sm:$0xf]
      %v899 = vunpack.c.l.b16 %v876
      %v900 = vunpack.c.l.b16 %v877
      %v901 = vunpack.c.l.b16 %v878
      %v902 = vpack.c.b16 %v900, %v899
      %v903 = vpack.c.b16 %v901, %v901
      %vm904 = vsmask.f32 4352
      %v906 = vshrl.u32 %v902, 16
      %v908 = vrot.slane %v906, 3
      %v909 = vshll.u32 %v902, 16
      %v911 = vrot.slane %v909, 4
      %v912 = vor.u32 %v908, %v911
      %v914 = vshll.u32 %v903, 16
      %v916 = vrot.slane %v914, 4
      %v917 = vsel %vm904, %v912, %v916
      %v935 = vunpack.c.l.b16 %v880
      %v936 = vunpack.c.l.b16 %v881
      %v937 = vunpack.c.l.b16 %v882
      %v938 = vunpack.c.l.b16 %v883
      %v939 = vunpack.c.l.b16 %v884
      %v940 = vunpack.c.l.b16 %v885
      %v941 = vunpack.c.l.b16 %v886
      %v942 = vunpack.c.l.b16 %v887
      %v943 = vunpack.c.l.b16 %v888
      %v944 = vunpack.c.l.b16 %v889
      %v945 = vunpack.c.l.b16 %v890
      %v946 = vunpack.c.l.b16 %v891
      %v947 = vunpack.c.l.b16 %v892
      %v948 = vunpack.c.l.b16 %v893
      %v949 = vunpack.c.l.b16 %v894
      %v950 = vunpack.c.l.b16 %v895
      %v951 = vpack.c.b16 %v936, %v935
      %v952 = vpack.c.b16 %v938, %v937
      %v953 = vpack.c.b16 %v940, %v939
      %v954 = vpack.c.b16 %v942, %v941
      %v955 = vpack.c.b16 %v944, %v943
      %v956 = vpack.c.b16 %v946, %v945
      %v957 = vpack.c.b16 %v948, %v947
      %v958 = vpack.c.b16 %v950, %v949
      %967 = vmatprep.subr.bf16.mxu0 0
      %968 = vmatpush1.bf16.msra.mxu0 %v958
      %969 = vmatprep.subr.bf16.mxu0 0
      %970 = vmatpush1.bf16.msra.mxu0 %v957
      %971 = vmatprep.subr.bf16.mxu0 0
      %972 = vmatpush1.bf16.msra.mxu0 %v956
      %973 = vmatprep.subr.bf16.mxu0 0
      %974 = vmatpush1.bf16.msra.mxu0 %v955
      %975 = vmatprep.subr.bf16.mxu0 0
      %976 = vmatpush1.bf16.msra.mxu0 %v954
      %977 = vmatprep.subr.bf16.mxu0 0
      %978 = vmatpush1.bf16.msra.mxu0 %v953
      %979 = vmatprep.subr.bf16.mxu0 0
      %980 = vmatpush1.bf16.msra.mxu0 %v952
      %981 = vmatprep.subr.bf16.mxu0 0
      %982 = vmatpush1.bf16.msra.mxu0 %v951
      %983 = vmatprep.subr.bf16.mxu0 0
      %984 = vmatpush2.bf16.msra.mxu0 0
      %985 = vmatprep.subr.bf16.mxu0 0
      %986 = vmatpush2.bf16.msra.mxu0 0
      %987 = vmatprep.subr.bf16.mxu0 0
      %988 = vmatpush2.bf16.msra.mxu0 0
      %989 = vmatprep.subr.bf16.mxu0 0
      %990 = vmatpush2.bf16.msra.mxu0 0
      %991 = vmatprep.subr.bf16.mxu0 0
      %992 = vmatpush2.bf16.msra.mxu0 0
      %993 = vmatprep.subr.bf16.mxu0 0
      %994 = vmatpush2.bf16.msra.mxu0 0
      %995 = vmatprep.subr.bf16.mxu0 0
      %996 = vmatpush2.bf16.msra.mxu0 0
      %997 = vmatprep.subr.bf16.mxu0 0
      %998 = vmatpush2.bf16.msra.mxu0 0
      %999 = vmatprep.mubr.bf16.mxu0 0
      %1000 = vmatmul.mubr.bf16.gmra.mxu0 %v917
      %v1001 = vpop.f32.mrf.mxu0
      %v1002 = vadd.f32 0.0, %v1001
      %v1003 = vpop.f32.mrf.mxu0
      %v1004 = vpop.f32.mrf.mxu0
      %v1005 = vadd.f32 0.0, %v1004
      %v1006 = vpop.f32.mrf.mxu0
      %1007 = vdwg.mxu0
      %v1008 = vadd.f32 %v874, %v1002
      %v1009 = vadd.f32 %v875, %v1005
      %s1010 = scalar_lea.vmem %s1, 448
      %v1011 = vld [vmem:[%s1010] sm:$0xf]
      %v1012 = vld [vmem:[%s1010 + $0x4] sm:$0xf]
      %v1013 = vld [vmem:[%s1010 + $0x8] sm:$0xf]
      %v1014 = vld [vmem:[%s1010 + $0xc] sm:$0xf]
      %v1015 = vld [vmem:[%s1010 + $0x10] sm:$0xf]
      %v1016 = vld [vmem:[%s1010 + $0x14] sm:$0xf]
      %v1017 = vld [vmem:[%s1010 + $0x18] sm:$0xf]
      %v1018 = vld [vmem:[%s1010 + $0x1c] sm:$0xf]
      %v1019 = vld [vmem:[%s1010 + $0x20] sm:$0xf]
      %v1020 = vld [vmem:[%s1010 + $0x24] sm:$0xf]
      %v1021 = vld [vmem:[%s1010 + $0x28] sm:$0xf]
      %v1022 = vld [vmem:[%s1010 + $0x2c] sm:$0xf]
      %v1023 = vld [vmem:[%s1010 + $0x30] sm:$0xf]
      %v1024 = vld [vmem:[%s1010 + $0x34] sm:$0xf]
      %v1025 = vld [vmem:[%s1010 + $0x38] sm:$0xf]
      %v1026 = vld [vmem:[%s1010 + $0x3c] sm:$0xf]
      %v1027 = vpack.c.b16 %v901, %v900
      %v1045 = vunpack.c.l.b16 %v1011
      %v1046 = vunpack.c.l.b16 %v1012
      %v1047 = vunpack.c.l.b16 %v1013
      %v1048 = vunpack.c.l.b16 %v1014
      %v1049 = vunpack.c.l.b16 %v1015
      %v1050 = vunpack.c.l.b16 %v1016
      %v1051 = vunpack.c.l.b16 %v1017
      %v1052 = vunpack.c.l.b16 %v1018
      %v1053 = vunpack.c.l.b16 %v1019
      %v1054 = vunpack.c.l.b16 %v1020
      %v1055 = vunpack.c.l.b16 %v1021
      %v1056 = vunpack.c.l.b16 %v1022
      %v1057 = vunpack.c.l.b16 %v1023
      %v1058 = vunpack.c.l.b16 %v1024
      %v1059 = vunpack.c.l.b16 %v1025
      %v1060 = vunpack.c.l.b16 %v1026
      %v1061 = vpack.c.b16 %v1046, %v1045
      %v1062 = vpack.c.b16 %v1048, %v1047
      %v1063 = vpack.c.b16 %v1050, %v1049
      %v1064 = vpack.c.b16 %v1052, %v1051
      %v1065 = vpack.c.b16 %v1054, %v1053
      %v1066 = vpack.c.b16 %v1056, %v1055
      %v1067 = vpack.c.b16 %v1058, %v1057
      %v1068 = vpack.c.b16 %v1060, %v1059
      %1077 = vmatprep.subr.bf16.mxu0 0
      %1078 = vmatpush1.bf16.msra.mxu0 %v1068
      %1079 = vmatprep.subr.bf16.mxu0 0
      %1080 = vmatpush1.bf16.msra.mxu0 %v1067
      %1081 = vmatprep.subr.bf16.mxu0 0
      %1082 = vmatpush1.bf16.msra.mxu0 %v1066
      %1083 = vmatprep.subr.bf16.mxu0 0
      %1084 = vmatpush1.bf16.msra.mxu0 %v1065
      %1085 = vmatprep.subr.bf16.mxu0 0
      %1086 = vmatpush1.bf16.msra.mxu0 %v1064
      %1087 = vmatprep.subr.bf16.mxu0 0
      %1088 = vmatpush1.bf16.msra.mxu0 %v1063
      %1089 = vmatprep.subr.bf16.mxu0 0
      %1090 = vmatpush1.bf16.msra.mxu0 %v1062
      %1091 = vmatprep.subr.bf16.mxu0 0
      %1092 = vmatpush1.bf16.msra.mxu0 %v1061
      %1093 = vmatprep.subr.bf16.mxu0 0
      %1094 = vmatpush2.bf16.msra.mxu0 0
      %1095 = vmatprep.subr.bf16.mxu0 0
      %1096 = vmatpush2.bf16.msra.mxu0 0
      %1097 = vmatprep.subr.bf16.mxu0 0
      %1098 = vmatpush2.bf16.msra.mxu0 0
      %1099 = vmatprep.subr.bf16.mxu0 0
      %1100 = vmatpush2.bf16.msra.mxu0 0
      %1101 = vmatprep.subr.bf16.mxu0 0
      %1102 = vmatpush2.bf16.msra.mxu0 0
      %1103 = vmatprep.subr.bf16.mxu0 0
      %1104 = vmatpush2.bf16.msra.mxu0 0
      %1105 = vmatprep.subr.bf16.mxu0 0
      %1106 = vmatpush2.bf16.msra.mxu0 0
      %1107 = vmatprep.subr.bf16.mxu0 0
      %1108 = vmatpush2.bf16.msra.mxu0 0
      %1109 = vmatprep.mubr.bf16.mxu0 0
      %1110 = vmatmul.mubr.bf16.gmra.mxu0 %v1027
      %v1111 = vpop.f32.mrf.mxu0
      %v1112 = vadd.f32 0.0, %v1111
      %v1113 = vpop.f32.mrf.mxu0
      %v1114 = vpop.f32.mrf.mxu0
      %v1115 = vadd.f32 0.0, %v1114
      %v1116 = vpop.f32.mrf.mxu0
      %1117 = vdwg.mxu0
      %v1118 = vadd.f32 %v1008, %v1112
      %v1119 = vadd.f32 %v1009, %v1115
      %v1120 = vld [vmem:[%s165 + $0x4] sm:$0xe]
      %v1121 = vld [vmem:[%s165 + $0x8] sm:$0x3]
      %s1122 = scalar_lea.vmem %s1, 512
      %v1123 = vld [vmem:[%s1122] sm:$0xf]
      %v1124 = vld [vmem:[%s1122 + $0x4] sm:$0xf]
      %v1125 = vld [vmem:[%s1122 + $0x8] sm:$0xf]
      %v1126 = vld [vmem:[%s1122 + $0xc] sm:$0xf]
      %v1127 = vld [vmem:[%s1122 + $0x10] sm:$0xf]
      %v1128 = vld [vmem:[%s1122 + $0x14] sm:$0xf]
      %v1129 = vld [vmem:[%s1122 + $0x18] sm:$0xf]
      %v1130 = vld [vmem:[%s1122 + $0x1c] sm:$0xf]
      %v1131 = vld [vmem:[%s1122 + $0x20] sm:$0xf]
      %v1132 = vld [vmem:[%s1122 + $0x24] sm:$0xf]
      %v1133 = vld [vmem:[%s1122 + $0x28] sm:$0xf]
      %v1134 = vld [vmem:[%s1122 + $0x2c] sm:$0xf]
      %v1135 = vld [vmem:[%s1122 + $0x30] sm:$0xf]
      %v1136 = vld [vmem:[%s1122 + $0x34] sm:$0xf]
      %v1137 = vld [vmem:[%s1122 + $0x38] sm:$0xf]
      %v1138 = vld [vmem:[%s1122 + $0x3c] sm:$0xf]
      %v1141 = vunpack.c.l.b16 %v1120
      %v1142 = vunpack.c.l.b16 %v1121
      %v1143 = vpack.c.b16 %v1142, %v1141
      %v1144 = vrot.slane %v1143, 1
      %v1162 = vunpack.c.l.b16 %v1123
      %v1163 = vunpack.c.l.b16 %v1124
      %v1164 = vunpack.c.l.b16 %v1125
      %v1165 = vunpack.c.l.b16 %v1126
      %v1166 = vunpack.c.l.b16 %v1127
      %v1167 = vunpack.c.l.b16 %v1128
      %v1168 = vunpack.c.l.b16 %v1129
      %v1169 = vunpack.c.l.b16 %v1130
      %v1170 = vunpack.c.l.b16 %v1131
      %v1171 = vunpack.c.l.b16 %v1132
      %v1172 = vunpack.c.l.b16 %v1133
      %v1173 = vunpack.c.l.b16 %v1134
      %v1174 = vunpack.c.l.b16 %v1135
      %v1175 = vunpack.c.l.b16 %v1136
      %v1176 = vunpack.c.l.b16 %v1137
      %v1177 = vunpack.c.l.b16 %v1138
      %v1178 = vpack.c.b16 %v1163, %v1162
      %v1179 = vpack.c.b16 %v1165, %v1164
      %v1180 = vpack.c.b16 %v1167, %v1166
      %v1181 = vpack.c.b16 %v1169, %v1168
      %v1182 = vpack.c.b16 %v1171, %v1170
      %v1183 = vpack.c.b16 %v1173, %v1172
      %v1184 = vpack.c.b16 %v1175, %v1174
      %v1185 = vpack.c.b16 %v1177, %v1176
      %1194 = vmatprep.subr.bf16.mxu0 0
      %1195 = vmatpush1.bf16.msra.mxu0 %v1185
      %1196 = vmatprep.subr.bf16.mxu0 0
      %1197 = vmatpush1.bf16.msra.mxu0 %v1184
      %1198 = vmatprep.subr.bf16.mxu0 0
      %1199 = vmatpush1.bf16.msra.mxu0 %v1183
      %1200 = vmatprep.subr.bf16.mxu0 0
      %1201 = vmatpush1.bf16.msra.mxu0 %v1182
      %1202 = vmatprep.subr.bf16.mxu0 0
      %1203 = vmatpush1.bf16.msra.mxu0 %v1181
      %1204 = vmatprep.subr.bf16.mxu0 0
      %1205 = vmatpush1.bf16.msra.mxu0 %v1180
      %1206 = vmatprep.subr.bf16.mxu0 0
      %1207 = vmatpush1.bf16.msra.mxu0 %v1179
      %1208 = vmatprep.subr.bf16.mxu0 0
      %1209 = vmatpush1.bf16.msra.mxu0 %v1178
      %1210 = vmatprep.subr.bf16.mxu0 0
      %1211 = vmatpush2.bf16.msra.mxu0 0
      %1212 = vmatprep.subr.bf16.mxu0 0
      %1213 = vmatpush2.bf16.msra.mxu0 0
      %1214 = vmatprep.subr.bf16.mxu0 0
      %1215 = vmatpush2.bf16.msra.mxu0 0
      %1216 = vmatprep.subr.bf16.mxu0 0
      %1217 = vmatpush2.bf16.msra.mxu0 0
      %1218 = vmatprep.subr.bf16.mxu0 0
      %1219 = vmatpush2.bf16.msra.mxu0 0
      %1220 = vmatprep.subr.bf16.mxu0 0
      %1221 = vmatpush2.bf16.msra.mxu0 0
      %1222 = vmatprep.subr.bf16.mxu0 0
      %1223 = vmatpush2.bf16.msra.mxu0 0
      %1224 = vmatprep.subr.bf16.mxu0 0
      %1225 = vmatpush2.bf16.msra.mxu0 0
      %1226 = vmatprep.mubr.bf16.mxu0 0
      %1227 = vmatmul.mubr.bf16.gmra.mxu0 %v1144
      %v1228 = vpop.f32.mrf.mxu0
      %v1229 = vadd.f32 0.0, %v1228
      %v1230 = vpop.f32.mrf.mxu0
      %v1231 = vpop.f32.mrf.mxu0
      %v1232 = vadd.f32 0.0, %v1231
      %v1233 = vpop.f32.mrf.mxu0
      %1234 = vdwg.mxu0
      %v1235 = vadd.f32 %v1118, %v1229
      %v1236 = vadd.f32 %v1119, %v1232
      %v1237 = vld [vmem:[%s165 + $0x8] sm:$0x7]
      %s1238 = scalar_lea.vmem %s1, 576
      %v1239 = vld [vmem:[%s1238] sm:$0xf]
      %v1240 = vld [vmem:[%s1238 + $0x4] sm:$0xf]
      %v1241 = vld [vmem:[%s1238 + $0x8] sm:$0xf]
      %v1242 = vld [vmem:[%s1238 + $0xc] sm:$0xf]
      %v1243 = vld [vmem:[%s1238 + $0x10] sm:$0xf]
      %v1244 = vld [vmem:[%s1238 + $0x14] sm:$0xf]
      %v1245 = vld [vmem:[%s1238 + $0x18] sm:$0xf]
      %v1246 = vld [vmem:[%s1238 + $0x1c] sm:$0xf]
      %v1247 = vld [vmem:[%s1238 + $0x20] sm:$0xf]
      %v1248 = vld [vmem:[%s1238 + $0x24] sm:$0xf]
      %v1249 = vld [vmem:[%s1238 + $0x28] sm:$0xf]
      %v1250 = vld [vmem:[%s1238 + $0x2c] sm:$0xf]
      %v1251 = vld [vmem:[%s1238 + $0x30] sm:$0xf]
      %v1252 = vld [vmem:[%s1238 + $0x34] sm:$0xf]
      %v1253 = vld [vmem:[%s1238 + $0x38] sm:$0xf]
      %v1254 = vld [vmem:[%s1238 + $0x3c] sm:$0xf]
      %v1256 = vunpack.c.l.b16 %v1237
      %v1257 = vpack.c.b16 %v1256, %v1141
      %v1259 = vshrl.u32 %v1257, 16
      %v1261 = vrot.slane %v1259, 1
      %v1262 = vshll.u32 %v1257, 16
      %v1264 = vrot.slane %v1262, 2
      %v1265 = vor.u32 %v1261, %v1264
      %v1283 = vunpack.c.l.b16 %v1239
      %v1284 = vunpack.c.l.b16 %v1240
      %v1285 = vunpack.c.l.b16 %v1241
      %v1286 = vunpack.c.l.b16 %v1242
      %v1287 = vunpack.c.l.b16 %v1243
      %v1288 = vunpack.c.l.b16 %v1244
      %v1289 = vunpack.c.l.b16 %v1245
      %v1290 = vunpack.c.l.b16 %v1246
      %v1291 = vunpack.c.l.b16 %v1247
      %v1292 = vunpack.c.l.b16 %v1248
      %v1293 = vunpack.c.l.b16 %v1249
      %v1294 = vunpack.c.l.b16 %v1250
      %v1295 = vunpack.c.l.b16 %v1251
      %v1296 = vunpack.c.l.b16 %v1252
      %v1297 = vunpack.c.l.b16 %v1253
      %v1298 = vunpack.c.l.b16 %v1254
      %v1299 = vpack.c.b16 %v1284, %v1283
      %v1300 = vpack.c.b16 %v1286, %v1285
      %v1301 = vpack.c.b16 %v1288, %v1287
      %v1302 = vpack.c.b16 %v1290, %v1289
      %v1303 = vpack.c.b16 %v1292, %v1291
      %v1304 = vpack.c.b16 %v1294, %v1293
      %v1305 = vpack.c.b16 %v1296, %v1295
      %v1306 = vpack.c.b16 %v1298, %v1297
      %1315 = vmatprep.subr.bf16.mxu0 0
      %1316 = vmatpush1.bf16.msra.mxu0 %v1306
      %1317 = vmatprep.subr.bf16.mxu0 0
      %1318 = vmatpush1.bf16.msra.mxu0 %v1305
      %1319 = vmatprep.subr.bf16.mxu0 0
      %1320 = vmatpush1.bf16.msra.mxu0 %v1304
      %1321 = vmatprep.subr.bf16.mxu0 0
      %1322 = vmatpush1.bf16.msra.mxu0 %v1303
      %1323 = vmatprep.subr.bf16.mxu0 0
      %1324 = vmatpush1.bf16.msra.mxu0 %v1302
      %1325 = vmatprep.subr.bf16.mxu0 0
      %1326 = vmatpush1.bf16.msra.mxu0 %v1301
      %1327 = vmatprep.subr.bf16.mxu0 0
      %1328 = vmatpush1.bf16.msra.mxu0 %v1300
      %1329 = vmatprep.subr.bf16.mxu0 0
      %1330 = vmatpush1.bf16.msra.mxu0 %v1299
      %1331 = vmatprep.subr.bf16.mxu0 0
      %1332 = vmatpush2.bf16.msra.mxu0 0
      %1333 = vmatprep.subr.bf16.mxu0 0
      %1334 = vmatpush2.bf16.msra.mxu0 0
      %1335 = vmatprep.subr.bf16.mxu0 0
      %1336 = vmatpush2.bf16.msra.mxu0 0
      %1337 = vmatprep.subr.bf16.mxu0 0
      %1338 = vmatpush2.bf16.msra.mxu0 0
      %1339 = vmatprep.subr.bf16.mxu0 0
      %1340 = vmatpush2.bf16.msra.mxu0 0
      %1341 = vmatprep.subr.bf16.mxu0 0
      %1342 = vmatpush2.bf16.msra.mxu0 0
      %1343 = vmatprep.subr.bf16.mxu0 0
      %1344 = vmatpush2.bf16.msra.mxu0 0
      %1345 = vmatprep.subr.bf16.mxu0 0
      %1346 = vmatpush2.bf16.msra.mxu0 0
      %1347 = vmatprep.mubr.bf16.mxu0 0
      %1348 = vmatmul.mubr.bf16.gmra.mxu0 %v1265
      %v1349 = vpop.f32.mrf.mxu0
      %v1350 = vadd.f32 0.0, %v1349
      %v1351 = vpop.f32.mrf.mxu0
      %v1352 = vpop.f32.mrf.mxu0
      %v1353 = vadd.f32 0.0, %v1352
      %v1354 = vpop.f32.mrf.mxu0
      %1355 = vdwg.mxu0
      %v1356 = vadd.f32 %v1235, %v1350
      %v1357 = vadd.f32 %v1236, %v1353
      %v1358 = vld [vmem:[%s165 + $0x4] sm:$0xc]
      %s1359 = scalar_lea.vmem %s1, 640
      %v1360 = vld [vmem:[%s1359] sm:$0xf]
      %v1361 = vld [vmem:[%s1359 + $0x4] sm:$0xf]
      %v1362 = vld [vmem:[%s1359 + $0x8] sm:$0xf]
      %v1363 = vld [vmem:[%s1359 + $0xc] sm:$0xf]
      %v1364 = vld [vmem:[%s1359 + $0x10] sm:$0xf]
      %v1365 = vld [vmem:[%s1359 + $0x14] sm:$0xf]
      %v1366 = vld [vmem:[%s1359 + $0x18] sm:$0xf]
      %v1367 = vld [vmem:[%s1359 + $0x1c] sm:$0xf]
      %v1368 = vld [vmem:[%s1359 + $0x20] sm:$0xf]
      %v1369 = vld [vmem:[%s1359 + $0x24] sm:$0xf]
      %v1370 = vld [vmem:[%s1359 + $0x28] sm:$0xf]
      %v1371 = vld [vmem:[%s1359 + $0x2c] sm:$0xf]
      %v1372 = vld [vmem:[%s1359 + $0x30] sm:$0xf]
      %v1373 = vld [vmem:[%s1359 + $0x34] sm:$0xf]
      %v1374 = vld [vmem:[%s1359 + $0x38] sm:$0xf]
      %v1375 = vld [vmem:[%s1359 + $0x3c] sm:$0xf]
      %v1377 = vunpack.c.l.b16 %v1358
      %v1378 = vpack.c.b16 %v1256, %v1377
      %v1379 = vrot.slane %v1378, 2
      %v1397 = vunpack.c.l.b16 %v1360
      %v1398 = vunpack.c.l.b16 %v1361
      %v1399 = vunpack.c.l.b16 %v1362
      %v1400 = vunpack.c.l.b16 %v1363
      %v1401 = vunpack.c.l.b16 %v1364
      %v1402 = vunpack.c.l.b16 %v1365
      %v1403 = vunpack.c.l.b16 %v1366
      %v1404 = vunpack.c.l.b16 %v1367
      %v1405 = vunpack.c.l.b16 %v1368
      %v1406 = vunpack.c.l.b16 %v1369
      %v1407 = vunpack.c.l.b16 %v1370
      %v1408 = vunpack.c.l.b16 %v1371
      %v1409 = vunpack.c.l.b16 %v1372
      %v1410 = vunpack.c.l.b16 %v1373
      %v1411 = vunpack.c.l.b16 %v1374
      %v1412 = vunpack.c.l.b16 %v1375
      %v1413 = vpack.c.b16 %v1398, %v1397
      %v1414 = vpack.c.b16 %v1400, %v1399
      %v1415 = vpack.c.b16 %v1402, %v1401
      %v1416 = vpack.c.b16 %v1404, %v1403
      %v1417 = vpack.c.b16 %v1406, %v1405
      %v1418 = vpack.c.b16 %v1408, %v1407
      %v1419 = vpack.c.b16 %v1410, %v1409
      %v1420 = vpack.c.b16 %v1412, %v1411
      %1429 = vmatprep.subr.bf16.mxu0 0
      %1430 = vmatpush1.bf16.msra.mxu0 %v1420
      %1431 = vmatprep.subr.bf16.mxu0 0
      %1432 = vmatpush1.bf16.msra.mxu0 %v1419
      %1433 = vmatprep.subr.bf16.mxu0 0
      %1434 = vmatpush1.bf16.msra.mxu0 %v1418
      %1435 = vmatprep.subr.bf16.mxu0 0
      %1436 = vmatpush1.bf16.msra.mxu0 %v1417
      %1437 = vmatprep.subr.bf16.mxu0 0
      %1438 = vmatpush1.bf16.msra.mxu0 %v1416
      %1439 = vmatprep.subr.bf16.mxu0 0
      %1440 = vmatpush1.bf16.msra.mxu0 %v1415
      %1441 = vmatprep.subr.bf16.mxu0 0
      %1442 = vmatpush1.bf16.msra.mxu0 %v1414
      %1443 = vmatprep.subr.bf16.mxu0 0
      %1444 = vmatpush1.bf16.msra.mxu0 %v1413
      %1445 = vmatprep.subr.bf16.mxu0 0
      %1446 = vmatpush2.bf16.msra.mxu0 0
      %1447 = vmatprep.subr.bf16.mxu0 0
      %1448 = vmatpush2.bf16.msra.mxu0 0
      %1449 = vmatprep.subr.bf16.mxu0 0
      %1450 = vmatpush2.bf16.msra.mxu0 0
      %1451 = vmatprep.subr.bf16.mxu0 0
      %1452 = vmatpush2.bf16.msra.mxu0 0
      %1453 = vmatprep.subr.bf16.mxu0 0
      %1454 = vmatpush2.bf16.msra.mxu0 0
      %1455 = vmatprep.subr.bf16.mxu0 0
      %1456 = vmatpush2.bf16.msra.mxu0 0
      %1457 = vmatprep.subr.bf16.mxu0 0
      %1458 = vmatpush2.bf16.msra.mxu0 0
      %1459 = vmatprep.subr.bf16.mxu0 0
      %1460 = vmatpush2.bf16.msra.mxu0 0
      %1461 = vmatprep.mubr.bf16.mxu0 0
      %1462 = vmatmul.mubr.bf16.gmra.mxu0 %v1379
      %v1463 = vpop.f32.mrf.mxu0
      %v1464 = vadd.f32 0.0, %v1463
      %v1465 = vpop.f32.mrf.mxu0
      %v1466 = vpop.f32.mrf.mxu0
      %v1467 = vadd.f32 0.0, %v1466
      %v1468 = vpop.f32.mrf.mxu0
      %1469 = vdwg.mxu0
      %v1470 = vadd.f32 %v1356, %v1464
      %v1471 = vadd.f32 %v1357, %v1467
      %v1472 = vld [vmem:[%s165 + $0x8] sm:$0xf]
      %s1473 = scalar_lea.vmem %s1, 704
      %v1474 = vld [vmem:[%s1473] sm:$0xf]
      %v1475 = vld [vmem:[%s1473 + $0x4] sm:$0xf]
      %v1476 = vld [vmem:[%s1473 + $0x8] sm:$0xf]
      %v1477 = vld [vmem:[%s1473 + $0xc] sm:$0xf]
      %v1478 = vld [vmem:[%s1473 + $0x10] sm:$0xf]
      %v1479 = vld [vmem:[%s1473 + $0x14] sm:$0xf]
      %v1480 = vld [vmem:[%s1473 + $0x18] sm:$0xf]
      %v1481 = vld [vmem:[%s1473 + $0x1c] sm:$0xf]
      %v1482 = vld [vmem:[%s1473 + $0x20] sm:$0xf]
      %v1483 = vld [vmem:[%s1473 + $0x24] sm:$0xf]
      %v1484 = vld [vmem:[%s1473 + $0x28] sm:$0xf]
      %v1485 = vld [vmem:[%s1473 + $0x2c] sm:$0xf]
      %v1486 = vld [vmem:[%s1473 + $0x30] sm:$0xf]
      %v1487 = vld [vmem:[%s1473 + $0x34] sm:$0xf]
      %v1488 = vld [vmem:[%s1473 + $0x38] sm:$0xf]
      %v1489 = vld [vmem:[%s1473 + $0x3c] sm:$0xf]
      %v1491 = vunpack.c.l.b16 %v1472
      %v1492 = vpack.c.b16 %v1491, %v1377
      %v1494 = vshrl.u32 %v1492, 16
      %v1496 = vrot.slane %v1494, 2
      %v1497 = vshll.u32 %v1492, 16
      %v1499 = vrot.slane %v1497, 3
      %v1500 = vor.u32 %v1496, %v1499
      %v1518 = vunpack.c.l.b16 %v1474
      %v1519 = vunpack.c.l.b16 %v1475
      %v1520 = vunpack.c.l.b16 %v1476
      %v1521 = vunpack.c.l.b16 %v1477
      %v1522 = vunpack.c.l.b16 %v1478
      %v1523 = vunpack.c.l.b16 %v1479
      %v1524 = vunpack.c.l.b16 %v1480
      %v1525 = vunpack.c.l.b16 %v1481
      %v1526 = vunpack.c.l.b16 %v1482
      %v1527 = vunpack.c.l.b16 %v1483
      %v1528 = vunpack.c.l.b16 %v1484
      %v1529 = vunpack.c.l.b16 %v1485
      %v1530 = vunpack.c.l.b16 %v1486
      %v1531 = vunpack.c.l.b16 %v1487
      %v1532 = vunpack.c.l.b16 %v1488
      %v1533 = vunpack.c.l.b16 %v1489
      %v1534 = vpack.c.b16 %v1519, %v1518
      %v1535 = vpack.c.b16 %v1521, %v1520
      %v1536 = vpack.c.b16 %v1523, %v1522
      %v1537 = vpack.c.b16 %v1525, %v1524
      %v1538 = vpack.c.b16 %v1527, %v1526
      %v1539 = vpack.c.b16 %v1529, %v1528
      %v1540 = vpack.c.b16 %v1531, %v1530
      %v1541 = vpack.c.b16 %v1533, %v1532
      %1550 = vmatprep.subr.bf16.mxu0 0
      %1551 = vmatpush1.bf16.msra.mxu0 %v1541
      %1552 = vmatprep.subr.bf16.mxu0 0
      %1553 = vmatpush1.bf16.msra.mxu0 %v1540
      %1554 = vmatprep.subr.bf16.mxu0 0
      %1555 = vmatpush1.bf16.msra.mxu0 %v1539
      %1556 = vmatprep.subr.bf16.mxu0 0
      %1557 = vmatpush1.bf16.msra.mxu0 %v1538
      %1558 = vmatprep.subr.bf16.mxu0 0
      %1559 = vmatpush1.bf16.msra.mxu0 %v1537
      %1560 = vmatprep.subr.bf16.mxu0 0
      %1561 = vmatpush1.bf16.msra.mxu0 %v1536
      %1562 = vmatprep.subr.bf16.mxu0 0
      %1563 = vmatpush1.bf16.msra.mxu0 %v1535
      %1564 = vmatprep.subr.bf16.mxu0 0
      %1565 = vmatpush1.bf16.msra.mxu0 %v1534
      %1566 = vmatprep.subr.bf16.mxu0 0
      %1567 = vmatpush2.bf16.msra.mxu0 0
      %1568 = vmatprep.subr.bf16.mxu0 0
      %1569 = vmatpush2.bf16.msra.mxu0 0
      %1570 = vmatprep.subr.bf16.mxu0 0
      %1571 = vmatpush2.bf16.msra.mxu0 0
      %1572 = vmatprep.subr.bf16.mxu0 0
      %1573 = vmatpush2.bf16.msra.mxu0 0
      %1574 = vmatprep.subr.bf16.mxu0 0
      %1575 = vmatpush2.bf16.msra.mxu0 0
      %1576 = vmatprep.subr.bf16.mxu0 0
      %1577 = vmatpush2.bf16.msra.mxu0 0
      %1578 = vmatprep.subr.bf16.mxu0 0
      %1579 = vmatpush2.bf16.msra.mxu0 0
      %1580 = vmatprep.subr.bf16.mxu0 0
      %1581 = vmatpush2.bf16.msra.mxu0 0
      %1582 = vmatprep.mubr.bf16.mxu0 0
      %1583 = vmatmul.mubr.bf16.gmra.mxu0 %v1500
      %v1584 = vpop.f32.mrf.mxu0
      %v1585 = vadd.f32 0.0, %v1584
      %v1586 = vpop.f32.mrf.mxu0
      %v1587 = vpop.f32.mrf.mxu0
      %v1588 = vadd.f32 0.0, %v1587
      %v1589 = vpop.f32.mrf.mxu0
      %1590 = vdwg.mxu0
      %v1591 = vadd.f32 %v1470, %v1585
      %v1592 = vadd.f32 %v1471, %v1588
      %v1593 = vld [vmem:[%s165 + $0x4] sm:$0x8]
      %v1594 = vld [vmem:[%s165 + $0x8] sm:$0xf]
      %v1595 = vld [vmem:[%s165 + $0xc] sm:$0x1]
      %s1596 = scalar_lea.vmem %s1, 768
      %v1597 = vld [vmem:[%s1596] sm:$0xf]
      %v1598 = vld [vmem:[%s1596 + $0x4] sm:$0xf]
      %v1599 = vld [vmem:[%s1596 + $0x8] sm:$0xf]
      %v1600 = vld [vmem:[%s1596 + $0xc] sm:$0xf]
      %v1601 = vld [vmem:[%s1596 + $0x10] sm:$0xf]
      %v1602 = vld [vmem:[%s1596 + $0x14] sm:$0xf]
      %v1603 = vld [vmem:[%s1596 + $0x18] sm:$0xf]
      %v1604 = vld [vmem:[%s1596 + $0x1c] sm:$0xf]
      %v1605 = vld [vmem:[%s1596 + $0x20] sm:$0xf]
      %v1606 = vld [vmem:[%s1596 + $0x24] sm:$0xf]
      %v1607 = vld [vmem:[%s1596 + $0x28] sm:$0xf]
      %v1608 = vld [vmem:[%s1596 + $0x2c] sm:$0xf]
      %v1609 = vld [vmem:[%s1596 + $0x30] sm:$0xf]
      %v1610 = vld [vmem:[%s1596 + $0x34] sm:$0xf]
      %v1611 = vld [vmem:[%s1596 + $0x38] sm:$0xf]
      %v1612 = vld [vmem:[%s1596 + $0x3c] sm:$0xf]
      %v1616 = vunpack.c.l.b16 %v1593
      %v1617 = vunpack.c.l.b16 %v1594
      %v1618 = vunpack.c.l.b16 %v1595
      %v1619 = vpack.c.b16 %v1617, %v1616
      %v1620 = vpack.c.b16 %v1618, %v1618
      %v1622 = vshrl.u32 %v1619, 16
      %v1624 = vrot.slane %v1622, 3
      %v1625 = vshll.u32 %v1619, 16
      %v1627 = vrot.slane %v1625, 4
      %v1628 = vor.u32 %v1624, %v1627
      %v1630 = vshll.u32 %v1620, 16
      %v1632 = vrot.slane %v1630, 4
      %v1633 = vsel %vm904, %v1628, %v1632
      %v1651 = vunpack.c.l.b16 %v1597
      %v1652 = vunpack.c.l.b16 %v1598
      %v1653 = vunpack.c.l.b16 %v1599
      %v1654 = vunpack.c.l.b16 %v1600
      %v1655 = vunpack.c.l.b16 %v1601
      %v1656 = vunpack.c.l.b16 %v1602
      %v1657 = vunpack.c.l.b16 %v1603
      %v1658 = vunpack.c.l.b16 %v1604
      %v1659 = vunpack.c.l.b16 %v1605
      %v1660 = vunpack.c.l.b16 %v1606
      %v1661 = vunpack.c.l.b16 %v1607
      %v1662 = vunpack.c.l.b16 %v1608
      %v1663 = vunpack.c.l.b16 %v1609
      %v1664 = vunpack.c.l.b16 %v1610
      %v1665 = vunpack.c.l.b16 %v1611
      %v1666 = vunpack.c.l.b16 %v1612
      %v1667 = vpack.c.b16 %v1652, %v1651
      %v1668 = vpack.c.b16 %v1654, %v1653
      %v1669 = vpack.c.b16 %v1656, %v1655
      %v1670 = vpack.c.b16 %v1658, %v1657
      %v1671 = vpack.c.b16 %v1660, %v1659
      %v1672 = vpack.c.b16 %v1662, %v1661
      %v1673 = vpack.c.b16 %v1664, %v1663
      %v1674 = vpack.c.b16 %v1666, %v1665
      %1683 = vmatprep.subr.bf16.mxu0 0
      %1684 = vmatpush1.bf16.msra.mxu0 %v1674
      %1685 = vmatprep.subr.bf16.mxu0 0
      %1686 = vmatpush1.bf16.msra.mxu0 %v1673
      %1687 = vmatprep.subr.bf16.mxu0 0
      %1688 = vmatpush1.bf16.msra.mxu0 %v1672
      %1689 = vmatprep.subr.bf16.mxu0 0
      %1690 = vmatpush1.bf16.msra.mxu0 %v1671
      %1691 = vmatprep.subr.bf16.mxu0 0
      %1692 = vmatpush1.bf16.msra.mxu0 %v1670
      %1693 = vmatprep.subr.bf16.mxu0 0
      %1694 = vmatpush1.bf16.msra.mxu0 %v1669
      %1695 = vmatprep.subr.bf16.mxu0 0
      %1696 = vmatpush1.bf16.msra.mxu0 %v1668
      %1697 = vmatprep.subr.bf16.mxu0 0
      %1698 = vmatpush1.bf16.msra.mxu0 %v1667
      %1699 = vmatprep.subr.bf16.mxu0 0
      %1700 = vmatpush2.bf16.msra.mxu0 0
      %1701 = vmatprep.subr.bf16.mxu0 0
      %1702 = vmatpush2.bf16.msra.mxu0 0
      %1703 = vmatprep.subr.bf16.mxu0 0
      %1704 = vmatpush2.bf16.msra.mxu0 0
      %1705 = vmatprep.subr.bf16.mxu0 0
      %1706 = vmatpush2.bf16.msra.mxu0 0
      %1707 = vmatprep.subr.bf16.mxu0 0
      %1708 = vmatpush2.bf16.msra.mxu0 0
      %1709 = vmatprep.subr.bf16.mxu0 0
      %1710 = vmatpush2.bf16.msra.mxu0 0
      %1711 = vmatprep.subr.bf16.mxu0 0
      %1712 = vmatpush2.bf16.msra.mxu0 0
      %1713 = vmatprep.subr.bf16.mxu0 0
      %1714 = vmatpush2.bf16.msra.mxu0 0
      %1715 = vmatprep.mubr.bf16.mxu0 0
      %1716 = vmatmul.mubr.bf16.gmra.mxu0 %v1633
      %v1717 = vpop.f32.mrf.mxu0
      %v1718 = vadd.f32 0.0, %v1717
      %v1719 = vpop.f32.mrf.mxu0
      %v1720 = vpop.f32.mrf.mxu0
      %v1721 = vadd.f32 0.0, %v1720
      %v1722 = vpop.f32.mrf.mxu0
      %1723 = vdwg.mxu0
      %v1724 = vadd.f32 %v1591, %v1718
      %v1725 = vadd.f32 %v1592, %v1721
      %s1726 = scalar_lea.vmem %s1, 832
      %v1727 = vld [vmem:[%s1726] sm:$0xf]
      %v1728 = vld [vmem:[%s1726 + $0x4] sm:$0xf]
      %v1729 = vld [vmem:[%s1726 + $0x8] sm:$0xf]
      %v1730 = vld [vmem:[%s1726 + $0xc] sm:$0xf]
      %v1731 = vld [vmem:[%s1726 + $0x10] sm:$0xf]
      %v1732 = vld [vmem:[%s1726 + $0x14] sm:$0xf]
      %v1733 = vld [vmem:[%s1726 + $0x18] sm:$0xf]
      %v1734 = vld [vmem:[%s1726 + $0x1c] sm:$0xf]
      %v1735 = vld [vmem:[%s1726 + $0x20] sm:$0xf]
      %v1736 = vld [vmem:[%s1726 + $0x24] sm:$0xf]
      %v1737 = vld [vmem:[%s1726 + $0x28] sm:$0xf]
      %v1738 = vld [vmem:[%s1726 + $0x2c] sm:$0xf]
      %v1739 = vld [vmem:[%s1726 + $0x30] sm:$0xf]
      %v1740 = vld [vmem:[%s1726 + $0x34] sm:$0xf]
      %v1741 = vld [vmem:[%s1726 + $0x38] sm:$0xf]
      %v1742 = vld [vmem:[%s1726 + $0x3c] sm:$0xf]
      %v1743 = vpack.c.b16 %v1618, %v1617
      %v1761 = vunpack.c.l.b16 %v1727
      %v1762 = vunpack.c.l.b16 %v1728
      %v1763 = vunpack.c.l.b16 %v1729
      %v1764 = vunpack.c.l.b16 %v1730
      %v1765 = vunpack.c.l.b16 %v1731
      %v1766 = vunpack.c.l.b16 %v1732
      %v1767 = vunpack.c.l.b16 %v1733
      %v1768 = vunpack.c.l.b16 %v1734
      %v1769 = vunpack.c.l.b16 %v1735
      %v1770 = vunpack.c.l.b16 %v1736
      %v1771 = vunpack.c.l.b16 %v1737
      %v1772 = vunpack.c.l.b16 %v1738
      %v1773 = vunpack.c.l.b16 %v1739
      %v1774 = vunpack.c.l.b16 %v1740
      %v1775 = vunpack.c.l.b16 %v1741
      %v1776 = vunpack.c.l.b16 %v1742
      %v1777 = vpack.c.b16 %v1762, %v1761
      %v1778 = vpack.c.b16 %v1764, %v1763
      %v1779 = vpack.c.b16 %v1766, %v1765
      %v1780 = vpack.c.b16 %v1768, %v1767
      %v1781 = vpack.c.b16 %v1770, %v1769
      %v1782 = vpack.c.b16 %v1772, %v1771
      %v1783 = vpack.c.b16 %v1774, %v1773
      %v1784 = vpack.c.b16 %v1776, %v1775
      %1793 = vmatprep.subr.bf16.mxu0 0
      %1794 = vmatpush1.bf16.msra.mxu0 %v1784
      %1795 = vmatprep.subr.bf16.mxu0 0
      %1796 = vmatpush1.bf16.msra.mxu0 %v1783
      %1797 = vmatprep.subr.bf16.mxu0 0
      %1798 = vmatpush1.bf16.msra.mxu0 %v1782
      %1799 = vmatprep.subr.bf16.mxu0 0
      %1800 = vmatpush1.bf16.msra.mxu0 %v1781
      %1801 = vmatprep.subr.bf16.mxu0 0
      %1802 = vmatpush1.bf16.msra.mxu0 %v1780
      %1803 = vmatprep.subr.bf16.mxu0 0
      %1804 = vmatpush1.bf16.msra.mxu0 %v1779
      %1805 = vmatprep.subr.bf16.mxu0 0
      %1806 = vmatpush1.bf16.msra.mxu0 %v1778
      %1807 = vmatprep.subr.bf16.mxu0 0
      %1808 = vmatpush1.bf16.msra.mxu0 %v1777
      %1809 = vmatprep.subr.bf16.mxu0 0
      %1810 = vmatpush2.bf16.msra.mxu0 0
      %1811 = vmatprep.subr.bf16.mxu0 0
      %1812 = vmatpush2.bf16.msra.mxu0 0
      %1813 = vmatprep.subr.bf16.mxu0 0
      %1814 = vmatpush2.bf16.msra.mxu0 0
      %1815 = vmatprep.subr.bf16.mxu0 0
      %1816 = vmatpush2.bf16.msra.mxu0 0
      %1817 = vmatprep.subr.bf16.mxu0 0
      %1818 = vmatpush2.bf16.msra.mxu0 0
      %1819 = vmatprep.subr.bf16.mxu0 0
      %1820 = vmatpush2.bf16.msra.mxu0 0
      %1821 = vmatprep.subr.bf16.mxu0 0
      %1822 = vmatpush2.bf16.msra.mxu0 0
      %1823 = vmatprep.subr.bf16.mxu0 0
      %1824 = vmatpush2.bf16.msra.mxu0 0
      %1825 = vmatprep.mubr.bf16.mxu0 0
      %1826 = vmatmul.mubr.bf16.gmra.mxu0 %v1743
      %v1827 = vpop.f32.mrf.mxu0
      %v1828 = vadd.f32 0.0, %v1827
      %v1829 = vpop.f32.mrf.mxu0
      %v1830 = vpop.f32.mrf.mxu0
      %v1831 = vadd.f32 0.0, %v1830
      %v1832 = vpop.f32.mrf.mxu0
      %1833 = vdwg.mxu0
      %v1834 = vadd.f32 %v1724, %v1828
      %v1835 = vadd.f32 %v1725, %v1831
      %v1836 = vld [vmem:[%s165 + $0xc] sm:$0x3]
      %s1837 = scalar_lea.vmem %s1, 896
      %v1838 = vld [vmem:[%s1837] sm:$0xf]
      %v1839 = vld [vmem:[%s1837 + $0x4] sm:$0xf]
      %v1840 = vld [vmem:[%s1837 + $0x8] sm:$0xf]
      %v1841 = vld [vmem:[%s1837 + $0xc] sm:$0xf]
      %v1842 = vld [vmem:[%s1837 + $0x10] sm:$0xf]
      %v1843 = vld [vmem:[%s1837 + $0x14] sm:$0xf]
      %v1844 = vld [vmem:[%s1837 + $0x18] sm:$0xf]
      %v1845 = vld [vmem:[%s1837 + $0x1c] sm:$0xf]
      %v1846 = vld [vmem:[%s1837 + $0x20] sm:$0xf]
      %v1847 = vld [vmem:[%s1837 + $0x24] sm:$0xf]
      %v1848 = vld [vmem:[%s1837 + $0x28] sm:$0xf]
      %v1849 = vld [vmem:[%s1837 + $0x2c] sm:$0xf]
      %v1850 = vld [vmem:[%s1837 + $0x30] sm:$0xf]
      %v1851 = vld [vmem:[%s1837 + $0x34] sm:$0xf]
      %v1852 = vld [vmem:[%s1837 + $0x38] sm:$0xf]
      %v1853 = vld [vmem:[%s1837 + $0x3c] sm:$0xf]
      %v1855 = vunpack.c.l.b16 %v1836
      %v1856 = vpack.c.b16 %v1855, %v1617
      %v1858 = vshrl.u32 %v1856, 16
      %v1860 = vshll.u32 %v1856, 16
      %v1862 = vrot.slane %v1860, 1
      %v1863 = vor.u32 %v1858, %v1862
      %v1881 = vunpack.c.l.b16 %v1838
      %v1882 = vunpack.c.l.b16 %v1839
      %v1883 = vunpack.c.l.b16 %v1840
      %v1884 = vunpack.c.l.b16 %v1841
      %v1885 = vunpack.c.l.b16 %v1842
      %v1886 = vunpack.c.l.b16 %v1843
      %v1887 = vunpack.c.l.b16 %v1844
      %v1888 = vunpack.c.l.b16 %v1845
      %v1889 = vunpack.c.l.b16 %v1846
      %v1890 = vunpack.c.l.b16 %v1847
      %v1891 = vunpack.c.l.b16 %v1848
      %v1892 = vunpack.c.l.b16 %v1849
      %v1893 = vunpack.c.l.b16 %v1850
      %v1894 = vunpack.c.l.b16 %v1851
      %v1895 = vunpack.c.l.b16 %v1852
      %v1896 = vunpack.c.l.b16 %v1853
      %v1897 = vpack.c.b16 %v1882, %v1881
      %v1898 = vpack.c.b16 %v1884, %v1883
      %v1899 = vpack.c.b16 %v1886, %v1885
      %v1900 = vpack.c.b16 %v1888, %v1887
      %v1901 = vpack.c.b16 %v1890, %v1889
      %v1902 = vpack.c.b16 %v1892, %v1891
      %v1903 = vpack.c.b16 %v1894, %v1893
      %v1904 = vpack.c.b16 %v1896, %v1895
      %1913 = vmatprep.subr.bf16.mxu0 0
      %1914 = vmatpush1.bf16.msra.mxu0 %v1904
      %1915 = vmatprep.subr.bf16.mxu0 0
      %1916 = vmatpush1.bf16.msra.mxu0 %v1903
      %1917 = vmatprep.subr.bf16.mxu0 0
      %1918 = vmatpush1.bf16.msra.mxu0 %v1902
      %1919 = vmatprep.subr.bf16.mxu0 0
      %1920 = vmatpush1.bf16.msra.mxu0 %v1901
      %1921 = vmatprep.subr.bf16.mxu0 0
      %1922 = vmatpush1.bf16.msra.mxu0 %v1900
      %1923 = vmatprep.subr.bf16.mxu0 0
      %1924 = vmatpush1.bf16.msra.mxu0 %v1899
      %1925 = vmatprep.subr.bf16.mxu0 0
      %1926 = vmatpush1.bf16.msra.mxu0 %v1898
      %1927 = vmatprep.subr.bf16.mxu0 0
      %1928 = vmatpush1.bf16.msra.mxu0 %v1897
      %1929 = vmatprep.subr.bf16.mxu0 0
      %1930 = vmatpush2.bf16.msra.mxu0 0
      %1931 = vmatprep.subr.bf16.mxu0 0
      %1932 = vmatpush2.bf16.msra.mxu0 0
      %1933 = vmatprep.subr.bf16.mxu0 0
      %1934 = vmatpush2.bf16.msra.mxu0 0
      %1935 = vmatprep.subr.bf16.mxu0 0
      %1936 = vmatpush2.bf16.msra.mxu0 0
      %1937 = vmatprep.subr.bf16.mxu0 0
      %1938 = vmatpush2.bf16.msra.mxu0 0
      %1939 = vmatprep.subr.bf16.mxu0 0
      %1940 = vmatpush2.bf16.msra.mxu0 0
      %1941 = vmatprep.subr.bf16.mxu0 0
      %1942 = vmatpush2.bf16.msra.mxu0 0
      %1943 = vmatprep.subr.bf16.mxu0 0
      %1944 = vmatpush2.bf16.msra.mxu0 0
      %1945 = vmatprep.mubr.bf16.mxu0 0
      %1946 = vmatmul.mubr.bf16.gmra.mxu0 %v1863
      %v1947 = vpop.f32.mrf.mxu0
      %v1948 = vadd.f32 0.0, %v1947
      %v1949 = vpop.f32.mrf.mxu0
      %v1950 = vpop.f32.mrf.mxu0
      %v1951 = vadd.f32 0.0, %v1950
      %v1952 = vpop.f32.mrf.mxu0
      %1953 = vdwg.mxu0
      %v1954 = vadd.f32 %v1834, %v1948
      %v1955 = vadd.f32 %v1835, %v1951
      %v1956 = vld [vmem:[%s165 + $0x8] sm:$0xe]
      %s1957 = scalar_lea.vmem %s1, 960
      %v1958 = vld [vmem:[%s1957] sm:$0xf]
      %v1959 = vld [vmem:[%s1957 + $0x4] sm:$0xf]
      %v1960 = vld [vmem:[%s1957 + $0x8] sm:$0xf]
      %v1961 = vld [vmem:[%s1957 + $0xc] sm:$0xf]
      %v1962 = vld [vmem:[%s1957 + $0x10] sm:$0xf]
      %v1963 = vld [vmem:[%s1957 + $0x14] sm:$0xf]
      %v1964 = vld [vmem:[%s1957 + $0x18] sm:$0xf]
      %v1965 = vld [vmem:[%s1957 + $0x1c] sm:$0xf]
      %v1966 = vld [vmem:[%s1957 + $0x20] sm:$0xf]
      %v1967 = vld [vmem:[%s1957 + $0x24] sm:$0xf]
      %v1968 = vld [vmem:[%s1957 + $0x28] sm:$0xf]
      %v1969 = vld [vmem:[%s1957 + $0x2c] sm:$0xf]
      %v1970 = vld [vmem:[%s1957 + $0x30] sm:$0xf]
      %v1971 = vld [vmem:[%s1957 + $0x34] sm:$0xf]
      %v1972 = vld [vmem:[%s1957 + $0x38] sm:$0xf]
      %v1973 = vld [vmem:[%s1957 + $0x3c] sm:$0xf]
      %v1975 = vunpack.c.l.b16 %v1956
      %v1976 = vpack.c.b16 %v1855, %v1975
      %v1977 = vrot.slane %v1976, 1
      %v1995 = vunpack.c.l.b16 %v1958
      %v1996 = vunpack.c.l.b16 %v1959
      %v1997 = vunpack.c.l.b16 %v1960
      %v1998 = vunpack.c.l.b16 %v1961
      %v1999 = vunpack.c.l.b16 %v1962
      %v2000 = vunpack.c.l.b16 %v1963
      %v2001 = vunpack.c.l.b16 %v1964
      %v2002 = vunpack.c.l.b16 %v1965
      %v2003 = vunpack.c.l.b16 %v1966
      %v2004 = vunpack.c.l.b16 %v1967
      %v2005 = vunpack.c.l.b16 %v1968
      %v2006 = vunpack.c.l.b16 %v1969
      %v2007 = vunpack.c.l.b16 %v1970
      %v2008 = vunpack.c.l.b16 %v1971
      %v2009 = vunpack.c.l.b16 %v1972
      %v2010 = vunpack.c.l.b16 %v1973
      %v2011 = vpack.c.b16 %v1996, %v1995
      %v2012 = vpack.c.b16 %v1998, %v1997
      %v2013 = vpack.c.b16 %v2000, %v1999
      %v2014 = vpack.c.b16 %v2002, %v2001
      %v2015 = vpack.c.b16 %v2004, %v2003
      %v2016 = vpack.c.b16 %v2006, %v2005
      %v2017 = vpack.c.b16 %v2008, %v2007
      %v2018 = vpack.c.b16 %v2010, %v2009
      %2027 = vmatprep.subr.bf16.mxu0 0
      %2028 = vmatpush1.bf16.msra.mxu0 %v2018
      %2029 = vmatprep.subr.bf16.mxu0 0
      %2030 = vmatpush1.bf16.msra.mxu0 %v2017
      %2031 = vmatprep.subr.bf16.mxu0 0
      %2032 = vmatpush1.bf16.msra.mxu0 %v2016
      %2033 = vmatprep.subr.bf16.mxu0 0
      %2034 = vmatpush1.bf16.msra.mxu0 %v2015
      %2035 = vmatprep.subr.bf16.mxu0 0
      %2036 = vmatpush1.bf16.msra.mxu0 %v2014
      %2037 = vmatprep.subr.bf16.mxu0 0
      %2038 = vmatpush1.bf16.msra.mxu0 %v2013
      %2039 = vmatprep.subr.bf16.mxu0 0
      %2040 = vmatpush1.bf16.msra.mxu0 %v2012
      %2041 = vmatprep.subr.bf16.mxu0 0
      %2042 = vmatpush1.bf16.msra.mxu0 %v2011
      %2043 = vmatprep.subr.bf16.mxu0 0
      %2044 = vmatpush2.bf16.msra.mxu0 0
      %2045 = vmatprep.subr.bf16.mxu0 0
      %2046 = vmatpush2.bf16.msra.mxu0 0
      %2047 = vmatprep.subr.bf16.mxu0 0
      %2048 = vmatpush2.bf16.msra.mxu0 0
      %2049 = vmatprep.subr.bf16.mxu0 0
      %2050 = vmatpush2.bf16.msra.mxu0 0
      %2051 = vmatprep.subr.bf16.mxu0 0
      %2052 = vmatpush2.bf16.msra.mxu0 0
      %2053 = vmatprep.subr.bf16.mxu0 0
      %2054 = vmatpush2.bf16.msra.mxu0 0
      %2055 = vmatprep.subr.bf16.mxu0 0
      %2056 = vmatpush2.bf16.msra.mxu0 0
      %2057 = vmatprep.subr.bf16.mxu0 0
      %2058 = vmatpush2.bf16.msra.mxu0 0
      %2059 = vmatprep.mubr.bf16.mxu0 0
      %2060 = vmatmul.mubr.bf16.gmra.mxu0 %v1977
      %v2061 = vpop.f32.mrf.mxu0
      %v2062 = vadd.f32 0.0, %v2061
      %v2063 = vpop.f32.mrf.mxu0
      %v2064 = vpop.f32.mrf.mxu0
      %v2065 = vadd.f32 0.0, %v2064
      %v2066 = vpop.f32.mrf.mxu0
      %2067 = vdwg.mxu0
      %v2068 = vadd.f32 %v1954, %v2062
      %v2069 = vadd.f32 %v1955, %v2065
      %v2070 = vld [vmem:[%s2] sm:$0x1]
      %v2072 = vlaneseq
      %v2073 = vshrl.u32 %v2072, 7
      %v2074 = vsub.s32 0, %v2073
      %v2075 = vrot.slane %v2070, %v2074
      %v2077 = vadd.f32 %v2068, %v2075
      %v2078 = vadd.f32 %v2069, %v2075
      %2079 = vst [vmem:[%s170] sm:$0xff] %v2077
      %2080 = vst [vmem:[%s170 + $0x8] sm:$0x3] %v2078
      %p2081 = scmp.lt.s32.totalorder %s14, 1
      %s2082 = scalar_select %p2081, %s14, 1
      %s2083 = smul.addr %s2082, 2
      %s2084 = smul.addr %s2083, 8
      %s2085 = scalar_lea.vmem %s3, %s2084
      // Predicated region
      $region33: #{discriminator_forward.15} parent=31 // pred_check
        %p2086 = pneg %p100
      $region34: #{discriminator_forward.15} parent=31 // pred_check_branch
        %2088 = sbr.rel (%p2086) target = $region36
      $region35: #{discriminator_forward.15} parent=31 // pred_region
        _
      $region36: #{discriminator_forward.15} parent=31 // pred_fallthru
        _
    $region32: #{discriminator_forward.15} parent=5 // pred_fallthru
      _
    %p2089 = scmp.le.s32.totalorder 2, %s9
    // Predicated region
    $region37: #{discriminator_forward.15} parent=5 // pred_check
      %p2090 = pneg %p2089
    $region38: #{discriminator_forward.15} parent=5 // pred_check_branch
      %2092 = sbr.rel (%p2090) target = $region40
    $region39: #{discriminator_forward.15} parent=5 // pred_region
      %s2093 = ssub.s32 %s9, 2
      // Predicated region
      $region41: #{discriminator_forward.15} parent=39 // pred_check
        %p2094 = pneg %p106
      $region42: #{discriminator_forward.15} parent=39 // pred_check_branch
        %2096 = sbr.rel (%p2094) target = $region44
      $region43: #{discriminator_forward.15} parent=39 // pred_region
        %p2097 = scmp.lt.s32.totalorder %s15, 1
        %s2098 = scalar_select %p2097, %s15, 1
        %s2099 = smul.addr %s2098, 2
        %s2100 = smul.addr %s2099, 8
        %s2101 = scalar_lea.vmem %s3, %s2100
      $region44: #{discriminator_forward.15} parent=39 // pred_fallthru
        _
    $region40: #{discriminator_forward.15} parent=5 // pred_fallthru
      _
  $region6: #{discriminator_forward.15} parent=0 // loop_footer
    %s13 = sadd.s32 1, %s9
  $region7: #{discriminator_forward.15} parent=0 // loop_footer_branch
    %8 = sbr.rel target = $region3
  $region8: #{discriminator_forward.15} parent=0 // loop_exit
    _

</llo_original>
